<compile_context>
chip_gen: v7x
topology: tpu7x:2x2x1
jax: 0.10.0
libtpu: 0.0.40
codegen_flags: <defaults>
</compile_context>

<pallas_src>
import functools

import jax
import jax.numpy as jnp
from jax.experimental import pallas as pl
from jax.experimental.pallas import tpu as pltpu

# Channel sizes fixed by the module definition (Linear(128 + 256 + 128, 1024)).
C_FEATS = (128, 256, 128)
C_TOTAL = sum(C_FEATS)   # 512
HIDDEN = 1024
OUT = 1
_LANES = 128             # vreg lane width


# ---------------------------------------------------------------------------
# Per-generation sizing (perf review: v5e / v6e / v7x VMEM + tile targets)
# ---------------------------------------------------------------------------
@functools.lru_cache(maxsize=1)
def _chip_config():
    kind = ""
    try:
        kind = jax.devices()[0].device_kind.lower()
    except Exception:           # no accelerator visible: fall back to safe defaults
        pass
    mib = 1024 * 1024
    if "v7" in kind:            # 64 MiB VMEM per TC, 2 TCs per chip
        return {"name": "v7x", "vmem_limit": 48 * mib, "tile_budget": 32 * mib,
                "ts_target": 4096, "two_tc": True}
    if "v6" in kind or "trillium" in kind:          # 128 MiB VMEM, 1 TC
        return {"name": "v6e", "vmem_limit": 96 * mib, "tile_budget": 64 * mib,
                "ts_target": 8192, "two_tc": False}
    if "v5e" in kind or "v5 lite" in kind or "v5lite" in kind:
        # 128 MiB physical, but default scoped VMEM is 16 MiB -> keep explicit 32 MiB.
        return {"name": "v5e", "vmem_limit": 32 * mib, "tile_budget": 16 * mib,
                "ts_target": 2048, "two_tc": False}
    return {"name": "default", "vmem_limit": 32 * mib, "tile_budget": 16 * mib,
            "ts_target": 2048, "two_tc": False}


# ---------------------------------------------------------------------------
# Helpers
# ---------------------------------------------------------------------------
def _spatial_size(shape):
    s = 1
    for d in shape[2:]:
        s *= int(d)
    return s


def _choose_spatial_tile(s, bytes_per_pos, ts_target, budget_bytes):
    """Spatial tile (multiple of 128) sized against the double-buffered VMEM
    budget; a single full-extent tile when the whole axis fits."""
    ts_target = max(128, (ts_target // 128) * 128)
    cap = max(128, (budget_bytes // (2 * bytes_per_pos)) // 128 * 128)
    ts = min(ts_target, cap)
    if s <= ts:
        return s, 1                  # single full-extent block (any size allowed)
    return ts, pl.cdiv(s, ts)        # ts is a multiple of 128 here


def _choose_channel_split(c, parallel_blocks):
    """Channel tile so the 'parallel' grid axis has `parallel_blocks` blocks
    (v7x megacore sharding).  Keeps the sublane dim a multiple of 8."""
    if parallel_blocks > 1 and c % parallel_blocks == 0:
        tc = c // parallel_blocks
        if tc % 8 == 0:
            return tc
    return c


def _accumulate_tile(acc_ref, x_ref, valid, col=None):
    """Add `valid` spatial positions of a (B, C, ts) tile into a lane-wise
    (B, C, 128) f32 accumulator with pure VPU adds (ts is a multiple of 128).
    Only a partial final 128-chunk pays for a mask; OOB garbage (even NaN/Inf)
    is replaced by 0 via select, never read otherwise."""
    x = x_ref[...].astype(jnp.float32)
    a = acc_ref[...]
    nfull = valid // _LANES
    lane_rem = valid % _LANES
    for k in range(nfull):
        a = a + x[:, :, k * _LANES:(k + 1) * _LANES]
    if lane_rem:
        if col is None:
            col = jax.lax.broadcasted_iota(jnp.int32, (1, 1, _LANES), 2)
        start = nfull * _LANES
        chunk = x[:, :, start:start + _LANES]
        a = a + jnp.where(col < lane_rem, chunk, 0.0)
    acc_ref[...] = a


def _mlp_body(pooled, w1_ref, b1_ref, w2_ref, b2_ref, probs_ref, logits_ref,
              channel_sizes):
    """Linear(512,1024) -> ReLU -> Linear(1024,1) -> Softmax(dim=1)."""
    # First linear: per-feature pooled chunks against static row-slices of w1
    # (no concatenated (B, 512) activation ever materializes).
    h = b1_ref[...].astype(jnp.float32)
    off = 0
    for p, c in zip(pooled, channel_sizes):
        h = h + jnp.dot(p, w1_ref[off:off + c, :].astype(jnp.float32),
                        preferred_element_type=jnp.float32)
        off += c
    h = jnp.maximum(h, 0.0)
    # Second linear (1024 -> 1): VPU multiply + lane reduce, keeps it off the MXU.
    logits = (jnp.sum(h * w2_ref[...].astype(jnp.float32), axis=-1, keepdims=True)
              + b2_ref[...].astype(jnp.float32))
    # Softmax over dim=1 (size 1 => all ones); computed faithfully.
    # TODO(synk): softmax over a size-1 dim is degenerate; the original module
    # almost certainly intended sigmoid / >1 classes.
    m = jnp.max(logits, axis=1, keepdims=True)
    e = jnp.exp(logits - m)
    probs_ref[...] = (e / jnp.sum(e, axis=1, keepdims=True)).astype(probs_ref.dtype)
    logits_ref[...] = logits.astype(logits_ref.dtype)


# ---------------------------------------------------------------------------
# Fused path (single-TC chips): one pallas_call = 3 tiled pools + MLP head
# ---------------------------------------------------------------------------
def _make_fused_kernel(channel_sizes, s, ts, ns):
    n = len(channel_sizes)
    rem = s % ts                   # valid positions in the last tile (0 => full)
    inv_s = 1.0 / float(s)

    def kernel(*refs):
        x_refs = refs[:n]
        w1_hbm, b1_ref, w2_ref, b2_ref = refs[n:n + 4]
        probs_ref, logits_ref = refs[n + 4:n + 6]
        w1_vmem, w1_sem = refs[n + 6:n + 8]
        acc_refs = refs[n + 8:]

        si = pl.program_id(0)

        @pl.when(si == 0)
        def _prologue():
            # Single-buffered weight fetch: issued on the first grid step,
            # waited on only in the final step's MLP head.
            pltpu.make_async_copy(w1_hbm, w1_vmem, w1_sem).start()
            for acc in acc_refs:
                acc[...] = jnp.zeros_like(acc)

        if ns == 1:
            # Whole spatial extent in one tile: no accumulators, no masking.
            pooled = [jnp.sum(x_ref[...].astype(jnp.float32), axis=-1) * inv_s
                      for x_ref in x_refs]
        else:
            if rem == 0:
                for x_ref, acc in zip(x_refs, acc_refs):
                    _accumulate_tile(acc, x_ref, ts)
            else:
                # Only the final tile pays for masking.
                @pl.when(si < ns - 1)
                def _full_tiles():
                    for x_ref, acc in zip(x_refs, acc_refs):
                        _accumulate_tile(acc, x_ref, ts)

                @pl.when(si == ns - 1)
                def _last_tile():
                    # One small (1,1,128) iota shared by all three features.
                    col = jax.lax.broadcasted_iota(jnp.int32, (1, 1, _LANES), 2)
                    for x_ref, acc in zip(x_refs, acc_refs):
                        _accumulate_tile(acc, x_ref, rem, col=col)

        @pl.when(si == ns - 1)
        def _finalize():
            pltpu.make_async_copy(w1_hbm, w1_vmem, w1_sem).wait()
            if ns == 1:
                p = pooled
            else:
                # Deferred cross-lane reduce: once per kernel, not per step.
                p = [jnp.sum(acc[...], axis=-1) * inv_s for acc in acc_refs]
            _mlp_body(p, w1_vmem, b1_ref, w2_ref, b2_ref,
                      probs_ref, logits_ref, channel_sizes)

    return kernel


def _fused_forward(features, w1, b1, w2, b2, *, cfg=None, ts_target=None):
    cfg = cfg or _chip_config()
    ts_target = ts_target if ts_target is not None else cfg["ts_target"]

    b = features[0].shape[0]
    s = _spatial_size(features[0].shape)
    channel_sizes = tuple(f.shape[1] for f in features)
    xs = [f.reshape(b, c, s) for f, c in zip(features, channel_sizes)]

    itemsize = max(jnp.dtype(f.dtype).itemsize for f in features)
    bytes_per_pos = b * sum(channel_sizes) * itemsize
    ts, ns = _choose_spatial_tile(s, bytes_per_pos, ts_target, cfg["tile_budget"])

    in_specs = [pl.BlockSpec((b, c, ts), lambda si: (0, 0, si))
                for c in channel_sizes]
    in_specs += [
        pl.BlockSpec(memory_space=pl.ANY),                 # w1: manual, single-buffered DMA
        pl.BlockSpec((1, HIDDEN), lambda si: (0, 0)),      # b1
        pl.BlockSpec((OUT, HIDDEN), lambda si: (0, 0)),    # w2
        pl.BlockSpec((1, OUT), lambda si: (0, 0)),         # b2
    ]
    out_specs = (pl.BlockSpec((b, OUT), lambda si: (0, 0)),
                 pl.BlockSpec((b, OUT), lambda si: (0, 0)))

    scratch = [pltpu.VMEM(w1.shape, w1.dtype),             # resident weights
               pltpu.SemaphoreType.DMA(())]
    if ns > 1:
        scratch += [pltpu.VMEM((b, c, _LANES), jnp.float32) for c in channel_sizes]

    bytes_accessed = int(sum(f.size * jnp.dtype(f.dtype).itemsize for f in features)
                         + (w1.size + b1.size + w2.size + b2.size) * 4
                         + 2 * b * OUT * 4)
    flops = int(b * s * sum(channel_sizes)        # pooling adds
                + 2 * b * C_TOTAL * HIDDEN        # first linear
                + 2 * b * HIDDEN)                 # second linear (VPU)

    probs, logits = pl.pallas_call(
        _make_fused_kernel(channel_sizes, s, ts, ns),
        out_shape=(jax.ShapeDtypeStruct((b, OUT), jnp.float32),
                   jax.ShapeDtypeStruct((b, OUT), jnp.float32)),
        grid=(ns,),
        in_specs=in_specs,
        out_specs=out_specs,
        scratch_shapes=scratch,
        compiler_params=pltpu.CompilerParams(
            dimension_semantics=("arbitrary",),
            vmem_limit_bytes=cfg["vmem_limit"]),
        cost_estimate=pl.CostEstimate(flops=flops, transcendentals=b,
                                      bytes_accessed=bytes_accessed),
    )(*xs, w1, b1, w2, b2)
    return probs, logits


# ---------------------------------------------------------------------------
# Split path: per-feature pooling kernels (+ optional channel parallelism for
# v7x megacore) followed by a concat-free MLP head kernel.
# ---------------------------------------------------------------------------
def _pool_kernel(x_ref, o_ref, *acc, s, ts, ns):
    inv_s = 1.0 / float(s)
    if ns == 1:
        o_ref[...] = (jnp.sum(x_ref[...].astype(jnp.float32), axis=-1)
                      * inv_s)[None].astype(o_ref.dtype)
        return

    acc_ref = acc[0]
    si = pl.program_id(1)
    rem = s % ts

    @pl.when(si == 0)
    def _init():
        acc_ref[...] = jnp.zeros_like(acc_ref)

    if rem == 0:
        _accumulate_tile(acc_ref, x_ref, ts)
    else:
        @pl.when(si < ns - 1)
        def _full_tiles():
            _accumulate_tile(acc_ref, x_ref, ts)

        @pl.when(si == ns - 1)
        def _last_tile():
            _accumulate_tile(acc_ref, x_ref, rem)

    @pl.when(si == ns - 1)
    def _finalize():
        o_ref[...] = (jnp.sum(acc_ref[...], axis=-1)
                      * inv_s)[None].astype(o_ref.dtype)


def adaptive_avg_pool(x_ncdhw, *, ts_target=None, parallel_blocks=None, cfg=None):
    """Global average pool: (B, C, D, H, W) -> (B, C) f32."""
    cfg = cfg or _chip_config()
    ts_target = ts_target if ts_target is not None else cfg["ts_target"]
    if parallel_blocks is None:
        parallel_blocks = 2 if cfg["two_tc"] else 1   # channel split only on v7x

    b, c = x_ncdhw.shape[:2]
    s = _spatial_size(x_ncdhw.shape)
    x = x_ncdhw.reshape(b, c, s)

    tc = _choose_channel_split(c, parallel_blocks)
    nc = c // tc
    itemsize = jnp.dtype(x.dtype).itemsize
    ts, ns = _choose_spatial_tile(s, b * tc * itemsize, ts_target, cfg["tile_budget"])

    scratch = [] if ns == 1 else [pltpu.VMEM((b, tc, _LANES), jnp.float32)]

    out = pl.pallas_call(
        functools.partial(_pool_kernel, s=s, ts=ts, ns=ns),
        out_shape=jax.ShapeDtypeStruct((nc, b, tc), jnp.float32),
        grid=(nc, ns),                                    # reduction axis last
        in_specs=[pl.BlockSpec((b, tc, ts), lambda ci, si: (0, ci, si))],
        out_specs=pl.BlockSpec((1, b, tc), lambda ci, si: (ci, 0, 0)),
        scratch_shapes=scratch,
        compiler_params=pltpu.CompilerParams(
            dimension_semantics=("parallel", "arbitrary"),
            vmem_limit_bytes=cfg["vmem_limit"]),
        cost_estimate=pl.CostEstimate(
            flops=int(b * c * s), transcendentals=0,
            bytes_accessed=int(x.size * itemsize + nc * b * tc * 4)),
    )(x)
    # (nc, B, tc) -> (B, C): tiny (B*C floats), negligible XLA reshuffle.
    return jnp.transpose(out, (1, 0, 2)).reshape(b, c)


def _make_head_kernel(channel_sizes):
    n = len(channel_sizes)

    def kernel(*refs):
        x_refs = refs[:n]
        w1_ref, b1_ref, w2_ref, b2_ref = refs[n:n + 4]
        probs_ref, logits_ref = refs[n + 4:n + 6]
        pooled = [x[...].astype(jnp.float32) for x in x_refs]
        _mlp_body(pooled, w1_ref, b1_ref, w2_ref, b2_ref,
                  probs_ref, logits_ref, channel_sizes)

    return kernel


def classifier_head(pooled_feats, w1, b1, w2, b2, *, cfg=None):
    """pooled_feats: list of (B, C_i) arrays; no XLA concat is materialized —
    w1 is sliced per chunk inside the kernel (static slices, free)."""
    cfg = cfg or _chip_config()
    b = pooled_feats[0].shape[0]
    channel_sizes = tuple(p.shape[1] for p in pooled_feats)

    in_specs = [pl.BlockSpec((b, c), lambda i: (0, 0)) for c in channel_sizes]
    in_specs += [
        pl.BlockSpec((C_TOTAL, HIDDEN), lambda i: (0, 0)),
        pl.BlockSpec((1, HIDDEN), lambda i: (0, 0)),
        pl.BlockSpec((OUT, HIDDEN), lambda i: (0, 0)),
        pl.BlockSpec((1, OUT), lambda i: (0, 0)),
    ]
    probs, logits = pl.pallas_call(
        _make_head_kernel(channel_sizes),
        out_shape=(jax.ShapeDtypeStruct((b, OUT), jnp.float32),
                   jax.ShapeDtypeStruct((b, OUT), jnp.float32)),
        grid=(1,),
        in_specs=in_specs,
        out_specs=(pl.BlockSpec((b, OUT), lambda i: (0, 0)),
                   pl.BlockSpec((b, OUT), lambda i: (0, 0))),
        compiler_params=pltpu.CompilerParams(vmem_limit_bytes=cfg["vmem_limit"]),
    )(*pooled_feats, w1, b1, w2, b2)
    return probs, logits


def _split_forward(features, w1, b1, w2, b2, *, cfg=None, ts_target=None,
                   parallel_blocks=None):
    cfg = cfg or _chip_config()
    pooled = [adaptive_avg_pool(f, ts_target=ts_target,
                                parallel_blocks=parallel_blocks, cfg=cfg)
              for f in features]
    return classifier_head(pooled, w1, b1, w2, b2, cfg=cfg)


# ---------------------------------------------------------------------------
# Module wrapper
# ---------------------------------------------------------------------------
def init_params(key):
    """Init mimicking torch.nn.Linear defaults (U(-1/sqrt(fan_in), +1/sqrt(fan_in)))."""
    k1, k2, k3, k4 = jax.random.split(key, 4)
    lim1 = 1.0 / jnp.sqrt(jnp.float32(C_TOTAL))
    lim2 = 1.0 / jnp.sqrt(jnp.float32(HIDDEN))
    w1 = jax.random.uniform(k1, (C_TOTAL, HIDDEN), jnp.float32, -lim1, lim1)  # (in, out)
    b1 = jax.random.uniform(k2, (1, HIDDEN), jnp.float32, -lim1, lim1)
    w2 = jax.random.uniform(k3, (OUT, HIDDEN), jnp.float32, -lim2, lim2)      # torch (out, in)
    b2 = jax.random.uniform(k4, (1, OUT), jnp.float32, -lim2, lim2)
    return w1, b1, w2, b2


def classifier_forward(params, *features, ts_target=None):
    """features: NCDHW feature maps whose channel sizes sum to 512."""
    w1, b1, w2, b2 = params
    cfg = _chip_config()
    same_shape = (len({f.shape[2:] for f in features}) == 1
                  and len({f.shape[0] for f in features}) == 1)
    if same_shape and not cfg["two_tc"]:
        # Single-TC chips (v5e/v6e): one fused launch = 3 pools + MLP head.
        probs, _ = _fused_forward(features, w1, b1, w2, b2,
                                  cfg=cfg, ts_target=ts_target)
    else:
        # v7x (2 TCs): channel-parallel pooling shards across both cores; the
        # (B, C_i) round trips + head launch are ~4 KB / negligible.
        # Also used whenever the feature maps have different spatial shapes.
        probs, _ = _split_forward(features, w1, b1, w2, b2,
                                  cfg=cfg, ts_target=ts_target)
    return probs


if __name__ == "__main__":
    key = jax.random.PRNGKey(0)
    kp, k0, k1, k2, k3, k4, k5 = jax.random.split(key, 7)
    params = init_params(kp)
    w1, b1, w2, b2 = params

    def reference(feats):
        pooled = jnp.concatenate(
            [f.astype(jnp.float32).mean(axis=(2, 3, 4)) for f in feats], axis=1)
        h = jnp.maximum(pooled @ w1 + b1, 0.0)
        logits = h @ w2.T + b2
        return jax.nn.softmax(logits, axis=1), logits

    B = 2

    # Case 1: equal spatial shapes.  D*H*W = 192 with a test tile of 128
    # exercises the multi-tile path with a masked 64-wide remainder.
    dims1 = (4, 6, 8)
    feats1 = (
        jax.random.normal(k0, (B, C_FEATS[0]) + dims1, jnp.float32),
        jax.random.normal(k1, (B, C_FEATS[1]) + dims1, jnp.float32),
        jax.random.normal(k2, (B, C_FEATS[2]) + dims1, jnp.float32),
    )
    ref_p1, ref_l1 = reference(feats1)

    # Fused kernel, multi-tile + masked remainder.
    probs1, logits1 = _fused_forward(feats1, w1, b1, w2, b2, ts_target=128)
    jax.block_until_ready(logits1)
    assert probs1.shape == (B, OUT)
    assert jnp.allclose(logits1, ref_l1, atol=1e-4, rtol=1e-4)
    assert jnp.allclose(probs1, ref_p1, atol=1e-6)

    # Fused kernel, single-tile (ns == 1) path.
    probs1b, logits1b = _fused_forward(feats1, w1, b1, w2, b2)
    assert jnp.allclose(logits1b, ref_l1, atol=1e-4, rtol=1e-4)

    # Split path (what v7x uses for megacore pooling), forced 2-way channel split.
    probs1c, logits1c = _split_forward(feats1, w1, b1, w2, b2,
                                       ts_target=128, parallel_blocks=2)
    assert jnp.allclose(logits1c, ref_l1, atol=1e-4, rtol=1e-4)
    assert jnp.allclose(probs1c, ref_p1, atol=1e-6)

    # Public entry point (auto-selects fused vs split based on the chip).
    out1 = jax.block_until_ready(classifier_forward(params, *feats1, ts_target=128))
    assert jnp.allclose(out1, ref_p1, atol=1e-6)

    # Case 2: mixed spatial shapes -> per-feature tiled pools + head kernel.
    feats2 = (
        jax.random.normal(k3, (B, C_FEATS[0], 4, 4, 4), jnp.float32),
        jax.random.normal(k4, (B, C_FEATS[1], 2, 2, 4), jnp.float32),
        jax.random.normal(k5, (B, C_FEATS[2], 4, 6, 8), jnp.float32),
    )
    for f in feats2:   # verifies tiled + masked pooling numerically
        pooled = jax.block_until_ready(adaptive_avg_pool(f, ts_target=128))
        assert jnp.allclose(pooled, f.mean(axis=(2, 3, 4)), atol=1e-5, rtol=1e-5)
    # Channel-parallel pooling variant (v7x megacore sharding), forced here.
    pooled_par = adaptive_avg_pool(feats2[1], ts_target=128, parallel_blocks=2)
    assert jnp.allclose(pooled_par, feats2[1].mean(axis=(2, 3, 4)),
                        atol=1e-5, rtol=1e-5)

    out2 = jax.block_until_ready(classifier_forward(params, *feats2, ts_target=128))
    ref_p2, _ = reference(feats2)
    assert out2.shape == (B, OUT)
    assert jnp.allclose(out2, ref_p2, atol=1e-6)

    print("KERNEL_OK")
</pallas_src>

<mosaic_0001>
module attributes {stable_mosaic.version = 11 : i64} {
  func.func @kernel(%arg0: i32, %arg1: memref<2x128x128xf32, #tpu.memory_space<vmem>>, %arg2: memref<2x256x128xf32, #tpu.memory_space<vmem>>, %arg3: memref<2x128x128xf32, #tpu.memory_space<vmem>>, %arg4: memref<512x1024xf32, #tpu.memory_space<any>>, %arg5: memref<1x1024xf32, #tpu.memory_space<vmem>>, %arg6: memref<1x1024xf32, #tpu.memory_space<vmem>>, %arg7: memref<1x1xf32, #tpu.memory_space<vmem>>, %arg8: memref<2x1xf32, #tpu.memory_space<vmem>>, %arg9: memref<2x1xf32, #tpu.memory_space<vmem>>, %arg10: memref<512x1024xf32, #tpu.memory_space<vmem>>, %arg11: memref<!tpu.dma_semaphore, #tpu.memory_space<semaphore_mem>>, %arg12: memref<2x128x128xf32, #tpu.memory_space<vmem>>, %arg13: memref<2x256x128xf32, #tpu.memory_space<vmem>>, %arg14: memref<2x128x128xf32, #tpu.memory_space<vmem>>) attributes {dimension_semantics = [#tpu.dimension_semantics<arbitrary>], iteration_bounds = array<i64: 2>, scalar_prefetch = 0 : i64, scratch_operands = 5 : i64, tpu.core_type = #tpu.core_type<tc>, window_params = [{transform_indices = @transform_0, window_bounds = array<i64: 2, 128, 128>}, {transform_indices = @transform_1, window_bounds = array<i64: 2, 256, 128>}, {transform_indices = @transform_2, window_bounds = array<i64: 2, 128, 128>}, {}, {pipeline_mode = #tpu.pipeline_mode<synchronous>, transform_indices = @transform_4, window_bounds = array<i64: 1, 1024>}, {pipeline_mode = #tpu.pipeline_mode<synchronous>, transform_indices = @transform_5, window_bounds = array<i64: 1, 1024>}, {pipeline_mode = #tpu.pipeline_mode<synchronous>, transform_indices = @transform_6, window_bounds = array<i64: 1, 1>}, {pipeline_mode = #tpu.pipeline_mode<synchronous>, transform_indices = @transform_7, window_bounds = array<i64: 2, 1>}, {pipeline_mode = #tpu.pipeline_mode<synchronous>, transform_indices = @transform_8, window_bounds = array<i64: 2, 1>}]} {
    %c0_i32 = arith.constant 0 : i32
    %0 = arith.cmpi eq, %arg0, %c0_i32 : i32
    %1 = arith.extui %0 : i1 to i32
    %c0_i32_0 = arith.constant 0 : i32
    %2 = arith.cmpi ne, %1, %c0_i32_0 : i32
    scf.if %2 {
      tpu.enqueue_dma source(%arg4 : memref<512x1024xf32, #tpu.memory_space<any>>) target(%arg10 : memref<512x1024xf32, #tpu.memory_space<vmem>>) target_semaphore(%arg11 : memref<!tpu.dma_semaphore, #tpu.memory_space<semaphore_mem>>)
      %cst = arith.constant 0.000000e+00 : f32
      %12 = vector.broadcast %cst : f32 to vector<2x128x128xf32>
      %c0 = arith.constant 0 : index
      %c0_6 = arith.constant 0 : index
      %c0_7 = arith.constant 0 : index
      %13 = vector.load %arg12[%c0, %c0_6, %c0_7] : memref<2x128x128xf32, #tpu.memory_space<vmem>>, vector<2x128x128xf32>
      tpu.vector_store %arg12[%c0, %c0_6, %c0_7], %12 {strides = array<i32>} : memref<2x128x128xf32, #tpu.memory_space<vmem>>, vector<2x128x128xf32>,
      %cst_8 = arith.constant 0.000000e+00 : f32
      %14 = vector.broadcast %cst_8 : f32 to vector<2x256x128xf32>
      %c0_9 = arith.constant 0 : index
      %c0_10 = arith.constant 0 : index
      %c0_11 = arith.constant 0 : index
      %15 = vector.load %arg13[%c0_9, %c0_10, %c0_11] : memref<2x256x128xf32, #tpu.memory_space<vmem>>, vector<2x256x128xf32>
      tpu.vector_store %arg13[%c0_9, %c0_10, %c0_11], %14 {strides = array<i32>} : memref<2x256x128xf32, #tpu.memory_space<vmem>>, vector<2x256x128xf32>,
      %cst_12 = arith.constant 0.000000e+00 : f32
      %16 = vector.broadcast %cst_12 : f32 to vector<2x128x128xf32>
      %c0_13 = arith.constant 0 : index
      %c0_14 = arith.constant 0 : index
      %c0_15 = arith.constant 0 : index
      %17 = vector.load %arg14[%c0_13, %c0_14, %c0_15] : memref<2x128x128xf32, #tpu.memory_space<vmem>>, vector<2x128x128xf32>
      tpu.vector_store %arg14[%c0_13, %c0_14, %c0_15], %16 {strides = array<i32>} : memref<2x128x128xf32, #tpu.memory_space<vmem>>, vector<2x128x128xf32>,
    } else {
    }
    %c1_i32 = arith.constant 1 : i32
    %3 = arith.cmpi slt, %arg0, %c1_i32 : i32
    %4 = arith.extui %3 : i1 to i32
    %c0_i32_1 = arith.constant 0 : i32
    %5 = arith.cmpi ne, %4, %c0_i32_1 : i32
    scf.if %5 {
      %c0 = arith.constant 0 : index
      %c0_6 = arith.constant 0 : index
      %c0_7 = arith.constant 0 : index
      %12 = vector.load %arg1[%c0, %c0_6, %c0_7] : memref<2x128x128xf32, #tpu.memory_space<vmem>>, vector<2x128x128xf32>
      %c0_8 = arith.constant 0 : index
      %c0_9 = arith.constant 0 : index
      %c0_10 = arith.constant 0 : index
      %13 = vector.load %arg12[%c0_8, %c0_9, %c0_10] : memref<2x128x128xf32, #tpu.memory_space<vmem>>, vector<2x128x128xf32>
      %14 = arith.addf %13, %12 : vector<2x128x128xf32>
      %c0_11 = arith.constant 0 : index
      %c0_12 = arith.constant 0 : index
      %c0_13 = arith.constant 0 : index
      %15 = vector.load %arg12[%c0_11, %c0_12, %c0_13] : memref<2x128x128xf32, #tpu.memory_space<vmem>>, vector<2x128x128xf32>
      tpu.vector_store %arg12[%c0_11, %c0_12, %c0_13], %14 {strides = array<i32>} : memref<2x128x128xf32, #tpu.memory_space<vmem>>, vector<2x128x128xf32>,
      %c0_14 = arith.constant 0 : index
      %c0_15 = arith.constant 0 : index
      %c0_16 = arith.constant 0 : index
      %16 = vector.load %arg2[%c0_14, %c0_15, %c0_16] : memref<2x256x128xf32, #tpu.memory_space<vmem>>, vector<2x256x128xf32>
      %c0_17 = arith.constant 0 : index
      %c0_18 = arith.constant 0 : index
      %c0_19 = arith.constant 0 : index
      %17 = vector.load %arg13[%c0_17, %c0_18, %c0_19] : memref<2x256x128xf32, #tpu.memory_space<vmem>>, vector<2x256x128xf32>
      %18 = arith.addf %17, %16 : vector<2x256x128xf32>
      %c0_20 = arith.constant 0 : index
      %c0_21 = arith.constant 0 : index
      %c0_22 = arith.constant 0 : index
      %19 = vector.load %arg13[%c0_20, %c0_21, %c0_22] : memref<2x256x128xf32, #tpu.memory_space<vmem>>, vector<2x256x128xf32>
      tpu.vector_store %arg13[%c0_20, %c0_21, %c0_22], %18 {strides = array<i32>} : memref<2x256x128xf32, #tpu.memory_space<vmem>>, vector<2x256x128xf32>,
      %c0_23 = arith.constant 0 : index
      %c0_24 = arith.constant 0 : index
      %c0_25 = arith.constant 0 : index
      %20 = vector.load %arg3[%c0_23, %c0_24, %c0_25] : memref<2x128x128xf32, #tpu.memory_space<vmem>>, vector<2x128x128xf32>
      %c0_26 = arith.constant 0 : index
      %c0_27 = arith.constant 0 : index
      %c0_28 = arith.constant 0 : index
      %21 = vector.load %arg14[%c0_26, %c0_27, %c0_28] : memref<2x128x128xf32, #tpu.memory_space<vmem>>, vector<2x128x128xf32>
      %22 = arith.addf %21, %20 : vector<2x128x128xf32>
      %c0_29 = arith.constant 0 : index
      %c0_30 = arith.constant 0 : index
      %c0_31 = arith.constant 0 : index
      %23 = vector.load %arg14[%c0_29, %c0_30, %c0_31] : memref<2x128x128xf32, #tpu.memory_space<vmem>>, vector<2x128x128xf32>
      tpu.vector_store %arg14[%c0_29, %c0_30, %c0_31], %22 {strides = array<i32>} : memref<2x128x128xf32, #tpu.memory_space<vmem>>, vector<2x128x128xf32>,
    } else {
    }
    %c1_i32_2 = arith.constant 1 : i32
    %6 = arith.cmpi eq, %arg0, %c1_i32_2 : i32
    %7 = arith.extui %6 : i1 to i32
    %c0_i32_3 = arith.constant 0 : i32
    %8 = arith.cmpi ne, %7, %c0_i32_3 : i32
    scf.if %8 {
      %12 = tpu.iota {dimensions = array<i32: 2>} : vector<1x1x128xi32>
      %c0 = arith.constant 0 : index
      %c0_6 = arith.constant 0 : index
      %c0_7 = arith.constant 0 : index
      %13 = vector.load %arg1[%c0, %c0_6, %c0_7] : memref<2x128x128xf32, #tpu.memory_space<vmem>>, vector<2x128x128xf32>
      %c0_8 = arith.constant 0 : index
      %c0_9 = arith.constant 0 : index
      %c0_10 = arith.constant 0 : index
      %14 = vector.load %arg12[%c0_8, %c0_9, %c0_10] : memref<2x128x128xf32, #tpu.memory_space<vmem>>, vector<2x128x128xf32>
      %c64_i32 = arith.constant 64 : i32
      %15 = vector.broadcast %c64_i32 : i32 to vector<1x1x128xi32>
      %16 = arith.cmpi slt, %12, %15 : vector<1x1x128xi32>
      %cst = arith.constant 0.000000e+00 : f32
      %17 = vector.shape_cast %16 : vector<1x1x128xi1> to vector<1x1x128xi1>
      %18 = vector.broadcast %17 : vector<1x1x128xi1> to vector<2x128x128xi1>
      %19 = vector.broadcast %cst : f32 to vector<2x128x128xf32>
      %20 = arith.select %18, %13, %19 : vector<2x128x128xi1>, vector<2x128x128xf32>
      %21 = arith.addf %14, %20 : vector<2x128x128xf32>
      %c0_11 = arith.constant 0 : index
      %c0_12 = arith.constant 0 : index
      %c0_13 = arith.constant 0 : index
      %22 = vector.load %arg12[%c0_11, %c0_12, %c0_13] : memref<2x128x128xf32, #tpu.memory_space<vmem>>, vector<2x128x128xf32>
      tpu.vector_store %arg12[%c0_11, %c0_12, %c0_13], %21 {strides = array<i32>} : memref<2x128x128xf32, #tpu.memory_space<vmem>>, vector<2x128x128xf32>,
      %c0_14 = arith.constant 0 : index
      %c0_15 = arith.constant 0 : index
      %c0_16 = arith.constant 0 : index
      %23 = vector.load %arg2[%c0_14, %c0_15, %c0_16] : memref<2x256x128xf32, #tpu.memory_space<vmem>>, vector<2x256x128xf32>
      %c0_17 = arith.constant 0 : index
      %c0_18 = arith.constant 0 : index
      %c0_19 = arith.constant 0 : index
      %24 = vector.load %arg13[%c0_17, %c0_18, %c0_19] : memref<2x256x128xf32, #tpu.memory_space<vmem>>, vector<2x256x128xf32>
      %c64_i32_20 = arith.constant 64 : i32
      %25 = vector.broadcast %c64_i32_20 : i32 to vector<1x1x128xi32>
      %26 = arith.cmpi slt, %12, %25 : vector<1x1x128xi32>
      %cst_21 = arith.constant 0.000000e+00 : f32
      %27 = vector.shape_cast %26 : vector<1x1x128xi1> to vector<1x1x128xi1>
      %28 = vector.broadcast %27 : vector<1x1x128xi1> to vector<2x256x128xi1>
      %29 = vector.broadcast %cst_21 : f32 to vector<2x256x128xf32>
      %30 = arith.select %28, %23, %29 : vector<2x256x128xi1>, vector<2x256x128xf32>
      %31 = arith.addf %24, %30 : vector<2x256x128xf32>
      %c0_22 = arith.constant 0 : index
      %c0_23 = arith.constant 0 : index
      %c0_24 = arith.constant 0 : index
      %32 = vector.load %arg13[%c0_22, %c0_23, %c0_24] : memref<2x256x128xf32, #tpu.memory_space<vmem>>, vector<2x256x128xf32>
      tpu.vector_store %arg13[%c0_22, %c0_23, %c0_24], %31 {strides = array<i32>} : memref<2x256x128xf32, #tpu.memory_space<vmem>>, vector<2x256x128xf32>,
      %c0_25 = arith.constant 0 : index
      %c0_26 = arith.constant 0 : index
      %c0_27 = arith.constant 0 : index
      %33 = vector.load %arg3[%c0_25, %c0_26, %c0_27] : memref<2x128x128xf32, #tpu.memory_space<vmem>>, vector<2x128x128xf32>
      %c0_28 = arith.constant 0 : index
      %c0_29 = arith.constant 0 : index
      %c0_30 = arith.constant 0 : index
      %34 = vector.load %arg14[%c0_28, %c0_29, %c0_30] : memref<2x128x128xf32, #tpu.memory_space<vmem>>, vector<2x128x128xf32>
      %c64_i32_31 = arith.constant 64 : i32
      %35 = vector.broadcast %c64_i32_31 : i32 to vector<1x1x128xi32>
      %36 = arith.cmpi slt, %12, %35 : vector<1x1x128xi32>
      %cst_32 = arith.constant 0.000000e+00 : f32
      %37 = vector.shape_cast %36 : vector<1x1x128xi1> to vector<1x1x128xi1>
      %38 = vector.broadcast %37 : vector<1x1x128xi1> to vector<2x128x128xi1>
      %39 = vector.broadcast %cst_32 : f32 to vector<2x128x128xf32>
      %40 = arith.select %38, %33, %39 : vector<2x128x128xi1>, vector<2x128x128xf32>
      %41 = arith.addf %34, %40 : vector<2x128x128xf32>
      %c0_33 = arith.constant 0 : index
      %c0_34 = arith.constant 0 : index
      %c0_35 = arith.constant 0 : index
      %42 = vector.load %arg14[%c0_33, %c0_34, %c0_35] : memref<2x128x128xf32, #tpu.memory_space<vmem>>, vector<2x128x128xf32>
      tpu.vector_store %arg14[%c0_33, %c0_34, %c0_35], %41 {strides = array<i32>} : memref<2x128x128xf32, #tpu.memory_space<vmem>>, vector<2x128x128xf32>,
    } else {
    }
    %c1_i32_4 = arith.constant 1 : i32
    %9 = arith.cmpi eq, %arg0, %c1_i32_4 : i32
    %10 = arith.extui %9 : i1 to i32
    %c0_i32_5 = arith.constant 0 : i32
    %11 = arith.cmpi ne, %10, %c0_i32_5 : i32
    scf.if %11 {
      tpu.wait_dma2 semaphore(%arg11 : memref<!tpu.dma_semaphore, #tpu.memory_space<semaphore_mem>>) src(%arg4 : memref<512x1024xf32, #tpu.memory_space<any>>) dst(%arg10 : memref<512x1024xf32, #tpu.memory_space<vmem>>)
      %c0 = arith.constant 0 : index
      %c0_6 = arith.constant 0 : index
      %c0_7 = arith.constant 0 : index
      %12 = vector.load %arg12[%c0, %c0_6, %c0_7] : memref<2x128x128xf32, #tpu.memory_space<vmem>>, vector<2x128x128xf32>
      %cst = arith.constant dense<0.000000e+00> : vector<2x128xf32>
      %13 = vector.multi_reduction <add>, %12, %cst [2] : vector<2x128x128xf32> to vector<2x128xf32>
      %cst_8 = arith.constant 0.00520833349 : f32
      %14 = vector.broadcast %cst_8 : f32 to vector<2x128xf32>
      %15 = arith.mulf %13, %14 : vector<2x128xf32>
      %c0_9 = arith.constant 0 : index
      %c0_10 = arith.constant 0 : index
      %c0_11 = arith.constant 0 : index
      %16 = vector.load %arg13[%c0_9, %c0_10, %c0_11] : memref<2x256x128xf32, #tpu.memory_space<vmem>>, vector<2x256x128xf32>
      %cst_12 = arith.constant dense<0.000000e+00> : vector<2x256xf32>
      %17 = vector.multi_reduction <add>, %16, %cst_12 [2] : vector<2x256x128xf32> to vector<2x256xf32>
      %cst_13 = arith.constant 0.00520833349 : f32
      %18 = vector.broadcast %cst_13 : f32 to vector<2x256xf32>
      %19 = arith.mulf %17, %18 : vector<2x256xf32>
      %c0_14 = arith.constant 0 : index
      %c0_15 = arith.constant 0 : index
      %c0_16 = arith.constant 0 : index
      %20 = vector.load %arg14[%c0_14, %c0_15, %c0_16] : memref<2x128x128xf32, #tpu.memory_space<vmem>>, vector<2x128x128xf32>
      %cst_17 = arith.constant dense<0.000000e+00> : vector<2x128xf32>
      %21 = vector.multi_reduction <add>, %20, %cst_17 [2] : vector<2x128x128xf32> to vector<2x128xf32>
      %cst_18 = arith.constant 0.00520833349 : f32
      %22 = vector.broadcast %cst_18 : f32 to vector<2x128xf32>
      %23 = arith.mulf %21, %22 : vector<2x128xf32>
      %c0_19 = arith.constant 0 : index
      %c0_20 = arith.constant 0 : index
      %24 = vector.load %arg5[%c0_19, %c0_20] : memref<1x1024xf32, #tpu.memory_space<vmem>>, vector<1x1024xf32>
      %c0_21 = arith.constant 0 : index
      %c0_22 = arith.constant 0 : index
      %25 = vector.load %arg10[%c0_21, %c0_22] : memref<512x1024xf32, #tpu.memory_space<vmem>>, vector<128x1024xf32>
      %cst_23 = arith.constant dense<0.000000e+00> : vector<2x1024xf32>
      %26 = tpu.matmul %15, %25, %cst_23 {dimension_numbers = #tpu.dot_dimension_numbers<[1], [0], [0], [1], [0, 0, 1, 1], [], []>} : vector<2x128xf32>, vector<128x1024xf32>, vector<2x1024xf32> -> vector<2x1024xf32>
      %27 = vector.broadcast %24 : vector<1x1024xf32> to vector<2x1024xf32>
      %28 = arith.addf %27, %26 : vector<2x1024xf32>
      %c128 = arith.constant 128 : index
      %c0_24 = arith.constant 0 : index
      %29 = vector.load %arg10[%c128, %c0_24] : memref<512x1024xf32, #tpu.memory_space<vmem>>, vector<256x1024xf32>
      %cst_25 = arith.constant dense<0.000000e+00> : vector<2x1024xf32>
      %30 = tpu.matmul %19, %29, %cst_25 {dimension_numbers = #tpu.dot_dimension_numbers<[1], [0], [0], [1], [0, 0, 1, 1], [], []>} : vector<2x256xf32>, vector<256x1024xf32>, vector<2x1024xf32> -> vector<2x1024xf32>
      %31 = arith.addf %28, %30 : vector<2x1024xf32>
      %c384 = arith.constant 384 : index
      %c0_26 = arith.constant 0 : index
      %32 = vector.load %arg10[%c384, %c0_26] : memref<512x1024xf32, #tpu.memory_space<vmem>>, vector<128x1024xf32>
      %cst_27 = arith.constant dense<0.000000e+00> : vector<2x1024xf32>
      %33 = tpu.matmul %23, %32, %cst_27 {dimension_numbers = #tpu.dot_dimension_numbers<[1], [0], [0], [1], [0, 0, 1, 1], [], []>} : vector<2x128xf32>, vector<128x1024xf32>, vector<2x1024xf32> -> vector<2x1024xf32>
      %34 = arith.addf %31, %33 : vector<2x1024xf32>
      %cst_28 = arith.constant 0.000000e+00 : f32
      %35 = vector.broadcast %cst_28 : f32 to vector<2x1024xf32>
      %36 = arith.maximumf %34, %35 : vector<2x1024xf32>
      %c0_29 = arith.constant 0 : index
      %c0_30 = arith.constant 0 : index
      %37 = vector.load %arg6[%c0_29, %c0_30] : memref<1x1024xf32, #tpu.memory_space<vmem>>, vector<1x1024xf32>
      %38 = vector.broadcast %37 : vector<1x1024xf32> to vector<2x1024xf32>
      %39 = arith.mulf %36, %38 : vector<2x1024xf32>
      %cst_31 = arith.constant dense<0.000000e+00> : vector<2xf32>
      %40 = vector.multi_reduction <add>, %39, %cst_31 [1] : vector<2x1024xf32> to vector<2xf32>
      %41 = vector.shape_cast %40 : vector<2xf32> to vector<2x1xf32>
      %c0_32 = arith.constant 0 : index
      %c0_33 = arith.constant 0 : index
      %42 = vector.load %arg7[%c0_32, %c0_33] : memref<1x1xf32, #tpu.memory_space<vmem>>, vector<1x1xf32>
      %43 = vector.broadcast %42 : vector<1x1xf32> to vector<2x1xf32>
      %44 = arith.addf %41, %43 : vector<2x1xf32>
      %cst_34 = arith.constant dense<0xFF800000> : vector<2xf32>
      %45 = vector.multi_reduction <maximumf>, %44, %cst_34 [1] : vector<2x1xf32> to vector<2xf32>
      %46 = vector.shape_cast %45 : vector<2xf32> to vector<2x1xf32>
      %47 = arith.subf %44, %46 : vector<2x1xf32>
      %48 = math.exp %47 : vector<2x1xf32>
      %cst_35 = arith.constant dense<0.000000e+00> : vector<2xf32>
      %49 = vector.multi_reduction <add>, %48, %cst_35 [1] : vector<2x1xf32> to vector<2xf32>
      %50 = vector.shape_cast %49 : vector<2xf32> to vector<2x1xf32>
      %51 = arith.divf %48, %50 : vector<2x1xf32>
      %c0_36 = arith.constant 0 : index
      %c0_37 = arith.constant 0 : index
      %52 = vector.load %arg8[%c0_36, %c0_37] : memref<2x1xf32, #tpu.memory_space<vmem>>, vector<2x1xf32>
      tpu.vector_store %arg8[%c0_36, %c0_37], %51 {strides = array<i32>} : memref<2x1xf32, #tpu.memory_space<vmem>>, vector<2x1xf32>,
      %c0_38 = arith.constant 0 : index
      %c0_39 = arith.constant 0 : index
      %53 = vector.load %arg9[%c0_38, %c0_39] : memref<2x1xf32, #tpu.memory_space<vmem>>, vector<2x1xf32>
      tpu.vector_store %arg9[%c0_38, %c0_39], %44 {strides = array<i32>} : memref<2x1xf32, #tpu.memory_space<vmem>>, vector<2x1xf32>,
    } else {
    }
    return
  }
  func.func @transform_0(%arg0: i32) -> (i32, i32, i32) {
    %c0_i32 = arith.constant 0 : i32
    %c0_i32_0 = arith.constant 0 : i32
    %c0_i32_1 = arith.constant 0 : i32
    return %c0_i32, %c0_i32_0, %arg0 : i32, i32, i32
  }
  func.func @transform_1(%arg0: i32) -> (i32, i32, i32) {
    %c0_i32 = arith.constant 0 : i32
    %c0_i32_0 = arith.constant 0 : i32
    %c0_i32_1 = arith.constant 0 : i32
    return %c0_i32, %c0_i32_0, %arg0 : i32, i32, i32
  }
  func.func @transform_2(%arg0: i32) -> (i32, i32, i32) {
    %c0_i32 = arith.constant 0 : i32
    %c0_i32_0 = arith.constant 0 : i32
    %c0_i32_1 = arith.constant 0 : i32
    return %c0_i32, %c0_i32_0, %arg0 : i32, i32, i32
  }
  func.func @transform_4(%arg0: i32) -> (i32, i32) {
    %c0_i32 = arith.constant 0 : i32
    %c0_i32_0 = arith.constant 0 : i32
    %c0_i32_1 = arith.constant 0 : i32
    return %c0_i32, %c0_i32_0 : i32, i32
  }
  func.func @transform_5(%arg0: i32) -> (i32, i32) {
    %c0_i32 = arith.constant 0 : i32
    %c0_i32_0 = arith.constant 0 : i32
    %c0_i32_1 = arith.constant 0 : i32
    return %c0_i32, %c0_i32_0 : i32, i32
  }
  func.func @transform_6(%arg0: i32) -> (i32, i32) {
    %c0_i32 = arith.constant 0 : i32
    %c0_i32_0 = arith.constant 0 : i32
    %c0_i32_1 = arith.constant 0 : i32
    return %c0_i32, %c0_i32_0 : i32, i32
  }
  func.func @transform_7(%arg0: i32) -> (i32, i32) {
    %c0_i32 = arith.constant 0 : i32
    %c0_i32_0 = arith.constant 0 : i32
    %c0_i32_1 = arith.constant 0 : i32
    return %c0_i32, %c0_i32_0 : i32, i32
  }
  func.func @transform_8(%arg0: i32) -> (i32, i32) {
    %c0_i32 = arith.constant 0 : i32
    %c0_i32_0 = arith.constant 0 : i32
    %c0_i32_1 = arith.constant 0 : i32
    return %c0_i32, %c0_i32_0 : i32, i32
  }
}

</mosaic_0001>

<llo_original>
// kernel: tpu_custom_call.1
$region0: #{tpu_custom_call.1}
  #allocation0 [shape = 'u32[]', space=smem, size = 0x4, offset = 0x4, fixed_abs, tag = 'smem constant byte address 0x4 - core index']
  #allocation1 [shape = 'u32[144,128]{1,0:T(1,128)}', space=vmem, size = 0x12000, scoped, tag = 'internal scratch']
  #allocation2 [shape = 'f32[512,1024]{1,0:T(8,128)}', space=vmem, size = 0x200000, scoped, tag = 'scratch operand']
  #allocation3 [shape = 's32[1]{0}', space=sflag, size = 0x4, scoped, tag = 'scratch operand']
  #allocation4 [shape = 'f32[2,128,128]{2,1,0:T(8,128)}', space=vmem, size = 0x20000, scoped, tag = 'scratch operand']
  #allocation5 [shape = 'f32[2,256,128]{2,1,0:T(8,128)}', space=vmem, size = 0x40000, scoped, tag = 'scratch operand']
  #allocation6 [shape = 'f32[2,128,128]{2,1,0:T(8,128)}', space=vmem, size = 0x20000, scoped, tag = 'scratch operand']
  #allocation7 [shape = 'f32[1,1]{1,0:T(1,128)S(1)}', space=vmem, size = 0x200, scoped, tag = 'scoped memory for tpu_custom_call.1']
  #allocation15 [shape = 's32[]', space=sflag, size = 0x4, offset = 0, fixed_abs, tag = 'sflag constant byte address 0x0 - dummy sync flag']
  #allocation16 [shape = 's32[]', space=sflag, size = 0x4, offset = 0, fixed_abs, tag = 'sflag constant byte address 0x0 - dummy sync flag']
  #allocation17 [shape = 'u32[]', space=smem, size = 0x4, offset = 0x44, fixed_abs, tag = 'smem constant byte address 0x44 - assertion arg 0']
  #allocation18 [shape = 'u32[]', space=smem, size = 0x4, offset = 0x48, fixed_abs, tag = 'smem constant byte address 0x48 - assertion arg 1']
  %s0 = inlined_call_operand.vmem [shape: f32[2,128,192], index: 0, kind: input, shape index: {}]
  %s1 = inlined_call_operand.vmem [shape: f32[2,256,192], index: 1, kind: input, shape index: {}]
  %s2 = inlined_call_operand.vmem [shape: f32[2,128,192], index: 2, kind: input, shape index: {}]
  %s3 = inlined_call_operand.hbm [shape: f32[512,1024], index: 3, kind: input, shape index: {}]
  %s4 = inlined_call_operand.hbm [shape: f32[1,1024], index: 4, kind: input, shape index: {}]
  %s5 = inlined_call_operand.hbm [shape: f32[1,1024], index: 5, kind: input, shape index: {}]
  %s6 = inlined_call_operand.<no memory space> [shape: f32[1,1], index: 6, kind: input, shape index: {}]
  %s7 = inlined_call_operand.vmem [shape: f32[2,1], index: 7, kind: output, shape index: {0}]
  %s8 = inlined_call_operand.vmem [shape: f32[2,1], index: 8, kind: output, shape index: {1}]
  %9 = xla_tuple %s7, %s8
  %s10 = sld [smem:[#allocation0]]
  $region203: #{tpu_custom_call.1} parent=0
    _
  %s12 = ssub.s32 1, %s10
  %s13 = scalar_select 0, %s12, %s10
  %v14 = vstv %s6
  %15 = vst [vmem:[#allocation7] sm:$0x1] %v14
  $region1: #{tpu_custom_call.1} parent=0
    #allocation8 [shape = 'u8[262144]{0}', space=vmem, size = 0x40000, scoped, tag = 'input window, operand 0']
    #allocation9 [shape = 'u8[524288]{0}', space=vmem, size = 0x80000, scoped, tag = 'input window, operand 1']
    #allocation10 [shape = 'u8[262144]{0}', space=vmem, size = 0x40000, scoped, tag = 'input window, operand 2']
    #allocation11 [shape = 'u8[4096]{0}', space=vmem, size = 0x1000, scoped, tag = 'input window, operand 4, single buffered']
    #allocation12 [shape = 's32[2]{0}', space=sflag, size = 0x8, scoped, tag = 'scoped memory for tpu_custom_call.1']
    #allocation13 [shape = 'u8[4096]{0}', space=vmem, size = 0x1000, scoped, tag = 'input window, operand 5, single buffered']
    #allocation14 [shape = 's32[1]{0}', space=sflag, size = 0x4, scoped, tag = 'scoped memory for tpu_custom_call.1']
    %16 = vsyncpa [#allocation12], 0
    %17 = vsyncpa [#allocation14], 0
    loop: start=0, step=1, limit=4
    $region2: #{tpu_custom_call.1} parent=1 // loop_pre_header
      _
    $region3: #{tpu_custom_call.1} parent=1 // loop_header
      %s19 = sphi 0, %s23
      %p20 = scmp.ge.s32.totalorder %s19, 4
      %s29 = sphi 0, %s31
      %s32 = sphi 0, %s29
      %s33 = sphi 0, %s32
      %s49 = sphi 0, %s33
      %s55 = sphi 0, %s57
      %s58 = sphi 0, %s55
      %s59 = sphi 0, %s58
      %s75 = sphi 0, %s59
      %s81 = sphi 0, %s83
      %s84 = sphi 0, %s81
      %s85 = sphi 0, %s84
      %s101 = sphi 0, %s85
      %s105 = sphi 0, %s105
      %s107 = sphi 0, %s105
      %s108 = sphi 0, %s107
      %s122 = sphi 0, %s108
      %s126 = sphi 0, %s126
      %s128 = sphi 0, %s126
      %s129 = sphi 0, %s128
      %s143 = sphi 0, %s129
      %s147 = sphi 0, %s147
      %s149 = sphi 0, %s147
      %s150 = sphi 0, %s149
      %s164 = sphi 0, %s150
      %s168 = sphi 0, %s168
      %s170 = sphi 0, %s168
      %s171 = sphi 0, %s170
      %s185 = sphi 0, %s171
      %s189 = sphi 0, %s189
      %s191 = sphi 0, %s189
      %s192 = sphi 0, %s191
      %s206 = sphi 0, %s192
    $region4: #{tpu_custom_call.1} parent=1 // loop_header_branch
      %22 = sbr.rel (%p20) target = $region8
    $region5: #{tpu_custom_call.1} parent=1 // loop_body
      %s24 = ssub.s32 %s19, 1
      %s25 = ssub.s32 %s19, 2
      %s26 = sadd.s32 %s19, 1
      %s27 = ssub.s32 %s19, %s26
      %p28 = scmp.eq.s32.totalorder %s27, 0
      %s30 = sadd.s32 %s29, 1
      %s31 = scalar_select %p28, %s29, %s30
      %p34 = pneg %p28
      %p35 = scmp.eq.s32.totalorder %s19, 1
      %p36 = por %p34, %p35
      %p37 = scmp.ne.s32.totalorder %s29, %s32
      %p38 = scmp.eq.s32.totalorder %s19, 0
      %p39 = por %p37, %p38
      %p40 = scmp.ne.s32.totalorder %s29, %s32
      %p41 = scmp.eq.s32.totalorder %s24, 1
      %p42 = por %p40, %p41
      %p43 = scmp.ne.s32.totalorder %s32, %s33
      %p44 = scmp.eq.s32.totalorder %s24, 0
      %p45 = por %p43, %p44
      %p46 = scmp.ne.s32.totalorder %s32, %s33
      %p47 = scmp.eq.s32.totalorder %s25, 1
      %p48 = por %p46, %p47
      %p50 = scmp.ne.s32.totalorder %s33, %s49
      %p51 = scmp.eq.s32.totalorder %s25, 0
      %p52 = por %p50, %p51
      %s53 = ssub.s32 %s19, %s26
      %p54 = scmp.eq.s32.totalorder %s53, 0
      %s56 = sadd.s32 %s55, 1
      %s57 = scalar_select %p54, %s55, %s56
      %p60 = pneg %p54
      %p61 = scmp.eq.s32.totalorder %s19, 1
      %p62 = por %p60, %p61
      %p63 = scmp.ne.s32.totalorder %s55, %s58
      %p64 = scmp.eq.s32.totalorder %s19, 0
      %p65 = por %p63, %p64
      %p66 = scmp.ne.s32.totalorder %s55, %s58
      %p67 = scmp.eq.s32.totalorder %s24, 1
      %p68 = por %p66, %p67
      %p69 = scmp.ne.s32.totalorder %s58, %s59
      %p70 = scmp.eq.s32.totalorder %s24, 0
      %p71 = por %p69, %p70
      %p72 = scmp.ne.s32.totalorder %s58, %s59
      %p73 = scmp.eq.s32.totalorder %s25, 1
      %p74 = por %p72, %p73
      %p76 = scmp.ne.s32.totalorder %s59, %s75
      %p77 = scmp.eq.s32.totalorder %s25, 0
      %p78 = por %p76, %p77
      %s79 = ssub.s32 %s19, %s26
      %p80 = scmp.eq.s32.totalorder %s79, 0
      %s82 = sadd.s32 %s81, 1
      %s83 = scalar_select %p80, %s81, %s82
      %p86 = pneg %p80
      %p87 = scmp.eq.s32.totalorder %s19, 1
      %p88 = por %p86, %p87
      %p89 = scmp.ne.s32.totalorder %s81, %s84
      %p90 = scmp.eq.s32.totalorder %s19, 0
      %p91 = por %p89, %p90
      %p92 = scmp.ne.s32.totalorder %s81, %s84
      %p93 = scmp.eq.s32.totalorder %s24, 1
      %p94 = por %p92, %p93
      %p95 = scmp.ne.s32.totalorder %s84, %s85
      %p96 = scmp.eq.s32.totalorder %s24, 0
      %p97 = por %p95, %p96
      %p98 = scmp.ne.s32.totalorder %s84, %s85
      %p99 = scmp.eq.s32.totalorder %s25, 1
      %p100 = por %p98, %p99
      %p102 = scmp.ne.s32.totalorder %s85, %s101
      %p103 = scmp.eq.s32.totalorder %s25, 0
      %p104 = por %p102, %p103
      %s106 = sadd.s32 %s105, 1
      %p109 = scmp.eq.s32.totalorder %s19, 1
      %p110 = scmp.ne.s32.totalorder %s105, %s107
      %p111 = scmp.eq.s32.totalorder %s19, 0
      %p112 = por %p110, %p111
      %p113 = scmp.ne.s32.totalorder %s105, %s107
      %p114 = scmp.eq.s32.totalorder %s24, 1
      %p115 = por %p113, %p114
      %p116 = scmp.ne.s32.totalorder %s107, %s108
      %p117 = scmp.eq.s32.totalorder %s24, 0
      %p118 = por %p116, %p117
      %p119 = scmp.ne.s32.totalorder %s107, %s108
      %p120 = scmp.eq.s32.totalorder %s25, 1
      %p121 = por %p119, %p120
      %p123 = scmp.ne.s32.totalorder %s108, %s122
      %p124 = scmp.eq.s32.totalorder %s25, 0
      %p125 = por %p123, %p124
      %s127 = sadd.s32 %s126, 1
      %p130 = scmp.eq.s32.totalorder %s19, 1
      %p131 = scmp.ne.s32.totalorder %s126, %s128
      %p132 = scmp.eq.s32.totalorder %s19, 0
      %p133 = por %p131, %p132
      %p134 = scmp.ne.s32.totalorder %s126, %s128
      %p135 = scmp.eq.s32.totalorder %s24, 1
      %p136 = por %p134, %p135
      %p137 = scmp.ne.s32.totalorder %s128, %s129
      %p138 = scmp.eq.s32.totalorder %s24, 0
      %p139 = por %p137, %p138
      %p140 = scmp.ne.s32.totalorder %s128, %s129
      %p141 = scmp.eq.s32.totalorder %s25, 1
      %p142 = por %p140, %p141
      %p144 = scmp.ne.s32.totalorder %s129, %s143
      %p145 = scmp.eq.s32.totalorder %s25, 0
      %p146 = por %p144, %p145
      %s148 = sadd.s32 %s147, 1
      %p151 = scmp.eq.s32.totalorder %s19, 1
      %p152 = scmp.ne.s32.totalorder %s147, %s149
      %p153 = scmp.eq.s32.totalorder %s19, 0
      %p154 = por %p152, %p153
      %p155 = scmp.ne.s32.totalorder %s147, %s149
      %p156 = scmp.eq.s32.totalorder %s24, 1
      %p157 = por %p155, %p156
      %p158 = scmp.ne.s32.totalorder %s149, %s150
      %p159 = scmp.eq.s32.totalorder %s24, 0
      %p160 = por %p158, %p159
      %p161 = scmp.ne.s32.totalorder %s149, %s150
      %p162 = scmp.eq.s32.totalorder %s25, 1
      %p163 = por %p161, %p162
      %p165 = scmp.ne.s32.totalorder %s150, %s164
      %p166 = scmp.eq.s32.totalorder %s25, 0
      %p167 = por %p165, %p166
      %s169 = sadd.s32 %s168, 1
      %p172 = scmp.eq.s32.totalorder %s19, 1
      %p173 = scmp.ne.s32.totalorder %s168, %s170
      %p174 = scmp.eq.s32.totalorder %s19, 0
      %p175 = por %p173, %p174
      %p176 = scmp.ne.s32.totalorder %s168, %s170
      %p177 = scmp.eq.s32.totalorder %s24, 1
      %p178 = por %p176, %p177
      %p179 = scmp.ne.s32.totalorder %s170, %s171
      %p180 = scmp.eq.s32.totalorder %s24, 0
      %p181 = por %p179, %p180
      %p182 = scmp.ne.s32.totalorder %s170, %s171
      %p183 = scmp.eq.s32.totalorder %s25, 1
      %p184 = por %p182, %p183
      %p186 = scmp.ne.s32.totalorder %s171, %s185
      %p187 = scmp.eq.s32.totalorder %s25, 0
      %p188 = por %p186, %p187
      %s190 = sadd.s32 %s189, 1
      %p193 = scmp.eq.s32.totalorder %s19, 1
      %p194 = scmp.ne.s32.totalorder %s189, %s191
      %p195 = scmp.eq.s32.totalorder %s19, 0
      %p196 = por %p194, %p195
      %p197 = scmp.ne.s32.totalorder %s189, %s191
      %p198 = scmp.eq.s32.totalorder %s24, 1
      %p199 = por %p197, %p198
      %p200 = scmp.ne.s32.totalorder %s191, %s192
      %p201 = scmp.eq.s32.totalorder %s24, 0
      %p202 = por %p200, %p201
      %p203 = scmp.ne.s32.totalorder %s191, %s192
      %p204 = scmp.eq.s32.totalorder %s25, 1
      %p205 = por %p203, %p204
      %p207 = scmp.ne.s32.totalorder %s192, %s206
      %p208 = scmp.eq.s32.totalorder %s25, 0
      %p209 = por %p207, %p208
      %p210 = scmp.le.s32.totalorder 1, %s19
      %p211 = scmp.lt.s32.totalorder %s19, 3
      %p212 = pnand %p210, %p211
      %p213 = pneg %p212
      // Predicated region
      $region9: #{tpu_custom_call.1} parent=5 // pred_check
        _
      $region10: #{tpu_custom_call.1} parent=5 // pred_check_branch
        %215 = sbr.rel (%p212) target = $region12
      $region11: #{tpu_custom_call.1} parent=5 // pred_region
        %s216 = ssub.s32 %s19, 1
        // Predicated region
        $region13: #{tpu_custom_call.1} parent=11 // pred_check
          %p217 = pneg %p118
        $region14: #{tpu_custom_call.1} parent=11 // pred_check_branch
          %219 = sbr.rel (%p217) target = $region16
        $region15: #{tpu_custom_call.1} parent=11 // pred_region
          %s221 = ssub.s32 128, 128
          %222 = vsyncadd [#allocation12], %s221
          %s224 = sshll.u32 [#allocation11], 4
          %s225 = int_to_ptr.vmem [resolvable:$true] %s224
          %227 = dma.hbm_to_vmem [thread:$0]  %s4, 128, %s225, [#allocation12]
        $region16: #{tpu_custom_call.1} parent=11 // pred_fallthru
          _
        // Predicated region
        $region17: #{tpu_custom_call.1} parent=11 // pred_check
          %p228 = pneg %p139
        $region18: #{tpu_custom_call.1} parent=11 // pred_check_branch
          %230 = sbr.rel (%p228) target = $region20
        $region19: #{tpu_custom_call.1} parent=11 // pred_region
          %s232 = ssub.s32 128, 128
          %233 = vsyncadd [#allocation14], %s232
          %s235 = sshll.u32 [#allocation13], 4
          %s236 = int_to_ptr.vmem [resolvable:$true] %s235
          %238 = dma.hbm_to_vmem [thread:$0]  %s5, 128, %s236, [#allocation14]
        $region20: #{tpu_custom_call.1} parent=11 // pred_fallthru
          _
        // Predicated region
        $region21: #{tpu_custom_call.1} parent=11 // pred_check
          %p239 = pneg %p160
        $region22: #{tpu_custom_call.1} parent=11 // pred_check_branch
          %241 = sbr.rel (%p239) target = $region24
        $region23: #{tpu_custom_call.1} parent=11 // pred_region
          _
        $region24: #{tpu_custom_call.1} parent=11 // pred_fallthru
          _
      $region12: #{tpu_custom_call.1} parent=5 // pred_fallthru
        _
      %p242 = scmp.lt.s32.totalorder %s19, 2
      // Predicated region
      $region25: #{tpu_custom_call.1} parent=5 // pred_check
        %p243 = pneg %p242
      $region26: #{tpu_custom_call.1} parent=5 // pred_check_branch
        %245 = sbr.rel (%p243) target = $region28
      $region27: #{tpu_custom_call.1} parent=5 // pred_region
        // Predicated region
        $region29: #{tpu_custom_call.1} parent=27 // pred_check
          %p246 = pneg %p39
        $region30: #{tpu_custom_call.1} parent=27 // pred_check_branch
          %248 = sbr.rel (%p246) target = $region32
        $region31: #{tpu_custom_call.1} parent=27 // pred_region
          %s249 = sand.u32 %s29, 1
          %s250 = sand.u32 %s29, 1
          %s251 = smul.addr %s250, 256
          %s252 = scalar_lea.vmem [#allocation8], %s251
          %s253 = smul.addr %s19, 8
          %s254 = scalar_lea.vmem %s0, %s253
          // Predicated region
          $region33: #{tpu_custom_call.1} parent=31 // pred_check
            _
          $region34: #{tpu_custom_call.1} parent=31 // pred_check_branch
            %256 = sbr.rel (0) target = $region36
          $region35: #{tpu_custom_call.1} parent=31 // pred_region
            // Predicated region
            $region37: #{tpu_custom_call.1} parent=35 // pred_check
              _
            $region38: #{tpu_custom_call.1} parent=35 // pred_check_branch
              %258 = sbr.rel (0) target = $region40
            $region39: #{tpu_custom_call.1} parent=35 // pred_region
              // Predicated region
              $region52: #{tpu_custom_call.1} parent=39 // pred_check
                _
              $region53: #{tpu_custom_call.1} parent=39 // pred_check_branch
                %335 = sbr.rel (0) target = $region55
              $region54: #{tpu_custom_call.1} parent=39 // pred_region
                loop: start=0, step=1, limit=1
                $region56: #{tpu_custom_call.1} parent=54 // loop_pre_header
                  _
                $region57: #{tpu_custom_call.1} parent=54 // loop_header
                  %s337 = sphi 0, %s341
                  %p338 = scmp.ge.s32.totalorder %s337, 1
                  %s342 = sphi %s254, %s254
                  %s343 = sphi %s252, %s252
                $region58: #{tpu_custom_call.1} parent=54 // loop_header_branch
                  %340 = sbr.rel (%p338) target = $region62
                $region59: #{tpu_custom_call.1} parent=54 // loop_body
                  %v344 = vld [vmem:[%s342] sm:$0xff]
                  %345 = vst [vmem:[%s343] sm:$0xff] %v344
                  %v346 = vld [vmem:[%s342 + $0x10] sm:$0xff]
                  %347 = vst [vmem:[%s343 + $0x8] sm:$0xff] %v346
                  %v348 = vld [vmem:[%s342 + $0x20] sm:$0xff]
                  %349 = vst [vmem:[%s343 + $0x10] sm:$0xff] %v348
                  %v350 = vld [vmem:[%s342 + $0x30] sm:$0xff]
                  %351 = vst [vmem:[%s343 + $0x18] sm:$0xff] %v350
                  %v352 = vld [vmem:[%s342 + $0x40] sm:$0xff]
                  %353 = vst [vmem:[%s343 + $0x20] sm:$0xff] %v352
                  %v354 = vld [vmem:[%s342 + $0x50] sm:$0xff]
                  %355 = vst [vmem:[%s343 + $0x28] sm:$0xff] %v354
                  %v356 = vld [vmem:[%s342 + $0x60] sm:$0xff]
                  %357 = vst [vmem:[%s343 + $0x30] sm:$0xff] %v356
                  %v358 = vld [vmem:[%s342 + $0x70] sm:$0xff]
                  %359 = vst [vmem:[%s343 + $0x38] sm:$0xff] %v358
                  %v360 = vld [vmem:[%s342 + $0x80] sm:$0xff]
                  %361 = vst [vmem:[%s343 + $0x40] sm:$0xff] %v360
                  %v362 = vld [vmem:[%s342 + $0x90] sm:$0xff]
                  %363 = vst [vmem:[%s343 + $0x48] sm:$0xff] %v362
                  %v364 = vld [vmem:[%s342 + $0xa0] sm:$0xff]
                  %365 = vst [vmem:[%s343 + $0x50] sm:$0xff] %v364
                  %v366 = vld [vmem:[%s342 + $0xb0] sm:$0xff]
                  %367 = vst [vmem:[%s343 + $0x58] sm:$0xff] %v366
                  %v368 = vld [vmem:[%s342 + $0xc0] sm:$0xff]
                  %369 = vst [vmem:[%s343 + $0x60] sm:$0xff] %v368
                  %v370 = vld [vmem:[%s342 + $0xd0] sm:$0xff]
                  %371 = vst [vmem:[%s343 + $0x68] sm:$0xff] %v370
                  %v372 = vld [vmem:[%s342 + $0xe0] sm:$0xff]
                  %373 = vst [vmem:[%s343 + $0x70] sm:$0xff] %v372
                  %v374 = vld [vmem:[%s342 + $0xf0] sm:$0xff]
                  %375 = vst [vmem:[%s343 + $0x78] sm:$0xff] %v374
                  %v376 = vld [vmem:[%s342 + $0x100] sm:$0xff]
                  %377 = vst [vmem:[%s343 + $0x80] sm:$0xff] %v376
                  %v378 = vld [vmem:[%s342 + $0x110] sm:$0xff]
                  %379 = vst [vmem:[%s343 + $0x88] sm:$0xff] %v378
                  %v380 = vld [vmem:[%s342 + $0x120] sm:$0xff]
                  %381 = vst [vmem:[%s343 + $0x90] sm:$0xff] %v380
                  %v382 = vld [vmem:[%s342 + $0x130] sm:$0xff]
                  %383 = vst [vmem:[%s343 + $0x98] sm:$0xff] %v382
                  %v384 = vld [vmem:[%s342 + $0x140] sm:$0xff]
                  %385 = vst [vmem:[%s343 + $0xa0] sm:$0xff] %v384
                  %v386 = vld [vmem:[%s342 + $0x150] sm:$0xff]
                  %387 = vst [vmem:[%s343 + $0xa8] sm:$0xff] %v386
                  %v388 = vld [vmem:[%s342 + $0x160] sm:$0xff]
                  %389 = vst [vmem:[%s343 + $0xb0] sm:$0xff] %v388
                  %v390 = vld [vmem:[%s342 + $0x170] sm:$0xff]
                  %391 = vst [vmem:[%s343 + $0xb8] sm:$0xff] %v390
                  %v392 = vld [vmem:[%s342 + $0x180] sm:$0xff]
                  %393 = vst [vmem:[%s343 + $0xc0] sm:$0xff] %v392
                  %v394 = vld [vmem:[%s342 + $0x190] sm:$0xff]
                  %395 = vst [vmem:[%s343 + $0xc8] sm:$0xff] %v394
                  %v396 = vld [vmem:[%s342 + $0x1a0] sm:$0xff]
                  %397 = vst [vmem:[%s343 + $0xd0] sm:$0xff] %v396
                  %v398 = vld [vmem:[%s342 + $0x1b0] sm:$0xff]
                  %399 = vst [vmem:[%s343 + $0xd8] sm:$0xff] %v398
                  %v400 = vld [vmem:[%s342 + $0x1c0] sm:$0xff]
                  %401 = vst [vmem:[%s343 + $0xe0] sm:$0xff] %v400
                  %v402 = vld [vmem:[%s342 + $0x1d0] sm:$0xff]
                  %403 = vst [vmem:[%s343 + $0xe8] sm:$0xff] %v402
                  %v404 = vld [vmem:[%s342 + $0x1e0] sm:$0xff]
                  %405 = vst [vmem:[%s343 + $0xf0] sm:$0xff] %v404
                  %v406 = vld [vmem:[%s342 + $0x1f0] sm:$0xff]
                  %407 = vst [vmem:[%s343 + $0xf8] sm:$0xff] %v406
                $region60: #{tpu_custom_call.1} parent=54 // loop_footer
                  %s341 = sadd.s32 1, %s337
                $region61: #{tpu_custom_call.1} parent=54 // loop_footer_branch
                  %336 = sbr.rel target = $region57
                $region62: #{tpu_custom_call.1} parent=54 // loop_exit
                  _
              $region55: #{tpu_custom_call.1} parent=39 // pred_fallthru
                _
              // Predicated region
              $region63: #{tpu_custom_call.1} parent=39 // pred_check
                _
              $region64: #{tpu_custom_call.1} parent=39 // pred_check_branch
                %409 = sbr.rel target = $region66
              $region65: #{tpu_custom_call.1} parent=39 // pred_region
                _
              $region66: #{tpu_custom_call.1} parent=39 // pred_fallthru
                _
            $region40: #{tpu_custom_call.1} parent=35 // pred_fallthru
              _
            // Predicated region
            $region41: #{tpu_custom_call.1} parent=35 // pred_check
              _
            $region42: #{tpu_custom_call.1} parent=35 // pred_check_branch
              %260 = sbr.rel target = $region44
            $region43: #{tpu_custom_call.1} parent=35 // pred_region
              loop: start=0, step=1, limit=1
              $region45: #{tpu_custom_call.1} parent=43 // loop_pre_header
                _
              $region46: #{tpu_custom_call.1} parent=43 // loop_header
                %s263 = sphi 0, %s267
                %p264 = scmp.ge.s32.totalorder %s263, 1
                %s268 = sphi %s254, %s254
                %s269 = sphi %s252, %s252
              $region47: #{tpu_custom_call.1} parent=43 // loop_header_branch
                %266 = sbr.rel (%p264) target = $region51
              $region48: #{tpu_custom_call.1} parent=43 // loop_body
                %v270 = vld [vmem:[%s268] sm:$0xff]
                %271 = vst [vmem:[%s269] sm:$0xff] %v270
                %v272 = vld [vmem:[%s268 + $0x10] sm:$0xff]
                %273 = vst [vmem:[%s269 + $0x8] sm:$0xff] %v272
                %v274 = vld [vmem:[%s268 + $0x20] sm:$0xff]
                %275 = vst [vmem:[%s269 + $0x10] sm:$0xff] %v274
                %v276 = vld [vmem:[%s268 + $0x30] sm:$0xff]
                %277 = vst [vmem:[%s269 + $0x18] sm:$0xff] %v276
                %v278 = vld [vmem:[%s268 + $0x40] sm:$0xff]
                %279 = vst [vmem:[%s269 + $0x20] sm:$0xff] %v278
                %v280 = vld [vmem:[%s268 + $0x50] sm:$0xff]
                %281 = vst [vmem:[%s269 + $0x28] sm:$0xff] %v280
                %v282 = vld [vmem:[%s268 + $0x60] sm:$0xff]
                %283 = vst [vmem:[%s269 + $0x30] sm:$0xff] %v282
                %v284 = vld [vmem:[%s268 + $0x70] sm:$0xff]
                %285 = vst [vmem:[%s269 + $0x38] sm:$0xff] %v284
                %v286 = vld [vmem:[%s268 + $0x80] sm:$0xff]
                %287 = vst [vmem:[%s269 + $0x40] sm:$0xff] %v286
                %v288 = vld [vmem:[%s268 + $0x90] sm:$0xff]
                %289 = vst [vmem:[%s269 + $0x48] sm:$0xff] %v288
                %v290 = vld [vmem:[%s268 + $0xa0] sm:$0xff]
                %291 = vst [vmem:[%s269 + $0x50] sm:$0xff] %v290
                %v292 = vld [vmem:[%s268 + $0xb0] sm:$0xff]
                %293 = vst [vmem:[%s269 + $0x58] sm:$0xff] %v292
                %v294 = vld [vmem:[%s268 + $0xc0] sm:$0xff]
                %295 = vst [vmem:[%s269 + $0x60] sm:$0xff] %v294
                %v296 = vld [vmem:[%s268 + $0xd0] sm:$0xff]
                %297 = vst [vmem:[%s269 + $0x68] sm:$0xff] %v296
                %v298 = vld [vmem:[%s268 + $0xe0] sm:$0xff]
                %299 = vst [vmem:[%s269 + $0x70] sm:$0xff] %v298
                %v300 = vld [vmem:[%s268 + $0xf0] sm:$0xff]
                %301 = vst [vmem:[%s269 + $0x78] sm:$0xff] %v300
                %v302 = vld [vmem:[%s268 + $0x100] sm:$0xff]
                %303 = vst [vmem:[%s269 + $0x80] sm:$0xff] %v302
                %v304 = vld [vmem:[%s268 + $0x110] sm:$0xff]
                %305 = vst [vmem:[%s269 + $0x88] sm:$0xff] %v304
                %v306 = vld [vmem:[%s268 + $0x120] sm:$0xff]
                %307 = vst [vmem:[%s269 + $0x90] sm:$0xff] %v306
                %v308 = vld [vmem:[%s268 + $0x130] sm:$0xff]
                %309 = vst [vmem:[%s269 + $0x98] sm:$0xff] %v308
                %v310 = vld [vmem:[%s268 + $0x140] sm:$0xff]
                %311 = vst [vmem:[%s269 + $0xa0] sm:$0xff] %v310
                %v312 = vld [vmem:[%s268 + $0x150] sm:$0xff]
                %313 = vst [vmem:[%s269 + $0xa8] sm:$0xff] %v312
                %v314 = vld [vmem:[%s268 + $0x160] sm:$0xff]
                %315 = vst [vmem:[%s269 + $0xb0] sm:$0xff] %v314
                %v316 = vld [vmem:[%s268 + $0x170] sm:$0xff]
                %317 = vst [vmem:[%s269 + $0xb8] sm:$0xff] %v316
                %v318 = vld [vmem:[%s268 + $0x180] sm:$0xff]
                %319 = vst [vmem:[%s269 + $0xc0] sm:$0xff] %v318
                %v320 = vld [vmem:[%s268 + $0x190] sm:$0xff]
                %321 = vst [vmem:[%s269 + $0xc8] sm:$0xff] %v320
                %v322 = vld [vmem:[%s268 + $0x1a0] sm:$0xff]
                %323 = vst [vmem:[%s269 + $0xd0] sm:$0xff] %v322
                %v324 = vld [vmem:[%s268 + $0x1b0] sm:$0xff]
                %325 = vst [vmem:[%s269 + $0xd8] sm:$0xff] %v324
                %v326 = vld [vmem:[%s268 + $0x1c0] sm:$0xff]
                %327 = vst [vmem:[%s269 + $0xe0] sm:$0xff] %v326
                %v328 = vld [vmem:[%s268 + $0x1d0] sm:$0xff]
                %329 = vst [vmem:[%s269 + $0xe8] sm:$0xff] %v328
                %v330 = vld [vmem:[%s268 + $0x1e0] sm:$0xff]
                %331 = vst [vmem:[%s269 + $0xf0] sm:$0xff] %v330
                %v332 = vld [vmem:[%s268 + $0x1f0] sm:$0xff]
                %333 = vst [vmem:[%s269 + $0xf8] sm:$0xff] %v332
              $region49: #{tpu_custom_call.1} parent=43 // loop_footer
                %s267 = sadd.s32 1, %s263
              $region50: #{tpu_custom_call.1} parent=43 // loop_footer_branch
                %262 = sbr.rel target = $region46
              $region51: #{tpu_custom_call.1} parent=43 // loop_exit
                _
            $region44: #{tpu_custom_call.1} parent=35 // pred_fallthru
              _
          $region36: #{tpu_custom_call.1} parent=31 // pred_fallthru
            _
          %410 = vnop
        $region32: #{tpu_custom_call.1} parent=27 // pred_fallthru
          _
        // Predicated region
        $region67: #{tpu_custom_call.1} parent=27 // pred_check
          %p411 = pneg %p65
        $region68: #{tpu_custom_call.1} parent=27 // pred_check_branch
          %413 = sbr.rel (%p411) target = $region70
        $region69: #{tpu_custom_call.1} parent=27 // pred_region
          %s414 = sand.u32 %s55, 1
          %s415 = sand.u32 %s55, 1
          %s416 = smul.addr %s415, 512
          %s417 = scalar_lea.vmem [#allocation9], %s416
          %s418 = smul.addr %s19, 8
          %s419 = scalar_lea.vmem %s1, %s418
          // Predicated region
          $region71: #{tpu_custom_call.1} parent=69 // pred_check
            _
          $region72: #{tpu_custom_call.1} parent=69 // pred_check_branch
            %421 = sbr.rel (0) target = $region74
          $region73: #{tpu_custom_call.1} parent=69 // pred_region
            // Predicated region
            $region75: #{tpu_custom_call.1} parent=73 // pred_check
              _
            $region76: #{tpu_custom_call.1} parent=73 // pred_check_branch
              %423 = sbr.rel (0) target = $region78
            $region77: #{tpu_custom_call.1} parent=73 // pred_region
              // Predicated region
              $region90: #{tpu_custom_call.1} parent=77 // pred_check
                _
              $region91: #{tpu_custom_call.1} parent=77 // pred_check_branch
                %564 = sbr.rel (0) target = $region93
              $region92: #{tpu_custom_call.1} parent=77 // pred_region
                loop: start=0, step=1, limit=1
                $region94: #{tpu_custom_call.1} parent=92 // loop_pre_header
                  _
                $region95: #{tpu_custom_call.1} parent=92 // loop_header
                  %s566 = sphi 0, %s570
                  %p567 = scmp.ge.s32.totalorder %s566, 1
                  %s571 = sphi %s419, %s419
                  %s572 = sphi %s417, %s417
                $region96: #{tpu_custom_call.1} parent=92 // loop_header_branch
                  %569 = sbr.rel (%p567) target = $region100
                $region97: #{tpu_custom_call.1} parent=92 // loop_body
                  %v573 = vld [vmem:[%s571] sm:$0xff]
                  %574 = vst [vmem:[%s572] sm:$0xff] %v573
                  %v575 = vld [vmem:[%s571 + $0x10] sm:$0xff]
                  %576 = vst [vmem:[%s572 + $0x8] sm:$0xff] %v575
                  %v577 = vld [vmem:[%s571 + $0x20] sm:$0xff]
                  %578 = vst [vmem:[%s572 + $0x10] sm:$0xff] %v577
                  %v579 = vld [vmem:[%s571 + $0x30] sm:$0xff]
                  %580 = vst [vmem:[%s572 + $0x18] sm:$0xff] %v579
                  %v581 = vld [vmem:[%s571 + $0x40] sm:$0xff]
                  %582 = vst [vmem:[%s572 + $0x20] sm:$0xff] %v581
                  %v583 = vld [vmem:[%s571 + $0x50] sm:$0xff]
                  %584 = vst [vmem:[%s572 + $0x28] sm:$0xff] %v583
                  %v585 = vld [vmem:[%s571 + $0x60] sm:$0xff]
                  %586 = vst [vmem:[%s572 + $0x30] sm:$0xff] %v585
                  %v587 = vld [vmem:[%s571 + $0x70] sm:$0xff]
                  %588 = vst [vmem:[%s572 + $0x38] sm:$0xff] %v587
                  %v589 = vld [vmem:[%s571 + $0x80] sm:$0xff]
                  %590 = vst [vmem:[%s572 + $0x40] sm:$0xff] %v589
                  %v591 = vld [vmem:[%s571 + $0x90] sm:$0xff]
                  %592 = vst [vmem:[%s572 + $0x48] sm:$0xff] %v591
                  %v593 = vld [vmem:[%s571 + $0xa0] sm:$0xff]
                  %594 = vst [vmem:[%s572 + $0x50] sm:$0xff] %v593
                  %v595 = vld [vmem:[%s571 + $0xb0] sm:$0xff]
                  %596 = vst [vmem:[%s572 + $0x58] sm:$0xff] %v595
                  %v597 = vld [vmem:[%s571 + $0xc0] sm:$0xff]
                  %598 = vst [vmem:[%s572 + $0x60] sm:$0xff] %v597
                  %v599 = vld [vmem:[%s571 + $0xd0] sm:$0xff]
                  %600 = vst [vmem:[%s572 + $0x68] sm:$0xff] %v599
                  %v601 = vld [vmem:[%s571 + $0xe0] sm:$0xff]
                  %602 = vst [vmem:[%s572 + $0x70] sm:$0xff] %v601
                  %v603 = vld [vmem:[%s571 + $0xf0] sm:$0xff]
                  %604 = vst [vmem:[%s572 + $0x78] sm:$0xff] %v603
                  %v605 = vld [vmem:[%s571 + $0x100] sm:$0xff]
                  %606 = vst [vmem:[%s572 + $0x80] sm:$0xff] %v605
                  %v607 = vld [vmem:[%s571 + $0x110] sm:$0xff]
                  %608 = vst [vmem:[%s572 + $0x88] sm:$0xff] %v607
                  %v609 = vld [vmem:[%s571 + $0x120] sm:$0xff]
                  %610 = vst [vmem:[%s572 + $0x90] sm:$0xff] %v609
                  %v611 = vld [vmem:[%s571 + $0x130] sm:$0xff]
                  %612 = vst [vmem:[%s572 + $0x98] sm:$0xff] %v611
                  %v613 = vld [vmem:[%s571 + $0x140] sm:$0xff]
                  %614 = vst [vmem:[%s572 + $0xa0] sm:$0xff] %v613
                  %v615 = vld [vmem:[%s571 + $0x150] sm:$0xff]
                  %616 = vst [vmem:[%s572 + $0xa8] sm:$0xff] %v615
                  %v617 = vld [vmem:[%s571 + $0x160] sm:$0xff]
                  %618 = vst [vmem:[%s572 + $0xb0] sm:$0xff] %v617
                  %v619 = vld [vmem:[%s571 + $0x170] sm:$0xff]
                  %620 = vst [vmem:[%s572 + $0xb8] sm:$0xff] %v619
                  %v621 = vld [vmem:[%s571 + $0x180] sm:$0xff]
                  %622 = vst [vmem:[%s572 + $0xc0] sm:$0xff] %v621
                  %v623 = vld [vmem:[%s571 + $0x190] sm:$0xff]
                  %624 = vst [vmem:[%s572 + $0xc8] sm:$0xff] %v623
                  %v625 = vld [vmem:[%s571 + $0x1a0] sm:$0xff]
                  %626 = vst [vmem:[%s572 + $0xd0] sm:$0xff] %v625
                  %v627 = vld [vmem:[%s571 + $0x1b0] sm:$0xff]
                  %628 = vst [vmem:[%s572 + $0xd8] sm:$0xff] %v627
                  %v629 = vld [vmem:[%s571 + $0x1c0] sm:$0xff]
                  %630 = vst [vmem:[%s572 + $0xe0] sm:$0xff] %v629
                  %v631 = vld [vmem:[%s571 + $0x1d0] sm:$0xff]
                  %632 = vst [vmem:[%s572 + $0xe8] sm:$0xff] %v631
                  %v633 = vld [vmem:[%s571 + $0x1e0] sm:$0xff]
                  %634 = vst [vmem:[%s572 + $0xf0] sm:$0xff] %v633
                  %v635 = vld [vmem:[%s571 + $0x1f0] sm:$0xff]
                  %636 = vst [vmem:[%s572 + $0xf8] sm:$0xff] %v635
                  %v637 = vld [vmem:[%s571 + $0x200] sm:$0xff]
                  %638 = vst [vmem:[%s572 + $0x100] sm:$0xff] %v637
                  %v639 = vld [vmem:[%s571 + $0x210] sm:$0xff]
                  %640 = vst [vmem:[%s572 + $0x108] sm:$0xff] %v639
                  %v641 = vld [vmem:[%s571 + $0x220] sm:$0xff]
                  %642 = vst [vmem:[%s572 + $0x110] sm:$0xff] %v641
                  %v643 = vld [vmem:[%s571 + $0x230] sm:$0xff]
                  %644 = vst [vmem:[%s572 + $0x118] sm:$0xff] %v643
                  %v645 = vld [vmem:[%s571 + $0x240] sm:$0xff]
                  %646 = vst [vmem:[%s572 + $0x120] sm:$0xff] %v645
                  %v647 = vld [vmem:[%s571 + $0x250] sm:$0xff]
                  %648 = vst [vmem:[%s572 + $0x128] sm:$0xff] %v647
                  %v649 = vld [vmem:[%s571 + $0x260] sm:$0xff]
                  %650 = vst [vmem:[%s572 + $0x130] sm:$0xff] %v649
                  %v651 = vld [vmem:[%s571 + $0x270] sm:$0xff]
                  %652 = vst [vmem:[%s572 + $0x138] sm:$0xff] %v651
                  %v653 = vld [vmem:[%s571 + $0x280] sm:$0xff]
                  %654 = vst [vmem:[%s572 + $0x140] sm:$0xff] %v653
                  %v655 = vld [vmem:[%s571 + $0x290] sm:$0xff]
                  %656 = vst [vmem:[%s572 + $0x148] sm:$0xff] %v655
                  %v657 = vld [vmem:[%s571 + $0x2a0] sm:$0xff]
                  %658 = vst [vmem:[%s572 + $0x150] sm:$0xff] %v657
                  %v659 = vld [vmem:[%s571 + $0x2b0] sm:$0xff]
                  %660 = vst [vmem:[%s572 + $0x158] sm:$0xff] %v659
                  %v661 = vld [vmem:[%s571 + $0x2c0] sm:$0xff]
                  %662 = vst [vmem:[%s572 + $0x160] sm:$0xff] %v661
                  %v663 = vld [vmem:[%s571 + $0x2d0] sm:$0xff]
                  %664 = vst [vmem:[%s572 + $0x168] sm:$0xff] %v663
                  %v665 = vld [vmem:[%s571 + $0x2e0] sm:$0xff]
                  %666 = vst [vmem:[%s572 + $0x170] sm:$0xff] %v665
                  %v667 = vld [vmem:[%s571 + $0x2f0] sm:$0xff]
                  %668 = vst [vmem:[%s572 + $0x178] sm:$0xff] %v667
                  %v669 = vld [vmem:[%s571 + $0x300] sm:$0xff]
                  %670 = vst [vmem:[%s572 + $0x180] sm:$0xff] %v669
                  %v671 = vld [vmem:[%s571 + $0x310] sm:$0xff]
                  %672 = vst [vmem:[%s572 + $0x188] sm:$0xff] %v671
                  %v673 = vld [vmem:[%s571 + $0x320] sm:$0xff]
                  %674 = vst [vmem:[%s572 + $0x190] sm:$0xff] %v673
                  %v675 = vld [vmem:[%s571 + $0x330] sm:$0xff]
                  %676 = vst [vmem:[%s572 + $0x198] sm:$0xff] %v675
                  %v677 = vld [vmem:[%s571 + $0x340] sm:$0xff]
                  %678 = vst [vmem:[%s572 + $0x1a0] sm:$0xff] %v677
                  %v679 = vld [vmem:[%s571 + $0x350] sm:$0xff]
                  %680 = vst [vmem:[%s572 + $0x1a8] sm:$0xff] %v679
                  %v681 = vld [vmem:[%s571 + $0x360] sm:$0xff]
                  %682 = vst [vmem:[%s572 + $0x1b0] sm:$0xff] %v681
                  %v683 = vld [vmem:[%s571 + $0x370] sm:$0xff]
                  %684 = vst [vmem:[%s572 + $0x1b8] sm:$0xff] %v683
                  %v685 = vld [vmem:[%s571 + $0x380] sm:$0xff]
                  %686 = vst [vmem:[%s572 + $0x1c0] sm:$0xff] %v685
                  %v687 = vld [vmem:[%s571 + $0x390] sm:$0xff]
                  %688 = vst [vmem:[%s572 + $0x1c8] sm:$0xff] %v687
                  %v689 = vld [vmem:[%s571 + $0x3a0] sm:$0xff]
                  %690 = vst [vmem:[%s572 + $0x1d0] sm:$0xff] %v689
                  %v691 = vld [vmem:[%s571 + $0x3b0] sm:$0xff]
                  %692 = vst [vmem:[%s572 + $0x1d8] sm:$0xff] %v691
                  %v693 = vld [vmem:[%s571 + $0x3c0] sm:$0xff]
                  %694 = vst [vmem:[%s572 + $0x1e0] sm:$0xff] %v693
                  %v695 = vld [vmem:[%s571 + $0x3d0] sm:$0xff]
                  %696 = vst [vmem:[%s572 + $0x1e8] sm:$0xff] %v695
                  %v697 = vld [vmem:[%s571 + $0x3e0] sm:$0xff]
                  %698 = vst [vmem:[%s572 + $0x1f0] sm:$0xff] %v697
                  %v699 = vld [vmem:[%s571 + $0x3f0] sm:$0xff]
                  %700 = vst [vmem:[%s572 + $0x1f8] sm:$0xff] %v699
                $region98: #{tpu_custom_call.1} parent=92 // loop_footer
                  %s570 = sadd.s32 1, %s566
                $region99: #{tpu_custom_call.1} parent=92 // loop_footer_branch
                  %565 = sbr.rel target = $region95
                $region100: #{tpu_custom_call.1} parent=92 // loop_exit
                  _
              $region93: #{tpu_custom_call.1} parent=77 // pred_fallthru
                _
              // Predicated region
              $region101: #{tpu_custom_call.1} parent=77 // pred_check
                _
              $region102: #{tpu_custom_call.1} parent=77 // pred_check_branch
                %702 = sbr.rel target = $region104
              $region103: #{tpu_custom_call.1} parent=77 // pred_region
                _
              $region104: #{tpu_custom_call.1} parent=77 // pred_fallthru
                _
            $region78: #{tpu_custom_call.1} parent=73 // pred_fallthru
              _
            // Predicated region
            $region79: #{tpu_custom_call.1} parent=73 // pred_check
              _
            $region80: #{tpu_custom_call.1} parent=73 // pred_check_branch
              %425 = sbr.rel target = $region82
            $region81: #{tpu_custom_call.1} parent=73 // pred_region
              loop: start=0, step=1, limit=1
              $region83: #{tpu_custom_call.1} parent=81 // loop_pre_header
                _
              $region84: #{tpu_custom_call.1} parent=81 // loop_header
                %s428 = sphi 0, %s432
                %p429 = scmp.ge.s32.totalorder %s428, 1
                %s433 = sphi %s419, %s419
                %s434 = sphi %s417, %s417
              $region85: #{tpu_custom_call.1} parent=81 // loop_header_branch
                %431 = sbr.rel (%p429) target = $region89
              $region86: #{tpu_custom_call.1} parent=81 // loop_body
                %v435 = vld [vmem:[%s433] sm:$0xff]
                %436 = vst [vmem:[%s434] sm:$0xff] %v435
                %v437 = vld [vmem:[%s433 + $0x10] sm:$0xff]
                %438 = vst [vmem:[%s434 + $0x8] sm:$0xff] %v437
                %v439 = vld [vmem:[%s433 + $0x20] sm:$0xff]
                %440 = vst [vmem:[%s434 + $0x10] sm:$0xff] %v439
                %v441 = vld [vmem:[%s433 + $0x30] sm:$0xff]
                %442 = vst [vmem:[%s434 + $0x18] sm:$0xff] %v441
                %v443 = vld [vmem:[%s433 + $0x40] sm:$0xff]
                %444 = vst [vmem:[%s434 + $0x20] sm:$0xff] %v443
                %v445 = vld [vmem:[%s433 + $0x50] sm:$0xff]
                %446 = vst [vmem:[%s434 + $0x28] sm:$0xff] %v445
                %v447 = vld [vmem:[%s433 + $0x60] sm:$0xff]
                %448 = vst [vmem:[%s434 + $0x30] sm:$0xff] %v447
                %v449 = vld [vmem:[%s433 + $0x70] sm:$0xff]
                %450 = vst [vmem:[%s434 + $0x38] sm:$0xff] %v449
                %v451 = vld [vmem:[%s433 + $0x80] sm:$0xff]
                %452 = vst [vmem:[%s434 + $0x40] sm:$0xff] %v451
                %v453 = vld [vmem:[%s433 + $0x90] sm:$0xff]
                %454 = vst [vmem:[%s434 + $0x48] sm:$0xff] %v453
                %v455 = vld [vmem:[%s433 + $0xa0] sm:$0xff]
                %456 = vst [vmem:[%s434 + $0x50] sm:$0xff] %v455
                %v457 = vld [vmem:[%s433 + $0xb0] sm:$0xff]
                %458 = vst [vmem:[%s434 + $0x58] sm:$0xff] %v457
                %v459 = vld [vmem:[%s433 + $0xc0] sm:$0xff]
                %460 = vst [vmem:[%s434 + $0x60] sm:$0xff] %v459
                %v461 = vld [vmem:[%s433 + $0xd0] sm:$0xff]
                %462 = vst [vmem:[%s434 + $0x68] sm:$0xff] %v461
                %v463 = vld [vmem:[%s433 + $0xe0] sm:$0xff]
                %464 = vst [vmem:[%s434 + $0x70] sm:$0xff] %v463
                %v465 = vld [vmem:[%s433 + $0xf0] sm:$0xff]
                %466 = vst [vmem:[%s434 + $0x78] sm:$0xff] %v465
                %v467 = vld [vmem:[%s433 + $0x100] sm:$0xff]
                %468 = vst [vmem:[%s434 + $0x80] sm:$0xff] %v467
                %v469 = vld [vmem:[%s433 + $0x110] sm:$0xff]
                %470 = vst [vmem:[%s434 + $0x88] sm:$0xff] %v469
                %v471 = vld [vmem:[%s433 + $0x120] sm:$0xff]
                %472 = vst [vmem:[%s434 + $0x90] sm:$0xff] %v471
                %v473 = vld [vmem:[%s433 + $0x130] sm:$0xff]
                %474 = vst [vmem:[%s434 + $0x98] sm:$0xff] %v473
                %v475 = vld [vmem:[%s433 + $0x140] sm:$0xff]
                %476 = vst [vmem:[%s434 + $0xa0] sm:$0xff] %v475
                %v477 = vld [vmem:[%s433 + $0x150] sm:$0xff]
                %478 = vst [vmem:[%s434 + $0xa8] sm:$0xff] %v477
                %v479 = vld [vmem:[%s433 + $0x160] sm:$0xff]
                %480 = vst [vmem:[%s434 + $0xb0] sm:$0xff] %v479
                %v481 = vld [vmem:[%s433 + $0x170] sm:$0xff]
                %482 = vst [vmem:[%s434 + $0xb8] sm:$0xff] %v481
                %v483 = vld [vmem:[%s433 + $0x180] sm:$0xff]
                %484 = vst [vmem:[%s434 + $0xc0] sm:$0xff] %v483
                %v485 = vld [vmem:[%s433 + $0x190] sm:$0xff]
                %486 = vst [vmem:[%s434 + $0xc8] sm:$0xff] %v485
                %v487 = vld [vmem:[%s433 + $0x1a0] sm:$0xff]
                %488 = vst [vmem:[%s434 + $0xd0] sm:$0xff] %v487
                %v489 = vld [vmem:[%s433 + $0x1b0] sm:$0xff]
                %490 = vst [vmem:[%s434 + $0xd8] sm:$0xff] %v489
                %v491 = vld [vmem:[%s433 + $0x1c0] sm:$0xff]
                %492 = vst [vmem:[%s434 + $0xe0] sm:$0xff] %v491
                %v493 = vld [vmem:[%s433 + $0x1d0] sm:$0xff]
                %494 = vst [vmem:[%s434 + $0xe8] sm:$0xff] %v493
                %v495 = vld [vmem:[%s433 + $0x1e0] sm:$0xff]
                %496 = vst [vmem:[%s434 + $0xf0] sm:$0xff] %v495
                %v497 = vld [vmem:[%s433 + $0x1f0] sm:$0xff]
                %498 = vst [vmem:[%s434 + $0xf8] sm:$0xff] %v497
                %v499 = vld [vmem:[%s433 + $0x200] sm:$0xff]
                %500 = vst [vmem:[%s434 + $0x100] sm:$0xff] %v499
                %v501 = vld [vmem:[%s433 + $0x210] sm:$0xff]
                %502 = vst [vmem:[%s434 + $0x108] sm:$0xff] %v501
                %v503 = vld [vmem:[%s433 + $0x220] sm:$0xff]
                %504 = vst [vmem:[%s434 + $0x110] sm:$0xff] %v503
                %v505 = vld [vmem:[%s433 + $0x230] sm:$0xff]
                %506 = vst [vmem:[%s434 + $0x118] sm:$0xff] %v505
                %v507 = vld [vmem:[%s433 + $0x240] sm:$0xff]
                %508 = vst [vmem:[%s434 + $0x120] sm:$0xff] %v507
                %v509 = vld [vmem:[%s433 + $0x250] sm:$0xff]
                %510 = vst [vmem:[%s434 + $0x128] sm:$0xff] %v509
                %v511 = vld [vmem:[%s433 + $0x260] sm:$0xff]
                %512 = vst [vmem:[%s434 + $0x130] sm:$0xff] %v511
                %v513 = vld [vmem:[%s433 + $0x270] sm:$0xff]
                %514 = vst [vmem:[%s434 + $0x138] sm:$0xff] %v513
                %v515 = vld [vmem:[%s433 + $0x280] sm:$0xff]
                %516 = vst [vmem:[%s434 + $0x140] sm:$0xff] %v515
                %v517 = vld [vmem:[%s433 + $0x290] sm:$0xff]
                %518 = vst [vmem:[%s434 + $0x148] sm:$0xff] %v517
                %v519 = vld [vmem:[%s433 + $0x2a0] sm:$0xff]
                %520 = vst [vmem:[%s434 + $0x150] sm:$0xff] %v519
                %v521 = vld [vmem:[%s433 + $0x2b0] sm:$0xff]
                %522 = vst [vmem:[%s434 + $0x158] sm:$0xff] %v521
                %v523 = vld [vmem:[%s433 + $0x2c0] sm:$0xff]
                %524 = vst [vmem:[%s434 + $0x160] sm:$0xff] %v523
                %v525 = vld [vmem:[%s433 + $0x2d0] sm:$0xff]
                %526 = vst [vmem:[%s434 + $0x168] sm:$0xff] %v525
                %v527 = vld [vmem:[%s433 + $0x2e0] sm:$0xff]
                %528 = vst [vmem:[%s434 + $0x170] sm:$0xff] %v527
                %v529 = vld [vmem:[%s433 + $0x2f0] sm:$0xff]
                %530 = vst [vmem:[%s434 + $0x178] sm:$0xff] %v529
                %v531 = vld [vmem:[%s433 + $0x300] sm:$0xff]
                %532 = vst [vmem:[%s434 + $0x180] sm:$0xff] %v531
                %v533 = vld [vmem:[%s433 + $0x310] sm:$0xff]
                %534 = vst [vmem:[%s434 + $0x188] sm:$0xff] %v533
                %v535 = vld [vmem:[%s433 + $0x320] sm:$0xff]
                %536 = vst [vmem:[%s434 + $0x190] sm:$0xff] %v535
                %v537 = vld [vmem:[%s433 + $0x330] sm:$0xff]
                %538 = vst [vmem:[%s434 + $0x198] sm:$0xff] %v537
                %v539 = vld [vmem:[%s433 + $0x340] sm:$0xff]
                %540 = vst [vmem:[%s434 + $0x1a0] sm:$0xff] %v539
                %v541 = vld [vmem:[%s433 + $0x350] sm:$0xff]
                %542 = vst [vmem:[%s434 + $0x1a8] sm:$0xff] %v541
                %v543 = vld [vmem:[%s433 + $0x360] sm:$0xff]
                %544 = vst [vmem:[%s434 + $0x1b0] sm:$0xff] %v543
                %v545 = vld [vmem:[%s433 + $0x370] sm:$0xff]
                %546 = vst [vmem:[%s434 + $0x1b8] sm:$0xff] %v545
                %v547 = vld [vmem:[%s433 + $0x380] sm:$0xff]
                %548 = vst [vmem:[%s434 + $0x1c0] sm:$0xff] %v547
                %v549 = vld [vmem:[%s433 + $0x390] sm:$0xff]
                %550 = vst [vmem:[%s434 + $0x1c8] sm:$0xff] %v549
                %v551 = vld [vmem:[%s433 + $0x3a0] sm:$0xff]
                %552 = vst [vmem:[%s434 + $0x1d0] sm:$0xff] %v551
                %v553 = vld [vmem:[%s433 + $0x3b0] sm:$0xff]
                %554 = vst [vmem:[%s434 + $0x1d8] sm:$0xff] %v553
                %v555 = vld [vmem:[%s433 + $0x3c0] sm:$0xff]
                %556 = vst [vmem:[%s434 + $0x1e0] sm:$0xff] %v555
                %v557 = vld [vmem:[%s433 + $0x3d0] sm:$0xff]
                %558 = vst [vmem:[%s434 + $0x1e8] sm:$0xff] %v557
                %v559 = vld [vmem:[%s433 + $0x3e0] sm:$0xff]
                %560 = vst [vmem:[%s434 + $0x1f0] sm:$0xff] %v559
                %v561 = vld [vmem:[%s433 + $0x3f0] sm:$0xff]
                %562 = vst [vmem:[%s434 + $0x1f8] sm:$0xff] %v561
              $region87: #{tpu_custom_call.1} parent=81 // loop_footer
                %s432 = sadd.s32 1, %s428
              $region88: #{tpu_custom_call.1} parent=81 // loop_footer_branch
                %427 = sbr.rel target = $region84
              $region89: #{tpu_custom_call.1} parent=81 // loop_exit
                _
            $region82: #{tpu_custom_call.1} parent=73 // pred_fallthru
              _
          $region74: #{tpu_custom_call.1} parent=69 // pred_fallthru
            _
          %703 = vnop
        $region70: #{tpu_custom_call.1} parent=27 // pred_fallthru
          _
        // Predicated region
        $region105: #{tpu_custom_call.1} parent=27 // pred_check
          %p704 = pneg %p91
        $region106: #{tpu_custom_call.1} parent=27 // pred_check_branch
          %706 = sbr.rel (%p704) target = $region108
        $region107: #{tpu_custom_call.1} parent=27 // pred_region
          %s707 = sand.u32 %s81, 1
          %s708 = sand.u32 %s81, 1
          %s709 = smul.addr %s708, 256
          %s710 = scalar_lea.vmem [#allocation10], %s709
          %s711 = smul.addr %s19, 8
          %s712 = scalar_lea.vmem %s2, %s711
          // Predicated region
          $region109: #{tpu_custom_call.1} parent=107 // pred_check
            _
          $region110: #{tpu_custom_call.1} parent=107 // pred_check_branch
            %714 = sbr.rel (0) target = $region112
          $region111: #{tpu_custom_call.1} parent=107 // pred_region
            // Predicated region
            $region113: #{tpu_custom_call.1} parent=111 // pred_check
              _
            $region114: #{tpu_custom_call.1} parent=111 // pred_check_branch
              %716 = sbr.rel (0) target = $region116
            $region115: #{tpu_custom_call.1} parent=111 // pred_region
              // Predicated region
              $region128: #{tpu_custom_call.1} parent=115 // pred_check
                _
              $region129: #{tpu_custom_call.1} parent=115 // pred_check_branch
                %793 = sbr.rel (0) target = $region131
              $region130: #{tpu_custom_call.1} parent=115 // pred_region
                loop: start=0, step=1, limit=1
                $region132: #{tpu_custom_call.1} parent=130 // loop_pre_header
                  _
                $region133: #{tpu_custom_call.1} parent=130 // loop_header
                  %s795 = sphi 0, %s799
                  %p796 = scmp.ge.s32.totalorder %s795, 1
                  %s800 = sphi %s712, %s712
                  %s801 = sphi %s710, %s710
                $region134: #{tpu_custom_call.1} parent=130 // loop_header_branch
                  %798 = sbr.rel (%p796) target = $region138
                $region135: #{tpu_custom_call.1} parent=130 // loop_body
                  %v802 = vld [vmem:[%s800] sm:$0xff]
                  %803 = vst [vmem:[%s801] sm:$0xff] %v802
                  %v804 = vld [vmem:[%s800 + $0x10] sm:$0xff]
                  %805 = vst [vmem:[%s801 + $0x8] sm:$0xff] %v804
                  %v806 = vld [vmem:[%s800 + $0x20] sm:$0xff]
                  %807 = vst [vmem:[%s801 + $0x10] sm:$0xff] %v806
                  %v808 = vld [vmem:[%s800 + $0x30] sm:$0xff]
                  %809 = vst [vmem:[%s801 + $0x18] sm:$0xff] %v808
                  %v810 = vld [vmem:[%s800 + $0x40] sm:$0xff]
                  %811 = vst [vmem:[%s801 + $0x20] sm:$0xff] %v810
                  %v812 = vld [vmem:[%s800 + $0x50] sm:$0xff]
                  %813 = vst [vmem:[%s801 + $0x28] sm:$0xff] %v812
                  %v814 = vld [vmem:[%s800 + $0x60] sm:$0xff]
                  %815 = vst [vmem:[%s801 + $0x30] sm:$0xff] %v814
                  %v816 = vld [vmem:[%s800 + $0x70] sm:$0xff]
                  %817 = vst [vmem:[%s801 + $0x38] sm:$0xff] %v816
                  %v818 = vld [vmem:[%s800 + $0x80] sm:$0xff]
                  %819 = vst [vmem:[%s801 + $0x40] sm:$0xff] %v818
                  %v820 = vld [vmem:[%s800 + $0x90] sm:$0xff]
                  %821 = vst [vmem:[%s801 + $0x48] sm:$0xff] %v820
                  %v822 = vld [vmem:[%s800 + $0xa0] sm:$0xff]
                  %823 = vst [vmem:[%s801 + $0x50] sm:$0xff] %v822
                  %v824 = vld [vmem:[%s800 + $0xb0] sm:$0xff]
                  %825 = vst [vmem:[%s801 + $0x58] sm:$0xff] %v824
                  %v826 = vld [vmem:[%s800 + $0xc0] sm:$0xff]
                  %827 = vst [vmem:[%s801 + $0x60] sm:$0xff] %v826
                  %v828 = vld [vmem:[%s800 + $0xd0] sm:$0xff]
                  %829 = vst [vmem:[%s801 + $0x68] sm:$0xff] %v828
                  %v830 = vld [vmem:[%s800 + $0xe0] sm:$0xff]
                  %831 = vst [vmem:[%s801 + $0x70] sm:$0xff] %v830
                  %v832 = vld [vmem:[%s800 + $0xf0] sm:$0xff]
                  %833 = vst [vmem:[%s801 + $0x78] sm:$0xff] %v832
                  %v834 = vld [vmem:[%s800 + $0x100] sm:$0xff]
                  %835 = vst [vmem:[%s801 + $0x80] sm:$0xff] %v834
                  %v836 = vld [vmem:[%s800 + $0x110] sm:$0xff]
                  %837 = vst [vmem:[%s801 + $0x88] sm:$0xff] %v836
                  %v838 = vld [vmem:[%s800 + $0x120] sm:$0xff]
                  %839 = vst [vmem:[%s801 + $0x90] sm:$0xff] %v838
                  %v840 = vld [vmem:[%s800 + $0x130] sm:$0xff]
                  %841 = vst [vmem:[%s801 + $0x98] sm:$0xff] %v840
                  %v842 = vld [vmem:[%s800 + $0x140] sm:$0xff]
                  %843 = vst [vmem:[%s801 + $0xa0] sm:$0xff] %v842
                  %v844 = vld [vmem:[%s800 + $0x150] sm:$0xff]
                  %845 = vst [vmem:[%s801 + $0xa8] sm:$0xff] %v844
                  %v846 = vld [vmem:[%s800 + $0x160] sm:$0xff]
                  %847 = vst [vmem:[%s801 + $0xb0] sm:$0xff] %v846
                  %v848 = vld [vmem:[%s800 + $0x170] sm:$0xff]
                  %849 = vst [vmem:[%s801 + $0xb8] sm:$0xff] %v848
                  %v850 = vld [vmem:[%s800 + $0x180] sm:$0xff]
                  %851 = vst [vmem:[%s801 + $0xc0] sm:$0xff] %v850
                  %v852 = vld [vmem:[%s800 + $0x190] sm:$0xff]
                  %853 = vst [vmem:[%s801 + $0xc8] sm:$0xff] %v852
                  %v854 = vld [vmem:[%s800 + $0x1a0] sm:$0xff]
                  %855 = vst [vmem:[%s801 + $0xd0] sm:$0xff] %v854
                  %v856 = vld [vmem:[%s800 + $0x1b0] sm:$0xff]
                  %857 = vst [vmem:[%s801 + $0xd8] sm:$0xff] %v856
                  %v858 = vld [vmem:[%s800 + $0x1c0] sm:$0xff]
                  %859 = vst [vmem:[%s801 + $0xe0] sm:$0xff] %v858
                  %v860 = vld [vmem:[%s800 + $0x1d0] sm:$0xff]
                  %861 = vst [vmem:[%s801 + $0xe8] sm:$0xff] %v860
                  %v862 = vld [vmem:[%s800 + $0x1e0] sm:$0xff]
                  %863 = vst [vmem:[%s801 + $0xf0] sm:$0xff] %v862
                  %v864 = vld [vmem:[%s800 + $0x1f0] sm:$0xff]
                  %865 = vst [vmem:[%s801 + $0xf8] sm:$0xff] %v864
                $region136: #{tpu_custom_call.1} parent=130 // loop_footer
                  %s799 = sadd.s32 1, %s795
                $region137: #{tpu_custom_call.1} parent=130 // loop_footer_branch
                  %794 = sbr.rel target = $region133
                $region138: #{tpu_custom_call.1} parent=130 // loop_exit
                  _
              $region131: #{tpu_custom_call.1} parent=115 // pred_fallthru
                _
              // Predicated region
              $region139: #{tpu_custom_call.1} parent=115 // pred_check
                _
              $region140: #{tpu_custom_call.1} parent=115 // pred_check_branch
                %867 = sbr.rel target = $region142
              $region141: #{tpu_custom_call.1} parent=115 // pred_region
                _
              $region142: #{tpu_custom_call.1} parent=115 // pred_fallthru
                _
            $region116: #{tpu_custom_call.1} parent=111 // pred_fallthru
              _
            // Predicated region
            $region117: #{tpu_custom_call.1} parent=111 // pred_check
              _
            $region118: #{tpu_custom_call.1} parent=111 // pred_check_branch
              %718 = sbr.rel target = $region120
            $region119: #{tpu_custom_call.1} parent=111 // pred_region
              loop: start=0, step=1, limit=1
              $region121: #{tpu_custom_call.1} parent=119 // loop_pre_header
                _
              $region122: #{tpu_custom_call.1} parent=119 // loop_header
                %s721 = sphi 0, %s725
                %p722 = scmp.ge.s32.totalorder %s721, 1
                %s726 = sphi %s712, %s712
                %s727 = sphi %s710, %s710
              $region123: #{tpu_custom_call.1} parent=119 // loop_header_branch
                %724 = sbr.rel (%p722) target = $region127
              $region124: #{tpu_custom_call.1} parent=119 // loop_body
                %v728 = vld [vmem:[%s726] sm:$0xff]
                %729 = vst [vmem:[%s727] sm:$0xff] %v728
                %v730 = vld [vmem:[%s726 + $0x10] sm:$0xff]
                %731 = vst [vmem:[%s727 + $0x8] sm:$0xff] %v730
                %v732 = vld [vmem:[%s726 + $0x20] sm:$0xff]
                %733 = vst [vmem:[%s727 + $0x10] sm:$0xff] %v732
                %v734 = vld [vmem:[%s726 + $0x30] sm:$0xff]
                %735 = vst [vmem:[%s727 + $0x18] sm:$0xff] %v734
                %v736 = vld [vmem:[%s726 + $0x40] sm:$0xff]
                %737 = vst [vmem:[%s727 + $0x20] sm:$0xff] %v736
                %v738 = vld [vmem:[%s726 + $0x50] sm:$0xff]
                %739 = vst [vmem:[%s727 + $0x28] sm:$0xff] %v738
                %v740 = vld [vmem:[%s726 + $0x60] sm:$0xff]
                %741 = vst [vmem:[%s727 + $0x30] sm:$0xff] %v740
                %v742 = vld [vmem:[%s726 + $0x70] sm:$0xff]
                %743 = vst [vmem:[%s727 + $0x38] sm:$0xff] %v742
                %v744 = vld [vmem:[%s726 + $0x80] sm:$0xff]
                %745 = vst [vmem:[%s727 + $0x40] sm:$0xff] %v744
                %v746 = vld [vmem:[%s726 + $0x90] sm:$0xff]
                %747 = vst [vmem:[%s727 + $0x48] sm:$0xff] %v746
                %v748 = vld [vmem:[%s726 + $0xa0] sm:$0xff]
                %749 = vst [vmem:[%s727 + $0x50] sm:$0xff] %v748
                %v750 = vld [vmem:[%s726 + $0xb0] sm:$0xff]
                %751 = vst [vmem:[%s727 + $0x58] sm:$0xff] %v750
                %v752 = vld [vmem:[%s726 + $0xc0] sm:$0xff]
                %753 = vst [vmem:[%s727 + $0x60] sm:$0xff] %v752
                %v754 = vld [vmem:[%s726 + $0xd0] sm:$0xff]
                %755 = vst [vmem:[%s727 + $0x68] sm:$0xff] %v754
                %v756 = vld [vmem:[%s726 + $0xe0] sm:$0xff]
                %757 = vst [vmem:[%s727 + $0x70] sm:$0xff] %v756
                %v758 = vld [vmem:[%s726 + $0xf0] sm:$0xff]
                %759 = vst [vmem:[%s727 + $0x78] sm:$0xff] %v758
                %v760 = vld [vmem:[%s726 + $0x100] sm:$0xff]
                %761 = vst [vmem:[%s727 + $0x80] sm:$0xff] %v760
                %v762 = vld [vmem:[%s726 + $0x110] sm:$0xff]
                %763 = vst [vmem:[%s727 + $0x88] sm:$0xff] %v762
                %v764 = vld [vmem:[%s726 + $0x120] sm:$0xff]
                %765 = vst [vmem:[%s727 + $0x90] sm:$0xff] %v764
                %v766 = vld [vmem:[%s726 + $0x130] sm:$0xff]
                %767 = vst [vmem:[%s727 + $0x98] sm:$0xff] %v766
                %v768 = vld [vmem:[%s726 + $0x140] sm:$0xff]
                %769 = vst [vmem:[%s727 + $0xa0] sm:$0xff] %v768
                %v770 = vld [vmem:[%s726 + $0x150] sm:$0xff]
                %771 = vst [vmem:[%s727 + $0xa8] sm:$0xff] %v770
                %v772 = vld [vmem:[%s726 + $0x160] sm:$0xff]
                %773 = vst [vmem:[%s727 + $0xb0] sm:$0xff] %v772
                %v774 = vld [vmem:[%s726 + $0x170] sm:$0xff]
                %775 = vst [vmem:[%s727 + $0xb8] sm:$0xff] %v774
                %v776 = vld [vmem:[%s726 + $0x180] sm:$0xff]
                %777 = vst [vmem:[%s727 + $0xc0] sm:$0xff] %v776
                %v778 = vld [vmem:[%s726 + $0x190] sm:$0xff]
                %779 = vst [vmem:[%s727 + $0xc8] sm:$0xff] %v778
                %v780 = vld [vmem:[%s726 + $0x1a0] sm:$0xff]
                %781 = vst [vmem:[%s727 + $0xd0] sm:$0xff] %v780
                %v782 = vld [vmem:[%s726 + $0x1b0] sm:$0xff]
                %783 = vst [vmem:[%s727 + $0xd8] sm:$0xff] %v782
                %v784 = vld [vmem:[%s726 + $0x1c0] sm:$0xff]
                %785 = vst [vmem:[%s727 + $0xe0] sm:$0xff] %v784
                %v786 = vld [vmem:[%s726 + $0x1d0] sm:$0xff]
                %787 = vst [vmem:[%s727 + $0xe8] sm:$0xff] %v786
                %v788 = vld [vmem:[%s726 + $0x1e0] sm:$0xff]
                %789 = vst [vmem:[%s727 + $0xf0] sm:$0xff] %v788
                %v790 = vld [vmem:[%s726 + $0x1f0] sm:$0xff]
                %791 = vst [vmem:[%s727 + $0xf8] sm:$0xff] %v790
              $region125: #{tpu_custom_call.1} parent=119 // loop_footer
                %s725 = sadd.s32 1, %s721
              $region126: #{tpu_custom_call.1} parent=119 // loop_footer_branch
                %720 = sbr.rel target = $region122
              $region127: #{tpu_custom_call.1} parent=119 // loop_exit
                _
            $region120: #{tpu_custom_call.1} parent=111 // pred_fallthru
              _
          $region112: #{tpu_custom_call.1} parent=107 // pred_fallthru
            _
          %868 = vnop
        $region108: #{tpu_custom_call.1} parent=27 // pred_fallthru
          _
      $region28: #{tpu_custom_call.1} parent=5 // pred_fallthru
        _
      %p869 = scmp.le.s32.totalorder 1, %s19
      %p870 = scmp.lt.s32.totalorder %s19, 3
      %p871 = pnand %p869, %p870
      %p872 = pneg %p871
      // Predicated region
      $region143: #{tpu_custom_call.1} parent=5 // pred_check
        _
      $region144: #{tpu_custom_call.1} parent=5 // pred_check_branch
        %874 = sbr.rel (%p871) target = $region146
      $region145: #{tpu_custom_call.1} parent=5 // pred_region
        %s875 = ssub.s32 %s19, 1
        %s876 = sand.u32 %s32, 1
        %s877 = sand.u32 %s32, 1
        %s878 = smul.addr %s877, 256
        %s879 = scalar_lea.vmem [#allocation8], %s878
        // Predicated region
        $region147: #{tpu_custom_call.1} parent=145 // pred_check
          %p880 = pneg %p45
        $region148: #{tpu_custom_call.1} parent=145 // pred_check_branch
          %882 = sbr.rel (%p880) target = $region150
        $region149: #{tpu_custom_call.1} parent=145 // pred_region
          _
        $region150: #{tpu_custom_call.1} parent=145 // pred_fallthru
          _
        %s883 = sand.u32 %s58, 1
        %s884 = sand.u32 %s58, 1
        %s885 = smul.addr %s884, 512
        %s886 = scalar_lea.vmem [#allocation9], %s885
        // Predicated region
        $region151: #{tpu_custom_call.1} parent=145 // pred_check
          %p887 = pneg %p71
        $region152: #{tpu_custom_call.1} parent=145 // pred_check_branch
          %889 = sbr.rel (%p887) target = $region154
        $region153: #{tpu_custom_call.1} parent=145 // pred_region
          _
        $region154: #{tpu_custom_call.1} parent=145 // pred_fallthru
          _
        %s890 = sand.u32 %s84, 1
        %s891 = sand.u32 %s84, 1
        %s892 = smul.addr %s891, 256
        %s893 = scalar_lea.vmem [#allocation10], %s892
        // Predicated region
        $region155: #{tpu_custom_call.1} parent=145 // pred_check
          %p894 = pneg %p97
        $region156: #{tpu_custom_call.1} parent=145 // pred_check_branch
          %896 = sbr.rel (%p894) target = $region158
        $region157: #{tpu_custom_call.1} parent=145 // pred_region
          _
        $region158: #{tpu_custom_call.1} parent=145 // pred_fallthru
          _
        // Predicated region
        $region159: #{tpu_custom_call.1} parent=145 // pred_check
          %p897 = pneg %p118
        $region160: #{tpu_custom_call.1} parent=145 // pred_check_branch
          %899 = sbr.rel (%p897) target = $region162
        $region161: #{tpu_custom_call.1} parent=145 // pred_region
          %900 = dma.done [#allocation12], 128
        $region162: #{tpu_custom_call.1} parent=145 // pred_fallthru
          _
        // Predicated region
        $region163: #{tpu_custom_call.1} parent=145 // pred_check
          %p901 = pneg %p139
        $region164: #{tpu_custom_call.1} parent=145 // pred_check_branch
          %903 = sbr.rel (%p901) target = $region166
        $region165: #{tpu_custom_call.1} parent=145 // pred_region
          %904 = dma.done [#allocation14], 128
        $region166: #{tpu_custom_call.1} parent=145 // pred_fallthru
          _
        %s905 = sand.u32 %s32, 1
        %s906 = sand.u32 %s32, 1
        %s907 = smul.addr %s906, 256
        %s908 = scalar_lea.vmem [#allocation8], %s907
        %p909 = pneg %p45
        %p910 = pneg %p42
        %s911 = sand.u32 %s58, 1
        %s912 = sand.u32 %s58, 1
        %s913 = smul.addr %s912, 512
        %s914 = scalar_lea.vmem [#allocation9], %s913
        %p915 = pneg %p71
        %p916 = pneg %p68
        %s917 = sand.u32 %s84, 1
        %s918 = sand.u32 %s84, 1
        %s919 = smul.addr %s918, 256
        %s920 = scalar_lea.vmem [#allocation10], %s919
        %p921 = pneg %p97
        %p922 = pneg %p94
        %p923 = pneg %p118
        %p924 = pneg %p115
        %p925 = pneg %p139
        %p926 = pneg %p136
        %p927 = pneg %p160
        %p928 = pneg %p157
        %p929 = pneg %p181
        %p930 = pneg %p178
        %p931 = pneg %p202
        %p932 = pneg %p199
        %p933 = scmp.eq.s32.totalorder %s24, 0
        // Predicated region
        $region167: #{tpu_custom_call.1} parent=145 // pred_check
          %p934 = pneg %p933
        $region168: #{tpu_custom_call.1} parent=145 // pred_check_branch
          %936 = sbr.rel (%p934) target = $region170
        $region169: #{tpu_custom_call.1} parent=145 // pred_region
          // Predicated region
          $region171: #{tpu_custom_call.1} parent=169 // pred_check
            _
          $region172: #{tpu_custom_call.1} parent=169 // pred_check_branch
            %938 = sbr.rel target = $region174
          $region173: #{tpu_custom_call.1} parent=169 // pred_region
            %939 = sst [smem:[#allocation17]] [#allocation16]
            %940 = sst [smem:[#allocation18]] [#allocation15]
          $region174: #{tpu_custom_call.1} parent=169 // pred_fallthru
            _
          %942 = shalt.err (0)
          %s944 = sshll.u32 [#allocation2], 4
          %s945 = int_to_ptr.vmem [resolvable:$true] %s944
          %947 = dma.hbm_to_vmem [thread:$0]  %s3, 65536, %s945, [#allocation3]
          %948 = vst [vmem:[#allocation4] sm:$0xff] 0.0
          %949 = vst [vmem:[#allocation4 + $0x8] sm:$0xff] 0.0
          %950 = vst [vmem:[#allocation4 + $0x10] sm:$0xff] 0.0
          %951 = vst [vmem:[#allocation4 + $0x18] sm:$0xff] 0.0
          %952 = vst [vmem:[#allocation4 + $0x20] sm:$0xff] 0.0
          %953 = vst [vmem:[#allocation4 + $0x28] sm:$0xff] 0.0
          %954 = vst [vmem:[#allocation4 + $0x30] sm:$0xff] 0.0
          %955 = vst [vmem:[#allocation4 + $0x38] sm:$0xff] 0.0
          %956 = vst [vmem:[#allocation4 + $0x40] sm:$0xff] 0.0
          %957 = vst [vmem:[#allocation4 + $0x48] sm:$0xff] 0.0
          %958 = vst [vmem:[#allocation4 + $0x50] sm:$0xff] 0.0
          %959 = vst [vmem:[#allocation4 + $0x58] sm:$0xff] 0.0
          %960 = vst [vmem:[#allocation4 + $0x60] sm:$0xff] 0.0
          %961 = vst [vmem:[#allocation4 + $0x68] sm:$0xff] 0.0
          %962 = vst [vmem:[#allocation4 + $0x70] sm:$0xff] 0.0
          %963 = vst [vmem:[#allocation4 + $0x78] sm:$0xff] 0.0
          %964 = vst [vmem:[#allocation4 + $0x80] sm:$0xff] 0.0
          %965 = vst [vmem:[#allocation4 + $0x88] sm:$0xff] 0.0
          %966 = vst [vmem:[#allocation4 + $0x90] sm:$0xff] 0.0
          %967 = vst [vmem:[#allocation4 + $0x98] sm:$0xff] 0.0
          %968 = vst [vmem:[#allocation4 + $0xa0] sm:$0xff] 0.0
          %969 = vst [vmem:[#allocation4 + $0xa8] sm:$0xff] 0.0
          %970 = vst [vmem:[#allocation4 + $0xb0] sm:$0xff] 0.0
          %971 = vst [vmem:[#allocation4 + $0xb8] sm:$0xff] 0.0
          %972 = vst [vmem:[#allocation4 + $0xc0] sm:$0xff] 0.0
          %973 = vst [vmem:[#allocation4 + $0xc8] sm:$0xff] 0.0
          %974 = vst [vmem:[#allocation4 + $0xd0] sm:$0xff] 0.0
          %975 = vst [vmem:[#allocation4 + $0xd8] sm:$0xff] 0.0
          %976 = vst [vmem:[#allocation4 + $0xe0] sm:$0xff] 0.0
          %977 = vst [vmem:[#allocation4 + $0xe8] sm:$0xff] 0.0
          %978 = vst [vmem:[#allocation4 + $0xf0] sm:$0xff] 0.0
          %979 = vst [vmem:[#allocation4 + $0xf8] sm:$0xff] 0.0
          %980 = vst [vmem:[#allocation5] sm:$0xff] 0.0
          %981 = vst [vmem:[#allocation5 + $0x8] sm:$0xff] 0.0
          %982 = vst [vmem:[#allocation5 + $0x10] sm:$0xff] 0.0
          %983 = vst [vmem:[#allocation5 + $0x18] sm:$0xff] 0.0
          %984 = vst [vmem:[#allocation5 + $0x20] sm:$0xff] 0.0
          %985 = vst [vmem:[#allocation5 + $0x28] sm:$0xff] 0.0
          %986 = vst [vmem:[#allocation5 + $0x30] sm:$0xff] 0.0
          %987 = vst [vmem:[#allocation5 + $0x38] sm:$0xff] 0.0
          %988 = vst [vmem:[#allocation5 + $0x40] sm:$0xff] 0.0
          %989 = vst [vmem:[#allocation5 + $0x48] sm:$0xff] 0.0
          %990 = vst [vmem:[#allocation5 + $0x50] sm:$0xff] 0.0
          %991 = vst [vmem:[#allocation5 + $0x58] sm:$0xff] 0.0
          %992 = vst [vmem:[#allocation5 + $0x60] sm:$0xff] 0.0
          %993 = vst [vmem:[#allocation5 + $0x68] sm:$0xff] 0.0
          %994 = vst [vmem:[#allocation5 + $0x70] sm:$0xff] 0.0
          %995 = vst [vmem:[#allocation5 + $0x78] sm:$0xff] 0.0
          %996 = vst [vmem:[#allocation5 + $0x80] sm:$0xff] 0.0
          %997 = vst [vmem:[#allocation5 + $0x88] sm:$0xff] 0.0
          %998 = vst [vmem:[#allocation5 + $0x90] sm:$0xff] 0.0
          %999 = vst [vmem:[#allocation5 + $0x98] sm:$0xff] 0.0
          %1000 = vst [vmem:[#allocation5 + $0xa0] sm:$0xff] 0.0
          %1001 = vst [vmem:[#allocation5 + $0xa8] sm:$0xff] 0.0
          %1002 = vst [vmem:[#allocation5 + $0xb0] sm:$0xff] 0.0
          %1003 = vst [vmem:[#allocation5 + $0xb8] sm:$0xff] 0.0
          %1004 = vst [vmem:[#allocation5 + $0xc0] sm:$0xff] 0.0
          %1005 = vst [vmem:[#allocation5 + $0xc8] sm:$0xff] 0.0
          %1006 = vst [vmem:[#allocation5 + $0xd0] sm:$0xff] 0.0
          %1007 = vst [vmem:[#allocation5 + $0xd8] sm:$0xff] 0.0
          %1008 = vst [vmem:[#allocation5 + $0xe0] sm:$0xff] 0.0
          %1009 = vst [vmem:[#allocation5 + $0xe8] sm:$0xff] 0.0
          %1010 = vst [vmem:[#allocation5 + $0xf0] sm:$0xff] 0.0
          %1011 = vst [vmem:[#allocation5 + $0xf8] sm:$0xff] 0.0
          %1012 = vst [vmem:[#allocation5 + $0x100] sm:$0xff] 0.0
          %1013 = vst [vmem:[#allocation5 + $0x108] sm:$0xff] 0.0
          %1014 = vst [vmem:[#allocation5 + $0x110] sm:$0xff] 0.0
          %1015 = vst [vmem:[#allocation5 + $0x118] sm:$0xff] 0.0
          %1016 = vst [vmem:[#allocation5 + $0x120] sm:$0xff] 0.0
          %1017 = vst [vmem:[#allocation5 + $0x128] sm:$0xff] 0.0
          %1018 = vst [vmem:[#allocation5 + $0x130] sm:$0xff] 0.0
          %1019 = vst [vmem:[#allocation5 + $0x138] sm:$0xff] 0.0
          %1020 = vst [vmem:[#allocation5 + $0x140] sm:$0xff] 0.0
          %1021 = vst [vmem:[#allocation5 + $0x148] sm:$0xff] 0.0
          %1022 = vst [vmem:[#allocation5 + $0x150] sm:$0xff] 0.0
          %1023 = vst [vmem:[#allocation5 + $0x158] sm:$0xff] 0.0
          %1024 = vst [vmem:[#allocation5 + $0x160] sm:$0xff] 0.0
          %1025 = vst [vmem:[#allocation5 + $0x168] sm:$0xff] 0.0
          %1026 = vst [vmem:[#allocation5 + $0x170] sm:$0xff] 0.0
          %1027 = vst [vmem:[#allocation5 + $0x178] sm:$0xff] 0.0
          %1028 = vst [vmem:[#allocation5 + $0x180] sm:$0xff] 0.0
          %1029 = vst [vmem:[#allocation5 + $0x188] sm:$0xff] 0.0
          %1030 = vst [vmem:[#allocation5 + $0x190] sm:$0xff] 0.0
          %1031 = vst [vmem:[#allocation5 + $0x198] sm:$0xff] 0.0
          %1032 = vst [vmem:[#allocation5 + $0x1a0] sm:$0xff] 0.0
          %1033 = vst [vmem:[#allocation5 + $0x1a8] sm:$0xff] 0.0
          %1034 = vst [vmem:[#allocation5 + $0x1b0] sm:$0xff] 0.0
          %1035 = vst [vmem:[#allocation5 + $0x1b8] sm:$0xff] 0.0
          %1036 = vst [vmem:[#allocation5 + $0x1c0] sm:$0xff] 0.0
          %1037 = vst [vmem:[#allocation5 + $0x1c8] sm:$0xff] 0.0
          %1038 = vst [vmem:[#allocation5 + $0x1d0] sm:$0xff] 0.0
          %1039 = vst [vmem:[#allocation5 + $0x1d8] sm:$0xff] 0.0
          %1040 = vst [vmem:[#allocation5 + $0x1e0] sm:$0xff] 0.0
          %1041 = vst [vmem:[#allocation5 + $0x1e8] sm:$0xff] 0.0
          %1042 = vst [vmem:[#allocation5 + $0x1f0] sm:$0xff] 0.0
          %1043 = vst [vmem:[#allocation5 + $0x1f8] sm:$0xff] 0.0
          %1044 = vst [vmem:[#allocation6] sm:$0xff] 0.0
          %1045 = vst [vmem:[#allocation6 + $0x8] sm:$0xff] 0.0
          %1046 = vst [vmem:[#allocation6 + $0x10] sm:$0xff] 0.0
          %1047 = vst [vmem:[#allocation6 + $0x18] sm:$0xff] 0.0
          %1048 = vst [vmem:[#allocation6 + $0x20] sm:$0xff] 0.0
          %1049 = vst [vmem:[#allocation6 + $0x28] sm:$0xff] 0.0
          %1050 = vst [vmem:[#allocation6 + $0x30] sm:$0xff] 0.0
          %1051 = vst [vmem:[#allocation6 + $0x38] sm:$0xff] 0.0
          %1052 = vst [vmem:[#allocation6 + $0x40] sm:$0xff] 0.0
          %1053 = vst [vmem:[#allocation6 + $0x48] sm:$0xff] 0.0
          %1054 = vst [vmem:[#allocation6 + $0x50] sm:$0xff] 0.0
          %1055 = vst [vmem:[#allocation6 + $0x58] sm:$0xff] 0.0
          %1056 = vst [vmem:[#allocation6 + $0x60] sm:$0xff] 0.0
          %1057 = vst [vmem:[#allocation6 + $0x68] sm:$0xff] 0.0
          %1058 = vst [vmem:[#allocation6 + $0x70] sm:$0xff] 0.0
          %1059 = vst [vmem:[#allocation6 + $0x78] sm:$0xff] 0.0
          %1060 = vst [vmem:[#allocation6 + $0x80] sm:$0xff] 0.0
          %1061 = vst [vmem:[#allocation6 + $0x88] sm:$0xff] 0.0
          %1062 = vst [vmem:[#allocation6 + $0x90] sm:$0xff] 0.0
          %1063 = vst [vmem:[#allocation6 + $0x98] sm:$0xff] 0.0
          %1064 = vst [vmem:[#allocation6 + $0xa0] sm:$0xff] 0.0
          %1065 = vst [vmem:[#allocation6 + $0xa8] sm:$0xff] 0.0
          %1066 = vst [vmem:[#allocation6 + $0xb0] sm:$0xff] 0.0
          %1067 = vst [vmem:[#allocation6 + $0xb8] sm:$0xff] 0.0
          %1068 = vst [vmem:[#allocation6 + $0xc0] sm:$0xff] 0.0
          %1069 = vst [vmem:[#allocation6 + $0xc8] sm:$0xff] 0.0
          %1070 = vst [vmem:[#allocation6 + $0xd0] sm:$0xff] 0.0
          %1071 = vst [vmem:[#allocation6 + $0xd8] sm:$0xff] 0.0
          %1072 = vst [vmem:[#allocation6 + $0xe0] sm:$0xff] 0.0
          %1073 = vst [vmem:[#allocation6 + $0xe8] sm:$0xff] 0.0
          %1074 = vst [vmem:[#allocation6 + $0xf0] sm:$0xff] 0.0
          %1075 = vst [vmem:[#allocation6 + $0xf8] sm:$0xff] 0.0
        $region170: #{tpu_custom_call.1} parent=145 // pred_fallthru
          _
        %p1076 = scmp.lt.s32.totalorder %s24, 1
        // Predicated region
        $region175: #{tpu_custom_call.1} parent=145 // pred_check
          %p1077 = pneg %p1076
        $region176: #{tpu_custom_call.1} parent=145 // pred_check_branch
          %1079 = sbr.rel (%p1077) target = $region178
        $region177: #{tpu_custom_call.1} parent=145 // pred_region
          %v1080 = vld [vmem:[%s879] sm:$0xff]
          %v1081 = vld [vmem:[%s879 + $0x8] sm:$0xff]
          %v1082 = vld [vmem:[%s879 + $0x10] sm:$0xff]
          %v1083 = vld [vmem:[%s879 + $0x18] sm:$0xff]
          %v1084 = vld [vmem:[%s879 + $0x20] sm:$0xff]
          %v1085 = vld [vmem:[%s879 + $0x28] sm:$0xff]
          %v1086 = vld [vmem:[%s879 + $0x30] sm:$0xff]
          %v1087 = vld [vmem:[%s879 + $0x38] sm:$0xff]
          %v1088 = vld [vmem:[%s879 + $0x40] sm:$0xff]
          %v1089 = vld [vmem:[%s879 + $0x48] sm:$0xff]
          %v1090 = vld [vmem:[%s879 + $0x50] sm:$0xff]
          %v1091 = vld [vmem:[%s879 + $0x58] sm:$0xff]
          %v1092 = vld [vmem:[%s879 + $0x60] sm:$0xff]
          %v1093 = vld [vmem:[%s879 + $0x68] sm:$0xff]
          %v1094 = vld [vmem:[%s879 + $0x70] sm:$0xff]
          %v1095 = vld [vmem:[%s879 + $0x78] sm:$0xff]
          %v1096 = vld [vmem:[%s879 + $0x80] sm:$0xff]
          %v1097 = vld [vmem:[%s879 + $0x88] sm:$0xff]
          %v1098 = vld [vmem:[%s879 + $0x90] sm:$0xff]
          %v1099 = vld [vmem:[%s879 + $0x98] sm:$0xff]
          %v1100 = vld [vmem:[%s879 + $0xa0] sm:$0xff]
          %v1101 = vld [vmem:[%s879 + $0xa8] sm:$0xff]
          %v1102 = vld [vmem:[%s879 + $0xb0] sm:$0xff]
          %v1103 = vld [vmem:[%s879 + $0xb8] sm:$0xff]
          %v1104 = vld [vmem:[%s879 + $0xc0] sm:$0xff]
          %v1105 = vld [vmem:[%s879 + $0xc8] sm:$0xff]
          %v1106 = vld [vmem:[%s879 + $0xd0] sm:$0xff]
          %v1107 = vld [vmem:[%s879 + $0xd8] sm:$0xff]
          %v1108 = vld [vmem:[%s879 + $0xe0] sm:$0xff]
          %v1109 = vld [vmem:[%s879 + $0xe8] sm:$0xff]
          %v1110 = vld [vmem:[%s879 + $0xf0] sm:$0xff]
          %v1111 = vld [vmem:[%s879 + $0xf8] sm:$0xff]
          %v1112 = vld [vmem:[#allocation4] sm:$0xff]
          %v1113 = vld [vmem:[#allocation4 + $0x8] sm:$0xff]
          %v1114 = vld [vmem:[#allocation4 + $0x10] sm:$0xff]
          %v1115 = vld [vmem:[#allocation4 + $0x18] sm:$0xff]
          %v1116 = vld [vmem:[#allocation4 + $0x20] sm:$0xff]
          %v1117 = vld [vmem:[#allocation4 + $0x28] sm:$0xff]
          %v1118 = vld [vmem:[#allocation4 + $0x30] sm:$0xff]
          %v1119 = vld [vmem:[#allocation4 + $0x38] sm:$0xff]
          %v1120 = vld [vmem:[#allocation4 + $0x40] sm:$0xff]
          %v1121 = vld [vmem:[#allocation4 + $0x48] sm:$0xff]
          %v1122 = vld [vmem:[#allocation4 + $0x50] sm:$0xff]
          %v1123 = vld [vmem:[#allocation4 + $0x58] sm:$0xff]
          %v1124 = vld [vmem:[#allocation4 + $0x60] sm:$0xff]
          %v1125 = vld [vmem:[#allocation4 + $0x68] sm:$0xff]
          %v1126 = vld [vmem:[#allocation4 + $0x70] sm:$0xff]
          %v1127 = vld [vmem:[#allocation4 + $0x78] sm:$0xff]
          %v1128 = vld [vmem:[#allocation4 + $0x80] sm:$0xff]
          %v1129 = vld [vmem:[#allocation4 + $0x88] sm:$0xff]
          %v1130 = vld [vmem:[#allocation4 + $0x90] sm:$0xff]
          %v1131 = vld [vmem:[#allocation4 + $0x98] sm:$0xff]
          %v1132 = vld [vmem:[#allocation4 + $0xa0] sm:$0xff]
          %v1133 = vld [vmem:[#allocation4 + $0xa8] sm:$0xff]
          %v1134 = vld [vmem:[#allocation4 + $0xb0] sm:$0xff]
          %v1135 = vld [vmem:[#allocation4 + $0xb8] sm:$0xff]
          %v1136 = vld [vmem:[#allocation4 + $0xc0] sm:$0xff]
          %v1137 = vld [vmem:[#allocation4 + $0xc8] sm:$0xff]
          %v1138 = vld [vmem:[#allocation4 + $0xd0] sm:$0xff]
          %v1139 = vld [vmem:[#allocation4 + $0xd8] sm:$0xff]
          %v1140 = vld [vmem:[#allocation4 + $0xe0] sm:$0xff]
          %v1141 = vld [vmem:[#allocation4 + $0xe8] sm:$0xff]
          %v1142 = vld [vmem:[#allocation4 + $0xf0] sm:$0xff]
          %v1143 = vld [vmem:[#allocation4 + $0xf8] sm:$0xff]
          %v1144 = vadd.f32 %v1112, %v1080
          %v1145 = vadd.f32 %v1113, %v1081
          %v1146 = vadd.f32 %v1114, %v1082
          %v1147 = vadd.f32 %v1115, %v1083
          %v1148 = vadd.f32 %v1116, %v1084
          %v1149 = vadd.f32 %v1117, %v1085
          %v1150 = vadd.f32 %v1118, %v1086
          %v1151 = vadd.f32 %v1119, %v1087
          %v1152 = vadd.f32 %v1120, %v1088
          %v1153 = vadd.f32 %v1121, %v1089
          %v1154 = vadd.f32 %v1122, %v1090
          %v1155 = vadd.f32 %v1123, %v1091
          %v1156 = vadd.f32 %v1124, %v1092
          %v1157 = vadd.f32 %v1125, %v1093
          %v1158 = vadd.f32 %v1126, %v1094
          %v1159 = vadd.f32 %v1127, %v1095
          %v1160 = vadd.f32 %v1128, %v1096
          %v1161 = vadd.f32 %v1129, %v1097
          %v1162 = vadd.f32 %v1130, %v1098
          %v1163 = vadd.f32 %v1131, %v1099
          %v1164 = vadd.f32 %v1132, %v1100
          %v1165 = vadd.f32 %v1133, %v1101
          %v1166 = vadd.f32 %v1134, %v1102
          %v1167 = vadd.f32 %v1135, %v1103
          %v1168 = vadd.f32 %v1136, %v1104
          %v1169 = vadd.f32 %v1137, %v1105
          %v1170 = vadd.f32 %v1138, %v1106
          %v1171 = vadd.f32 %v1139, %v1107
          %v1172 = vadd.f32 %v1140, %v1108
          %v1173 = vadd.f32 %v1141, %v1109
          %v1174 = vadd.f32 %v1142, %v1110
          %v1175 = vadd.f32 %v1143, %v1111
          %1176 = vst [vmem:[#allocation4] sm:$0xff] %v1144
          %1177 = vst [vmem:[#allocation4 + $0x8] sm:$0xff] %v1145
          %1178 = vst [vmem:[#allocation4 + $0x10] sm:$0xff] %v1146
          %1179 = vst [vmem:[#allocation4 + $0x18] sm:$0xff] %v1147
          %1180 = vst [vmem:[#allocation4 + $0x20] sm:$0xff] %v1148
          %1181 = vst [vmem:[#allocation4 + $0x28] sm:$0xff] %v1149
          %1182 = vst [vmem:[#allocation4 + $0x30] sm:$0xff] %v1150
          %1183 = vst [vmem:[#allocation4 + $0x38] sm:$0xff] %v1151
          %1184 = vst [vmem:[#allocation4 + $0x40] sm:$0xff] %v1152
          %1185 = vst [vmem:[#allocation4 + $0x48] sm:$0xff] %v1153
          %1186 = vst [vmem:[#allocation4 + $0x50] sm:$0xff] %v1154
          %1187 = vst [vmem:[#allocation4 + $0x58] sm:$0xff] %v1155
          %1188 = vst [vmem:[#allocation4 + $0x60] sm:$0xff] %v1156
          %1189 = vst [vmem:[#allocation4 + $0x68] sm:$0xff] %v1157
          %1190 = vst [vmem:[#allocation4 + $0x70] sm:$0xff] %v1158
          %1191 = vst [vmem:[#allocation4 + $0x78] sm:$0xff] %v1159
          %1192 = vst [vmem:[#allocation4 + $0x80] sm:$0xff] %v1160
          %1193 = vst [vmem:[#allocation4 + $0x88] sm:$0xff] %v1161
          %1194 = vst [vmem:[#allocation4 + $0x90] sm:$0xff] %v1162
          %1195 = vst [vmem:[#allocation4 + $0x98] sm:$0xff] %v1163
          %1196 = vst [vmem:[#allocation4 + $0xa0] sm:$0xff] %v1164
          %1197 = vst [vmem:[#allocation4 + $0xa8] sm:$0xff] %v1165
          %1198 = vst [vmem:[#allocation4 + $0xb0] sm:$0xff] %v1166
          %1199 = vst [vmem:[#allocation4 + $0xb8] sm:$0xff] %v1167
          %1200 = vst [vmem:[#allocation4 + $0xc0] sm:$0xff] %v1168
          %1201 = vst [vmem:[#allocation4 + $0xc8] sm:$0xff] %v1169
          %1202 = vst [vmem:[#allocation4 + $0xd0] sm:$0xff] %v1170
          %1203 = vst [vmem:[#allocation4 + $0xd8] sm:$0xff] %v1171
          %1204 = vst [vmem:[#allocation4 + $0xe0] sm:$0xff] %v1172
          %1205 = vst [vmem:[#allocation4 + $0xe8] sm:$0xff] %v1173
          %1206 = vst [vmem:[#allocation4 + $0xf0] sm:$0xff] %v1174
          %1207 = vst [vmem:[#allocation4 + $0xf8] sm:$0xff] %v1175
          %v1208 = vld [vmem:[%s886] sm:$0xff]
          %v1209 = vld [vmem:[%s886 + $0x8] sm:$0xff]
          %v1210 = vld [vmem:[%s886 + $0x10] sm:$0xff]
          %v1211 = vld [vmem:[%s886 + $0x18] sm:$0xff]
          %v1212 = vld [vmem:[%s886 + $0x20] sm:$0xff]
          %v1213 = vld [vmem:[%s886 + $0x28] sm:$0xff]
          %v1214 = vld [vmem:[%s886 + $0x30] sm:$0xff]
          %v1215 = vld [vmem:[%s886 + $0x38] sm:$0xff]
          %v1216 = vld [vmem:[%s886 + $0x40] sm:$0xff]
          %v1217 = vld [vmem:[%s886 + $0x48] sm:$0xff]
          %v1218 = vld [vmem:[%s886 + $0x50] sm:$0xff]
          %v1219 = vld [vmem:[%s886 + $0x58] sm:$0xff]
          %v1220 = vld [vmem:[%s886 + $0x60] sm:$0xff]
          %v1221 = vld [vmem:[%s886 + $0x68] sm:$0xff]
          %v1222 = vld [vmem:[%s886 + $0x70] sm:$0xff]
          %v1223 = vld [vmem:[%s886 + $0x78] sm:$0xff]
          %v1224 = vld [vmem:[%s886 + $0x80] sm:$0xff]
          %v1225 = vld [vmem:[%s886 + $0x88] sm:$0xff]
          %v1226 = vld [vmem:[%s886 + $0x90] sm:$0xff]
          %v1227 = vld [vmem:[%s886 + $0x98] sm:$0xff]
          %v1228 = vld [vmem:[%s886 + $0xa0] sm:$0xff]
          %v1229 = vld [vmem:[%s886 + $0xa8] sm:$0xff]
          %v1230 = vld [vmem:[%s886 + $0xb0] sm:$0xff]
          %v1231 = vld [vmem:[%s886 + $0xb8] sm:$0xff]
          %v1232 = vld [vmem:[%s886 + $0xc0] sm:$0xff]
          %v1233 = vld [vmem:[%s886 + $0xc8] sm:$0xff]
          %v1234 = vld [vmem:[%s886 + $0xd0] sm:$0xff]
          %v1235 = vld [vmem:[%s886 + $0xd8] sm:$0xff]
          %v1236 = vld [vmem:[%s886 + $0xe0] sm:$0xff]
          %v1237 = vld [vmem:[%s886 + $0xe8] sm:$0xff]
          %v1238 = vld [vmem:[%s886 + $0xf0] sm:$0xff]
          %v1239 = vld [vmem:[%s886 + $0xf8] sm:$0xff]
          %v1240 = vld [vmem:[%s886 + $0x100] sm:$0xff]
          %v1241 = vld [vmem:[%s886 + $0x108] sm:$0xff]
          %v1242 = vld [vmem:[%s886 + $0x110] sm:$0xff]
          %v1243 = vld [vmem:[%s886 + $0x118] sm:$0xff]
          %v1244 = vld [vmem:[%s886 + $0x120] sm:$0xff]
          %v1245 = vld [vmem:[%s886 + $0x128] sm:$0xff]
          %v1246 = vld [vmem:[%s886 + $0x130] sm:$0xff]
          %v1247 = vld [vmem:[%s886 + $0x138] sm:$0xff]
          %v1248 = vld [vmem:[%s886 + $0x140] sm:$0xff]
          %v1249 = vld [vmem:[%s886 + $0x148] sm:$0xff]
          %v1250 = vld [vmem:[%s886 + $0x150] sm:$0xff]
          %v1251 = vld [vmem:[%s886 + $0x158] sm:$0xff]
          %v1252 = vld [vmem:[%s886 + $0x160] sm:$0xff]
          %v1253 = vld [vmem:[%s886 + $0x168] sm:$0xff]
          %v1254 = vld [vmem:[%s886 + $0x170] sm:$0xff]
          %v1255 = vld [vmem:[%s886 + $0x178] sm:$0xff]
          %v1256 = vld [vmem:[%s886 + $0x180] sm:$0xff]
          %v1257 = vld [vmem:[%s886 + $0x188] sm:$0xff]
          %v1258 = vld [vmem:[%s886 + $0x190] sm:$0xff]
          %v1259 = vld [vmem:[%s886 + $0x198] sm:$0xff]
          %v1260 = vld [vmem:[%s886 + $0x1a0] sm:$0xff]
          %v1261 = vld [vmem:[%s886 + $0x1a8] sm:$0xff]
          %v1262 = vld [vmem:[%s886 + $0x1b0] sm:$0xff]
          %v1263 = vld [vmem:[%s886 + $0x1b8] sm:$0xff]
          %v1264 = vld [vmem:[%s886 + $0x1c0] sm:$0xff]
          %v1265 = vld [vmem:[%s886 + $0x1c8] sm:$0xff]
          %v1266 = vld [vmem:[%s886 + $0x1d0] sm:$0xff]
          %v1267 = vld [vmem:[%s886 + $0x1d8] sm:$0xff]
          %v1268 = vld [vmem:[%s886 + $0x1e0] sm:$0xff]
          %v1269 = vld [vmem:[%s886 + $0x1e8] sm:$0xff]
          %v1270 = vld [vmem:[%s886 + $0x1f0] sm:$0xff]
          %v1271 = vld [vmem:[%s886 + $0x1f8] sm:$0xff]
          %v1272 = vld [vmem:[#allocation5] sm:$0xff]
          %v1273 = vld [vmem:[#allocation5 + $0x8] sm:$0xff]
          %v1274 = vld [vmem:[#allocation5 + $0x10] sm:$0xff]
          %v1275 = vld [vmem:[#allocation5 + $0x18] sm:$0xff]
          %v1276 = vld [vmem:[#allocation5 + $0x20] sm:$0xff]
          %v1277 = vld [vmem:[#allocation5 + $0x28] sm:$0xff]
          %v1278 = vld [vmem:[#allocation5 + $0x30] sm:$0xff]
          %v1279 = vld [vmem:[#allocation5 + $0x38] sm:$0xff]
          %v1280 = vld [vmem:[#allocation5 + $0x40] sm:$0xff]
          %v1281 = vld [vmem:[#allocation5 + $0x48] sm:$0xff]
          %v1282 = vld [vmem:[#allocation5 + $0x50] sm:$0xff]
          %v1283 = vld [vmem:[#allocation5 + $0x58] sm:$0xff]
          %v1284 = vld [vmem:[#allocation5 + $0x60] sm:$0xff]
          %v1285 = vld [vmem:[#allocation5 + $0x68] sm:$0xff]
          %v1286 = vld [vmem:[#allocation5 + $0x70] sm:$0xff]
          %v1287 = vld [vmem:[#allocation5 + $0x78] sm:$0xff]
          %v1288 = vld [vmem:[#allocation5 + $0x80] sm:$0xff]
          %v1289 = vld [vmem:[#allocation5 + $0x88] sm:$0xff]
          %v1290 = vld [vmem:[#allocation5 + $0x90] sm:$0xff]
          %v1291 = vld [vmem:[#allocation5 + $0x98] sm:$0xff]
          %v1292 = vld [vmem:[#allocation5 + $0xa0] sm:$0xff]
          %v1293 = vld [vmem:[#allocation5 + $0xa8] sm:$0xff]
          %v1294 = vld [vmem:[#allocation5 + $0xb0] sm:$0xff]
          %v1295 = vld [vmem:[#allocation5 + $0xb8] sm:$0xff]
          %v1296 = vld [vmem:[#allocation5 + $0xc0] sm:$0xff]
          %v1297 = vld [vmem:[#allocation5 + $0xc8] sm:$0xff]
          %v1298 = vld [vmem:[#allocation5 + $0xd0] sm:$0xff]
          %v1299 = vld [vmem:[#allocation5 + $0xd8] sm:$0xff]
          %v1300 = vld [vmem:[#allocation5 + $0xe0] sm:$0xff]
          %v1301 = vld [vmem:[#allocation5 + $0xe8] sm:$0xff]
          %v1302 = vld [vmem:[#allocation5 + $0xf0] sm:$0xff]
          %v1303 = vld [vmem:[#allocation5 + $0xf8] sm:$0xff]
          %v1304 = vld [vmem:[#allocation5 + $0x100] sm:$0xff]
          %v1305 = vld [vmem:[#allocation5 + $0x108] sm:$0xff]
          %v1306 = vld [vmem:[#allocation5 + $0x110] sm:$0xff]
          %v1307 = vld [vmem:[#allocation5 + $0x118] sm:$0xff]
          %v1308 = vld [vmem:[#allocation5 + $0x120] sm:$0xff]
          %v1309 = vld [vmem:[#allocation5 + $0x128] sm:$0xff]
          %v1310 = vld [vmem:[#allocation5 + $0x130] sm:$0xff]
          %v1311 = vld [vmem:[#allocation5 + $0x138] sm:$0xff]
          %v1312 = vld [vmem:[#allocation5 + $0x140] sm:$0xff]
          %v1313 = vld [vmem:[#allocation5 + $0x148] sm:$0xff]
          %v1314 = vld [vmem:[#allocation5 + $0x150] sm:$0xff]
          %v1315 = vld [vmem:[#allocation5 + $0x158] sm:$0xff]
          %v1316 = vld [vmem:[#allocation5 + $0x160] sm:$0xff]
          %v1317 = vld [vmem:[#allocation5 + $0x168] sm:$0xff]
          %v1318 = vld [vmem:[#allocation5 + $0x170] sm:$0xff]
          %v1319 = vld [vmem:[#allocation5 + $0x178] sm:$0xff]
          %v1320 = vld [vmem:[#allocation5 + $0x180] sm:$0xff]
          %v1321 = vld [vmem:[#allocation5 + $0x188] sm:$0xff]
          %v1322 = vld [vmem:[#allocation5 + $0x190] sm:$0xff]
          %v1323 = vld [vmem:[#allocation5 + $0x198] sm:$0xff]
          %v1324 = vld [vmem:[#allocation5 + $0x1a0] sm:$0xff]
          %v1325 = vld [vmem:[#allocation5 + $0x1a8] sm:$0xff]
          %v1326 = vld [vmem:[#allocation5 + $0x1b0] sm:$0xff]
          %v1327 = vld [vmem:[#allocation5 + $0x1b8] sm:$0xff]
          %v1328 = vld [vmem:[#allocation5 + $0x1c0] sm:$0xff]
          %v1329 = vld [vmem:[#allocation5 + $0x1c8] sm:$0xff]
          %v1330 = vld [vmem:[#allocation5 + $0x1d0] sm:$0xff]
          %v1331 = vld [vmem:[#allocation5 + $0x1d8] sm:$0xff]
          %v1332 = vld [vmem:[#allocation5 + $0x1e0] sm:$0xff]
          %v1333 = vld [vmem:[#allocation5 + $0x1e8] sm:$0xff]
          %v1334 = vld [vmem:[#allocation5 + $0x1f0] sm:$0xff]
          %v1335 = vld [vmem:[#allocation5 + $0x1f8] sm:$0xff]
          %v1336 = vadd.f32 %v1272, %v1208
          %v1337 = vadd.f32 %v1273, %v1209
          %v1338 = vadd.f32 %v1274, %v1210
          %v1339 = vadd.f32 %v1275, %v1211
          %v1340 = vadd.f32 %v1276, %v1212
          %v1341 = vadd.f32 %v1277, %v1213
          %v1342 = vadd.f32 %v1278, %v1214
          %v1343 = vadd.f32 %v1279, %v1215
          %v1344 = vadd.f32 %v1280, %v1216
          %v1345 = vadd.f32 %v1281, %v1217
          %v1346 = vadd.f32 %v1282, %v1218
          %v1347 = vadd.f32 %v1283, %v1219
          %v1348 = vadd.f32 %v1284, %v1220
          %v1349 = vadd.f32 %v1285, %v1221
          %v1350 = vadd.f32 %v1286, %v1222
          %v1351 = vadd.f32 %v1287, %v1223
          %v1352 = vadd.f32 %v1288, %v1224
          %v1353 = vadd.f32 %v1289, %v1225
          %v1354 = vadd.f32 %v1290, %v1226
          %v1355 = vadd.f32 %v1291, %v1227
          %v1356 = vadd.f32 %v1292, %v1228
          %v1357 = vadd.f32 %v1293, %v1229
          %v1358 = vadd.f32 %v1294, %v1230
          %v1359 = vadd.f32 %v1295, %v1231
          %v1360 = vadd.f32 %v1296, %v1232
          %v1361 = vadd.f32 %v1297, %v1233
          %v1362 = vadd.f32 %v1298, %v1234
          %v1363 = vadd.f32 %v1299, %v1235
          %v1364 = vadd.f32 %v1300, %v1236
          %v1365 = vadd.f32 %v1301, %v1237
          %v1366 = vadd.f32 %v1302, %v1238
          %v1367 = vadd.f32 %v1303, %v1239
          %v1368 = vadd.f32 %v1304, %v1240
          %v1369 = vadd.f32 %v1305, %v1241
          %v1370 = vadd.f32 %v1306, %v1242
          %v1371 = vadd.f32 %v1307, %v1243
          %v1372 = vadd.f32 %v1308, %v1244
          %v1373 = vadd.f32 %v1309, %v1245
          %v1374 = vadd.f32 %v1310, %v1246
          %v1375 = vadd.f32 %v1311, %v1247
          %v1376 = vadd.f32 %v1312, %v1248
          %v1377 = vadd.f32 %v1313, %v1249
          %v1378 = vadd.f32 %v1314, %v1250
          %v1379 = vadd.f32 %v1315, %v1251
          %v1380 = vadd.f32 %v1316, %v1252
          %v1381 = vadd.f32 %v1317, %v1253
          %v1382 = vadd.f32 %v1318, %v1254
          %v1383 = vadd.f32 %v1319, %v1255
          %v1384 = vadd.f32 %v1320, %v1256
          %v1385 = vadd.f32 %v1321, %v1257
          %v1386 = vadd.f32 %v1322, %v1258
          %v1387 = vadd.f32 %v1323, %v1259
          %v1388 = vadd.f32 %v1324, %v1260
          %v1389 = vadd.f32 %v1325, %v1261
          %v1390 = vadd.f32 %v1326, %v1262
          %v1391 = vadd.f32 %v1327, %v1263
          %v1392 = vadd.f32 %v1328, %v1264
          %v1393 = vadd.f32 %v1329, %v1265
          %v1394 = vadd.f32 %v1330, %v1266
          %v1395 = vadd.f32 %v1331, %v1267
          %v1396 = vadd.f32 %v1332, %v1268
          %v1397 = vadd.f32 %v1333, %v1269
          %v1398 = vadd.f32 %v1334, %v1270
          %v1399 = vadd.f32 %v1335, %v1271
          %1400 = vst [vmem:[#allocation5] sm:$0xff] %v1336
          %1401 = vst [vmem:[#allocation5 + $0x8] sm:$0xff] %v1337
          %1402 = vst [vmem:[#allocation5 + $0x10] sm:$0xff] %v1338
          %1403 = vst [vmem:[#allocation5 + $0x18] sm:$0xff] %v1339
          %1404 = vst [vmem:[#allocation5 + $0x20] sm:$0xff] %v1340
          %1405 = vst [vmem:[#allocation5 + $0x28] sm:$0xff] %v1341
          %1406 = vst [vmem:[#allocation5 + $0x30] sm:$0xff] %v1342
          %1407 = vst [vmem:[#allocation5 + $0x38] sm:$0xff] %v1343
          %1408 = vst [vmem:[#allocation5 + $0x40] sm:$0xff] %v1344
          %1409 = vst [vmem:[#allocation5 + $0x48] sm:$0xff] %v1345
          %1410 = vst [vmem:[#allocation5 + $0x50] sm:$0xff] %v1346
          %1411 = vst [vmem:[#allocation5 + $0x58] sm:$0xff] %v1347
          %1412 = vst [vmem:[#allocation5 + $0x60] sm:$0xff] %v1348
          %1413 = vst [vmem:[#allocation5 + $0x68] sm:$0xff] %v1349
          %1414 = vst [vmem:[#allocation5 + $0x70] sm:$0xff] %v1350
          %1415 = vst [vmem:[#allocation5 + $0x78] sm:$0xff] %v1351
          %1416 = vst [vmem:[#allocation5 + $0x80] sm:$0xff] %v1352
          %1417 = vst [vmem:[#allocation5 + $0x88] sm:$0xff] %v1353
          %1418 = vst [vmem:[#allocation5 + $0x90] sm:$0xff] %v1354
          %1419 = vst [vmem:[#allocation5 + $0x98] sm:$0xff] %v1355
          %1420 = vst [vmem:[#allocation5 + $0xa0] sm:$0xff] %v1356
          %1421 = vst [vmem:[#allocation5 + $0xa8] sm:$0xff] %v1357
          %1422 = vst [vmem:[#allocation5 + $0xb0] sm:$0xff] %v1358
          %1423 = vst [vmem:[#allocation5 + $0xb8] sm:$0xff] %v1359
          %1424 = vst [vmem:[#allocation5 + $0xc0] sm:$0xff] %v1360
          %1425 = vst [vmem:[#allocation5 + $0xc8] sm:$0xff] %v1361
          %1426 = vst [vmem:[#allocation5 + $0xd0] sm:$0xff] %v1362
          %1427 = vst [vmem:[#allocation5 + $0xd8] sm:$0xff] %v1363
          %1428 = vst [vmem:[#allocation5 + $0xe0] sm:$0xff] %v1364
          %1429 = vst [vmem:[#allocation5 + $0xe8] sm:$0xff] %v1365
          %1430 = vst [vmem:[#allocation5 + $0xf0] sm:$0xff] %v1366
          %1431 = vst [vmem:[#allocation5 + $0xf8] sm:$0xff] %v1367
          %1432 = vst [vmem:[#allocation5 + $0x100] sm:$0xff] %v1368
          %1433 = vst [vmem:[#allocation5 + $0x108] sm:$0xff] %v1369
          %1434 = vst [vmem:[#allocation5 + $0x110] sm:$0xff] %v1370
          %1435 = vst [vmem:[#allocation5 + $0x118] sm:$0xff] %v1371
          %1436 = vst [vmem:[#allocation5 + $0x120] sm:$0xff] %v1372
          %1437 = vst [vmem:[#allocation5 + $0x128] sm:$0xff] %v1373
          %1438 = vst [vmem:[#allocation5 + $0x130] sm:$0xff] %v1374
          %1439 = vst [vmem:[#allocation5 + $0x138] sm:$0xff] %v1375
          %1440 = vst [vmem:[#allocation5 + $0x140] sm:$0xff] %v1376
          %1441 = vst [vmem:[#allocation5 + $0x148] sm:$0xff] %v1377
          %1442 = vst [vmem:[#allocation5 + $0x150] sm:$0xff] %v1378
          %1443 = vst [vmem:[#allocation5 + $0x158] sm:$0xff] %v1379
          %1444 = vst [vmem:[#allocation5 + $0x160] sm:$0xff] %v1380
          %1445 = vst [vmem:[#allocation5 + $0x168] sm:$0xff] %v1381
          %1446 = vst [vmem:[#allocation5 + $0x170] sm:$0xff] %v1382
          %1447 = vst [vmem:[#allocation5 + $0x178] sm:$0xff] %v1383
          %1448 = vst [vmem:[#allocation5 + $0x180] sm:$0xff] %v1384
          %1449 = vst [vmem:[#allocation5 + $0x188] sm:$0xff] %v1385
          %1450 = vst [vmem:[#allocation5 + $0x190] sm:$0xff] %v1386
          %1451 = vst [vmem:[#allocation5 + $0x198] sm:$0xff] %v1387
          %1452 = vst [vmem:[#allocation5 + $0x1a0] sm:$0xff] %v1388
          %1453 = vst [vmem:[#allocation5 + $0x1a8] sm:$0xff] %v1389
          %1454 = vst [vmem:[#allocation5 + $0x1b0] sm:$0xff] %v1390
          %1455 = vst [vmem:[#allocation5 + $0x1b8] sm:$0xff] %v1391
          %1456 = vst [vmem:[#allocation5 + $0x1c0] sm:$0xff] %v1392
          %1457 = vst [vmem:[#allocation5 + $0x1c8] sm:$0xff] %v1393
          %1458 = vst [vmem:[#allocation5 + $0x1d0] sm:$0xff] %v1394
          %1459 = vst [vmem:[#allocation5 + $0x1d8] sm:$0xff] %v1395
          %1460 = vst [vmem:[#allocation5 + $0x1e0] sm:$0xff] %v1396
          %1461 = vst [vmem:[#allocation5 + $0x1e8] sm:$0xff] %v1397
          %1462 = vst [vmem:[#allocation5 + $0x1f0] sm:$0xff] %v1398
          %1463 = vst [vmem:[#allocation5 + $0x1f8] sm:$0xff] %v1399
          %v1464 = vld [vmem:[%s893] sm:$0xff]
          %v1465 = vld [vmem:[%s893 + $0x8] sm:$0xff]
          %v1466 = vld [vmem:[%s893 + $0x10] sm:$0xff]
          %v1467 = vld [vmem:[%s893 + $0x18] sm:$0xff]
          %v1468 = vld [vmem:[%s893 + $0x20] sm:$0xff]
          %v1469 = vld [vmem:[%s893 + $0x28] sm:$0xff]
          %v1470 = vld [vmem:[%s893 + $0x30] sm:$0xff]
          %v1471 = vld [vmem:[%s893 + $0x38] sm:$0xff]
          %v1472 = vld [vmem:[%s893 + $0x40] sm:$0xff]
          %v1473 = vld [vmem:[%s893 + $0x48] sm:$0xff]
          %v1474 = vld [vmem:[%s893 + $0x50] sm:$0xff]
          %v1475 = vld [vmem:[%s893 + $0x58] sm:$0xff]
          %v1476 = vld [vmem:[%s893 + $0x60] sm:$0xff]
          %v1477 = vld [vmem:[%s893 + $0x68] sm:$0xff]
          %v1478 = vld [vmem:[%s893 + $0x70] sm:$0xff]
          %v1479 = vld [vmem:[%s893 + $0x78] sm:$0xff]
          %v1480 = vld [vmem:[%s893 + $0x80] sm:$0xff]
          %v1481 = vld [vmem:[%s893 + $0x88] sm:$0xff]
          %v1482 = vld [vmem:[%s893 + $0x90] sm:$0xff]
          %v1483 = vld [vmem:[%s893 + $0x98] sm:$0xff]
          %v1484 = vld [vmem:[%s893 + $0xa0] sm:$0xff]
          %v1485 = vld [vmem:[%s893 + $0xa8] sm:$0xff]
          %v1486 = vld [vmem:[%s893 + $0xb0] sm:$0xff]
          %v1487 = vld [vmem:[%s893 + $0xb8] sm:$0xff]
          %v1488 = vld [vmem:[%s893 + $0xc0] sm:$0xff]
          %v1489 = vld [vmem:[%s893 + $0xc8] sm:$0xff]
          %v1490 = vld [vmem:[%s893 + $0xd0] sm:$0xff]
          %v1491 = vld [vmem:[%s893 + $0xd8] sm:$0xff]
          %v1492 = vld [vmem:[%s893 + $0xe0] sm:$0xff]
          %v1493 = vld [vmem:[%s893 + $0xe8] sm:$0xff]
          %v1494 = vld [vmem:[%s893 + $0xf0] sm:$0xff]
          %v1495 = vld [vmem:[%s893 + $0xf8] sm:$0xff]
          %v1496 = vld [vmem:[#allocation6] sm:$0xff]
          %v1497 = vld [vmem:[#allocation6 + $0x8] sm:$0xff]
          %v1498 = vld [vmem:[#allocation6 + $0x10] sm:$0xff]
          %v1499 = vld [vmem:[#allocation6 + $0x18] sm:$0xff]
          %v1500 = vld [vmem:[#allocation6 + $0x20] sm:$0xff]
          %v1501 = vld [vmem:[#allocation6 + $0x28] sm:$0xff]
          %v1502 = vld [vmem:[#allocation6 + $0x30] sm:$0xff]
          %v1503 = vld [vmem:[#allocation6 + $0x38] sm:$0xff]
          %v1504 = vld [vmem:[#allocation6 + $0x40] sm:$0xff]
          %v1505 = vld [vmem:[#allocation6 + $0x48] sm:$0xff]
          %v1506 = vld [vmem:[#allocation6 + $0x50] sm:$0xff]
          %v1507 = vld [vmem:[#allocation6 + $0x58] sm:$0xff]
          %v1508 = vld [vmem:[#allocation6 + $0x60] sm:$0xff]
          %v1509 = vld [vmem:[#allocation6 + $0x68] sm:$0xff]
          %v1510 = vld [vmem:[#allocation6 + $0x70] sm:$0xff]
          %v1511 = vld [vmem:[#allocation6 + $0x78] sm:$0xff]
          %v1512 = vld [vmem:[#allocation6 + $0x80] sm:$0xff]
          %v1513 = vld [vmem:[#allocation6 + $0x88] sm:$0xff]
          %v1514 = vld [vmem:[#allocation6 + $0x90] sm:$0xff]
          %v1515 = vld [vmem:[#allocation6 + $0x98] sm:$0xff]
          %v1516 = vld [vmem:[#allocation6 + $0xa0] sm:$0xff]
          %v1517 = vld [vmem:[#allocation6 + $0xa8] sm:$0xff]
          %v1518 = vld [vmem:[#allocation6 + $0xb0] sm:$0xff]
          %v1519 = vld [vmem:[#allocation6 + $0xb8] sm:$0xff]
          %v1520 = vld [vmem:[#allocation6 + $0xc0] sm:$0xff]
          %v1521 = vld [vmem:[#allocation6 + $0xc8] sm:$0xff]
          %v1522 = vld [vmem:[#allocation6 + $0xd0] sm:$0xff]
          %v1523 = vld [vmem:[#allocation6 + $0xd8] sm:$0xff]
          %v1524 = vld [vmem:[#allocation6 + $0xe0] sm:$0xff]
          %v1525 = vld [vmem:[#allocation6 + $0xe8] sm:$0xff]
          %v1526 = vld [vmem:[#allocation6 + $0xf0] sm:$0xff]
          %v1527 = vld [vmem:[#allocation6 + $0xf8] sm:$0xff]
          %v1528 = vadd.f32 %v1496, %v1464
          %v1529 = vadd.f32 %v1497, %v1465
          %v1530 = vadd.f32 %v1498, %v1466
          %v1531 = vadd.f32 %v1499, %v1467
          %v1532 = vadd.f32 %v1500, %v1468
          %v1533 = vadd.f32 %v1501, %v1469
          %v1534 = vadd.f32 %v1502, %v1470
          %v1535 = vadd.f32 %v1503, %v1471
          %v1536 = vadd.f32 %v1504, %v1472
          %v1537 = vadd.f32 %v1505, %v1473
          %v1538 = vadd.f32 %v1506, %v1474
          %v1539 = vadd.f32 %v1507, %v1475
          %v1540 = vadd.f32 %v1508, %v1476
          %v1541 = vadd.f32 %v1509, %v1477
          %v1542 = vadd.f32 %v1510, %v1478
          %v1543 = vadd.f32 %v1511, %v1479
          %v1544 = vadd.f32 %v1512, %v1480
          %v1545 = vadd.f32 %v1513, %v1481
          %v1546 = vadd.f32 %v1514, %v1482
          %v1547 = vadd.f32 %v1515, %v1483
          %v1548 = vadd.f32 %v1516, %v1484
          %v1549 = vadd.f32 %v1517, %v1485
          %v1550 = vadd.f32 %v1518, %v1486
          %v1551 = vadd.f32 %v1519, %v1487
          %v1552 = vadd.f32 %v1520, %v1488
          %v1553 = vadd.f32 %v1521, %v1489
          %v1554 = vadd.f32 %v1522, %v1490
          %v1555 = vadd.f32 %v1523, %v1491
          %v1556 = vadd.f32 %v1524, %v1492
          %v1557 = vadd.f32 %v1525, %v1493
          %v1558 = vadd.f32 %v1526, %v1494
          %v1559 = vadd.f32 %v1527, %v1495
          %1560 = vst [vmem:[#allocation6] sm:$0xff] %v1528
          %1561 = vst [vmem:[#allocation6 + $0x8] sm:$0xff] %v1529
          %1562 = vst [vmem:[#allocation6 + $0x10] sm:$0xff] %v1530
          %1563 = vst [vmem:[#allocation6 + $0x18] sm:$0xff] %v1531
          %1564 = vst [vmem:[#allocation6 + $0x20] sm:$0xff] %v1532
          %1565 = vst [vmem:[#allocation6 + $0x28] sm:$0xff] %v1533
          %1566 = vst [vmem:[#allocation6 + $0x30] sm:$0xff] %v1534
          %1567 = vst [vmem:[#allocation6 + $0x38] sm:$0xff] %v1535
          %1568 = vst [vmem:[#allocation6 + $0x40] sm:$0xff] %v1536
          %1569 = vst [vmem:[#allocation6 + $0x48] sm:$0xff] %v1537
          %1570 = vst [vmem:[#allocation6 + $0x50] sm:$0xff] %v1538
          %1571 = vst [vmem:[#allocation6 + $0x58] sm:$0xff] %v1539
          %1572 = vst [vmem:[#allocation6 + $0x60] sm:$0xff] %v1540
          %1573 = vst [vmem:[#allocation6 + $0x68] sm:$0xff] %v1541
          %1574 = vst [vmem:[#allocation6 + $0x70] sm:$0xff] %v1542
          %1575 = vst [vmem:[#allocation6 + $0x78] sm:$0xff] %v1543
          %1576 = vst [vmem:[#allocation6 + $0x80] sm:$0xff] %v1544
          %1577 = vst [vmem:[#allocation6 + $0x88] sm:$0xff] %v1545
          %1578 = vst [vmem:[#allocation6 + $0x90] sm:$0xff] %v1546
          %1579 = vst [vmem:[#allocation6 + $0x98] sm:$0xff] %v1547
          %1580 = vst [vmem:[#allocation6 + $0xa0] sm:$0xff] %v1548
          %1581 = vst [vmem:[#allocation6 + $0xa8] sm:$0xff] %v1549
          %1582 = vst [vmem:[#allocation6 + $0xb0] sm:$0xff] %v1550
          %1583 = vst [vmem:[#allocation6 + $0xb8] sm:$0xff] %v1551
          %1584 = vst [vmem:[#allocation6 + $0xc0] sm:$0xff] %v1552
          %1585 = vst [vmem:[#allocation6 + $0xc8] sm:$0xff] %v1553
          %1586 = vst [vmem:[#allocation6 + $0xd0] sm:$0xff] %v1554
          %1587 = vst [vmem:[#allocation6 + $0xd8] sm:$0xff] %v1555
          %1588 = vst [vmem:[#allocation6 + $0xe0] sm:$0xff] %v1556
          %1589 = vst [vmem:[#allocation6 + $0xe8] sm:$0xff] %v1557
          %1590 = vst [vmem:[#allocation6 + $0xf0] sm:$0xff] %v1558
          %1591 = vst [vmem:[#allocation6 + $0xf8] sm:$0xff] %v1559
        $region178: #{tpu_custom_call.1} parent=145 // pred_fallthru
          _
        %p1592 = scmp.eq.s32.totalorder %s24, 1
        // Predicated region
        $region179: #{tpu_custom_call.1} parent=145 // pred_check
          %p1593 = pneg %p1592
        $region180: #{tpu_custom_call.1} parent=145 // pred_check_branch
          %1595 = sbr.rel (%p1593) target = $region182
        $region181: #{tpu_custom_call.1} parent=145 // pred_region
          %v1596 = vlaneseq
          %v1597 = vand.u32 %v1596, 127
          %v1598 = vld [vmem:[%s879] sm:$0xff]
          %v1599 = vld [vmem:[%s879 + $0x8] sm:$0xff]
          %v1600 = vld [vmem:[%s879 + $0x10] sm:$0xff]
          %v1601 = vld [vmem:[%s879 + $0x18] sm:$0xff]
          %v1602 = vld [vmem:[%s879 + $0x20] sm:$0xff]
          %v1603 = vld [vmem:[%s879 + $0x28] sm:$0xff]
          %v1604 = vld [vmem:[%s879 + $0x30] sm:$0xff]
          %v1605 = vld [vmem:[%s879 + $0x38] sm:$0xff]
          %v1606 = vld [vmem:[%s879 + $0x40] sm:$0xff]
          %v1607 = vld [vmem:[%s879 + $0x48] sm:$0xff]
          %v1608 = vld [vmem:[%s879 + $0x50] sm:$0xff]
          %v1609 = vld [vmem:[%s879 + $0x58] sm:$0xff]
          %v1610 = vld [vmem:[%s879 + $0x60] sm:$0xff]
          %v1611 = vld [vmem:[%s879 + $0x68] sm:$0xff]
          %v1612 = vld [vmem:[%s879 + $0x70] sm:$0xff]
          %v1613 = vld [vmem:[%s879 + $0x78] sm:$0xff]
          %v1614 = vld [vmem:[%s879 + $0x80] sm:$0xff]
          %v1615 = vld [vmem:[%s879 + $0x88] sm:$0xff]
          %v1616 = vld [vmem:[%s879 + $0x90] sm:$0xff]
          %v1617 = vld [vmem:[%s879 + $0x98] sm:$0xff]
          %v1618 = vld [vmem:[%s879 + $0xa0] sm:$0xff]
          %v1619 = vld [vmem:[%s879 + $0xa8] sm:$0xff]
          %v1620 = vld [vmem:[%s879 + $0xb0] sm:$0xff]
          %v1621 = vld [vmem:[%s879 + $0xb8] sm:$0xff]
          %v1622 = vld [vmem:[%s879 + $0xc0] sm:$0xff]
          %v1623 = vld [vmem:[%s879 + $0xc8] sm:$0xff]
          %v1624 = vld [vmem:[%s879 + $0xd0] sm:$0xff]
          %v1625 = vld [vmem:[%s879 + $0xd8] sm:$0xff]
          %v1626 = vld [vmem:[%s879 + $0xe0] sm:$0xff]
          %v1627 = vld [vmem:[%s879 + $0xe8] sm:$0xff]
          %v1628 = vld [vmem:[%s879 + $0xf0] sm:$0xff]
          %v1629 = vld [vmem:[%s879 + $0xf8] sm:$0xff]
          %v1630 = vld [vmem:[#allocation4] sm:$0xff]
          %v1631 = vld [vmem:[#allocation4 + $0x8] sm:$0xff]
          %v1632 = vld [vmem:[#allocation4 + $0x10] sm:$0xff]
          %v1633 = vld [vmem:[#allocation4 + $0x18] sm:$0xff]
          %v1634 = vld [vmem:[#allocation4 + $0x20] sm:$0xff]
          %v1635 = vld [vmem:[#allocation4 + $0x28] sm:$0xff]
          %v1636 = vld [vmem:[#allocation4 + $0x30] sm:$0xff]
          %v1637 = vld [vmem:[#allocation4 + $0x38] sm:$0xff]
          %v1638 = vld [vmem:[#allocation4 + $0x40] sm:$0xff]
          %v1639 = vld [vmem:[#allocation4 + $0x48] sm:$0xff]
          %v1640 = vld [vmem:[#allocation4 + $0x50] sm:$0xff]
          %v1641 = vld [vmem:[#allocation4 + $0x58] sm:$0xff]
          %v1642 = vld [vmem:[#allocation4 + $0x60] sm:$0xff]
          %v1643 = vld [vmem:[#allocation4 + $0x68] sm:$0xff]
          %v1644 = vld [vmem:[#allocation4 + $0x70] sm:$0xff]
          %v1645 = vld [vmem:[#allocation4 + $0x78] sm:$0xff]
          %v1646 = vld [vmem:[#allocation4 + $0x80] sm:$0xff]
          %v1647 = vld [vmem:[#allocation4 + $0x88] sm:$0xff]
          %v1648 = vld [vmem:[#allocation4 + $0x90] sm:$0xff]
          %v1649 = vld [vmem:[#allocation4 + $0x98] sm:$0xff]
          %v1650 = vld [vmem:[#allocation4 + $0xa0] sm:$0xff]
          %v1651 = vld [vmem:[#allocation4 + $0xa8] sm:$0xff]
          %v1652 = vld [vmem:[#allocation4 + $0xb0] sm:$0xff]
          %v1653 = vld [vmem:[#allocation4 + $0xb8] sm:$0xff]
          %v1654 = vld [vmem:[#allocation4 + $0xc0] sm:$0xff]
          %v1655 = vld [vmem:[#allocation4 + $0xc8] sm:$0xff]
          %v1656 = vld [vmem:[#allocation4 + $0xd0] sm:$0xff]
          %v1657 = vld [vmem:[#allocation4 + $0xd8] sm:$0xff]
          %v1658 = vld [vmem:[#allocation4 + $0xe0] sm:$0xff]
          %v1659 = vld [vmem:[#allocation4 + $0xe8] sm:$0xff]
          %v1660 = vld [vmem:[#allocation4 + $0xf0] sm:$0xff]
          %v1661 = vld [vmem:[#allocation4 + $0xf8] sm:$0xff]
          %vm1662 = vcmp.lt.s32.totalorder %v1597, 64
          %v1663 = vsel %vm1662, 1, 0
          %vm1664 = vcmp.eq.s32.totalorder %v1663, 1
          %v1665 = vsel %vm1664, %v1598, 0.0
          %v1666 = vsel %vm1664, %v1599, 0.0
          %v1667 = vsel %vm1664, %v1600, 0.0
          %v1668 = vsel %vm1664, %v1601, 0.0
          %v1669 = vsel %vm1664, %v1602, 0.0
          %v1670 = vsel %vm1664, %v1603, 0.0
          %v1671 = vsel %vm1664, %v1604, 0.0
          %v1672 = vsel %vm1664, %v1605, 0.0
          %v1673 = vsel %vm1664, %v1606, 0.0
          %v1674 = vsel %vm1664, %v1607, 0.0
          %v1675 = vsel %vm1664, %v1608, 0.0
          %v1676 = vsel %vm1664, %v1609, 0.0
          %v1677 = vsel %vm1664, %v1610, 0.0
          %v1678 = vsel %vm1664, %v1611, 0.0
          %v1679 = vsel %vm1664, %v1612, 0.0
          %v1680 = vsel %vm1664, %v1613, 0.0
          %v1681 = vsel %vm1664, %v1614, 0.0
          %v1682 = vsel %vm1664, %v1615, 0.0
          %v1683 = vsel %vm1664, %v1616, 0.0
          %v1684 = vsel %vm1664, %v1617, 0.0
          %v1685 = vsel %vm1664, %v1618, 0.0
          %v1686 = vsel %vm1664, %v1619, 0.0
          %v1687 = vsel %vm1664, %v1620, 0.0
          %v1688 = vsel %vm1664, %v1621, 0.0
          %v1689 = vsel %vm1664, %v1622, 0.0
          %v1690 = vsel %vm1664, %v1623, 0.0
          %v1691 = vsel %vm1664, %v1624, 0.0
          %v1692 = vsel %vm1664, %v1625, 0.0
          %v1693 = vsel %vm1664, %v1626, 0.0
          %v1694 = vsel %vm1664, %v1627, 0.0
          %v1695 = vsel %vm1664, %v1628, 0.0
          %v1696 = vsel %vm1664, %v1629, 0.0
          %v1697 = vadd.f32 %v1630, %v1665
          %v1698 = vadd.f32 %v1631, %v1666
          %v1699 = vadd.f32 %v1632, %v1667
          %v1700 = vadd.f32 %v1633, %v1668
          %v1701 = vadd.f32 %v1634, %v1669
          %v1702 = vadd.f32 %v1635, %v1670
          %v1703 = vadd.f32 %v1636, %v1671
          %v1704 = vadd.f32 %v1637, %v1672
          %v1705 = vadd.f32 %v1638, %v1673
          %v1706 = vadd.f32 %v1639, %v1674
          %v1707 = vadd.f32 %v1640, %v1675
          %v1708 = vadd.f32 %v1641, %v1676
          %v1709 = vadd.f32 %v1642, %v1677
          %v1710 = vadd.f32 %v1643, %v1678
          %v1711 = vadd.f32 %v1644, %v1679
          %v1712 = vadd.f32 %v1645, %v1680
          %v1713 = vadd.f32 %v1646, %v1681
          %v1714 = vadd.f32 %v1647, %v1682
          %v1715 = vadd.f32 %v1648, %v1683
          %v1716 = vadd.f32 %v1649, %v1684
          %v1717 = vadd.f32 %v1650, %v1685
          %v1718 = vadd.f32 %v1651, %v1686
          %v1719 = vadd.f32 %v1652, %v1687
          %v1720 = vadd.f32 %v1653, %v1688
          %v1721 = vadd.f32 %v1654, %v1689
          %v1722 = vadd.f32 %v1655, %v1690
          %v1723 = vadd.f32 %v1656, %v1691
          %v1724 = vadd.f32 %v1657, %v1692
          %v1725 = vadd.f32 %v1658, %v1693
          %v1726 = vadd.f32 %v1659, %v1694
          %v1727 = vadd.f32 %v1660, %v1695
          %v1728 = vadd.f32 %v1661, %v1696
          %1729 = vst [vmem:[#allocation4] sm:$0xff] %v1697
          %1730 = vst [vmem:[#allocation4 + $0x8] sm:$0xff] %v1698
          %1731 = vst [vmem:[#allocation4 + $0x10] sm:$0xff] %v1699
          %1732 = vst [vmem:[#allocation4 + $0x18] sm:$0xff] %v1700
          %1733 = vst [vmem:[#allocation4 + $0x20] sm:$0xff] %v1701
          %1734 = vst [vmem:[#allocation4 + $0x28] sm:$0xff] %v1702
          %1735 = vst [vmem:[#allocation4 + $0x30] sm:$0xff] %v1703
          %1736 = vst [vmem:[#allocation4 + $0x38] sm:$0xff] %v1704
          %1737 = vst [vmem:[#allocation4 + $0x40] sm:$0xff] %v1705
          %1738 = vst [vmem:[#allocation4 + $0x48] sm:$0xff] %v1706
          %1739 = vst [vmem:[#allocation4 + $0x50] sm:$0xff] %v1707
          %1740 = vst [vmem:[#allocation4 + $0x58] sm:$0xff] %v1708
          %1741 = vst [vmem:[#allocation4 + $0x60] sm:$0xff] %v1709
          %1742 = vst [vmem:[#allocation4 + $0x68] sm:$0xff] %v1710
          %1743 = vst [vmem:[#allocation4 + $0x70] sm:$0xff] %v1711
          %1744 = vst [vmem:[#allocation4 + $0x78] sm:$0xff] %v1712
          %1745 = vst [vmem:[#allocation4 + $0x80] sm:$0xff] %v1713
          %1746 = vst [vmem:[#allocation4 + $0x88] sm:$0xff] %v1714
          %1747 = vst [vmem:[#allocation4 + $0x90] sm:$0xff] %v1715
          %1748 = vst [vmem:[#allocation4 + $0x98] sm:$0xff] %v1716
          %1749 = vst [vmem:[#allocation4 + $0xa0] sm:$0xff] %v1717
          %1750 = vst [vmem:[#allocation4 + $0xa8] sm:$0xff] %v1718
          %1751 = vst [vmem:[#allocation4 + $0xb0] sm:$0xff] %v1719
          %1752 = vst [vmem:[#allocation4 + $0xb8] sm:$0xff] %v1720
          %1753 = vst [vmem:[#allocation4 + $0xc0] sm:$0xff] %v1721
          %1754 = vst [vmem:[#allocation4 + $0xc8] sm:$0xff] %v1722
          %1755 = vst [vmem:[#allocation4 + $0xd0] sm:$0xff] %v1723
          %1756 = vst [vmem:[#allocation4 + $0xd8] sm:$0xff] %v1724
          %1757 = vst [vmem:[#allocation4 + $0xe0] sm:$0xff] %v1725
          %1758 = vst [vmem:[#allocation4 + $0xe8] sm:$0xff] %v1726
          %1759 = vst [vmem:[#allocation4 + $0xf0] sm:$0xff] %v1727
          %1760 = vst [vmem:[#allocation4 + $0xf8] sm:$0xff] %v1728
          %v1761 = vld [vmem:[%s886] sm:$0xff]
          %v1762 = vld [vmem:[%s886 + $0x8] sm:$0xff]
          %v1763 = vld [vmem:[%s886 + $0x10] sm:$0xff]
          %v1764 = vld [vmem:[%s886 + $0x18] sm:$0xff]
          %v1765 = vld [vmem:[%s886 + $0x20] sm:$0xff]
          %v1766 = vld [vmem:[%s886 + $0x28] sm:$0xff]
          %v1767 = vld [vmem:[%s886 + $0x30] sm:$0xff]
          %v1768 = vld [vmem:[%s886 + $0x38] sm:$0xff]
          %v1769 = vld [vmem:[%s886 + $0x40] sm:$0xff]
          %v1770 = vld [vmem:[%s886 + $0x48] sm:$0xff]
          %v1771 = vld [vmem:[%s886 + $0x50] sm:$0xff]
          %v1772 = vld [vmem:[%s886 + $0x58] sm:$0xff]
          %v1773 = vld [vmem:[%s886 + $0x60] sm:$0xff]
          %v1774 = vld [vmem:[%s886 + $0x68] sm:$0xff]
          %v1775 = vld [vmem:[%s886 + $0x70] sm:$0xff]
          %v1776 = vld [vmem:[%s886 + $0x78] sm:$0xff]
          %v1777 = vld [vmem:[%s886 + $0x80] sm:$0xff]
          %v1778 = vld [vmem:[%s886 + $0x88] sm:$0xff]
          %v1779 = vld [vmem:[%s886 + $0x90] sm:$0xff]
          %v1780 = vld [vmem:[%s886 + $0x98] sm:$0xff]
          %v1781 = vld [vmem:[%s886 + $0xa0] sm:$0xff]
          %v1782 = vld [vmem:[%s886 + $0xa8] sm:$0xff]
          %v1783 = vld [vmem:[%s886 + $0xb0] sm:$0xff]
          %v1784 = vld [vmem:[%s886 + $0xb8] sm:$0xff]
          %v1785 = vld [vmem:[%s886 + $0xc0] sm:$0xff]
          %v1786 = vld [vmem:[%s886 + $0xc8] sm:$0xff]
          %v1787 = vld [vmem:[%s886 + $0xd0] sm:$0xff]
          %v1788 = vld [vmem:[%s886 + $0xd8] sm:$0xff]
          %v1789 = vld [vmem:[%s886 + $0xe0] sm:$0xff]
          %v1790 = vld [vmem:[%s886 + $0xe8] sm:$0xff]
          %v1791 = vld [vmem:[%s886 + $0xf0] sm:$0xff]
          %v1792 = vld [vmem:[%s886 + $0xf8] sm:$0xff]
          %v1793 = vld [vmem:[%s886 + $0x100] sm:$0xff]
          %v1794 = vld [vmem:[%s886 + $0x108] sm:$0xff]
          %v1795 = vld [vmem:[%s886 + $0x110] sm:$0xff]
          %v1796 = vld [vmem:[%s886 + $0x118] sm:$0xff]
          %v1797 = vld [vmem:[%s886 + $0x120] sm:$0xff]
          %v1798 = vld [vmem:[%s886 + $0x128] sm:$0xff]
          %v1799 = vld [vmem:[%s886 + $0x130] sm:$0xff]
          %v1800 = vld [vmem:[%s886 + $0x138] sm:$0xff]
          %v1801 = vld [vmem:[%s886 + $0x140] sm:$0xff]
          %v1802 = vld [vmem:[%s886 + $0x148] sm:$0xff]
          %v1803 = vld [vmem:[%s886 + $0x150] sm:$0xff]
          %v1804 = vld [vmem:[%s886 + $0x158] sm:$0xff]
          %v1805 = vld [vmem:[%s886 + $0x160] sm:$0xff]
          %v1806 = vld [vmem:[%s886 + $0x168] sm:$0xff]
          %v1807 = vld [vmem:[%s886 + $0x170] sm:$0xff]
          %v1808 = vld [vmem:[%s886 + $0x178] sm:$0xff]
          %v1809 = vld [vmem:[%s886 + $0x180] sm:$0xff]
          %v1810 = vld [vmem:[%s886 + $0x188] sm:$0xff]
          %v1811 = vld [vmem:[%s886 + $0x190] sm:$0xff]
          %v1812 = vld [vmem:[%s886 + $0x198] sm:$0xff]
          %v1813 = vld [vmem:[%s886 + $0x1a0] sm:$0xff]
          %v1814 = vld [vmem:[%s886 + $0x1a8] sm:$0xff]
          %v1815 = vld [vmem:[%s886 + $0x1b0] sm:$0xff]
          %v1816 = vld [vmem:[%s886 + $0x1b8] sm:$0xff]
          %v1817 = vld [vmem:[%s886 + $0x1c0] sm:$0xff]
          %v1818 = vld [vmem:[%s886 + $0x1c8] sm:$0xff]
          %v1819 = vld [vmem:[%s886 + $0x1d0] sm:$0xff]
          %v1820 = vld [vmem:[%s886 + $0x1d8] sm:$0xff]
          %v1821 = vld [vmem:[%s886 + $0x1e0] sm:$0xff]
          %v1822 = vld [vmem:[%s886 + $0x1e8] sm:$0xff]
          %v1823 = vld [vmem:[%s886 + $0x1f0] sm:$0xff]
          %v1824 = vld [vmem:[%s886 + $0x1f8] sm:$0xff]
          %v1825 = vld [vmem:[#allocation5] sm:$0xff]
          %v1826 = vld [vmem:[#allocation5 + $0x8] sm:$0xff]
          %v1827 = vld [vmem:[#allocation5 + $0x10] sm:$0xff]
          %v1828 = vld [vmem:[#allocation5 + $0x18] sm:$0xff]
          %v1829 = vld [vmem:[#allocation5 + $0x20] sm:$0xff]
          %v1830 = vld [vmem:[#allocation5 + $0x28] sm:$0xff]
          %v1831 = vld [vmem:[#allocation5 + $0x30] sm:$0xff]
          %v1832 = vld [vmem:[#allocation5 + $0x38] sm:$0xff]
          %v1833 = vld [vmem:[#allocation5 + $0x40] sm:$0xff]
          %v1834 = vld [vmem:[#allocation5 + $0x48] sm:$0xff]
          %v1835 = vld [vmem:[#allocation5 + $0x50] sm:$0xff]
          %v1836 = vld [vmem:[#allocation5 + $0x58] sm:$0xff]
          %v1837 = vld [vmem:[#allocation5 + $0x60] sm:$0xff]
          %v1838 = vld [vmem:[#allocation5 + $0x68] sm:$0xff]
          %v1839 = vld [vmem:[#allocation5 + $0x70] sm:$0xff]
          %v1840 = vld [vmem:[#allocation5 + $0x78] sm:$0xff]
          %v1841 = vld [vmem:[#allocation5 + $0x80] sm:$0xff]
          %v1842 = vld [vmem:[#allocation5 + $0x88] sm:$0xff]
          %v1843 = vld [vmem:[#allocation5 + $0x90] sm:$0xff]
          %v1844 = vld [vmem:[#allocation5 + $0x98] sm:$0xff]
          %v1845 = vld [vmem:[#allocation5 + $0xa0] sm:$0xff]
          %v1846 = vld [vmem:[#allocation5 + $0xa8] sm:$0xff]
          %v1847 = vld [vmem:[#allocation5 + $0xb0] sm:$0xff]
          %v1848 = vld [vmem:[#allocation5 + $0xb8] sm:$0xff]
          %v1849 = vld [vmem:[#allocation5 + $0xc0] sm:$0xff]
          %v1850 = vld [vmem:[#allocation5 + $0xc8] sm:$0xff]
          %v1851 = vld [vmem:[#allocation5 + $0xd0] sm:$0xff]
          %v1852 = vld [vmem:[#allocation5 + $0xd8] sm:$0xff]
          %v1853 = vld [vmem:[#allocation5 + $0xe0] sm:$0xff]
          %v1854 = vld [vmem:[#allocation5 + $0xe8] sm:$0xff]
          %v1855 = vld [vmem:[#allocation5 + $0xf0] sm:$0xff]
          %v1856 = vld [vmem:[#allocation5 + $0xf8] sm:$0xff]
          %v1857 = vld [vmem:[#allocation5 + $0x100] sm:$0xff]
          %v1858 = vld [vmem:[#allocation5 + $0x108] sm:$0xff]
          %v1859 = vld [vmem:[#allocation5 + $0x110] sm:$0xff]
          %v1860 = vld [vmem:[#allocation5 + $0x118] sm:$0xff]
          %v1861 = vld [vmem:[#allocation5 + $0x120] sm:$0xff]
          %v1862 = vld [vmem:[#allocation5 + $0x128] sm:$0xff]
          %v1863 = vld [vmem:[#allocation5 + $0x130] sm:$0xff]
          %v1864 = vld [vmem:[#allocation5 + $0x138] sm:$0xff]
          %v1865 = vld [vmem:[#allocation5 + $0x140] sm:$0xff]
          %v1866 = vld [vmem:[#allocation5 + $0x148] sm:$0xff]
          %v1867 = vld [vmem:[#allocation5 + $0x150] sm:$0xff]
          %v1868 = vld [vmem:[#allocation5 + $0x158] sm:$0xff]
          %v1869 = vld [vmem:[#allocation5 + $0x160] sm:$0xff]
          %v1870 = vld [vmem:[#allocation5 + $0x168] sm:$0xff]
          %v1871 = vld [vmem:[#allocation5 + $0x170] sm:$0xff]
          %v1872 = vld [vmem:[#allocation5 + $0x178] sm:$0xff]
          %v1873 = vld [vmem:[#allocation5 + $0x180] sm:$0xff]
          %v1874 = vld [vmem:[#allocation5 + $0x188] sm:$0xff]
          %v1875 = vld [vmem:[#allocation5 + $0x190] sm:$0xff]
          %v1876 = vld [vmem:[#allocation5 + $0x198] sm:$0xff]
          %v1877 = vld [vmem:[#allocation5 + $0x1a0] sm:$0xff]
          %v1878 = vld [vmem:[#allocation5 + $0x1a8] sm:$0xff]
          %v1879 = vld [vmem:[#allocation5 + $0x1b0] sm:$0xff]
          %v1880 = vld [vmem:[#allocation5 + $0x1b8] sm:$0xff]
          %v1881 = vld [vmem:[#allocation5 + $0x1c0] sm:$0xff]
          %v1882 = vld [vmem:[#allocation5 + $0x1c8] sm:$0xff]
          %v1883 = vld [vmem:[#allocation5 + $0x1d0] sm:$0xff]
          %v1884 = vld [vmem:[#allocation5 + $0x1d8] sm:$0xff]
          %v1885 = vld [vmem:[#allocation5 + $0x1e0] sm:$0xff]
          %v1886 = vld [vmem:[#allocation5 + $0x1e8] sm:$0xff]
          %v1887 = vld [vmem:[#allocation5 + $0x1f0] sm:$0xff]
          %v1888 = vld [vmem:[#allocation5 + $0x1f8] sm:$0xff]
          %v1889 = vsel %vm1664, %v1761, 0.0
          %v1890 = vsel %vm1664, %v1762, 0.0
          %v1891 = vsel %vm1664, %v1763, 0.0
          %v1892 = vsel %vm1664, %v1764, 0.0
          %v1893 = vsel %vm1664, %v1765, 0.0
          %v1894 = vsel %vm1664, %v1766, 0.0
          %v1895 = vsel %vm1664, %v1767, 0.0
          %v1896 = vsel %vm1664, %v1768, 0.0
          %v1897 = vsel %vm1664, %v1769, 0.0
          %v1898 = vsel %vm1664, %v1770, 0.0
          %v1899 = vsel %vm1664, %v1771, 0.0
          %v1900 = vsel %vm1664, %v1772, 0.0
          %v1901 = vsel %vm1664, %v1773, 0.0
          %v1902 = vsel %vm1664, %v1774, 0.0
          %v1903 = vsel %vm1664, %v1775, 0.0
          %v1904 = vsel %vm1664, %v1776, 0.0
          %v1905 = vsel %vm1664, %v1777, 0.0
          %v1906 = vsel %vm1664, %v1778, 0.0
          %v1907 = vsel %vm1664, %v1779, 0.0
          %v1908 = vsel %vm1664, %v1780, 0.0
          %v1909 = vsel %vm1664, %v1781, 0.0
          %v1910 = vsel %vm1664, %v1782, 0.0
          %v1911 = vsel %vm1664, %v1783, 0.0
          %v1912 = vsel %vm1664, %v1784, 0.0
          %v1913 = vsel %vm1664, %v1785, 0.0
          %v1914 = vsel %vm1664, %v1786, 0.0
          %v1915 = vsel %vm1664, %v1787, 0.0
          %v1916 = vsel %vm1664, %v1788, 0.0
          %v1917 = vsel %vm1664, %v1789, 0.0
          %v1918 = vsel %vm1664, %v1790, 0.0
          %v1919 = vsel %vm1664, %v1791, 0.0
          %v1920 = vsel %vm1664, %v1792, 0.0
          %v1921 = vsel %vm1664, %v1793, 0.0
          %v1922 = vsel %vm1664, %v1794, 0.0
          %v1923 = vsel %vm1664, %v1795, 0.0
          %v1924 = vsel %vm1664, %v1796, 0.0
          %v1925 = vsel %vm1664, %v1797, 0.0
          %v1926 = vsel %vm1664, %v1798, 0.0
          %v1927 = vsel %vm1664, %v1799, 0.0
          %v1928 = vsel %vm1664, %v1800, 0.0
          %v1929 = vsel %vm1664, %v1801, 0.0
          %v1930 = vsel %vm1664, %v1802, 0.0
          %v1931 = vsel %vm1664, %v1803, 0.0
          %v1932 = vsel %vm1664, %v1804, 0.0
          %v1933 = vsel %vm1664, %v1805, 0.0
          %v1934 = vsel %vm1664, %v1806, 0.0
          %v1935 = vsel %vm1664, %v1807, 0.0
          %v1936 = vsel %vm1664, %v1808, 0.0
          %v1937 = vsel %vm1664, %v1809, 0.0
          %v1938 = vsel %vm1664, %v1810, 0.0
          %v1939 = vsel %vm1664, %v1811, 0.0
          %v1940 = vsel %vm1664, %v1812, 0.0
          %v1941 = vsel %vm1664, %v1813, 0.0
          %v1942 = vsel %vm1664, %v1814, 0.0
          %v1943 = vsel %vm1664, %v1815, 0.0
          %v1944 = vsel %vm1664, %v1816, 0.0
          %v1945 = vsel %vm1664, %v1817, 0.0
          %v1946 = vsel %vm1664, %v1818, 0.0
          %v1947 = vsel %vm1664, %v1819, 0.0
          %v1948 = vsel %vm1664, %v1820, 0.0
          %v1949 = vsel %vm1664, %v1821, 0.0
          %v1950 = vsel %vm1664, %v1822, 0.0
          %v1951 = vsel %vm1664, %v1823, 0.0
          %v1952 = vsel %vm1664, %v1824, 0.0
          %v1953 = vadd.f32 %v1825, %v1889
          %v1954 = vadd.f32 %v1826, %v1890
          %v1955 = vadd.f32 %v1827, %v1891
          %v1956 = vadd.f32 %v1828, %v1892
          %v1957 = vadd.f32 %v1829, %v1893
          %v1958 = vadd.f32 %v1830, %v1894
          %v1959 = vadd.f32 %v1831, %v1895
          %v1960 = vadd.f32 %v1832, %v1896
          %v1961 = vadd.f32 %v1833, %v1897
          %v1962 = vadd.f32 %v1834, %v1898
          %v1963 = vadd.f32 %v1835, %v1899
          %v1964 = vadd.f32 %v1836, %v1900
          %v1965 = vadd.f32 %v1837, %v1901
          %v1966 = vadd.f32 %v1838, %v1902
          %v1967 = vadd.f32 %v1839, %v1903
          %v1968 = vadd.f32 %v1840, %v1904
          %v1969 = vadd.f32 %v1841, %v1905
          %v1970 = vadd.f32 %v1842, %v1906
          %v1971 = vadd.f32 %v1843, %v1907
          %v1972 = vadd.f32 %v1844, %v1908
          %v1973 = vadd.f32 %v1845, %v1909
          %v1974 = vadd.f32 %v1846, %v1910
          %v1975 = vadd.f32 %v1847, %v1911
          %v1976 = vadd.f32 %v1848, %v1912
          %v1977 = vadd.f32 %v1849, %v1913
          %v1978 = vadd.f32 %v1850, %v1914
          %v1979 = vadd.f32 %v1851, %v1915
          %v1980 = vadd.f32 %v1852, %v1916
          %v1981 = vadd.f32 %v1853, %v1917
          %v1982 = vadd.f32 %v1854, %v1918
          %v1983 = vadd.f32 %v1855, %v1919
          %v1984 = vadd.f32 %v1856, %v1920
          %v1985 = vadd.f32 %v1857, %v1921
          %v1986 = vadd.f32 %v1858, %v1922
          %v1987 = vadd.f32 %v1859, %v1923
          %v1988 = vadd.f32 %v1860, %v1924
          %v1989 = vadd.f32 %v1861, %v1925
          %v1990 = vadd.f32 %v1862, %v1926
          %v1991 = vadd.f32 %v1863, %v1927
          %v1992 = vadd.f32 %v1864, %v1928
          %v1993 = vadd.f32 %v1865, %v1929
          %v1994 = vadd.f32 %v1866, %v1930
          %v1995 = vadd.f32 %v1867, %v1931
          %v1996 = vadd.f32 %v1868, %v1932
          %v1997 = vadd.f32 %v1869, %v1933
          %v1998 = vadd.f32 %v1870, %v1934
          %v1999 = vadd.f32 %v1871, %v1935
          %v2000 = vadd.f32 %v1872, %v1936
          %v2001 = vadd.f32 %v1873, %v1937
          %v2002 = vadd.f32 %v1874, %v1938
          %v2003 = vadd.f32 %v1875, %v1939
          %v2004 = vadd.f32 %v1876, %v1940
          %v2005 = vadd.f32 %v1877, %v1941
          %v2006 = vadd.f32 %v1878, %v1942
          %v2007 = vadd.f32 %v1879, %v1943
          %v2008 = vadd.f32 %v1880, %v1944
          %v2009 = vadd.f32 %v1881, %v1945
          %v2010 = vadd.f32 %v1882, %v1946
          %v2011 = vadd.f32 %v1883, %v1947
          %v2012 = vadd.f32 %v1884, %v1948
          %v2013 = vadd.f32 %v1885, %v1949
          %v2014 = vadd.f32 %v1886, %v1950
          %v2015 = vadd.f32 %v1887, %v1951
          %v2016 = vadd.f32 %v1888, %v1952
          %2017 = vst [vmem:[#allocation5] sm:$0xff] %v1953
          %2018 = vst [vmem:[#allocation5 + $0x8] sm:$0xff] %v1954
          %2019 = vst [vmem:[#allocation5 + $0x10] sm:$0xff] %v1955
          %2020 = vst [vmem:[#allocation5 + $0x18] sm:$0xff] %v1956
          %2021 = vst [vmem:[#allocation5 + $0x20] sm:$0xff] %v1957
          %2022 = vst [vmem:[#allocation5 + $0x28] sm:$0xff] %v1958
          %2023 = vst [vmem:[#allocation5 + $0x30] sm:$0xff] %v1959
          %2024 = vst [vmem:[#allocation5 + $0x38] sm:$0xff] %v1960
          %2025 = vst [vmem:[#allocation5 + $0x40] sm:$0xff] %v1961
          %2026 = vst [vmem:[#allocation5 + $0x48] sm:$0xff] %v1962
          %2027 = vst [vmem:[#allocation5 + $0x50] sm:$0xff] %v1963
          %2028 = vst [vmem:[#allocation5 + $0x58] sm:$0xff] %v1964
          %2029 = vst [vmem:[#allocation5 + $0x60] sm:$0xff] %v1965
          %2030 = vst [vmem:[#allocation5 + $0x68] sm:$0xff] %v1966
          %2031 = vst [vmem:[#allocation5 + $0x70] sm:$0xff] %v1967
          %2032 = vst [vmem:[#allocation5 + $0x78] sm:$0xff] %v1968
          %2033 = vst [vmem:[#allocation5 + $0x80] sm:$0xff] %v1969
          %2034 = vst [vmem:[#allocation5 + $0x88] sm:$0xff] %v1970
          %2035 = vst [vmem:[#allocation5 + $0x90] sm:$0xff] %v1971
          %2036 = vst [vmem:[#allocation5 + $0x98] sm:$0xff] %v1972
          %2037 = vst [vmem:[#allocation5 + $0xa0] sm:$0xff] %v1973
          %2038 = vst [vmem:[#allocation5 + $0xa8] sm:$0xff] %v1974
          %2039 = vst [vmem:[#allocation5 + $0xb0] sm:$0xff] %v1975
          %2040 = vst [vmem:[#allocation5 + $0xb8] sm:$0xff] %v1976
          %2041 = vst [vmem:[#allocation5 + $0xc0] sm:$0xff] %v1977
          %2042 = vst [vmem:[#allocation5 + $0xc8] sm:$0xff] %v1978
          %2043 = vst [vmem:[#allocation5 + $0xd0] sm:$0xff] %v1979
          %2044 = vst [vmem:[#allocation5 + $0xd8] sm:$0xff] %v1980
          %2045 = vst [vmem:[#allocation5 + $0xe0] sm:$0xff] %v1981
          %2046 = vst [vmem:[#allocation5 + $0xe8] sm:$0xff] %v1982
          %2047 = vst [vmem:[#allocation5 + $0xf0] sm:$0xff] %v1983
          %2048 = vst [vmem:[#allocation5 + $0xf8] sm:$0xff] %v1984
          %2049 = vst [vmem:[#allocation5 + $0x100] sm:$0xff] %v1985
          %2050 = vst [vmem:[#allocation5 + $0x108] sm:$0xff] %v1986
          %2051 = vst [vmem:[#allocation5 + $0x110] sm:$0xff] %v1987
          %2052 = vst [vmem:[#allocation5 + $0x118] sm:$0xff] %v1988
          %2053 = vst [vmem:[#allocation5 + $0x120] sm:$0xff] %v1989
          %2054 = vst [vmem:[#allocation5 + $0x128] sm:$0xff] %v1990
          %2055 = vst [vmem:[#allocation5 + $0x130] sm:$0xff] %v1991
          %2056 = vst [vmem:[#allocation5 + $0x138] sm:$0xff] %v1992
          %2057 = vst [vmem:[#allocation5 + $0x140] sm:$0xff] %v1993
          %2058 = vst [vmem:[#allocation5 + $0x148] sm:$0xff] %v1994
          %2059 = vst [vmem:[#allocation5 + $0x150] sm:$0xff] %v1995
          %2060 = vst [vmem:[#allocation5 + $0x158] sm:$0xff] %v1996
          %2061 = vst [vmem:[#allocation5 + $0x160] sm:$0xff] %v1997
          %2062 = vst [vmem:[#allocation5 + $0x168] sm:$0xff] %v1998
          %2063 = vst [vmem:[#allocation5 + $0x170] sm:$0xff] %v1999
          %2064 = vst [vmem:[#allocation5 + $0x178] sm:$0xff] %v2000
          %2065 = vst [vmem:[#allocation5 + $0x180] sm:$0xff] %v2001
          %2066 = vst [vmem:[#allocation5 + $0x188] sm:$0xff] %v2002
          %2067 = vst [vmem:[#allocation5 + $0x190] sm:$0xff] %v2003
          %2068 = vst [vmem:[#allocation5 + $0x198] sm:$0xff] %v2004
          %2069 = vst [vmem:[#allocation5 + $0x1a0] sm:$0xff] %v2005
          %2070 = vst [vmem:[#allocation5 + $0x1a8] sm:$0xff] %v2006
          %2071 = vst [vmem:[#allocation5 + $0x1b0] sm:$0xff] %v2007
          %2072 = vst [vmem:[#allocation5 + $0x1b8] sm:$0xff] %v2008
          %2073 = vst [vmem:[#allocation5 + $0x1c0] sm:$0xff] %v2009
          %2074 = vst [vmem:[#allocation5 + $0x1c8] sm:$0xff] %v2010
          %2075 = vst [vmem:[#allocation5 + $0x1d0] sm:$0xff] %v2011
          %2076 = vst [vmem:[#allocation5 + $0x1d8] sm:$0xff] %v2012
          %2077 = vst [vmem:[#allocation5 + $0x1e0] sm:$0xff] %v2013
          %2078 = vst [vmem:[#allocation5 + $0x1e8] sm:$0xff] %v2014
          %2079 = vst [vmem:[#allocation5 + $0x1f0] sm:$0xff] %v2015
          %2080 = vst [vmem:[#allocation5 + $0x1f8] sm:$0xff] %v2016
          %v2081 = vld [vmem:[%s893] sm:$0xff]
          %v2082 = vld [vmem:[%s893 + $0x8] sm:$0xff]
          %v2083 = vld [vmem:[%s893 + $0x10] sm:$0xff]
          %v2084 = vld [vmem:[%s893 + $0x18] sm:$0xff]
          %v2085 = vld [vmem:[%s893 + $0x20] sm:$0xff]
          %v2086 = vld [vmem:[%s893 + $0x28] sm:$0xff]
          %v2087 = vld [vmem:[%s893 + $0x30] sm:$0xff]
          %v2088 = vld [vmem:[%s893 + $0x38] sm:$0xff]
          %v2089 = vld [vmem:[%s893 + $0x40] sm:$0xff]
          %v2090 = vld [vmem:[%s893 + $0x48] sm:$0xff]
          %v2091 = vld [vmem:[%s893 + $0x50] sm:$0xff]
          %v2092 = vld [vmem:[%s893 + $0x58] sm:$0xff]
          %v2093 = vld [vmem:[%s893 + $0x60] sm:$0xff]
          %v2094 = vld [vmem:[%s893 + $0x68] sm:$0xff]
          %v2095 = vld [vmem:[%s893 + $0x70] sm:$0xff]
          %v2096 = vld [vmem:[%s893 + $0x78] sm:$0xff]
          %v2097 = vld [vmem:[%s893 + $0x80] sm:$0xff]
          %v2098 = vld [vmem:[%s893 + $0x88] sm:$0xff]
          %v2099 = vld [vmem:[%s893 + $0x90] sm:$0xff]
          %v2100 = vld [vmem:[%s893 + $0x98] sm:$0xff]
          %v2101 = vld [vmem:[%s893 + $0xa0] sm:$0xff]
          %v2102 = vld [vmem:[%s893 + $0xa8] sm:$0xff]
          %v2103 = vld [vmem:[%s893 + $0xb0] sm:$0xff]
          %v2104 = vld [vmem:[%s893 + $0xb8] sm:$0xff]
          %v2105 = vld [vmem:[%s893 + $0xc0] sm:$0xff]
          %v2106 = vld [vmem:[%s893 + $0xc8] sm:$0xff]
          %v2107 = vld [vmem:[%s893 + $0xd0] sm:$0xff]
          %v2108 = vld [vmem:[%s893 + $0xd8] sm:$0xff]
          %v2109 = vld [vmem:[%s893 + $0xe0] sm:$0xff]
          %v2110 = vld [vmem:[%s893 + $0xe8] sm:$0xff]
          %v2111 = vld [vmem:[%s893 + $0xf0] sm:$0xff]
          %v2112 = vld [vmem:[%s893 + $0xf8] sm:$0xff]
          %v2113 = vld [vmem:[#allocation6] sm:$0xff]
          %v2114 = vld [vmem:[#allocation6 + $0x8] sm:$0xff]
          %v2115 = vld [vmem:[#allocation6 + $0x10] sm:$0xff]
          %v2116 = vld [vmem:[#allocation6 + $0x18] sm:$0xff]
          %v2117 = vld [vmem:[#allocation6 + $0x20] sm:$0xff]
          %v2118 = vld [vmem:[#allocation6 + $0x28] sm:$0xff]
          %v2119 = vld [vmem:[#allocation6 + $0x30] sm:$0xff]
          %v2120 = vld [vmem:[#allocation6 + $0x38] sm:$0xff]
          %v2121 = vld [vmem:[#allocation6 + $0x40] sm:$0xff]
          %v2122 = vld [vmem:[#allocation6 + $0x48] sm:$0xff]
          %v2123 = vld [vmem:[#allocation6 + $0x50] sm:$0xff]
          %v2124 = vld [vmem:[#allocation6 + $0x58] sm:$0xff]
          %v2125 = vld [vmem:[#allocation6 + $0x60] sm:$0xff]
          %v2126 = vld [vmem:[#allocation6 + $0x68] sm:$0xff]
          %v2127 = vld [vmem:[#allocation6 + $0x70] sm:$0xff]
          %v2128 = vld [vmem:[#allocation6 + $0x78] sm:$0xff]
          %v2129 = vld [vmem:[#allocation6 + $0x80] sm:$0xff]
          %v2130 = vld [vmem:[#allocation6 + $0x88] sm:$0xff]
          %v2131 = vld [vmem:[#allocation6 + $0x90] sm:$0xff]
          %v2132 = vld [vmem:[#allocation6 + $0x98] sm:$0xff]
          %v2133 = vld [vmem:[#allocation6 + $0xa0] sm:$0xff]
          %v2134 = vld [vmem:[#allocation6 + $0xa8] sm:$0xff]
          %v2135 = vld [vmem:[#allocation6 + $0xb0] sm:$0xff]
          %v2136 = vld [vmem:[#allocation6 + $0xb8] sm:$0xff]
          %v2137 = vld [vmem:[#allocation6 + $0xc0] sm:$0xff]
          %v2138 = vld [vmem:[#allocation6 + $0xc8] sm:$0xff]
          %v2139 = vld [vmem:[#allocation6 + $0xd0] sm:$0xff]
          %v2140 = vld [vmem:[#allocation6 + $0xd8] sm:$0xff]
          %v2141 = vld [vmem:[#allocation6 + $0xe0] sm:$0xff]
          %v2142 = vld [vmem:[#allocation6 + $0xe8] sm:$0xff]
          %v2143 = vld [vmem:[#allocation6 + $0xf0] sm:$0xff]
          %v2144 = vld [vmem:[#allocation6 + $0xf8] sm:$0xff]
          %v2145 = vsel %vm1664, %v2081, 0.0
          %v2146 = vsel %vm1664, %v2082, 0.0
          %v2147 = vsel %vm1664, %v2083, 0.0
          %v2148 = vsel %vm1664, %v2084, 0.0
          %v2149 = vsel %vm1664, %v2085, 0.0
          %v2150 = vsel %vm1664, %v2086, 0.0
          %v2151 = vsel %vm1664, %v2087, 0.0
          %v2152 = vsel %vm1664, %v2088, 0.0
          %v2153 = vsel %vm1664, %v2089, 0.0
          %v2154 = vsel %vm1664, %v2090, 0.0
          %v2155 = vsel %vm1664, %v2091, 0.0
          %v2156 = vsel %vm1664, %v2092, 0.0
          %v2157 = vsel %vm1664, %v2093, 0.0
          %v2158 = vsel %vm1664, %v2094, 0.0
          %v2159 = vsel %vm1664, %v2095, 0.0
          %v2160 = vsel %vm1664, %v2096, 0.0
          %v2161 = vsel %vm1664, %v2097, 0.0
          %v2162 = vsel %vm1664, %v2098, 0.0
          %v2163 = vsel %vm1664, %v2099, 0.0
          %v2164 = vsel %vm1664, %v2100, 0.0
          %v2165 = vsel %vm1664, %v2101, 0.0
          %v2166 = vsel %vm1664, %v2102, 0.0
          %v2167 = vsel %vm1664, %v2103, 0.0
          %v2168 = vsel %vm1664, %v2104, 0.0
          %v2169 = vsel %vm1664, %v2105, 0.0
          %v2170 = vsel %vm1664, %v2106, 0.0
          %v2171 = vsel %vm1664, %v2107, 0.0
          %v2172 = vsel %vm1664, %v2108, 0.0
          %v2173 = vsel %vm1664, %v2109, 0.0
          %v2174 = vsel %vm1664, %v2110, 0.0
          %v2175 = vsel %vm1664, %v2111, 0.0
          %v2176 = vsel %vm1664, %v2112, 0.0
          %v2177 = vadd.f32 %v2113, %v2145
          %v2178 = vadd.f32 %v2114, %v2146
          %v2179 = vadd.f32 %v2115, %v2147
          %v2180 = vadd.f32 %v2116, %v2148
          %v2181 = vadd.f32 %v2117, %v2149
          %v2182 = vadd.f32 %v2118, %v2150
          %v2183 = vadd.f32 %v2119, %v2151
          %v2184 = vadd.f32 %v2120, %v2152
          %v2185 = vadd.f32 %v2121, %v2153
          %v2186 = vadd.f32 %v2122, %v2154
          %v2187 = vadd.f32 %v2123, %v2155
          %v2188 = vadd.f32 %v2124, %v2156
          %v2189 = vadd.f32 %v2125, %v2157
          %v2190 = vadd.f32 %v2126, %v2158
          %v2191 = vadd.f32 %v2127, %v2159
          %v2192 = vadd.f32 %v2128, %v2160
          %v2193 = vadd.f32 %v2129, %v2161
          %v2194 = vadd.f32 %v2130, %v2162
          %v2195 = vadd.f32 %v2131, %v2163
          %v2196 = vadd.f32 %v2132, %v2164
          %v2197 = vadd.f32 %v2133, %v2165
          %v2198 = vadd.f32 %v2134, %v2166
          %v2199 = vadd.f32 %v2135, %v2167
          %v2200 = vadd.f32 %v2136, %v2168
          %v2201 = vadd.f32 %v2137, %v2169
          %v2202 = vadd.f32 %v2138, %v2170
          %v2203 = vadd.f32 %v2139, %v2171
          %v2204 = vadd.f32 %v2140, %v2172
          %v2205 = vadd.f32 %v2141, %v2173
          %v2206 = vadd.f32 %v2142, %v2174
          %v2207 = vadd.f32 %v2143, %v2175
          %v2208 = vadd.f32 %v2144, %v2176
          %2209 = vst [vmem:[#allocation6] sm:$0xff] %v2177
          %2210 = vst [vmem:[#allocation6 + $0x8] sm:$0xff] %v2178
          %2211 = vst [vmem:[#allocation6 + $0x10] sm:$0xff] %v2179
          %2212 = vst [vmem:[#allocation6 + $0x18] sm:$0xff] %v2180
          %2213 = vst [vmem:[#allocation6 + $0x20] sm:$0xff] %v2181
          %2214 = vst [vmem:[#allocation6 + $0x28] sm:$0xff] %v2182
          %2215 = vst [vmem:[#allocation6 + $0x30] sm:$0xff] %v2183
          %2216 = vst [vmem:[#allocation6 + $0x38] sm:$0xff] %v2184
          %2217 = vst [vmem:[#allocation6 + $0x40] sm:$0xff] %v2185
          %2218 = vst [vmem:[#allocation6 + $0x48] sm:$0xff] %v2186
          %2219 = vst [vmem:[#allocation6 + $0x50] sm:$0xff] %v2187
          %2220 = vst [vmem:[#allocation6 + $0x58] sm:$0xff] %v2188
          %2221 = vst [vmem:[#allocation6 + $0x60] sm:$0xff] %v2189
          %2222 = vst [vmem:[#allocation6 + $0x68] sm:$0xff] %v2190
          %2223 = vst [vmem:[#allocation6 + $0x70] sm:$0xff] %v2191
          %2224 = vst [vmem:[#allocation6 + $0x78] sm:$0xff] %v2192
          %2225 = vst [vmem:[#allocation6 + $0x80] sm:$0xff] %v2193
          %2226 = vst [vmem:[#allocation6 + $0x88] sm:$0xff] %v2194
          %2227 = vst [vmem:[#allocation6 + $0x90] sm:$0xff] %v2195
          %2228 = vst [vmem:[#allocation6 + $0x98] sm:$0xff] %v2196
          %2229 = vst [vmem:[#allocation6 + $0xa0] sm:$0xff] %v2197
          %2230 = vst [vmem:[#allocation6 + $0xa8] sm:$0xff] %v2198
          %2231 = vst [vmem:[#allocation6 + $0xb0] sm:$0xff] %v2199
          %2232 = vst [vmem:[#allocation6 + $0xb8] sm:$0xff] %v2200
          %2233 = vst [vmem:[#allocation6 + $0xc0] sm:$0xff] %v2201
          %2234 = vst [vmem:[#allocation6 + $0xc8] sm:$0xff] %v2202
          %2235 = vst [vmem:[#allocation6 + $0xd0] sm:$0xff] %v2203
          %2236 = vst [vmem:[#allocation6 + $0xd8] sm:$0xff] %v2204
          %2237 = vst [vmem:[#allocation6 + $0xe0] sm:$0xff] %v2205
          %2238 = vst [vmem:[#allocation6 + $0xe8] sm:$0xff] %v2206
          %2239 = vst [vmem:[#allocation6 + $0xf0] sm:$0xff] %v2207
          %2240 = vst [vmem:[#allocation6 + $0xf8] sm:$0xff] %v2208
          %s2241 = smul.u32 8, 64
          %s2242 = smul.u32 %s2241, 8
          %s2243 = sshll.u32 %s2242, 4
          %2244 = dma.done [#allocation3], %s2243
          %v2245 = vld [vmem:[#allocation4] sm:$0xff]
          %v2246 = vld [vmem:[#allocation4 + $0x8] sm:$0xff]
          %v2247 = vld [vmem:[#allocation4 + $0x10] sm:$0xff]
          %v2248 = vld [vmem:[#allocation4 + $0x18] sm:$0xff]
          %v2249 = vld [vmem:[#allocation4 + $0x20] sm:$0xff]
          %v2250 = vld [vmem:[#allocation4 + $0x28] sm:$0xff]
          %v2251 = vld [vmem:[#allocation4 + $0x30] sm:$0xff]
          %v2252 = vld [vmem:[#allocation4 + $0x38] sm:$0xff]
          %v2253 = vld [vmem:[#allocation4 + $0x40] sm:$0xff]
          %v2254 = vld [vmem:[#allocation4 + $0x48] sm:$0xff]
          %v2255 = vld [vmem:[#allocation4 + $0x50] sm:$0xff]
          %v2256 = vld [vmem:[#allocation4 + $0x58] sm:$0xff]
          %v2257 = vld [vmem:[#allocation4 + $0x60] sm:$0xff]
          %v2258 = vld [vmem:[#allocation4 + $0x68] sm:$0xff]
          %v2259 = vld [vmem:[#allocation4 + $0x70] sm:$0xff]
          %v2260 = vld [vmem:[#allocation4 + $0x78] sm:$0xff]
          %v2261 = vld [vmem:[#allocation4 + $0x80] sm:$0xff]
          %v2262 = vld [vmem:[#allocation4 + $0x88] sm:$0xff]
          %v2263 = vld [vmem:[#allocation4 + $0x90] sm:$0xff]
          %v2264 = vld [vmem:[#allocation4 + $0x98] sm:$0xff]
          %v2265 = vld [vmem:[#allocation4 + $0xa0] sm:$0xff]
          %v2266 = vld [vmem:[#allocation4 + $0xa8] sm:$0xff]
          %v2267 = vld [vmem:[#allocation4 + $0xb0] sm:$0xff]
          %v2268 = vld [vmem:[#allocation4 + $0xb8] sm:$0xff]
          %v2269 = vld [vmem:[#allocation4 + $0xc0] sm:$0xff]
          %v2270 = vld [vmem:[#allocation4 + $0xc8] sm:$0xff]
          %v2271 = vld [vmem:[#allocation4 + $0xd0] sm:$0xff]
          %v2272 = vld [vmem:[#allocation4 + $0xd8] sm:$0xff]
          %v2273 = vld [vmem:[#allocation4 + $0xe0] sm:$0xff]
          %v2274 = vld [vmem:[#allocation4 + $0xe8] sm:$0xff]
          %v2275 = vld [vmem:[#allocation4 + $0xf0] sm:$0xff]
          %v2276 = vld [vmem:[#allocation4 + $0xf8] sm:$0xff]
          %2277 = vadd.xlane.f32.xlu0 %v2245
          %v2278 = vpop.xlane.xlu0 %2277
          %2279 = vadd.xlane.f32.xlu0 %v2246
          %v2280 = vpop.xlane.xlu0 %2279
          %2281 = vadd.xlane.f32.xlu0 %v2247
          %v2282 = vpop.xlane.xlu0 %2281
          %2283 = vadd.xlane.f32.xlu0 %v2248
          %v2284 = vpop.xlane.xlu0 %2283
          %2285 = vadd.xlane.f32.xlu0 %v2249
          %v2286 = vpop.xlane.xlu0 %2285
          %2287 = vadd.xlane.f32.xlu0 %v2250
          %v2288 = vpop.xlane.xlu0 %2287
          %2289 = vadd.xlane.f32.xlu0 %v2251
          %v2290 = vpop.xlane.xlu0 %2289
          %2291 = vadd.xlane.f32.xlu0 %v2252
          %v2292 = vpop.xlane.xlu0 %2291
          %2293 = vadd.xlane.f32.xlu0 %v2253
          %v2294 = vpop.xlane.xlu0 %2293
          %2295 = vadd.xlane.f32.xlu0 %v2254
          %v2296 = vpop.xlane.xlu0 %2295
          %2297 = vadd.xlane.f32.xlu0 %v2255
          %v2298 = vpop.xlane.xlu0 %2297
          %2299 = vadd.xlane.f32.xlu0 %v2256
          %v2300 = vpop.xlane.xlu0 %2299
          %2301 = vadd.xlane.f32.xlu0 %v2257
          %v2302 = vpop.xlane.xlu0 %2301
          %2303 = vadd.xlane.f32.xlu0 %v2258
          %v2304 = vpop.xlane.xlu0 %2303
          %2305 = vadd.xlane.f32.xlu0 %v2259
          %v2306 = vpop.xlane.xlu0 %2305
          %2307 = vadd.xlane.f32.xlu0 %v2260
          %v2308 = vpop.xlane.xlu0 %2307
          %2309 = vadd.xlane.f32.xlu0 %v2261
          %v2310 = vpop.xlane.xlu0 %2309
          %2311 = vadd.xlane.f32.xlu0 %v2262
          %v2312 = vpop.xlane.xlu0 %2311
          %2313 = vadd.xlane.f32.xlu0 %v2263
          %v2314 = vpop.xlane.xlu0 %2313
          %2315 = vadd.xlane.f32.xlu0 %v2264
          %v2316 = vpop.xlane.xlu0 %2315
          %2317 = vadd.xlane.f32.xlu0 %v2265
          %v2318 = vpop.xlane.xlu0 %2317
          %2319 = vadd.xlane.f32.xlu0 %v2266
          %v2320 = vpop.xlane.xlu0 %2319
          %2321 = vadd.xlane.f32.xlu0 %v2267
          %v2322 = vpop.xlane.xlu0 %2321
          %2323 = vadd.xlane.f32.xlu0 %v2268
          %v2324 = vpop.xlane.xlu0 %2323
          %2325 = vadd.xlane.f32.xlu0 %v2269
          %v2326 = vpop.xlane.xlu0 %2325
          %2327 = vadd.xlane.f32.xlu0 %v2270
          %v2328 = vpop.xlane.xlu0 %2327
          %2329 = vadd.xlane.f32.xlu0 %v2271
          %v2330 = vpop.xlane.xlu0 %2329
          %2331 = vadd.xlane.f32.xlu0 %v2272
          %v2332 = vpop.xlane.xlu0 %2331
          %2333 = vadd.xlane.f32.xlu0 %v2273
          %v2334 = vpop.xlane.xlu0 %2333
          %2335 = vadd.xlane.f32.xlu0 %v2274
          %v2336 = vpop.xlane.xlu0 %2335
          %2337 = vadd.xlane.f32.xlu0 %v2275
          %v2338 = vpop.xlane.xlu0 %2337
          %2339 = vadd.xlane.f32.xlu0 %v2276
          %v2340 = vpop.xlane.xlu0 %2339
          %v2341 = vmul.f32 %v2278, 0.0052083335
          %v2342 = vmul.f32 %v2280, 0.0052083335
          %v2343 = vmul.f32 %v2282, 0.0052083335
          %v2344 = vmul.f32 %v2284, 0.0052083335
          %v2345 = vmul.f32 %v2286, 0.0052083335
          %v2346 = vmul.f32 %v2288, 0.0052083335
          %v2347 = vmul.f32 %v2290, 0.0052083335
          %v2348 = vmul.f32 %v2292, 0.0052083335
          %v2349 = vmul.f32 %v2294, 0.0052083335
          %v2350 = vmul.f32 %v2296, 0.0052083335
          %v2351 = vmul.f32 %v2298, 0.0052083335
          %v2352 = vmul.f32 %v2300, 0.0052083335
          %v2353 = vmul.f32 %v2302, 0.0052083335
          %v2354 = vmul.f32 %v2304, 0.0052083335
          %v2355 = vmul.f32 %v2306, 0.0052083335
          %v2356 = vmul.f32 %v2308, 0.0052083335
          %v2357 = vmul.f32 %v2310, 0.0052083335
          %v2358 = vmul.f32 %v2312, 0.0052083335
          %v2359 = vmul.f32 %v2314, 0.0052083335
          %v2360 = vmul.f32 %v2316, 0.0052083335
          %v2361 = vmul.f32 %v2318, 0.0052083335
          %v2362 = vmul.f32 %v2320, 0.0052083335
          %v2363 = vmul.f32 %v2322, 0.0052083335
          %v2364 = vmul.f32 %v2324, 0.0052083335
          %v2365 = vmul.f32 %v2326, 0.0052083335
          %v2366 = vmul.f32 %v2328, 0.0052083335
          %v2367 = vmul.f32 %v2330, 0.0052083335
          %v2368 = vmul.f32 %v2332, 0.0052083335
          %v2369 = vmul.f32 %v2334, 0.0052083335
          %v2370 = vmul.f32 %v2336, 0.0052083335
          %v2371 = vmul.f32 %v2338, 0.0052083335
          %v2372 = vmul.f32 %v2340, 0.0052083335
          %v2373 = vld [vmem:[#allocation5] sm:$0xff]
          %v2374 = vld [vmem:[#allocation5 + $0x8] sm:$0xff]
          %v2375 = vld [vmem:[#allocation5 + $0x10] sm:$0xff]
          %v2376 = vld [vmem:[#allocation5 + $0x18] sm:$0xff]
          %v2377 = vld [vmem:[#allocation5 + $0x20] sm:$0xff]
          %v2378 = vld [vmem:[#allocation5 + $0x28] sm:$0xff]
          %v2379 = vld [vmem:[#allocation5 + $0x30] sm:$0xff]
          %v2380 = vld [vmem:[#allocation5 + $0x38] sm:$0xff]
          %v2381 = vld [vmem:[#allocation5 + $0x40] sm:$0xff]
          %v2382 = vld [vmem:[#allocation5 + $0x48] sm:$0xff]
          %v2383 = vld [vmem:[#allocation5 + $0x50] sm:$0xff]
          %v2384 = vld [vmem:[#allocation5 + $0x58] sm:$0xff]
          %v2385 = vld [vmem:[#allocation5 + $0x60] sm:$0xff]
          %v2386 = vld [vmem:[#allocation5 + $0x68] sm:$0xff]
          %v2387 = vld [vmem:[#allocation5 + $0x70] sm:$0xff]
          %v2388 = vld [vmem:[#allocation5 + $0x78] sm:$0xff]
          %v2389 = vld [vmem:[#allocation5 + $0x80] sm:$0xff]
          %v2390 = vld [vmem:[#allocation5 + $0x88] sm:$0xff]
          %v2391 = vld [vmem:[#allocation5 + $0x90] sm:$0xff]
          %v2392 = vld [vmem:[#allocation5 + $0x98] sm:$0xff]
          %v2393 = vld [vmem:[#allocation5 + $0xa0] sm:$0xff]
          %v2394 = vld [vmem:[#allocation5 + $0xa8] sm:$0xff]
          %v2395 = vld [vmem:[#allocation5 + $0xb0] sm:$0xff]
          %v2396 = vld [vmem:[#allocation5 + $0xb8] sm:$0xff]
          %v2397 = vld [vmem:[#allocation5 + $0xc0] sm:$0xff]
          %v2398 = vld [vmem:[#allocation5 + $0xc8] sm:$0xff]
          %v2399 = vld [vmem:[#allocation5 + $0xd0] sm:$0xff]
          %v2400 = vld [vmem:[#allocation5 + $0xd8] sm:$0xff]
          %v2401 = vld [vmem:[#allocation5 + $0xe0] sm:$0xff]
          %v2402 = vld [vmem:[#allocation5 + $0xe8] sm:$0xff]
          %v2403 = vld [vmem:[#allocation5 + $0xf0] sm:$0xff]
          %v2404 = vld [vmem:[#allocation5 + $0xf8] sm:$0xff]
          %v2405 = vld [vmem:[#allocation5 + $0x100] sm:$0xff]
          %v2406 = vld [vmem:[#allocation5 + $0x108] sm:$0xff]
          %v2407 = vld [vmem:[#allocation5 + $0x110] sm:$0xff]
          %v2408 = vld [vmem:[#allocation5 + $0x118] sm:$0xff]
          %v2409 = vld [vmem:[#allocation5 + $0x120] sm:$0xff]
          %v2410 = vld [vmem:[#allocation5 + $0x128] sm:$0xff]
          %v2411 = vld [vmem:[#allocation5 + $0x130] sm:$0xff]
          %v2412 = vld [vmem:[#allocation5 + $0x138] sm:$0xff]
          %v2413 = vld [vmem:[#allocation5 + $0x140] sm:$0xff]
          %v2414 = vld [vmem:[#allocation5 + $0x148] sm:$0xff]
          %v2415 = vld [vmem:[#allocation5 + $0x150] sm:$0xff]
          %v2416 = vld [vmem:[#allocation5 + $0x158] sm:$0xff]
          %v2417 = vld [vmem:[#allocation5 + $0x160] sm:$0xff]
          %v2418 = vld [vmem:[#allocation5 + $0x168] sm:$0xff]
          %v2419 = vld [vmem:[#allocation5 + $0x170] sm:$0xff]
          %v2420 = vld [vmem:[#allocation5 + $0x178] sm:$0xff]
          %v2421 = vld [vmem:[#allocation5 + $0x180] sm:$0xff]
          %v2422 = vld [vmem:[#allocation5 + $0x188] sm:$0xff]
          %v2423 = vld [vmem:[#allocation5 + $0x190] sm:$0xff]
          %v2424 = vld [vmem:[#allocation5 + $0x198] sm:$0xff]
          %v2425 = vld [vmem:[#allocation5 + $0x1a0] sm:$0xff]
          %v2426 = vld [vmem:[#allocation5 + $0x1a8] sm:$0xff]
          %v2427 = vld [vmem:[#allocation5 + $0x1b0] sm:$0xff]
          %v2428 = vld [vmem:[#allocation5 + $0x1b8] sm:$0xff]
          %v2429 = vld [vmem:[#allocation5 + $0x1c0] sm:$0xff]
          %v2430 = vld [vmem:[#allocation5 + $0x1c8] sm:$0xff]
          %v2431 = vld [vmem:[#allocation5 + $0x1d0] sm:$0xff]
          %v2432 = vld [vmem:[#allocation5 + $0x1d8] sm:$0xff]
          %v2433 = vld [vmem:[#allocation5 + $0x1e0] sm:$0xff]
          %v2434 = vld [vmem:[#allocation5 + $0x1e8] sm:$0xff]
          %v2435 = vld [vmem:[#allocation5 + $0x1f0] sm:$0xff]
          %v2436 = vld [vmem:[#allocation5 + $0x1f8] sm:$0xff]
          %2437 = vadd.xlane.f32.xlu0 %v2373
          %v2438 = vpop.xlane.xlu0 %2437
          %2439 = vadd.xlane.f32.xlu0 %v2374
          %v2440 = vpop.xlane.xlu0 %2439
          %2441 = vadd.xlane.f32.xlu0 %v2375
          %v2442 = vpop.xlane.xlu0 %2441
          %2443 = vadd.xlane.f32.xlu0 %v2376
          %v2444 = vpop.xlane.xlu0 %2443
          %2445 = vadd.xlane.f32.xlu0 %v2377
          %v2446 = vpop.xlane.xlu0 %2445
          %2447 = vadd.xlane.f32.xlu0 %v2378
          %v2448 = vpop.xlane.xlu0 %2447
          %2449 = vadd.xlane.f32.xlu0 %v2379
          %v2450 = vpop.xlane.xlu0 %2449
          %2451 = vadd.xlane.f32.xlu0 %v2380
          %v2452 = vpop.xlane.xlu0 %2451
          %2453 = vadd.xlane.f32.xlu0 %v2381
          %v2454 = vpop.xlane.xlu0 %2453
          %2455 = vadd.xlane.f32.xlu0 %v2382
          %v2456 = vpop.xlane.xlu0 %2455
          %2457 = vadd.xlane.f32.xlu0 %v2383
          %v2458 = vpop.xlane.xlu0 %2457
          %2459 = vadd.xlane.f32.xlu0 %v2384
          %v2460 = vpop.xlane.xlu0 %2459
          %2461 = vadd.xlane.f32.xlu0 %v2385
          %v2462 = vpop.xlane.xlu0 %2461
          %2463 = vadd.xlane.f32.xlu0 %v2386
          %v2464 = vpop.xlane.xlu0 %2463
          %2465 = vadd.xlane.f32.xlu0 %v2387
          %v2466 = vpop.xlane.xlu0 %2465
          %2467 = vadd.xlane.f32.xlu0 %v2388
          %v2468 = vpop.xlane.xlu0 %2467
          %2469 = vadd.xlane.f32.xlu0 %v2389
          %v2470 = vpop.xlane.xlu0 %2469
          %2471 = vadd.xlane.f32.xlu0 %v2390
          %v2472 = vpop.xlane.xlu0 %2471
          %2473 = vadd.xlane.f32.xlu0 %v2391
          %v2474 = vpop.xlane.xlu0 %2473
          %2475 = vadd.xlane.f32.xlu0 %v2392
          %v2476 = vpop.xlane.xlu0 %2475
          %2477 = vadd.xlane.f32.xlu0 %v2393
          %v2478 = vpop.xlane.xlu0 %2477
          %2479 = vadd.xlane.f32.xlu0 %v2394
          %v2480 = vpop.xlane.xlu0 %2479
          %2481 = vadd.xlane.f32.xlu0 %v2395
          %v2482 = vpop.xlane.xlu0 %2481
          %2483 = vadd.xlane.f32.xlu0 %v2396
          %v2484 = vpop.xlane.xlu0 %2483
          %2485 = vadd.xlane.f32.xlu0 %v2397
          %v2486 = vpop.xlane.xlu0 %2485
          %2487 = vadd.xlane.f32.xlu0 %v2398
          %v2488 = vpop.xlane.xlu0 %2487
          %2489 = vadd.xlane.f32.xlu0 %v2399
          %v2490 = vpop.xlane.xlu0 %2489
          %2491 = vadd.xlane.f32.xlu0 %v2400
          %v2492 = vpop.xlane.xlu0 %2491
          %2493 = vadd.xlane.f32.xlu0 %v2401
          %v2494 = vpop.xlane.xlu0 %2493
          %2495 = vadd.xlane.f32.xlu0 %v2402
          %v2496 = vpop.xlane.xlu0 %2495
          %2497 = vadd.xlane.f32.xlu0 %v2403
          %v2498 = vpop.xlane.xlu0 %2497
          %2499 = vadd.xlane.f32.xlu0 %v2404
          %v2500 = vpop.xlane.xlu0 %2499
          %2501 = vadd.xlane.f32.xlu0 %v2405
          %v2502 = vpop.xlane.xlu0 %2501
          %2503 = vadd.xlane.f32.xlu0 %v2406
          %v2504 = vpop.xlane.xlu0 %2503
          %2505 = vadd.xlane.f32.xlu0 %v2407
          %v2506 = vpop.xlane.xlu0 %2505
          %2507 = vadd.xlane.f32.xlu0 %v2408
          %v2508 = vpop.xlane.xlu0 %2507
          %2509 = vadd.xlane.f32.xlu0 %v2409
          %v2510 = vpop.xlane.xlu0 %2509
          %2511 = vadd.xlane.f32.xlu0 %v2410
          %v2512 = vpop.xlane.xlu0 %2511
          %2513 = vadd.xlane.f32.xlu0 %v2411
          %v2514 = vpop.xlane.xlu0 %2513
          %2515 = vadd.xlane.f32.xlu0 %v2412
          %v2516 = vpop.xlane.xlu0 %2515
          %2517 = vadd.xlane.f32.xlu0 %v2413
          %v2518 = vpop.xlane.xlu0 %2517
          %2519 = vadd.xlane.f32.xlu0 %v2414
          %v2520 = vpop.xlane.xlu0 %2519
          %2521 = vadd.xlane.f32.xlu0 %v2415
          %v2522 = vpop.xlane.xlu0 %2521
          %2523 = vadd.xlane.f32.xlu0 %v2416
          %v2524 = vpop.xlane.xlu0 %2523
          %2525 = vadd.xlane.f32.xlu0 %v2417
          %v2526 = vpop.xlane.xlu0 %2525
          %2527 = vadd.xlane.f32.xlu0 %v2418
          %v2528 = vpop.xlane.xlu0 %2527
          %2529 = vadd.xlane.f32.xlu0 %v2419
          %v2530 = vpop.xlane.xlu0 %2529
          %2531 = vadd.xlane.f32.xlu0 %v2420
          %v2532 = vpop.xlane.xlu0 %2531
          %2533 = vadd.xlane.f32.xlu0 %v2421
          %v2534 = vpop.xlane.xlu0 %2533
          %2535 = vadd.xlane.f32.xlu0 %v2422
          %v2536 = vpop.xlane.xlu0 %2535
          %2537 = vadd.xlane.f32.xlu0 %v2423
          %v2538 = vpop.xlane.xlu0 %2537
          %2539 = vadd.xlane.f32.xlu0 %v2424
          %v2540 = vpop.xlane.xlu0 %2539
          %2541 = vadd.xlane.f32.xlu0 %v2425
          %v2542 = vpop.xlane.xlu0 %2541
          %2543 = vadd.xlane.f32.xlu0 %v2426
          %v2544 = vpop.xlane.xlu0 %2543
          %2545 = vadd.xlane.f32.xlu0 %v2427
          %v2546 = vpop.xlane.xlu0 %2545
          %2547 = vadd.xlane.f32.xlu0 %v2428
          %v2548 = vpop.xlane.xlu0 %2547
          %2549 = vadd.xlane.f32.xlu0 %v2429
          %v2550 = vpop.xlane.xlu0 %2549
          %2551 = vadd.xlane.f32.xlu0 %v2430
          %v2552 = vpop.xlane.xlu0 %2551
          %2553 = vadd.xlane.f32.xlu0 %v2431
          %v2554 = vpop.xlane.xlu0 %2553
          %2555 = vadd.xlane.f32.xlu0 %v2432
          %v2556 = vpop.xlane.xlu0 %2555
          %2557 = vadd.xlane.f32.xlu0 %v2433
          %v2558 = vpop.xlane.xlu0 %2557
          %2559 = vadd.xlane.f32.xlu0 %v2434
          %v2560 = vpop.xlane.xlu0 %2559
          %2561 = vadd.xlane.f32.xlu0 %v2435
          %v2562 = vpop.xlane.xlu0 %2561
          %2563 = vadd.xlane.f32.xlu0 %v2436
          %v2564 = vpop.xlane.xlu0 %2563
          %v2565 = vmul.f32 %v2438, 0.0052083335
          %v2566 = vmul.f32 %v2440, 0.0052083335
          %v2567 = vmul.f32 %v2442, 0.0052083335
          %v2568 = vmul.f32 %v2444, 0.0052083335
          %v2569 = vmul.f32 %v2446, 0.0052083335
          %v2570 = vmul.f32 %v2448, 0.0052083335
          %v2571 = vmul.f32 %v2450, 0.0052083335
          %v2572 = vmul.f32 %v2452, 0.0052083335
          %v2573 = vmul.f32 %v2454, 0.0052083335
          %v2574 = vmul.f32 %v2456, 0.0052083335
          %v2575 = vmul.f32 %v2458, 0.0052083335
          %v2576 = vmul.f32 %v2460, 0.0052083335
          %v2577 = vmul.f32 %v2462, 0.0052083335
          %v2578 = vmul.f32 %v2464, 0.0052083335
          %v2579 = vmul.f32 %v2466, 0.0052083335
          %v2580 = vmul.f32 %v2468, 0.0052083335
          %v2581 = vmul.f32 %v2470, 0.0052083335
          %v2582 = vmul.f32 %v2472, 0.0052083335
          %v2583 = vmul.f32 %v2474, 0.0052083335
          %v2584 = vmul.f32 %v2476, 0.0052083335
          %v2585 = vmul.f32 %v2478, 0.0052083335
          %v2586 = vmul.f32 %v2480, 0.0052083335
          %v2587 = vmul.f32 %v2482, 0.0052083335
          %v2588 = vmul.f32 %v2484, 0.0052083335
          %v2589 = vmul.f32 %v2486, 0.0052083335
          %v2590 = vmul.f32 %v2488, 0.0052083335
          %v2591 = vmul.f32 %v2490, 0.0052083335
          %v2592 = vmul.f32 %v2492, 0.0052083335
          %v2593 = vmul.f32 %v2494, 0.0052083335
          %v2594 = vmul.f32 %v2496, 0.0052083335
          %v2595 = vmul.f32 %v2498, 0.0052083335
          %v2596 = vmul.f32 %v2500, 0.0052083335
          %v2597 = vmul.f32 %v2502, 0.0052083335
          %v2598 = vmul.f32 %v2504, 0.0052083335
          %v2599 = vmul.f32 %v2506, 0.0052083335
          %v2600 = vmul.f32 %v2508, 0.0052083335
          %v2601 = vmul.f32 %v2510, 0.0052083335
          %v2602 = vmul.f32 %v2512, 0.0052083335
          %v2603 = vmul.f32 %v2514, 0.0052083335
          %v2604 = vmul.f32 %v2516, 0.0052083335
          %v2605 = vmul.f32 %v2518, 0.0052083335
          %v2606 = vmul.f32 %v2520, 0.0052083335
          %v2607 = vmul.f32 %v2522, 0.0052083335
          %v2608 = vmul.f32 %v2524, 0.0052083335
          %v2609 = vmul.f32 %v2526, 0.0052083335
          %v2610 = vmul.f32 %v2528, 0.0052083335
          %v2611 = vmul.f32 %v2530, 0.0052083335
          %v2612 = vmul.f32 %v2532, 0.0052083335
          %v2613 = vmul.f32 %v2534, 0.0052083335
          %v2614 = vmul.f32 %v2536, 0.0052083335
          %v2615 = vmul.f32 %v2538, 0.0052083335
          %v2616 = vmul.f32 %v2540, 0.0052083335
          %v2617 = vmul.f32 %v2542, 0.0052083335
          %v2618 = vmul.f32 %v2544, 0.0052083335
          %v2619 = vmul.f32 %v2546, 0.0052083335
          %v2620 = vmul.f32 %v2548, 0.0052083335
          %v2621 = vmul.f32 %v2550, 0.0052083335
          %v2622 = vmul.f32 %v2552, 0.0052083335
          %v2623 = vmul.f32 %v2554, 0.0052083335
          %v2624 = vmul.f32 %v2556, 0.0052083335
          %v2625 = vmul.f32 %v2558, 0.0052083335
          %v2626 = vmul.f32 %v2560, 0.0052083335
          %v2627 = vmul.f32 %v2562, 0.0052083335
          %v2628 = vmul.f32 %v2564, 0.0052083335
          %v2629 = vld [vmem:[#allocation6] sm:$0xff]
          %v2630 = vld [vmem:[#allocation6 + $0x8] sm:$0xff]
          %v2631 = vld [vmem:[#allocation6 + $0x10] sm:$0xff]
          %v2632 = vld [vmem:[#allocation6 + $0x18] sm:$0xff]
          %v2633 = vld [vmem:[#allocation6 + $0x20] sm:$0xff]
          %v2634 = vld [vmem:[#allocation6 + $0x28] sm:$0xff]
          %v2635 = vld [vmem:[#allocation6 + $0x30] sm:$0xff]
          %v2636 = vld [vmem:[#allocation6 + $0x38] sm:$0xff]
          %v2637 = vld [vmem:[#allocation6 + $0x40] sm:$0xff]
          %v2638 = vld [vmem:[#allocation6 + $0x48] sm:$0xff]
          %v2639 = vld [vmem:[#allocation6 + $0x50] sm:$0xff]
          %v2640 = vld [vmem:[#allocation6 + $0x58] sm:$0xff]
          %v2641 = vld [vmem:[#allocation6 + $0x60] sm:$0xff]
          %v2642 = vld [vmem:[#allocation6 + $0x68] sm:$0xff]
          %v2643 = vld [vmem:[#allocation6 + $0x70] sm:$0xff]
          %v2644 = vld [vmem:[#allocation6 + $0x78] sm:$0xff]
          %v2645 = vld [vmem:[#allocation6 + $0x80] sm:$0xff]
          %v2646 = vld [vmem:[#allocation6 + $0x88] sm:$0xff]
          %v2647 = vld [vmem:[#allocation6 + $0x90] sm:$0xff]
          %v2648 = vld [vmem:[#allocation6 + $0x98] sm:$0xff]
          %v2649 = vld [vmem:[#allocation6 + $0xa0] sm:$0xff]
          %v2650 = vld [vmem:[#allocation6 + $0xa8] sm:$0xff]
          %v2651 = vld [vmem:[#allocation6 + $0xb0] sm:$0xff]
          %v2652 = vld [vmem:[#allocation6 + $0xb8] sm:$0xff]
          %v2653 = vld [vmem:[#allocation6 + $0xc0] sm:$0xff]
          %v2654 = vld [vmem:[#allocation6 + $0xc8] sm:$0xff]
          %v2655 = vld [vmem:[#allocation6 + $0xd0] sm:$0xff]
          %v2656 = vld [vmem:[#allocation6 + $0xd8] sm:$0xff]
          %v2657 = vld [vmem:[#allocation6 + $0xe0] sm:$0xff]
          %v2658 = vld [vmem:[#allocation6 + $0xe8] sm:$0xff]
          %v2659 = vld [vmem:[#allocation6 + $0xf0] sm:$0xff]
          %v2660 = vld [vmem:[#allocation6 + $0xf8] sm:$0xff]
          %2661 = vadd.xlane.f32.xlu0 %v2629
          %v2662 = vpop.xlane.xlu0 %2661
          %2663 = vadd.xlane.f32.xlu0 %v2630
          %v2664 = vpop.xlane.xlu0 %2663
          %2665 = vadd.xlane.f32.xlu0 %v2631
          %v2666 = vpop.xlane.xlu0 %2665
          %2667 = vadd.xlane.f32.xlu0 %v2632
          %v2668 = vpop.xlane.xlu0 %2667
          %2669 = vadd.xlane.f32.xlu0 %v2633
          %v2670 = vpop.xlane.xlu0 %2669
          %2671 = vadd.xlane.f32.xlu0 %v2634
          %v2672 = vpop.xlane.xlu0 %2671
          %2673 = vadd.xlane.f32.xlu0 %v2635
          %v2674 = vpop.xlane.xlu0 %2673
          %2675 = vadd.xlane.f32.xlu0 %v2636
          %v2676 = vpop.xlane.xlu0 %2675
          %2677 = vadd.xlane.f32.xlu0 %v2637
          %v2678 = vpop.xlane.xlu0 %2677
          %2679 = vadd.xlane.f32.xlu0 %v2638
          %v2680 = vpop.xlane.xlu0 %2679
          %2681 = vadd.xlane.f32.xlu0 %v2639
          %v2682 = vpop.xlane.xlu0 %2681
          %2683 = vadd.xlane.f32.xlu0 %v2640
          %v2684 = vpop.xlane.xlu0 %2683
          %2685 = vadd.xlane.f32.xlu0 %v2641
          %v2686 = vpop.xlane.xlu0 %2685
          %2687 = vadd.xlane.f32.xlu0 %v2642
          %v2688 = vpop.xlane.xlu0 %2687
          %2689 = vadd.xlane.f32.xlu0 %v2643
          %v2690 = vpop.xlane.xlu0 %2689
          %2691 = vadd.xlane.f32.xlu0 %v2644
          %v2692 = vpop.xlane.xlu0 %2691
          %2693 = vadd.xlane.f32.xlu0 %v2645
          %v2694 = vpop.xlane.xlu0 %2693
          %2695 = vadd.xlane.f32.xlu0 %v2646
          %v2696 = vpop.xlane.xlu0 %2695
          %2697 = vadd.xlane.f32.xlu0 %v2647
          %v2698 = vpop.xlane.xlu0 %2697
          %2699 = vadd.xlane.f32.xlu0 %v2648
          %v2700 = vpop.xlane.xlu0 %2699
          %2701 = vadd.xlane.f32.xlu0 %v2649
          %v2702 = vpop.xlane.xlu0 %2701
          %2703 = vadd.xlane.f32.xlu0 %v2650
          %v2704 = vpop.xlane.xlu0 %2703
          %2705 = vadd.xlane.f32.xlu0 %v2651
          %v2706 = vpop.xlane.xlu0 %2705
          %2707 = vadd.xlane.f32.xlu0 %v2652
          %v2708 = vpop.xlane.xlu0 %2707
          %2709 = vadd.xlane.f32.xlu0 %v2653
          %v2710 = vpop.xlane.xlu0 %2709
          %2711 = vadd.xlane.f32.xlu0 %v2654
          %v2712 = vpop.xlane.xlu0 %2711
          %2713 = vadd.xlane.f32.xlu0 %v2655
          %v2714 = vpop.xlane.xlu0 %2713
          %2715 = vadd.xlane.f32.xlu0 %v2656
          %v2716 = vpop.xlane.xlu0 %2715
          %2717 = vadd.xlane.f32.xlu0 %v2657
          %v2718 = vpop.xlane.xlu0 %2717
          %2719 = vadd.xlane.f32.xlu0 %v2658
          %v2720 = vpop.xlane.xlu0 %2719
          %2721 = vadd.xlane.f32.xlu0 %v2659
          %v2722 = vpop.xlane.xlu0 %2721
          %2723 = vadd.xlane.f32.xlu0 %v2660
          %v2724 = vpop.xlane.xlu0 %2723
          %v2725 = vmul.f32 %v2662, 0.0052083335
          %v2726 = vmul.f32 %v2664, 0.0052083335
          %v2727 = vmul.f32 %v2666, 0.0052083335
          %v2728 = vmul.f32 %v2668, 0.0052083335
          %v2729 = vmul.f32 %v2670, 0.0052083335
          %v2730 = vmul.f32 %v2672, 0.0052083335
          %v2731 = vmul.f32 %v2674, 0.0052083335
          %v2732 = vmul.f32 %v2676, 0.0052083335
          %v2733 = vmul.f32 %v2678, 0.0052083335
          %v2734 = vmul.f32 %v2680, 0.0052083335
          %v2735 = vmul.f32 %v2682, 0.0052083335
          %v2736 = vmul.f32 %v2684, 0.0052083335
          %v2737 = vmul.f32 %v2686, 0.0052083335
          %v2738 = vmul.f32 %v2688, 0.0052083335
          %v2739 = vmul.f32 %v2690, 0.0052083335
          %v2740 = vmul.f32 %v2692, 0.0052083335
          %v2741 = vmul.f32 %v2694, 0.0052083335
          %v2742 = vmul.f32 %v2696, 0.0052083335
          %v2743 = vmul.f32 %v2698, 0.0052083335
          %v2744 = vmul.f32 %v2700, 0.0052083335
          %v2745 = vmul.f32 %v2702, 0.0052083335
          %v2746 = vmul.f32 %v2704, 0.0052083335
          %v2747 = vmul.f32 %v2706, 0.0052083335
          %v2748 = vmul.f32 %v2708, 0.0052083335
          %v2749 = vmul.f32 %v2710, 0.0052083335
          %v2750 = vmul.f32 %v2712, 0.0052083335
          %v2751 = vmul.f32 %v2714, 0.0052083335
          %v2752 = vmul.f32 %v2716, 0.0052083335
          %v2753 = vmul.f32 %v2718, 0.0052083335
          %v2754 = vmul.f32 %v2720, 0.0052083335
          %v2755 = vmul.f32 %v2722, 0.0052083335
          %v2756 = vmul.f32 %v2724, 0.0052083335
          %v2757 = vld [vmem:[#allocation11] sm:$0xff]
          %v2758 = vld [vmem:[#allocation2] sm:$0xff]
          %v2759 = vld [vmem:[#allocation2 + $0x8] sm:$0xff]
          %v2760 = vld [vmem:[#allocation2 + $0x10] sm:$0xff]
          %v2761 = vld [vmem:[#allocation2 + $0x18] sm:$0xff]
          %v2762 = vld [vmem:[#allocation2 + $0x20] sm:$0xff]
          %v2763 = vld [vmem:[#allocation2 + $0x28] sm:$0xff]
          %v2764 = vld [vmem:[#allocation2 + $0x30] sm:$0xff]
          %v2765 = vld [vmem:[#allocation2 + $0x38] sm:$0xff]
          %v2766 = vld [vmem:[#allocation2 + $0x40] sm:$0xff]
          %v2767 = vld [vmem:[#allocation2 + $0x48] sm:$0xff]
          %v2768 = vld [vmem:[#allocation2 + $0x50] sm:$0xff]
          %v2769 = vld [vmem:[#allocation2 + $0x58] sm:$0xff]
          %v2770 = vld [vmem:[#allocation2 + $0x60] sm:$0xff]
          %v2771 = vld [vmem:[#allocation2 + $0x68] sm:$0xff]
          %v2772 = vld [vmem:[#allocation2 + $0x70] sm:$0xff]
          %v2773 = vld [vmem:[#allocation2 + $0x78] sm:$0xff]
          %v2774 = vld [vmem:[#allocation2 + $0x80] sm:$0xff]
          %v2775 = vld [vmem:[#allocation2 + $0x88] sm:$0xff]
          %v2776 = vld [vmem:[#allocation2 + $0x90] sm:$0xff]
          %v2777 = vld [vmem:[#allocation2 + $0x98] sm:$0xff]
          %v2778 = vld [vmem:[#allocation2 + $0xa0] sm:$0xff]
          %v2779 = vld [vmem:[#allocation2 + $0xa8] sm:$0xff]
          %v2780 = vld [vmem:[#allocation2 + $0xb0] sm:$0xff]
          %v2781 = vld [vmem:[#allocation2 + $0xb8] sm:$0xff]
          %v2782 = vld [vmem:[#allocation2 + $0xc0] sm:$0xff]
          %v2783 = vld [vmem:[#allocation2 + $0xc8] sm:$0xff]
          %v2784 = vld [vmem:[#allocation2 + $0xd0] sm:$0xff]
          %v2785 = vld [vmem:[#allocation2 + $0xd8] sm:$0xff]
          %v2786 = vld [vmem:[#allocation2 + $0xe0] sm:$0xff]
          %v2787 = vld [vmem:[#allocation2 + $0xe8] sm:$0xff]
          %v2788 = vld [vmem:[#allocation2 + $0xf0] sm:$0xff]
          %v2789 = vld [vmem:[#allocation2 + $0xf8] sm:$0xff]
          %v2790 = vld [vmem:[#allocation2 + $0x100] sm:$0xff]
          %v2791 = vld [vmem:[#allocation2 + $0x108] sm:$0xff]
          %v2792 = vld [vmem:[#allocation2 + $0x110] sm:$0xff]
          %v2793 = vld [vmem:[#allocation2 + $0x118] sm:$0xff]
          %v2794 = vld [vmem:[#allocation2 + $0x120] sm:$0xff]
          %v2795 = vld [vmem:[#allocation2 + $0x128] sm:$0xff]
          %v2796 = vld [vmem:[#allocation2 + $0x130] sm:$0xff]
          %v2797 = vld [vmem:[#allocation2 + $0x138] sm:$0xff]
          %v2798 = vld [vmem:[#allocation2 + $0x140] sm:$0xff]
          %v2799 = vld [vmem:[#allocation2 + $0x148] sm:$0xff]
          %v2800 = vld [vmem:[#allocation2 + $0x150] sm:$0xff]
          %v2801 = vld [vmem:[#allocation2 + $0x158] sm:$0xff]
          %v2802 = vld [vmem:[#allocation2 + $0x160] sm:$0xff]
          %v2803 = vld [vmem:[#allocation2 + $0x168] sm:$0xff]
          %v2804 = vld [vmem:[#allocation2 + $0x170] sm:$0xff]
          %v2805 = vld [vmem:[#allocation2 + $0x178] sm:$0xff]
          %v2806 = vld [vmem:[#allocation2 + $0x180] sm:$0xff]
          %v2807 = vld [vmem:[#allocation2 + $0x188] sm:$0xff]
          %v2808 = vld [vmem:[#allocation2 + $0x190] sm:$0xff]
          %v2809 = vld [vmem:[#allocation2 + $0x198] sm:$0xff]
          %v2810 = vld [vmem:[#allocation2 + $0x1a0] sm:$0xff]
          %v2811 = vld [vmem:[#allocation2 + $0x1a8] sm:$0xff]
          %v2812 = vld [vmem:[#allocation2 + $0x1b0] sm:$0xff]
          %v2813 = vld [vmem:[#allocation2 + $0x1b8] sm:$0xff]
          %v2814 = vld [vmem:[#allocation2 + $0x1c0] sm:$0xff]
          %v2815 = vld [vmem:[#allocation2 + $0x1c8] sm:$0xff]
          %v2816 = vld [vmem:[#allocation2 + $0x1d0] sm:$0xff]
          %v2817 = vld [vmem:[#allocation2 + $0x1d8] sm:$0xff]
          %v2818 = vld [vmem:[#allocation2 + $0x1e0] sm:$0xff]
          %v2819 = vld [vmem:[#allocation2 + $0x1e8] sm:$0xff]
          %v2820 = vld [vmem:[#allocation2 + $0x1f0] sm:$0xff]
          %v2821 = vld [vmem:[#allocation2 + $0x1f8] sm:$0xff]
          %v2822 = vld [vmem:[#allocation2 + $0x200] sm:$0xff]
          %v2823 = vld [vmem:[#allocation2 + $0x208] sm:$0xff]
          %v2824 = vld [vmem:[#allocation2 + $0x210] sm:$0xff]
          %v2825 = vld [vmem:[#allocation2 + $0x218] sm:$0xff]
          %v2826 = vld [vmem:[#allocation2 + $0x220] sm:$0xff]
          %v2827 = vld [vmem:[#allocation2 + $0x228] sm:$0xff]
          %v2828 = vld [vmem:[#allocation2 + $0x230] sm:$0xff]
          %v2829 = vld [vmem:[#allocation2 + $0x238] sm:$0xff]
          %v2830 = vld [vmem:[#allocation2 + $0x240] sm:$0xff]
          %v2831 = vld [vmem:[#allocation2 + $0x248] sm:$0xff]
          %v2832 = vld [vmem:[#allocation2 + $0x250] sm:$0xff]
          %v2833 = vld [vmem:[#allocation2 + $0x258] sm:$0xff]
          %v2834 = vld [vmem:[#allocation2 + $0x260] sm:$0xff]
          %v2835 = vld [vmem:[#allocation2 + $0x268] sm:$0xff]
          %v2836 = vld [vmem:[#allocation2 + $0x270] sm:$0xff]
          %v2837 = vld [vmem:[#allocation2 + $0x278] sm:$0xff]
          %v2838 = vld [vmem:[#allocation2 + $0x280] sm:$0xff]
          %v2839 = vld [vmem:[#allocation2 + $0x288] sm:$0xff]
          %v2840 = vld [vmem:[#allocation2 + $0x290] sm:$0xff]
          %v2841 = vld [vmem:[#allocation2 + $0x298] sm:$0xff]
          %v2842 = vld [vmem:[#allocation2 + $0x2a0] sm:$0xff]
          %v2843 = vld [vmem:[#allocation2 + $0x2a8] sm:$0xff]
          %v2844 = vld [vmem:[#allocation2 + $0x2b0] sm:$0xff]
          %v2845 = vld [vmem:[#allocation2 + $0x2b8] sm:$0xff]
          %v2846 = vld [vmem:[#allocation2 + $0x2c0] sm:$0xff]
          %v2847 = vld [vmem:[#allocation2 + $0x2c8] sm:$0xff]
          %v2848 = vld [vmem:[#allocation2 + $0x2d0] sm:$0xff]
          %v2849 = vld [vmem:[#allocation2 + $0x2d8] sm:$0xff]
          %v2850 = vld [vmem:[#allocation2 + $0x2e0] sm:$0xff]
          %v2851 = vld [vmem:[#allocation2 + $0x2e8] sm:$0xff]
          %v2852 = vld [vmem:[#allocation2 + $0x2f0] sm:$0xff]
          %v2853 = vld [vmem:[#allocation2 + $0x2f8] sm:$0xff]
          %v2854 = vld [vmem:[#allocation2 + $0x300] sm:$0xff]
          %v2855 = vld [vmem:[#allocation2 + $0x308] sm:$0xff]
          %v2856 = vld [vmem:[#allocation2 + $0x310] sm:$0xff]
          %v2857 = vld [vmem:[#allocation2 + $0x318] sm:$0xff]
          %v2858 = vld [vmem:[#allocation2 + $0x320] sm:$0xff]
          %v2859 = vld [vmem:[#allocation2 + $0x328] sm:$0xff]
          %v2860 = vld [vmem:[#allocation2 + $0x330] sm:$0xff]
          %v2861 = vld [vmem:[#allocation2 + $0x338] sm:$0xff]
          %v2862 = vld [vmem:[#allocation2 + $0x340] sm:$0xff]
          %v2863 = vld [vmem:[#allocation2 + $0x348] sm:$0xff]
          %v2864 = vld [vmem:[#allocation2 + $0x350] sm:$0xff]
          %v2865 = vld [vmem:[#allocation2 + $0x358] sm:$0xff]
          %v2866 = vld [vmem:[#allocation2 + $0x360] sm:$0xff]
          %v2867 = vld [vmem:[#allocation2 + $0x368] sm:$0xff]
          %v2868 = vld [vmem:[#allocation2 + $0x370] sm:$0xff]
          %v2869 = vld [vmem:[#allocation2 + $0x378] sm:$0xff]
          %v2870 = vld [vmem:[#allocation2 + $0x380] sm:$0xff]
          %v2871 = vld [vmem:[#allocation2 + $0x388] sm:$0xff]
          %v2872 = vld [vmem:[#allocation2 + $0x390] sm:$0xff]
          %v2873 = vld [vmem:[#allocation2 + $0x398] sm:$0xff]
          %v2874 = vld [vmem:[#allocation2 + $0x3a0] sm:$0xff]
          %v2875 = vld [vmem:[#allocation2 + $0x3a8] sm:$0xff]
          %v2876 = vld [vmem:[#allocation2 + $0x3b0] sm:$0xff]
          %v2877 = vld [vmem:[#allocation2 + $0x3b8] sm:$0xff]
          %v2878 = vld [vmem:[#allocation2 + $0x3c0] sm:$0xff]
          %v2879 = vld [vmem:[#allocation2 + $0x3c8] sm:$0xff]
          %v2880 = vld [vmem:[#allocation2 + $0x3d0] sm:$0xff]
          %v2881 = vld [vmem:[#allocation2 + $0x3d8] sm:$0xff]
          %v2882 = vld [vmem:[#allocation2 + $0x3e0] sm:$0xff]
          %v2883 = vld [vmem:[#allocation2 + $0x3e8] sm:$0xff]
          %v2884 = vld [vmem:[#allocation2 + $0x3f0] sm:$0xff]
          %v2885 = vld [vmem:[#allocation2 + $0x3f8] sm:$0xff]
          %v2918 = vlaneseq
          %v2919 = vshrl.u32 %v2918, 7
          %v2920 = vsub.s32 %v1597, %v2919
          %v2921 = vrot.slane %v2341, %v2920
          %v2922 = vadd.s32 %v1597, 4294967288
          %v2923 = vlaneseq
          %v2924 = vshrl.u32 %v2923, 7
          %v2925 = vsub.s32 %v2922, %v2924
          %v2926 = vrot.slane %v2342, %v2925
          %vm2927 = vcmask 130112
          %v2928 = vsel %vm2927, %v2926, %v2921
          %v2929 = vadd.s32 %v1597, 4294967280
          %v2930 = vlaneseq
          %v2931 = vshrl.u32 %v2930, 7
          %v2932 = vsub.s32 %v2929, %v2931
          %v2933 = vrot.slane %v2343, %v2932
          %vm2934 = vcmask 195712
          %v2935 = vsel %vm2934, %v2933, %v2928
          %v2936 = vadd.s32 %v1597, 4294967272
          %v2937 = vlaneseq
          %v2938 = vshrl.u32 %v2937, 7
          %v2939 = vsub.s32 %v2936, %v2938
          %v2940 = vrot.slane %v2344, %v2939
          %vm2941 = vcmask 261312
          %v2942 = vsel %vm2941, %v2940, %v2935
          %v2943 = vadd.s32 %v1597, 4294967264
          %v2944 = vlaneseq
          %v2945 = vshrl.u32 %v2944, 7
          %v2946 = vsub.s32 %v2943, %v2945
          %v2947 = vrot.slane %v2345, %v2946
          %vm2948 = vcmask 326912
          %v2949 = vsel %vm2948, %v2947, %v2942
          %v2950 = vadd.s32 %v1597, 4294967256
          %v2951 = vlaneseq
          %v2952 = vshrl.u32 %v2951, 7
          %v2953 = vsub.s32 %v2950, %v2952
          %v2954 = vrot.slane %v2346, %v2953
          %vm2955 = vcmask 392512
          %v2956 = vsel %vm2955, %v2954, %v2949
          %v2957 = vadd.s32 %v1597, 4294967248
          %v2958 = vlaneseq
          %v2959 = vshrl.u32 %v2958, 7
          %v2960 = vsub.s32 %v2957, %v2959
          %v2961 = vrot.slane %v2347, %v2960
          %vm2962 = vcmask 458112
          %v2963 = vsel %vm2962, %v2961, %v2956
          %v2964 = vadd.s32 %v1597, 4294967240
          %v2965 = vlaneseq
          %v2966 = vshrl.u32 %v2965, 7
          %v2967 = vsub.s32 %v2964, %v2966
          %v2968 = vrot.slane %v2348, %v2967
          %vm2969 = vcmask 523712
          %v2970 = vsel %vm2969, %v2968, %v2963
          %v2971 = vadd.s32 %v1597, 4294967232
          %v2972 = vlaneseq
          %v2973 = vshrl.u32 %v2972, 7
          %v2974 = vsub.s32 %v2971, %v2973
          %v2975 = vrot.slane %v2349, %v2974
          %vm2976 = vcmask 589312
          %v2977 = vsel %vm2976, %v2975, %v2970
          %v2978 = vadd.s32 %v1597, 4294967224
          %v2979 = vlaneseq
          %v2980 = vshrl.u32 %v2979, 7
          %v2981 = vsub.s32 %v2978, %v2980
          %v2982 = vrot.slane %v2350, %v2981
          %vm2983 = vcmask 654912
          %v2984 = vsel %vm2983, %v2982, %v2977
          %v2985 = vadd.s32 %v1597, 4294967216
          %v2986 = vlaneseq
          %v2987 = vshrl.u32 %v2986, 7
          %v2988 = vsub.s32 %v2985, %v2987
          %v2989 = vrot.slane %v2351, %v2988
          %vm2990 = vcmask 720512
          %v2991 = vsel %vm2990, %v2989, %v2984
          %v2992 = vadd.s32 %v1597, 4294967208
          %v2993 = vlaneseq
          %v2994 = vshrl.u32 %v2993, 7
          %v2995 = vsub.s32 %v2992, %v2994
          %v2996 = vrot.slane %v2352, %v2995
          %vm2997 = vcmask 786112
          %v2998 = vsel %vm2997, %v2996, %v2991
          %v2999 = vadd.s32 %v1597, 4294967200
          %v3000 = vlaneseq
          %v3001 = vshrl.u32 %v3000, 7
          %v3002 = vsub.s32 %v2999, %v3001
          %v3003 = vrot.slane %v2353, %v3002
          %vm3004 = vcmask 851712
          %v3005 = vsel %vm3004, %v3003, %v2998
          %v3006 = vadd.s32 %v1597, 4294967192
          %v3007 = vlaneseq
          %v3008 = vshrl.u32 %v3007, 7
          %v3009 = vsub.s32 %v3006, %v3008
          %v3010 = vrot.slane %v2354, %v3009
          %vm3011 = vcmask 917312
          %v3012 = vsel %vm3011, %v3010, %v3005
          %v3013 = vadd.s32 %v1597, 4294967184
          %v3014 = vlaneseq
          %v3015 = vshrl.u32 %v3014, 7
          %v3016 = vsub.s32 %v3013, %v3015
          %v3017 = vrot.slane %v2355, %v3016
          %vm3018 = vcmask 982912
          %v3019 = vsel %vm3018, %v3017, %v3012
          %v3020 = vadd.s32 %v1597, 4294967176
          %v3021 = vlaneseq
          %v3022 = vshrl.u32 %v3021, 7
          %v3023 = vsub.s32 %v3020, %v3022
          %v3024 = vrot.slane %v2356, %v3023
          %vm3025 = vcmask 1048512
          %v3026 = vsel %vm3025, %v3024, %v3019
          %v3027 = vlaneseq
          %v3028 = vshrl.u32 %v3027, 7
          %v3029 = vsub.s32 %v1597, %v3028
          %v3030 = vrot.slane %v2357, %v3029
          %v3031 = vlaneseq
          %v3032 = vshrl.u32 %v3031, 7
          %v3033 = vsub.s32 %v2922, %v3032
          %v3034 = vrot.slane %v2358, %v3033
          %v3035 = vsel %vm2927, %v3034, %v3030
          %v3036 = vlaneseq
          %v3037 = vshrl.u32 %v3036, 7
          %v3038 = vsub.s32 %v2929, %v3037
          %v3039 = vrot.slane %v2359, %v3038
          %v3040 = vsel %vm2934, %v3039, %v3035
          %v3041 = vlaneseq
          %v3042 = vshrl.u32 %v3041, 7
          %v3043 = vsub.s32 %v2936, %v3042
          %v3044 = vrot.slane %v2360, %v3043
          %v3045 = vsel %vm2941, %v3044, %v3040
          %v3046 = vlaneseq
          %v3047 = vshrl.u32 %v3046, 7
          %v3048 = vsub.s32 %v2943, %v3047
          %v3049 = vrot.slane %v2361, %v3048
          %v3050 = vsel %vm2948, %v3049, %v3045
          %v3051 = vlaneseq
          %v3052 = vshrl.u32 %v3051, 7
          %v3053 = vsub.s32 %v2950, %v3052
          %v3054 = vrot.slane %v2362, %v3053
          %v3055 = vsel %vm2955, %v3054, %v3050
          %v3056 = vlaneseq
          %v3057 = vshrl.u32 %v3056, 7
          %v3058 = vsub.s32 %v2957, %v3057
          %v3059 = vrot.slane %v2363, %v3058
          %v3060 = vsel %vm2962, %v3059, %v3055
          %v3061 = vlaneseq
          %v3062 = vshrl.u32 %v3061, 7
          %v3063 = vsub.s32 %v2964, %v3062
          %v3064 = vrot.slane %v2364, %v3063
          %v3065 = vsel %vm2969, %v3064, %v3060
          %v3066 = vlaneseq
          %v3067 = vshrl.u32 %v3066, 7
          %v3068 = vsub.s32 %v2971, %v3067
          %v3069 = vrot.slane %v2365, %v3068
          %v3070 = vsel %vm2976, %v3069, %v3065
          %v3071 = vlaneseq
          %v3072 = vshrl.u32 %v3071, 7
          %v3073 = vsub.s32 %v2978, %v3072
          %v3074 = vrot.slane %v2366, %v3073
          %v3075 = vsel %vm2983, %v3074, %v3070
          %v3076 = vlaneseq
          %v3077 = vshrl.u32 %v3076, 7
          %v3078 = vsub.s32 %v2985, %v3077
          %v3079 = vrot.slane %v2367, %v3078
          %v3080 = vsel %vm2990, %v3079, %v3075
          %v3081 = vlaneseq
          %v3082 = vshrl.u32 %v3081, 7
          %v3083 = vsub.s32 %v2992, %v3082
          %v3084 = vrot.slane %v2368, %v3083
          %v3085 = vsel %vm2997, %v3084, %v3080
          %v3086 = vlaneseq
          %v3087 = vshrl.u32 %v3086, 7
          %v3088 = vsub.s32 %v2999, %v3087
          %v3089 = vrot.slane %v2369, %v3088
          %v3090 = vsel %vm3004, %v3089, %v3085
          %v3091 = vlaneseq
          %v3092 = vshrl.u32 %v3091, 7
          %v3093 = vsub.s32 %v3006, %v3092
          %v3094 = vrot.slane %v2370, %v3093
          %v3095 = vsel %vm3011, %v3094, %v3090
          %v3096 = vlaneseq
          %v3097 = vshrl.u32 %v3096, 7
          %v3098 = vsub.s32 %v3013, %v3097
          %v3099 = vrot.slane %v2371, %v3098
          %v3100 = vsel %vm3018, %v3099, %v3095
          %v3101 = vlaneseq
          %v3102 = vshrl.u32 %v3101, 7
          %v3103 = vsub.s32 %v3020, %v3102
          %v3104 = vrot.slane %v2372, %v3103
          %v3105 = vsel %vm3025, %v3104, %v3100
          %vm3106 = vcmask 1041409
          %v3107 = vsel %vm3106, %v3105, %v3026
          %3109 = vmatprep.subr.mxu0 %v2759
          %3110 = vmatpush1.msra.mxu0 %v2758
          %3111 = vmatprep.subr.mxu0 %v2767
          %3112 = vmatpush1.msra.mxu0 %v2766
          %3113 = vmatprep.subr.mxu0 %v2775
          %3114 = vmatpush1.msra.mxu0 %v2774
          %3115 = vmatprep.subr.mxu0 %v2783
          %3116 = vmatpush1.msra.mxu0 %v2782
          %3117 = vmatprep.subr.mxu0 %v2791
          %3118 = vmatpush1.msra.mxu0 %v2790
          %3119 = vmatprep.subr.mxu0 %v2799
          %3120 = vmatpush1.msra.mxu0 %v2798
          %3121 = vmatprep.subr.mxu0 %v2807
          %3122 = vmatpush1.msra.mxu0 %v2806
          %3123 = vmatprep.subr.mxu0 %v2815
          %3124 = vmatpush1.msra.mxu0 %v2814
          %3125 = vmatprep.subr.mxu0 %v2823
          %3126 = vmatpush1.msra.mxu0 %v2822
          %3127 = vmatprep.subr.mxu0 %v2831
          %3128 = vmatpush1.msra.mxu0 %v2830
          %3129 = vmatprep.subr.mxu0 %v2839
          %3130 = vmatpush1.msra.mxu0 %v2838
          %3131 = vmatprep.subr.mxu0 %v2847
          %3132 = vmatpush1.msra.mxu0 %v2846
          %3133 = vmatprep.subr.mxu0 %v2855
          %3134 = vmatpush1.msra.mxu0 %v2854
          %3135 = vmatprep.subr.mxu0 %v2863
          %3136 = vmatpush1.msra.mxu0 %v2862
          %3137 = vmatprep.subr.mxu0 %v2871
          %3138 = vmatpush1.msra.mxu0 %v2870
          %3139 = vmatprep.subr.mxu0 %v2879
          %3140 = vmatpush1.msra.mxu0 %v2878
          %3141 = vmatprep.subr.mxu0 0.0
          %3142 = vmatpush1.msra.mxu0 0.0
          %3143 = vmatprep.subr.mxu0 0.0
          %3144 = vmatpush1.msra.mxu0 0.0
          %3145 = vmatprep.subr.mxu0 0.0
          %3146 = vmatpush1.msra.mxu0 0.0
          %3147 = vmatprep.subr.mxu0 0.0
          %3148 = vmatpush1.msra.mxu0 0.0
          %3149 = vmatprep.subr.mxu0 0.0
          %3150 = vmatpush1.msra.mxu0 0.0
          %3151 = vmatprep.subr.mxu0 0.0
          %3152 = vmatpush1.msra.mxu0 0.0
          %3153 = vmatprep.subr.mxu0 0.0
          %3154 = vmatpush1.msra.mxu0 0.0
          %3155 = vmatprep.subr.mxu0 0.0
          %3156 = vmatpush1.msra.mxu0 0.0
          %3157 = vmatprep.subr.mxu0 0.0
          %3158 = vmatpush1.msra.mxu0 0.0
          %3159 = vmatprep.subr.mxu0 0.0
          %3160 = vmatpush1.msra.mxu0 0.0
          %3161 = vmatprep.subr.mxu0 0.0
          %3162 = vmatpush1.msra.mxu0 0.0
          %3163 = vmatprep.subr.mxu0 0.0
          %3164 = vmatpush1.msra.mxu0 0.0
          %3165 = vmatprep.subr.mxu0 0.0
          %3166 = vmatpush1.msra.mxu0 0.0
          %3167 = vmatprep.subr.mxu0 0.0
          %3168 = vmatpush1.msra.mxu0 0.0
          %3169 = vmatprep.subr.mxu0 0.0
          %3170 = vmatpush1.msra.mxu0 0.0
          %3171 = vmatprep.subr.mxu0 0.0
          %3172 = vmatpush1.msra.mxu0 0.0
          %3173 = vmatprep.mubr.f32.mxu0 0.0
          %3174 = vmatmul.mubr.f32.gmra.mrb[0].mxu0 %v3107
          %v3175 = vpop.f32.mrb[0].mxu0
          %v3176 = vadd.f32 0.0, %v3175
          %v3177 = vpop.f32.mrb[0].mxu0
          %v3178 = vadd.f32 0.0, %v3177
          %3179 = vdwg.mxu0
          %3180 = vmatprep.subr.mxu0 %v2761
          %3181 = vmatpush1.msra.mxu0 %v2760
          %3182 = vmatprep.subr.mxu0 %v2769
          %3183 = vmatpush1.msra.mxu0 %v2768
          %3184 = vmatprep.subr.mxu0 %v2777
          %3185 = vmatpush1.msra.mxu0 %v2776
          %3186 = vmatprep.subr.mxu0 %v2785
          %3187 = vmatpush1.msra.mxu0 %v2784
          %3188 = vmatprep.subr.mxu0 %v2793
          %3189 = vmatpush1.msra.mxu0 %v2792
          %3190 = vmatprep.subr.mxu0 %v2801
          %3191 = vmatpush1.msra.mxu0 %v2800
          %3192 = vmatprep.subr.mxu0 %v2809
          %3193 = vmatpush1.msra.mxu0 %v2808
          %3194 = vmatprep.subr.mxu0 %v2817
          %3195 = vmatpush1.msra.mxu0 %v2816
          %3196 = vmatprep.subr.mxu0 %v2825
          %3197 = vmatpush1.msra.mxu0 %v2824
          %3198 = vmatprep.subr.mxu0 %v2833
          %3199 = vmatpush1.msra.mxu0 %v2832
          %3200 = vmatprep.subr.mxu0 %v2841
          %3201 = vmatpush1.msra.mxu0 %v2840
          %3202 = vmatprep.subr.mxu0 %v2849
          %3203 = vmatpush1.msra.mxu0 %v2848
          %3204 = vmatprep.subr.mxu0 %v2857
          %3205 = vmatpush1.msra.mxu0 %v2856
          %3206 = vmatprep.subr.mxu0 %v2865
          %3207 = vmatpush1.msra.mxu0 %v2864
          %3208 = vmatprep.subr.mxu0 %v2873
          %3209 = vmatpush1.msra.mxu0 %v2872
          %3210 = vmatprep.subr.mxu0 %v2881
          %3211 = vmatpush1.msra.mxu0 %v2880
          %3212 = vmatprep.subr.mxu0 0.0
          %3213 = vmatpush1.msra.mxu0 0.0
          %3214 = vmatprep.subr.mxu0 0.0
          %3215 = vmatpush1.msra.mxu0 0.0
          %3216 = vmatprep.subr.mxu0 0.0
          %3217 = vmatpush1.msra.mxu0 0.0
          %3218 = vmatprep.subr.mxu0 0.0
          %3219 = vmatpush1.msra.mxu0 0.0
          %3220 = vmatprep.subr.mxu0 0.0
          %3221 = vmatpush1.msra.mxu0 0.0
          %3222 = vmatprep.subr.mxu0 0.0
          %3223 = vmatpush1.msra.mxu0 0.0
          %3224 = vmatprep.subr.mxu0 0.0
          %3225 = vmatpush1.msra.mxu0 0.0
          %3226 = vmatprep.subr.mxu0 0.0
          %3227 = vmatpush1.msra.mxu0 0.0
          %3228 = vmatprep.subr.mxu0 0.0
          %3229 = vmatpush1.msra.mxu0 0.0
          %3230 = vmatprep.subr.mxu0 0.0
          %3231 = vmatpush1.msra.mxu0 0.0
          %3232 = vmatprep.subr.mxu0 0.0
          %3233 = vmatpush1.msra.mxu0 0.0
          %3234 = vmatprep.subr.mxu0 0.0
          %3235 = vmatpush1.msra.mxu0 0.0
          %3236 = vmatprep.subr.mxu0 0.0
          %3237 = vmatpush1.msra.mxu0 0.0
          %3238 = vmatprep.subr.mxu0 0.0
          %3239 = vmatpush1.msra.mxu0 0.0
          %3240 = vmatprep.subr.mxu0 0.0
          %3241 = vmatpush1.msra.mxu0 0.0
          %3242 = vmatprep.subr.mxu0 0.0
          %3243 = vmatpush1.msra.mxu0 0.0
          %3244 = vmatprep.mubr.f32.mxu0 0.0
          %3245 = vmatmul.mubr.f32.gmra.mrb[0].mxu0 %v3107
          %v3246 = vpop.f32.mrb[0].mxu0
          %v3247 = vadd.f32 0.0, %v3246
          %v3248 = vpop.f32.mrb[0].mxu0
          %v3249 = vadd.f32 0.0, %v3248
          %3250 = vdwg.mxu0
          %3251 = vmatprep.subr.mxu0 %v2763
          %3252 = vmatpush1.msra.mxu0 %v2762
          %3253 = vmatprep.subr.mxu0 %v2771
          %3254 = vmatpush1.msra.mxu0 %v2770
          %3255 = vmatprep.subr.mxu0 %v2779
          %3256 = vmatpush1.msra.mxu0 %v2778
          %3257 = vmatprep.subr.mxu0 %v2787
          %3258 = vmatpush1.msra.mxu0 %v2786
          %3259 = vmatprep.subr.mxu0 %v2795
          %3260 = vmatpush1.msra.mxu0 %v2794
          %3261 = vmatprep.subr.mxu0 %v2803
          %3262 = vmatpush1.msra.mxu0 %v2802
          %3263 = vmatprep.subr.mxu0 %v2811
          %3264 = vmatpush1.msra.mxu0 %v2810
          %3265 = vmatprep.subr.mxu0 %v2819
          %3266 = vmatpush1.msra.mxu0 %v2818
          %3267 = vmatprep.subr.mxu0 %v2827
          %3268 = vmatpush1.msra.mxu0 %v2826
          %3269 = vmatprep.subr.mxu0 %v2835
          %3270 = vmatpush1.msra.mxu0 %v2834
          %3271 = vmatprep.subr.mxu0 %v2843
          %3272 = vmatpush1.msra.mxu0 %v2842
          %3273 = vmatprep.subr.mxu0 %v2851
          %3274 = vmatpush1.msra.mxu0 %v2850
          %3275 = vmatprep.subr.mxu0 %v2859
          %3276 = vmatpush1.msra.mxu0 %v2858
          %3277 = vmatprep.subr.mxu0 %v2867
          %3278 = vmatpush1.msra.mxu0 %v2866
          %3279 = vmatprep.subr.mxu0 %v2875
          %3280 = vmatpush1.msra.mxu0 %v2874
          %3281 = vmatprep.subr.mxu0 %v2883
          %3282 = vmatpush1.msra.mxu0 %v2882
          %3283 = vmatprep.subr.mxu0 0.0
          %3284 = vmatpush1.msra.mxu0 0.0
          %3285 = vmatprep.subr.mxu0 0.0
          %3286 = vmatpush1.msra.mxu0 0.0
          %3287 = vmatprep.subr.mxu0 0.0
          %3288 = vmatpush1.msra.mxu0 0.0
          %3289 = vmatprep.subr.mxu0 0.0
          %3290 = vmatpush1.msra.mxu0 0.0
          %3291 = vmatprep.subr.mxu0 0.0
          %3292 = vmatpush1.msra.mxu0 0.0
          %3293 = vmatprep.subr.mxu0 0.0
          %3294 = vmatpush1.msra.mxu0 0.0
          %3295 = vmatprep.subr.mxu0 0.0
          %3296 = vmatpush1.msra.mxu0 0.0
          %3297 = vmatprep.subr.mxu0 0.0
          %3298 = vmatpush1.msra.mxu0 0.0
          %3299 = vmatprep.subr.mxu0 0.0
          %3300 = vmatpush1.msra.mxu0 0.0
          %3301 = vmatprep.subr.mxu0 0.0
          %3302 = vmatpush1.msra.mxu0 0.0
          %3303 = vmatprep.subr.mxu0 0.0
          %3304 = vmatpush1.msra.mxu0 0.0
          %3305 = vmatprep.subr.mxu0 0.0
          %3306 = vmatpush1.msra.mxu0 0.0
          %3307 = vmatprep.subr.mxu0 0.0
          %3308 = vmatpush1.msra.mxu0 0.0
          %3309 = vmatprep.subr.mxu0 0.0
          %3310 = vmatpush1.msra.mxu0 0.0
          %3311 = vmatprep.subr.mxu0 0.0
          %3312 = vmatpush1.msra.mxu0 0.0
          %3313 = vmatprep.subr.mxu0 0.0
          %3314 = vmatpush1.msra.mxu0 0.0
          %3315 = vmatprep.mubr.f32.mxu0 0.0
          %3316 = vmatmul.mubr.f32.gmra.mrb[0].mxu0 %v3107
          %v3317 = vpop.f32.mrb[0].mxu0
          %v3318 = vadd.f32 0.0, %v3317
          %v3319 = vpop.f32.mrb[0].mxu0
          %v3320 = vadd.f32 0.0, %v3319
          %3321 = vdwg.mxu0
          %3322 = vmatprep.subr.mxu0 %v2765
          %3323 = vmatpush1.msra.mxu0 %v2764
          %3324 = vmatprep.subr.mxu0 %v2773
          %3325 = vmatpush1.msra.mxu0 %v2772
          %3326 = vmatprep.subr.mxu0 %v2781
          %3327 = vmatpush1.msra.mxu0 %v2780
          %3328 = vmatprep.subr.mxu0 %v2789
          %3329 = vmatpush1.msra.mxu0 %v2788
          %3330 = vmatprep.subr.mxu0 %v2797
          %3331 = vmatpush1.msra.mxu0 %v2796
          %3332 = vmatprep.subr.mxu0 %v2805
          %3333 = vmatpush1.msra.mxu0 %v2804
          %3334 = vmatprep.subr.mxu0 %v2813
          %3335 = vmatpush1.msra.mxu0 %v2812
          %3336 = vmatprep.subr.mxu0 %v2821
          %3337 = vmatpush1.msra.mxu0 %v2820
          %3338 = vmatprep.subr.mxu0 %v2829
          %3339 = vmatpush1.msra.mxu0 %v2828
          %3340 = vmatprep.subr.mxu0 %v2837
          %3341 = vmatpush1.msra.mxu0 %v2836
          %3342 = vmatprep.subr.mxu0 %v2845
          %3343 = vmatpush1.msra.mxu0 %v2844
          %3344 = vmatprep.subr.mxu0 %v2853
          %3345 = vmatpush1.msra.mxu0 %v2852
          %3346 = vmatprep.subr.mxu0 %v2861
          %3347 = vmatpush1.msra.mxu0 %v2860
          %3348 = vmatprep.subr.mxu0 %v2869
          %3349 = vmatpush1.msra.mxu0 %v2868
          %3350 = vmatprep.subr.mxu0 %v2877
          %3351 = vmatpush1.msra.mxu0 %v2876
          %3352 = vmatprep.subr.mxu0 %v2885
          %3353 = vmatpush1.msra.mxu0 %v2884
          %3354 = vmatprep.subr.mxu0 0.0
          %3355 = vmatpush1.msra.mxu0 0.0
          %3356 = vmatprep.subr.mxu0 0.0
          %3357 = vmatpush1.msra.mxu0 0.0
          %3358 = vmatprep.subr.mxu0 0.0
          %3359 = vmatpush1.msra.mxu0 0.0
          %3360 = vmatprep.subr.mxu0 0.0
          %3361 = vmatpush1.msra.mxu0 0.0
          %3362 = vmatprep.subr.mxu0 0.0
          %3363 = vmatpush1.msra.mxu0 0.0
          %3364 = vmatprep.subr.mxu0 0.0
          %3365 = vmatpush1.msra.mxu0 0.0
          %3366 = vmatprep.subr.mxu0 0.0
          %3367 = vmatpush1.msra.mxu0 0.0
          %3368 = vmatprep.subr.mxu0 0.0
          %3369 = vmatpush1.msra.mxu0 0.0
          %3370 = vmatprep.subr.mxu0 0.0
          %3371 = vmatpush1.msra.mxu0 0.0
          %3372 = vmatprep.subr.mxu0 0.0
          %3373 = vmatpush1.msra.mxu0 0.0
          %3374 = vmatprep.subr.mxu0 0.0
          %3375 = vmatpush1.msra.mxu0 0.0
          %3376 = vmatprep.subr.mxu0 0.0
          %3377 = vmatpush1.msra.mxu0 0.0
          %3378 = vmatprep.subr.mxu0 0.0
          %3379 = vmatpush1.msra.mxu0 0.0
          %3380 = vmatprep.subr.mxu0 0.0
          %3381 = vmatpush1.msra.mxu0 0.0
          %3382 = vmatprep.subr.mxu0 0.0
          %3383 = vmatpush1.msra.mxu0 0.0
          %3384 = vmatprep.subr.mxu0 0.0
          %3385 = vmatpush1.msra.mxu0 0.0
          %3386 = vmatprep.mubr.f32.mxu0 0.0
          %3387 = vmatmul.mubr.f32.gmra.mrb[0].mxu0 %v3107
          %v3388 = vpop.f32.mrb[0].mxu0
          %v3389 = vadd.f32 0.0, %v3388
          %v3390 = vpop.f32.mrb[0].mxu0
          %v3391 = vadd.f32 0.0, %v3390
          %3392 = vdwg.mxu0
          %v3394 = vlaneseq
          %v3395 = vshrl.u32 %v3394, 7
          %v3396 = vsub.s32 0, %v3395
          %v3397 = vrot.slane %v2757, %v3396
          %v3398 = vlaneseq
          %v3399 = vshrl.u32 %v3398, 7
          %v3400 = vsub.s32 1, %v3399
          %v3401 = vrot.slane %v2757, %v3400
          %v3402 = vlaneseq
          %v3403 = vshrl.u32 %v3402, 7
          %v3404 = vsub.s32 2, %v3403
          %v3405 = vrot.slane %v2757, %v3404
          %v3406 = vlaneseq
          %v3407 = vshrl.u32 %v3406, 7
          %v3408 = vsub.s32 3, %v3407
          %v3409 = vrot.slane %v2757, %v3408
          %v3410 = vlaneseq
          %v3411 = vshrl.u32 %v3410, 7
          %v3412 = vsub.s32 4, %v3411
          %v3413 = vrot.slane %v2757, %v3412
          %v3414 = vlaneseq
          %v3415 = vshrl.u32 %v3414, 7
          %v3416 = vsub.s32 5, %v3415
          %v3417 = vrot.slane %v2757, %v3416
          %v3418 = vlaneseq
          %v3419 = vshrl.u32 %v3418, 7
          %v3420 = vsub.s32 6, %v3419
          %v3421 = vrot.slane %v2757, %v3420
          %v3422 = vlaneseq
          %v3423 = vshrl.u32 %v3422, 7
          %v3424 = vsub.s32 7, %v3423
          %v3425 = vrot.slane %v2757, %v3424
          %v3434 = vadd.f32 %v3397, %v3176
          %v3435 = vadd.f32 %v3401, %v3178
          %v3436 = vadd.f32 %v3405, %v3247
          %v3437 = vadd.f32 %v3409, %v3249
          %v3438 = vadd.f32 %v3413, %v3318
          %v3439 = vadd.f32 %v3417, %v3320
          %v3440 = vadd.f32 %v3421, %v3389
          %v3441 = vadd.f32 %v3425, %v3391
          %v3442 = vld [vmem:[#allocation2 + $0x400] sm:$0xff]
          %v3443 = vld [vmem:[#allocation2 + $0x408] sm:$0xff]
          %v3444 = vld [vmem:[#allocation2 + $0x410] sm:$0xff]
          %v3445 = vld [vmem:[#allocation2 + $0x418] sm:$0xff]
          %v3446 = vld [vmem:[#allocation2 + $0x420] sm:$0xff]
          %v3447 = vld [vmem:[#allocation2 + $0x428] sm:$0xff]
          %v3448 = vld [vmem:[#allocation2 + $0x430] sm:$0xff]
          %v3449 = vld [vmem:[#allocation2 + $0x438] sm:$0xff]
          %v3450 = vld [vmem:[#allocation2 + $0x440] sm:$0xff]
          %v3451 = vld [vmem:[#allocation2 + $0x448] sm:$0xff]
          %v3452 = vld [vmem:[#allocation2 + $0x450] sm:$0xff]
          %v3453 = vld [vmem:[#allocation2 + $0x458] sm:$0xff]
          %v3454 = vld [vmem:[#allocation2 + $0x460] sm:$0xff]
          %v3455 = vld [vmem:[#allocation2 + $0x468] sm:$0xff]
          %v3456 = vld [vmem:[#allocation2 + $0x470] sm:$0xff]
          %v3457 = vld [vmem:[#allocation2 + $0x478] sm:$0xff]
          %v3458 = vld [vmem:[#allocation2 + $0x480] sm:$0xff]
          %v3459 = vld [vmem:[#allocation2 + $0x488] sm:$0xff]
          %v3460 = vld [vmem:[#allocation2 + $0x490] sm:$0xff]
          %v3461 = vld [vmem:[#allocation2 + $0x498] sm:$0xff]
          %v3462 = vld [vmem:[#allocation2 + $0x4a0] sm:$0xff]
          %v3463 = vld [vmem:[#allocation2 + $0x4a8] sm:$0xff]
          %v3464 = vld [vmem:[#allocation2 + $0x4b0] sm:$0xff]
          %v3465 = vld [vmem:[#allocation2 + $0x4b8] sm:$0xff]
          %v3466 = vld [vmem:[#allocation2 + $0x4c0] sm:$0xff]
          %v3467 = vld [vmem:[#allocation2 + $0x4c8] sm:$0xff]
          %v3468 = vld [vmem:[#allocation2 + $0x4d0] sm:$0xff]
          %v3469 = vld [vmem:[#allocation2 + $0x4d8] sm:$0xff]
          %v3470 = vld [vmem:[#allocation2 + $0x4e0] sm:$0xff]
          %v3471 = vld [vmem:[#allocation2 + $0x4e8] sm:$0xff]
          %v3472 = vld [vmem:[#allocation2 + $0x4f0] sm:$0xff]
          %v3473 = vld [vmem:[#allocation2 + $0x4f8] sm:$0xff]
          %v3474 = vld [vmem:[#allocation2 + $0x500] sm:$0xff]
          %v3475 = vld [vmem:[#allocation2 + $0x508] sm:$0xff]
          %v3476 = vld [vmem:[#allocation2 + $0x510] sm:$0xff]
          %v3477 = vld [vmem:[#allocation2 + $0x518] sm:$0xff]
          %v3478 = vld [vmem:[#allocation2 + $0x520] sm:$0xff]
          %v3479 = vld [vmem:[#allocation2 + $0x528] sm:$0xff]
          %v3480 = vld [vmem:[#allocation2 + $0x530] sm:$0xff]
          %v3481 = vld [vmem:[#allocation2 + $0x538] sm:$0xff]
          %v3482 = vld [vmem:[#allocation2 + $0x540] sm:$0xff]
          %v3483 = vld [vmem:[#allocation2 + $0x548] sm:$0xff]
          %v3484 = vld [vmem:[#allocation2 + $0x550] sm:$0xff]
          %v3485 = vld [vmem:[#allocation2 + $0x558] sm:$0xff]
          %v3486 = vld [vmem:[#allocation2 + $0x560] sm:$0xff]
          %v3487 = vld [vmem:[#allocation2 + $0x568] sm:$0xff]
          %v3488 = vld [vmem:[#allocation2 + $0x570] sm:$0xff]
          %v3489 = vld [vmem:[#allocation2 + $0x578] sm:$0xff]
          %v3490 = vld [vmem:[#allocation2 + $0x580] sm:$0xff]
          %v3491 = vld [vmem:[#allocation2 + $0x588] sm:$0xff]
          %v3492 = vld [vmem:[#allocation2 + $0x590] sm:$0xff]
          %v3493 = vld [vmem:[#allocation2 + $0x598] sm:$0xff]
          %v3494 = vld [vmem:[#allocation2 + $0x5a0] sm:$0xff]
          %v3495 = vld [vmem:[#allocation2 + $0x5a8] sm:$0xff]
          %v3496 = vld [vmem:[#allocation2 + $0x5b0] sm:$0xff]
          %v3497 = vld [vmem:[#allocation2 + $0x5b8] sm:$0xff]
          %v3498 = vld [vmem:[#allocation2 + $0x5c0] sm:$0xff]
          %v3499 = vld [vmem:[#allocation2 + $0x5c8] sm:$0xff]
          %v3500 = vld [vmem:[#allocation2 + $0x5d0] sm:$0xff]
          %v3501 = vld [vmem:[#allocation2 + $0x5d8] sm:$0xff]
          %v3502 = vld [vmem:[#allocation2 + $0x5e0] sm:$0xff]
          %v3503 = vld [vmem:[#allocation2 + $0x5e8] sm:$0xff]
          %v3504 = vld [vmem:[#allocation2 + $0x5f0] sm:$0xff]
          %v3505 = vld [vmem:[#allocation2 + $0x5f8] sm:$0xff]
          %v3506 = vld [vmem:[#allocation2 + $0x600] sm:$0xff]
          %v3507 = vld [vmem:[#allocation2 + $0x608] sm:$0xff]
          %v3508 = vld [vmem:[#allocation2 + $0x610] sm:$0xff]
          %v3509 = vld [vmem:[#allocation2 + $0x618] sm:$0xff]
          %v3510 = vld [vmem:[#allocation2 + $0x620] sm:$0xff]
          %v3511 = vld [vmem:[#allocation2 + $0x628] sm:$0xff]
          %v3512 = vld [vmem:[#allocation2 + $0x630] sm:$0xff]
          %v3513 = vld [vmem:[#allocation2 + $0x638] sm:$0xff]
          %v3514 = vld [vmem:[#allocation2 + $0x640] sm:$0xff]
          %v3515 = vld [vmem:[#allocation2 + $0x648] sm:$0xff]
          %v3516 = vld [vmem:[#allocation2 + $0x650] sm:$0xff]
          %v3517 = vld [vmem:[#allocation2 + $0x658] sm:$0xff]
          %v3518 = vld [vmem:[#allocation2 + $0x660] sm:$0xff]
          %v3519 = vld [vmem:[#allocation2 + $0x668] sm:$0xff]
          %v3520 = vld [vmem:[#allocation2 + $0x670] sm:$0xff]
          %v3521 = vld [vmem:[#allocation2 + $0x678] sm:$0xff]
          %v3522 = vld [vmem:[#allocation2 + $0x680] sm:$0xff]
          %v3523 = vld [vmem:[#allocation2 + $0x688] sm:$0xff]
          %v3524 = vld [vmem:[#allocation2 + $0x690] sm:$0xff]
          %v3525 = vld [vmem:[#allocation2 + $0x698] sm:$0xff]
          %v3526 = vld [vmem:[#allocation2 + $0x6a0] sm:$0xff]
          %v3527 = vld [vmem:[#allocation2 + $0x6a8] sm:$0xff]
          %v3528 = vld [vmem:[#allocation2 + $0x6b0] sm:$0xff]
          %v3529 = vld [vmem:[#allocation2 + $0x6b8] sm:$0xff]
          %v3530 = vld [vmem:[#allocation2 + $0x6c0] sm:$0xff]
          %v3531 = vld [vmem:[#allocation2 + $0x6c8] sm:$0xff]
          %v3532 = vld [vmem:[#allocation2 + $0x6d0] sm:$0xff]
          %v3533 = vld [vmem:[#allocation2 + $0x6d8] sm:$0xff]
          %v3534 = vld [vmem:[#allocation2 + $0x6e0] sm:$0xff]
          %v3535 = vld [vmem:[#allocation2 + $0x6e8] sm:$0xff]
          %v3536 = vld [vmem:[#allocation2 + $0x6f0] sm:$0xff]
          %v3537 = vld [vmem:[#allocation2 + $0x6f8] sm:$0xff]
          %v3538 = vld [vmem:[#allocation2 + $0x700] sm:$0xff]
          %v3539 = vld [vmem:[#allocation2 + $0x708] sm:$0xff]
          %v3540 = vld [vmem:[#allocation2 + $0x710] sm:$0xff]
          %v3541 = vld [vmem:[#allocation2 + $0x718] sm:$0xff]
          %v3542 = vld [vmem:[#allocation2 + $0x720] sm:$0xff]
          %v3543 = vld [vmem:[#allocation2 + $0x728] sm:$0xff]
          %v3544 = vld [vmem:[#allocation2 + $0x730] sm:$0xff]
          %v3545 = vld [vmem:[#allocation2 + $0x738] sm:$0xff]
          %v3546 = vld [vmem:[#allocation2 + $0x740] sm:$0xff]
          %v3547 = vld [vmem:[#allocation2 + $0x748] sm:$0xff]
          %v3548 = vld [vmem:[#allocation2 + $0x750] sm:$0xff]
          %v3549 = vld [vmem:[#allocation2 + $0x758] sm:$0xff]
          %v3550 = vld [vmem:[#allocation2 + $0x760] sm:$0xff]
          %v3551 = vld [vmem:[#allocation2 + $0x768] sm:$0xff]
          %v3552 = vld [vmem:[#allocation2 + $0x770] sm:$0xff]
          %v3553 = vld [vmem:[#allocation2 + $0x778] sm:$0xff]
          %v3554 = vld [vmem:[#allocation2 + $0x780] sm:$0xff]
          %v3555 = vld [vmem:[#allocation2 + $0x788] sm:$0xff]
          %v3556 = vld [vmem:[#allocation2 + $0x790] sm:$0xff]
          %v3557 = vld [vmem:[#allocation2 + $0x798] sm:$0xff]
          %v3558 = vld [vmem:[#allocation2 + $0x7a0] sm:$0xff]
          %v3559 = vld [vmem:[#allocation2 + $0x7a8] sm:$0xff]
          %v3560 = vld [vmem:[#allocation2 + $0x7b0] sm:$0xff]
          %v3561 = vld [vmem:[#allocation2 + $0x7b8] sm:$0xff]
          %v3562 = vld [vmem:[#allocation2 + $0x7c0] sm:$0xff]
          %v3563 = vld [vmem:[#allocation2 + $0x7c8] sm:$0xff]
          %v3564 = vld [vmem:[#allocation2 + $0x7d0] sm:$0xff]
          %v3565 = vld [vmem:[#allocation2 + $0x7d8] sm:$0xff]
          %v3566 = vld [vmem:[#allocation2 + $0x7e0] sm:$0xff]
          %v3567 = vld [vmem:[#allocation2 + $0x7e8] sm:$0xff]
          %v3568 = vld [vmem:[#allocation2 + $0x7f0] sm:$0xff]
          %v3569 = vld [vmem:[#allocation2 + $0x7f8] sm:$0xff]
          %v3570 = vld [vmem:[#allocation2 + $0x800] sm:$0xff]
          %v3571 = vld [vmem:[#allocation2 + $0x808] sm:$0xff]
          %v3572 = vld [vmem:[#allocation2 + $0x810] sm:$0xff]
          %v3573 = vld [vmem:[#allocation2 + $0x818] sm:$0xff]
          %v3574 = vld [vmem:[#allocation2 + $0x820] sm:$0xff]
          %v3575 = vld [vmem:[#allocation2 + $0x828] sm:$0xff]
          %v3576 = vld [vmem:[#allocation2 + $0x830] sm:$0xff]
          %v3577 = vld [vmem:[#allocation2 + $0x838] sm:$0xff]
          %v3578 = vld [vmem:[#allocation2 + $0x840] sm:$0xff]
          %v3579 = vld [vmem:[#allocation2 + $0x848] sm:$0xff]
          %v3580 = vld [vmem:[#allocation2 + $0x850] sm:$0xff]
          %v3581 = vld [vmem:[#allocation2 + $0x858] sm:$0xff]
          %v3582 = vld [vmem:[#allocation2 + $0x860] sm:$0xff]
          %v3583 = vld [vmem:[#allocation2 + $0x868] sm:$0xff]
          %v3584 = vld [vmem:[#allocation2 + $0x870] sm:$0xff]
          %v3585 = vld [vmem:[#allocation2 + $0x878] sm:$0xff]
          %v3586 = vld [vmem:[#allocation2 + $0x880] sm:$0xff]
          %v3587 = vld [vmem:[#allocation2 + $0x888] sm:$0xff]
          %v3588 = vld [vmem:[#allocation2 + $0x890] sm:$0xff]
          %v3589 = vld [vmem:[#allocation2 + $0x898] sm:$0xff]
          %v3590 = vld [vmem:[#allocation2 + $0x8a0] sm:$0xff]
          %v3591 = vld [vmem:[#allocation2 + $0x8a8] sm:$0xff]
          %v3592 = vld [vmem:[#allocation2 + $0x8b0] sm:$0xff]
          %v3593 = vld [vmem:[#allocation2 + $0x8b8] sm:$0xff]
          %v3594 = vld [vmem:[#allocation2 + $0x8c0] sm:$0xff]
          %v3595 = vld [vmem:[#allocation2 + $0x8c8] sm:$0xff]
          %v3596 = vld [vmem:[#allocation2 + $0x8d0] sm:$0xff]
          %v3597 = vld [vmem:[#allocation2 + $0x8d8] sm:$0xff]
          %v3598 = vld [vmem:[#allocation2 + $0x8e0] sm:$0xff]
          %v3599 = vld [vmem:[#allocation2 + $0x8e8] sm:$0xff]
          %v3600 = vld [vmem:[#allocation2 + $0x8f0] sm:$0xff]
          %v3601 = vld [vmem:[#allocation2 + $0x8f8] sm:$0xff]
          %v3602 = vld [vmem:[#allocation2 + $0x900] sm:$0xff]
          %v3603 = vld [vmem:[#allocation2 + $0x908] sm:$0xff]
          %v3604 = vld [vmem:[#allocation2 + $0x910] sm:$0xff]
          %v3605 = vld [vmem:[#allocation2 + $0x918] sm:$0xff]
          %v3606 = vld [vmem:[#allocation2 + $0x920] sm:$0xff]
          %v3607 = vld [vmem:[#allocation2 + $0x928] sm:$0xff]
          %v3608 = vld [vmem:[#allocation2 + $0x930] sm:$0xff]
          %v3609 = vld [vmem:[#allocation2 + $0x938] sm:$0xff]
          %v3610 = vld [vmem:[#allocation2 + $0x940] sm:$0xff]
          %v3611 = vld [vmem:[#allocation2 + $0x948] sm:$0xff]
          %v3612 = vld [vmem:[#allocation2 + $0x950] sm:$0xff]
          %v3613 = vld [vmem:[#allocation2 + $0x958] sm:$0xff]
          %v3614 = vld [vmem:[#allocation2 + $0x960] sm:$0xff]
          %v3615 = vld [vmem:[#allocation2 + $0x968] sm:$0xff]
          %v3616 = vld [vmem:[#allocation2 + $0x970] sm:$0xff]
          %v3617 = vld [vmem:[#allocation2 + $0x978] sm:$0xff]
          %v3618 = vld [vmem:[#allocation2 + $0x980] sm:$0xff]
          %v3619 = vld [vmem:[#allocation2 + $0x988] sm:$0xff]
          %v3620 = vld [vmem:[#allocation2 + $0x990] sm:$0xff]
          %v3621 = vld [vmem:[#allocation2 + $0x998] sm:$0xff]
          %v3622 = vld [vmem:[#allocation2 + $0x9a0] sm:$0xff]
          %v3623 = vld [vmem:[#allocation2 + $0x9a8] sm:$0xff]
          %v3624 = vld [vmem:[#allocation2 + $0x9b0] sm:$0xff]
          %v3625 = vld [vmem:[#allocation2 + $0x9b8] sm:$0xff]
          %v3626 = vld [vmem:[#allocation2 + $0x9c0] sm:$0xff]
          %v3627 = vld [vmem:[#allocation2 + $0x9c8] sm:$0xff]
          %v3628 = vld [vmem:[#allocation2 + $0x9d0] sm:$0xff]
          %v3629 = vld [vmem:[#allocation2 + $0x9d8] sm:$0xff]
          %v3630 = vld [vmem:[#allocation2 + $0x9e0] sm:$0xff]
          %v3631 = vld [vmem:[#allocation2 + $0x9e8] sm:$0xff]
          %v3632 = vld [vmem:[#allocation2 + $0x9f0] sm:$0xff]
          %v3633 = vld [vmem:[#allocation2 + $0x9f8] sm:$0xff]
          %v3634 = vld [vmem:[#allocation2 + $0xa00] sm:$0xff]
          %v3635 = vld [vmem:[#allocation2 + $0xa08] sm:$0xff]
          %v3636 = vld [vmem:[#allocation2 + $0xa10] sm:$0xff]
          %v3637 = vld [vmem:[#allocation2 + $0xa18] sm:$0xff]
          %v3638 = vld [vmem:[#allocation2 + $0xa20] sm:$0xff]
          %v3639 = vld [vmem:[#allocation2 + $0xa28] sm:$0xff]
          %v3640 = vld [vmem:[#allocation2 + $0xa30] sm:$0xff]
          %v3641 = vld [vmem:[#allocation2 + $0xa38] sm:$0xff]
          %v3642 = vld [vmem:[#allocation2 + $0xa40] sm:$0xff]
          %v3643 = vld [vmem:[#allocation2 + $0xa48] sm:$0xff]
          %v3644 = vld [vmem:[#allocation2 + $0xa50] sm:$0xff]
          %v3645 = vld [vmem:[#allocation2 + $0xa58] sm:$0xff]
          %v3646 = vld [vmem:[#allocation2 + $0xa60] sm:$0xff]
          %v3647 = vld [vmem:[#allocation2 + $0xa68] sm:$0xff]
          %v3648 = vld [vmem:[#allocation2 + $0xa70] sm:$0xff]
          %v3649 = vld [vmem:[#allocation2 + $0xa78] sm:$0xff]
          %v3650 = vld [vmem:[#allocation2 + $0xa80] sm:$0xff]
          %v3651 = vld [vmem:[#allocation2 + $0xa88] sm:$0xff]
          %v3652 = vld [vmem:[#allocation2 + $0xa90] sm:$0xff]
          %v3653 = vld [vmem:[#allocation2 + $0xa98] sm:$0xff]
          %v3654 = vld [vmem:[#allocation2 + $0xaa0] sm:$0xff]
          %v3655 = vld [vmem:[#allocation2 + $0xaa8] sm:$0xff]
          %v3656 = vld [vmem:[#allocation2 + $0xab0] sm:$0xff]
          %v3657 = vld [vmem:[#allocation2 + $0xab8] sm:$0xff]
          %v3658 = vld [vmem:[#allocation2 + $0xac0] sm:$0xff]
          %v3659 = vld [vmem:[#allocation2 + $0xac8] sm:$0xff]
          %v3660 = vld [vmem:[#allocation2 + $0xad0] sm:$0xff]
          %v3661 = vld [vmem:[#allocation2 + $0xad8] sm:$0xff]
          %v3662 = vld [vmem:[#allocation2 + $0xae0] sm:$0xff]
          %v3663 = vld [vmem:[#allocation2 + $0xae8] sm:$0xff]
          %v3664 = vld [vmem:[#allocation2 + $0xaf0] sm:$0xff]
          %v3665 = vld [vmem:[#allocation2 + $0xaf8] sm:$0xff]
          %v3666 = vld [vmem:[#allocation2 + $0xb00] sm:$0xff]
          %v3667 = vld [vmem:[#allocation2 + $0xb08] sm:$0xff]
          %v3668 = vld [vmem:[#allocation2 + $0xb10] sm:$0xff]
          %v3669 = vld [vmem:[#allocation2 + $0xb18] sm:$0xff]
          %v3670 = vld [vmem:[#allocation2 + $0xb20] sm:$0xff]
          %v3671 = vld [vmem:[#allocation2 + $0xb28] sm:$0xff]
          %v3672 = vld [vmem:[#allocation2 + $0xb30] sm:$0xff]
          %v3673 = vld [vmem:[#allocation2 + $0xb38] sm:$0xff]
          %v3674 = vld [vmem:[#allocation2 + $0xb40] sm:$0xff]
          %v3675 = vld [vmem:[#allocation2 + $0xb48] sm:$0xff]
          %v3676 = vld [vmem:[#allocation2 + $0xb50] sm:$0xff]
          %v3677 = vld [vmem:[#allocation2 + $0xb58] sm:$0xff]
          %v3678 = vld [vmem:[#allocation2 + $0xb60] sm:$0xff]
          %v3679 = vld [vmem:[#allocation2 + $0xb68] sm:$0xff]
          %v3680 = vld [vmem:[#allocation2 + $0xb70] sm:$0xff]
          %v3681 = vld [vmem:[#allocation2 + $0xb78] sm:$0xff]
          %v3682 = vld [vmem:[#allocation2 + $0xb80] sm:$0xff]
          %v3683 = vld [vmem:[#allocation2 + $0xb88] sm:$0xff]
          %v3684 = vld [vmem:[#allocation2 + $0xb90] sm:$0xff]
          %v3685 = vld [vmem:[#allocation2 + $0xb98] sm:$0xff]
          %v3686 = vld [vmem:[#allocation2 + $0xba0] sm:$0xff]
          %v3687 = vld [vmem:[#allocation2 + $0xba8] sm:$0xff]
          %v3688 = vld [vmem:[#allocation2 + $0xbb0] sm:$0xff]
          %v3689 = vld [vmem:[#allocation2 + $0xbb8] sm:$0xff]
          %v3690 = vld [vmem:[#allocation2 + $0xbc0] sm:$0xff]
          %v3691 = vld [vmem:[#allocation2 + $0xbc8] sm:$0xff]
          %v3692 = vld [vmem:[#allocation2 + $0xbd0] sm:$0xff]
          %v3693 = vld [vmem:[#allocation2 + $0xbd8] sm:$0xff]
          %v3694 = vld [vmem:[#allocation2 + $0xbe0] sm:$0xff]
          %v3695 = vld [vmem:[#allocation2 + $0xbe8] sm:$0xff]
          %v3696 = vld [vmem:[#allocation2 + $0xbf0] sm:$0xff]
          %v3697 = vld [vmem:[#allocation2 + $0xbf8] sm:$0xff]
          %v3762 = vlaneseq
          %v3763 = vshrl.u32 %v3762, 7
          %v3764 = vsub.s32 %v1597, %v3763
          %v3765 = vrot.slane %v2565, %v3764
          %v3766 = vlaneseq
          %v3767 = vshrl.u32 %v3766, 7
          %v3768 = vsub.s32 %v2922, %v3767
          %v3769 = vrot.slane %v2566, %v3768
          %v3770 = vsel %vm2927, %v3769, %v3765
          %v3771 = vlaneseq
          %v3772 = vshrl.u32 %v3771, 7
          %v3773 = vsub.s32 %v2929, %v3772
          %v3774 = vrot.slane %v2567, %v3773
          %v3775 = vsel %vm2934, %v3774, %v3770
          %v3776 = vlaneseq
          %v3777 = vshrl.u32 %v3776, 7
          %v3778 = vsub.s32 %v2936, %v3777
          %v3779 = vrot.slane %v2568, %v3778
          %v3780 = vsel %vm2941, %v3779, %v3775
          %v3781 = vlaneseq
          %v3782 = vshrl.u32 %v3781, 7
          %v3783 = vsub.s32 %v2943, %v3782
          %v3784 = vrot.slane %v2569, %v3783
          %v3785 = vsel %vm2948, %v3784, %v3780
          %v3786 = vlaneseq
          %v3787 = vshrl.u32 %v3786, 7
          %v3788 = vsub.s32 %v2950, %v3787
          %v3789 = vrot.slane %v2570, %v3788
          %v3790 = vsel %vm2955, %v3789, %v3785
          %v3791 = vlaneseq
          %v3792 = vshrl.u32 %v3791, 7
          %v3793 = vsub.s32 %v2957, %v3792
          %v3794 = vrot.slane %v2571, %v3793
          %v3795 = vsel %vm2962, %v3794, %v3790
          %v3796 = vlaneseq
          %v3797 = vshrl.u32 %v3796, 7
          %v3798 = vsub.s32 %v2964, %v3797
          %v3799 = vrot.slane %v2572, %v3798
          %v3800 = vsel %vm2969, %v3799, %v3795
          %v3801 = vlaneseq
          %v3802 = vshrl.u32 %v3801, 7
          %v3803 = vsub.s32 %v2971, %v3802
          %v3804 = vrot.slane %v2573, %v3803
          %v3805 = vsel %vm2976, %v3804, %v3800
          %v3806 = vlaneseq
          %v3807 = vshrl.u32 %v3806, 7
          %v3808 = vsub.s32 %v2978, %v3807
          %v3809 = vrot.slane %v2574, %v3808
          %v3810 = vsel %vm2983, %v3809, %v3805
          %v3811 = vlaneseq
          %v3812 = vshrl.u32 %v3811, 7
          %v3813 = vsub.s32 %v2985, %v3812
          %v3814 = vrot.slane %v2575, %v3813
          %v3815 = vsel %vm2990, %v3814, %v3810
          %v3816 = vlaneseq
          %v3817 = vshrl.u32 %v3816, 7
          %v3818 = vsub.s32 %v2992, %v3817
          %v3819 = vrot.slane %v2576, %v3818
          %v3820 = vsel %vm2997, %v3819, %v3815
          %v3821 = vlaneseq
          %v3822 = vshrl.u32 %v3821, 7
          %v3823 = vsub.s32 %v2999, %v3822
          %v3824 = vrot.slane %v2577, %v3823
          %v3825 = vsel %vm3004, %v3824, %v3820
          %v3826 = vlaneseq
          %v3827 = vshrl.u32 %v3826, 7
          %v3828 = vsub.s32 %v3006, %v3827
          %v3829 = vrot.slane %v2578, %v3828
          %v3830 = vsel %vm3011, %v3829, %v3825
          %v3831 = vlaneseq
          %v3832 = vshrl.u32 %v3831, 7
          %v3833 = vsub.s32 %v3013, %v3832
          %v3834 = vrot.slane %v2579, %v3833
          %v3835 = vsel %vm3018, %v3834, %v3830
          %v3836 = vlaneseq
          %v3837 = vshrl.u32 %v3836, 7
          %v3838 = vsub.s32 %v3020, %v3837
          %v3839 = vrot.slane %v2580, %v3838
          %v3840 = vsel %vm3025, %v3839, %v3835
          %v3841 = vlaneseq
          %v3842 = vshrl.u32 %v3841, 7
          %v3843 = vsub.s32 %v1597, %v3842
          %v3844 = vrot.slane %v2581, %v3843
          %v3845 = vlaneseq
          %v3846 = vshrl.u32 %v3845, 7
          %v3847 = vsub.s32 %v2922, %v3846
          %v3848 = vrot.slane %v2582, %v3847
          %v3849 = vsel %vm2927, %v3848, %v3844
          %v3850 = vlaneseq
          %v3851 = vshrl.u32 %v3850, 7
          %v3852 = vsub.s32 %v2929, %v3851
          %v3853 = vrot.slane %v2583, %v3852
          %v3854 = vsel %vm2934, %v3853, %v3849
          %v3855 = vlaneseq
          %v3856 = vshrl.u32 %v3855, 7
          %v3857 = vsub.s32 %v2936, %v3856
          %v3858 = vrot.slane %v2584, %v3857
          %v3859 = vsel %vm2941, %v3858, %v3854
          %v3860 = vlaneseq
          %v3861 = vshrl.u32 %v3860, 7
          %v3862 = vsub.s32 %v2943, %v3861
          %v3863 = vrot.slane %v2585, %v3862
          %v3864 = vsel %vm2948, %v3863, %v3859
          %v3865 = vlaneseq
          %v3866 = vshrl.u32 %v3865, 7
          %v3867 = vsub.s32 %v2950, %v3866
          %v3868 = vrot.slane %v2586, %v3867
          %v3869 = vsel %vm2955, %v3868, %v3864
          %v3870 = vlaneseq
          %v3871 = vshrl.u32 %v3870, 7
          %v3872 = vsub.s32 %v2957, %v3871
          %v3873 = vrot.slane %v2587, %v3872
          %v3874 = vsel %vm2962, %v3873, %v3869
          %v3875 = vlaneseq
          %v3876 = vshrl.u32 %v3875, 7
          %v3877 = vsub.s32 %v2964, %v3876
          %v3878 = vrot.slane %v2588, %v3877
          %v3879 = vsel %vm2969, %v3878, %v3874
          %v3880 = vlaneseq
          %v3881 = vshrl.u32 %v3880, 7
          %v3882 = vsub.s32 %v2971, %v3881
          %v3883 = vrot.slane %v2589, %v3882
          %v3884 = vsel %vm2976, %v3883, %v3879
          %v3885 = vlaneseq
          %v3886 = vshrl.u32 %v3885, 7
          %v3887 = vsub.s32 %v2978, %v3886
          %v3888 = vrot.slane %v2590, %v3887
          %v3889 = vsel %vm2983, %v3888, %v3884
          %v3890 = vlaneseq
          %v3891 = vshrl.u32 %v3890, 7
          %v3892 = vsub.s32 %v2985, %v3891
          %v3893 = vrot.slane %v2591, %v3892
          %v3894 = vsel %vm2990, %v3893, %v3889
          %v3895 = vlaneseq
          %v3896 = vshrl.u32 %v3895, 7
          %v3897 = vsub.s32 %v2992, %v3896
          %v3898 = vrot.slane %v2592, %v3897
          %v3899 = vsel %vm2997, %v3898, %v3894
          %v3900 = vlaneseq
          %v3901 = vshrl.u32 %v3900, 7
          %v3902 = vsub.s32 %v2999, %v3901
          %v3903 = vrot.slane %v2593, %v3902
          %v3904 = vsel %vm3004, %v3903, %v3899
          %v3905 = vlaneseq
          %v3906 = vshrl.u32 %v3905, 7
          %v3907 = vsub.s32 %v3006, %v3906
          %v3908 = vrot.slane %v2594, %v3907
          %v3909 = vsel %vm3011, %v3908, %v3904
          %v3910 = vlaneseq
          %v3911 = vshrl.u32 %v3910, 7
          %v3912 = vsub.s32 %v3013, %v3911
          %v3913 = vrot.slane %v2595, %v3912
          %v3914 = vsel %vm3018, %v3913, %v3909
          %v3915 = vlaneseq
          %v3916 = vshrl.u32 %v3915, 7
          %v3917 = vsub.s32 %v3020, %v3916
          %v3918 = vrot.slane %v2596, %v3917
          %v3919 = vsel %vm3025, %v3918, %v3914
          %v3920 = vlaneseq
          %v3921 = vshrl.u32 %v3920, 7
          %v3922 = vsub.s32 %v1597, %v3921
          %v3923 = vrot.slane %v2597, %v3922
          %v3924 = vlaneseq
          %v3925 = vshrl.u32 %v3924, 7
          %v3926 = vsub.s32 %v2922, %v3925
          %v3927 = vrot.slane %v2598, %v3926
          %v3928 = vsel %vm2927, %v3927, %v3923
          %v3929 = vlaneseq
          %v3930 = vshrl.u32 %v3929, 7
          %v3931 = vsub.s32 %v2929, %v3930
          %v3932 = vrot.slane %v2599, %v3931
          %v3933 = vsel %vm2934, %v3932, %v3928
          %v3934 = vlaneseq
          %v3935 = vshrl.u32 %v3934, 7
          %v3936 = vsub.s32 %v2936, %v3935
          %v3937 = vrot.slane %v2600, %v3936
          %v3938 = vsel %vm2941, %v3937, %v3933
          %v3939 = vlaneseq
          %v3940 = vshrl.u32 %v3939, 7
          %v3941 = vsub.s32 %v2943, %v3940
          %v3942 = vrot.slane %v2601, %v3941
          %v3943 = vsel %vm2948, %v3942, %v3938
          %v3944 = vlaneseq
          %v3945 = vshrl.u32 %v3944, 7
          %v3946 = vsub.s32 %v2950, %v3945
          %v3947 = vrot.slane %v2602, %v3946
          %v3948 = vsel %vm2955, %v3947, %v3943
          %v3949 = vlaneseq
          %v3950 = vshrl.u32 %v3949, 7
          %v3951 = vsub.s32 %v2957, %v3950
          %v3952 = vrot.slane %v2603, %v3951
          %v3953 = vsel %vm2962, %v3952, %v3948
          %v3954 = vlaneseq
          %v3955 = vshrl.u32 %v3954, 7
          %v3956 = vsub.s32 %v2964, %v3955
          %v3957 = vrot.slane %v2604, %v3956
          %v3958 = vsel %vm2969, %v3957, %v3953
          %v3959 = vlaneseq
          %v3960 = vshrl.u32 %v3959, 7
          %v3961 = vsub.s32 %v2971, %v3960
          %v3962 = vrot.slane %v2605, %v3961
          %v3963 = vsel %vm2976, %v3962, %v3958
          %v3964 = vlaneseq
          %v3965 = vshrl.u32 %v3964, 7
          %v3966 = vsub.s32 %v2978, %v3965
          %v3967 = vrot.slane %v2606, %v3966
          %v3968 = vsel %vm2983, %v3967, %v3963
          %v3969 = vlaneseq
          %v3970 = vshrl.u32 %v3969, 7
          %v3971 = vsub.s32 %v2985, %v3970
          %v3972 = vrot.slane %v2607, %v3971
          %v3973 = vsel %vm2990, %v3972, %v3968
          %v3974 = vlaneseq
          %v3975 = vshrl.u32 %v3974, 7
          %v3976 = vsub.s32 %v2992, %v3975
          %v3977 = vrot.slane %v2608, %v3976
          %v3978 = vsel %vm2997, %v3977, %v3973
          %v3979 = vlaneseq
          %v3980 = vshrl.u32 %v3979, 7
          %v3981 = vsub.s32 %v2999, %v3980
          %v3982 = vrot.slane %v2609, %v3981
          %v3983 = vsel %vm3004, %v3982, %v3978
          %v3984 = vlaneseq
          %v3985 = vshrl.u32 %v3984, 7
          %v3986 = vsub.s32 %v3006, %v3985
          %v3987 = vrot.slane %v2610, %v3986
          %v3988 = vsel %vm3011, %v3987, %v3983
          %v3989 = vlaneseq
          %v3990 = vshrl.u32 %v3989, 7
          %v3991 = vsub.s32 %v3013, %v3990
          %v3992 = vrot.slane %v2611, %v3991
          %v3993 = vsel %vm3018, %v3992, %v3988
          %v3994 = vlaneseq
          %v3995 = vshrl.u32 %v3994, 7
          %v3996 = vsub.s32 %v3020, %v3995
          %v3997 = vrot.slane %v2612, %v3996
          %v3998 = vsel %vm3025, %v3997, %v3993
          %v3999 = vlaneseq
          %v4000 = vshrl.u32 %v3999, 7
          %v4001 = vsub.s32 %v1597, %v4000
          %v4002 = vrot.slane %v2613, %v4001
          %v4003 = vlaneseq
          %v4004 = vshrl.u32 %v4003, 7
          %v4005 = vsub.s32 %v2922, %v4004
          %v4006 = vrot.slane %v2614, %v4005
          %v4007 = vsel %vm2927, %v4006, %v4002
          %v4008 = vlaneseq
          %v4009 = vshrl.u32 %v4008, 7
          %v4010 = vsub.s32 %v2929, %v4009
          %v4011 = vrot.slane %v2615, %v4010
          %v4012 = vsel %vm2934, %v4011, %v4007
          %v4013 = vlaneseq
          %v4014 = vshrl.u32 %v4013, 7
          %v4015 = vsub.s32 %v2936, %v4014
          %v4016 = vrot.slane %v2616, %v4015
          %v4017 = vsel %vm2941, %v4016, %v4012
          %v4018 = vlaneseq
          %v4019 = vshrl.u32 %v4018, 7
          %v4020 = vsub.s32 %v2943, %v4019
          %v4021 = vrot.slane %v2617, %v4020
          %v4022 = vsel %vm2948, %v4021, %v4017
          %v4023 = vlaneseq
          %v4024 = vshrl.u32 %v4023, 7
          %v4025 = vsub.s32 %v2950, %v4024
          %v4026 = vrot.slane %v2618, %v4025
          %v4027 = vsel %vm2955, %v4026, %v4022
          %v4028 = vlaneseq
          %v4029 = vshrl.u32 %v4028, 7
          %v4030 = vsub.s32 %v2957, %v4029
          %v4031 = vrot.slane %v2619, %v4030
          %v4032 = vsel %vm2962, %v4031, %v4027
          %v4033 = vlaneseq
          %v4034 = vshrl.u32 %v4033, 7
          %v4035 = vsub.s32 %v2964, %v4034
          %v4036 = vrot.slane %v2620, %v4035
          %v4037 = vsel %vm2969, %v4036, %v4032
          %v4038 = vlaneseq
          %v4039 = vshrl.u32 %v4038, 7
          %v4040 = vsub.s32 %v2971, %v4039
          %v4041 = vrot.slane %v2621, %v4040
          %v4042 = vsel %vm2976, %v4041, %v4037
          %v4043 = vlaneseq
          %v4044 = vshrl.u32 %v4043, 7
          %v4045 = vsub.s32 %v2978, %v4044
          %v4046 = vrot.slane %v2622, %v4045
          %v4047 = vsel %vm2983, %v4046, %v4042
          %v4048 = vlaneseq
          %v4049 = vshrl.u32 %v4048, 7
          %v4050 = vsub.s32 %v2985, %v4049
          %v4051 = vrot.slane %v2623, %v4050
          %v4052 = vsel %vm2990, %v4051, %v4047
          %v4053 = vlaneseq
          %v4054 = vshrl.u32 %v4053, 7
          %v4055 = vsub.s32 %v2992, %v4054
          %v4056 = vrot.slane %v2624, %v4055
          %v4057 = vsel %vm2997, %v4056, %v4052
          %v4058 = vlaneseq
          %v4059 = vshrl.u32 %v4058, 7
          %v4060 = vsub.s32 %v2999, %v4059
          %v4061 = vrot.slane %v2625, %v4060
          %v4062 = vsel %vm3004, %v4061, %v4057
          %v4063 = vlaneseq
          %v4064 = vshrl.u32 %v4063, 7
          %v4065 = vsub.s32 %v3006, %v4064
          %v4066 = vrot.slane %v2626, %v4065
          %v4067 = vsel %vm3011, %v4066, %v4062
          %v4068 = vlaneseq
          %v4069 = vshrl.u32 %v4068, 7
          %v4070 = vsub.s32 %v3013, %v4069
          %v4071 = vrot.slane %v2627, %v4070
          %v4072 = vsel %vm3018, %v4071, %v4067
          %v4073 = vlaneseq
          %v4074 = vshrl.u32 %v4073, 7
          %v4075 = vsub.s32 %v3020, %v4074
          %v4076 = vrot.slane %v2628, %v4075
          %v4077 = vsel %vm3025, %v4076, %v4072
          %v4078 = vsel %vm3106, %v3998, %v3840
          %v4079 = vsel %vm3106, %v4077, %v3919
          %4082 = vmatprep.subr.mxu0 %v3443
          %4083 = vmatpush1.msra.mxu0 %v3442
          %4084 = vmatprep.subr.mxu0 %v3451
          %4085 = vmatpush1.msra.mxu0 %v3450
          %4086 = vmatprep.subr.mxu0 %v3459
          %4087 = vmatpush1.msra.mxu0 %v3458
          %4088 = vmatprep.subr.mxu0 %v3467
          %4089 = vmatpush1.msra.mxu0 %v3466
          %4090 = vmatprep.subr.mxu0 %v3475
          %4091 = vmatpush1.msra.mxu0 %v3474
          %4092 = vmatprep.subr.mxu0 %v3483
          %4093 = vmatpush1.msra.mxu0 %v3482
          %4094 = vmatprep.subr.mxu0 %v3491
          %4095 = vmatpush1.msra.mxu0 %v3490
          %4096 = vmatprep.subr.mxu0 %v3499
          %4097 = vmatpush1.msra.mxu0 %v3498
          %4098 = vmatprep.subr.mxu0 %v3507
          %4099 = vmatpush1.msra.mxu0 %v3506
          %4100 = vmatprep.subr.mxu0 %v3515
          %4101 = vmatpush1.msra.mxu0 %v3514
          %4102 = vmatprep.subr.mxu0 %v3523
          %4103 = vmatpush1.msra.mxu0 %v3522
          %4104 = vmatprep.subr.mxu0 %v3531
          %4105 = vmatpush1.msra.mxu0 %v3530
          %4106 = vmatprep.subr.mxu0 %v3539
          %4107 = vmatpush1.msra.mxu0 %v3538
          %4108 = vmatprep.subr.mxu0 %v3547
          %4109 = vmatpush1.msra.mxu0 %v3546
          %4110 = vmatprep.subr.mxu0 %v3555
          %4111 = vmatpush1.msra.mxu0 %v3554
          %4112 = vmatprep.subr.mxu0 %v3563
          %4113 = vmatpush1.msra.mxu0 %v3562
          %4114 = vmatprep.subr.mxu0 %v3571
          %4115 = vmatpush1.msra.mxu0 %v3570
          %4116 = vmatprep.subr.mxu0 %v3579
          %4117 = vmatpush1.msra.mxu0 %v3578
          %4118 = vmatprep.subr.mxu0 %v3587
          %4119 = vmatpush1.msra.mxu0 %v3586
          %4120 = vmatprep.subr.mxu0 %v3595
          %4121 = vmatpush1.msra.mxu0 %v3594
          %4122 = vmatprep.subr.mxu0 %v3603
          %4123 = vmatpush1.msra.mxu0 %v3602
          %4124 = vmatprep.subr.mxu0 %v3611
          %4125 = vmatpush1.msra.mxu0 %v3610
          %4126 = vmatprep.subr.mxu0 %v3619
          %4127 = vmatpush1.msra.mxu0 %v3618
          %4128 = vmatprep.subr.mxu0 %v3627
          %4129 = vmatpush1.msra.mxu0 %v3626
          %4130 = vmatprep.subr.mxu0 %v3635
          %4131 = vmatpush1.msra.mxu0 %v3634
          %4132 = vmatprep.subr.mxu0 %v3643
          %4133 = vmatpush1.msra.mxu0 %v3642
          %4134 = vmatprep.subr.mxu0 %v3651
          %4135 = vmatpush1.msra.mxu0 %v3650
          %4136 = vmatprep.subr.mxu0 %v3659
          %4137 = vmatpush1.msra.mxu0 %v3658
          %4138 = vmatprep.subr.mxu0 %v3667
          %4139 = vmatpush1.msra.mxu0 %v3666
          %4140 = vmatprep.subr.mxu0 %v3675
          %4141 = vmatpush1.msra.mxu0 %v3674
          %4142 = vmatprep.subr.mxu0 %v3683
          %4143 = vmatpush1.msra.mxu0 %v3682
          %4144 = vmatprep.subr.mxu0 %v3691
          %4145 = vmatpush1.msra.mxu0 %v3690
          %4146 = vmatprep.mubr.f32.mxu0 %v4079
          %4147 = vmatmul.mubr.f32.gmra.mrb[0].mxu0 %v4078
          %v4148 = vpop.f32.mrb[0].mxu0
          %v4149 = vadd.f32 0.0, %v4148
          %v4150 = vpop.f32.mrb[0].mxu0
          %v4151 = vadd.f32 0.0, %v4150
          %4152 = vdwg.mxu0
          %4153 = vmatprep.subr.mxu0 %v3445
          %4154 = vmatpush1.msra.mxu0 %v3444
          %4155 = vmatprep.subr.mxu0 %v3453
          %4156 = vmatpush1.msra.mxu0 %v3452
          %4157 = vmatprep.subr.mxu0 %v3461
          %4158 = vmatpush1.msra.mxu0 %v3460
          %4159 = vmatprep.subr.mxu0 %v3469
          %4160 = vmatpush1.msra.mxu0 %v3468
          %4161 = vmatprep.subr.mxu0 %v3477
          %4162 = vmatpush1.msra.mxu0 %v3476
          %4163 = vmatprep.subr.mxu0 %v3485
          %4164 = vmatpush1.msra.mxu0 %v3484
          %4165 = vmatprep.subr.mxu0 %v3493
          %4166 = vmatpush1.msra.mxu0 %v3492
          %4167 = vmatprep.subr.mxu0 %v3501
          %4168 = vmatpush1.msra.mxu0 %v3500
          %4169 = vmatprep.subr.mxu0 %v3509
          %4170 = vmatpush1.msra.mxu0 %v3508
          %4171 = vmatprep.subr.mxu0 %v3517
          %4172 = vmatpush1.msra.mxu0 %v3516
          %4173 = vmatprep.subr.mxu0 %v3525
          %4174 = vmatpush1.msra.mxu0 %v3524
          %4175 = vmatprep.subr.mxu0 %v3533
          %4176 = vmatpush1.msra.mxu0 %v3532
          %4177 = vmatprep.subr.mxu0 %v3541
          %4178 = vmatpush1.msra.mxu0 %v3540
          %4179 = vmatprep.subr.mxu0 %v3549
          %4180 = vmatpush1.msra.mxu0 %v3548
          %4181 = vmatprep.subr.mxu0 %v3557
          %4182 = vmatpush1.msra.mxu0 %v3556
          %4183 = vmatprep.subr.mxu0 %v3565
          %4184 = vmatpush1.msra.mxu0 %v3564
          %4185 = vmatprep.subr.mxu0 %v3573
          %4186 = vmatpush1.msra.mxu0 %v3572
          %4187 = vmatprep.subr.mxu0 %v3581
          %4188 = vmatpush1.msra.mxu0 %v3580
          %4189 = vmatprep.subr.mxu0 %v3589
          %4190 = vmatpush1.msra.mxu0 %v3588
          %4191 = vmatprep.subr.mxu0 %v3597
          %4192 = vmatpush1.msra.mxu0 %v3596
          %4193 = vmatprep.subr.mxu0 %v3605
          %4194 = vmatpush1.msra.mxu0 %v3604
          %4195 = vmatprep.subr.mxu0 %v3613
          %4196 = vmatpush1.msra.mxu0 %v3612
          %4197 = vmatprep.subr.mxu0 %v3621
          %4198 = vmatpush1.msra.mxu0 %v3620
          %4199 = vmatprep.subr.mxu0 %v3629
          %4200 = vmatpush1.msra.mxu0 %v3628
          %4201 = vmatprep.subr.mxu0 %v3637
          %4202 = vmatpush1.msra.mxu0 %v3636
          %4203 = vmatprep.subr.mxu0 %v3645
          %4204 = vmatpush1.msra.mxu0 %v3644
          %4205 = vmatprep.subr.mxu0 %v3653
          %4206 = vmatpush1.msra.mxu0 %v3652
          %4207 = vmatprep.subr.mxu0 %v3661
          %4208 = vmatpush1.msra.mxu0 %v3660
          %4209 = vmatprep.subr.mxu0 %v3669
          %4210 = vmatpush1.msra.mxu0 %v3668
          %4211 = vmatprep.subr.mxu0 %v3677
          %4212 = vmatpush1.msra.mxu0 %v3676
          %4213 = vmatprep.subr.mxu0 %v3685
          %4214 = vmatpush1.msra.mxu0 %v3684
          %4215 = vmatprep.subr.mxu0 %v3693
          %4216 = vmatpush1.msra.mxu0 %v3692
          %4217 = vmatprep.mubr.f32.mxu0 %v4079
          %4218 = vmatmul.mubr.f32.gmra.mrb[0].mxu0 %v4078
          %v4219 = vpop.f32.mrb[0].mxu0
          %v4220 = vadd.f32 0.0, %v4219
          %v4221 = vpop.f32.mrb[0].mxu0
          %v4222 = vadd.f32 0.0, %v4221
          %4223 = vdwg.mxu0
          %4224 = vmatprep.subr.mxu0 %v3447
          %4225 = vmatpush1.msra.mxu0 %v3446
          %4226 = vmatprep.subr.mxu0 %v3455
          %4227 = vmatpush1.msra.mxu0 %v3454
          %4228 = vmatprep.subr.mxu0 %v3463
          %4229 = vmatpush1.msra.mxu0 %v3462
          %4230 = vmatprep.subr.mxu0 %v3471
          %4231 = vmatpush1.msra.mxu0 %v3470
          %4232 = vmatprep.subr.mxu0 %v3479
          %4233 = vmatpush1.msra.mxu0 %v3478
          %4234 = vmatprep.subr.mxu0 %v3487
          %4235 = vmatpush1.msra.mxu0 %v3486
          %4236 = vmatprep.subr.mxu0 %v3495
          %4237 = vmatpush1.msra.mxu0 %v3494
          %4238 = vmatprep.subr.mxu0 %v3503
          %4239 = vmatpush1.msra.mxu0 %v3502
          %4240 = vmatprep.subr.mxu0 %v3511
          %4241 = vmatpush1.msra.mxu0 %v3510
          %4242 = vmatprep.subr.mxu0 %v3519
          %4243 = vmatpush1.msra.mxu0 %v3518
          %4244 = vmatprep.subr.mxu0 %v3527
          %4245 = vmatpush1.msra.mxu0 %v3526
          %4246 = vmatprep.subr.mxu0 %v3535
          %4247 = vmatpush1.msra.mxu0 %v3534
          %4248 = vmatprep.subr.mxu0 %v3543
          %4249 = vmatpush1.msra.mxu0 %v3542
          %4250 = vmatprep.subr.mxu0 %v3551
          %4251 = vmatpush1.msra.mxu0 %v3550
          %4252 = vmatprep.subr.mxu0 %v3559
          %4253 = vmatpush1.msra.mxu0 %v3558
          %4254 = vmatprep.subr.mxu0 %v3567
          %4255 = vmatpush1.msra.mxu0 %v3566
          %4256 = vmatprep.subr.mxu0 %v3575
          %4257 = vmatpush1.msra.mxu0 %v3574
          %4258 = vmatprep.subr.mxu0 %v3583
          %4259 = vmatpush1.msra.mxu0 %v3582
          %4260 = vmatprep.subr.mxu0 %v3591
          %4261 = vmatpush1.msra.mxu0 %v3590
          %4262 = vmatprep.subr.mxu0 %v3599
          %4263 = vmatpush1.msra.mxu0 %v3598
          %4264 = vmatprep.subr.mxu0 %v3607
          %4265 = vmatpush1.msra.mxu0 %v3606
          %4266 = vmatprep.subr.mxu0 %v3615
          %4267 = vmatpush1.msra.mxu0 %v3614
          %4268 = vmatprep.subr.mxu0 %v3623
          %4269 = vmatpush1.msra.mxu0 %v3622
          %4270 = vmatprep.subr.mxu0 %v3631
          %4271 = vmatpush1.msra.mxu0 %v3630
          %4272 = vmatprep.subr.mxu0 %v3639
          %4273 = vmatpush1.msra.mxu0 %v3638
          %4274 = vmatprep.subr.mxu0 %v3647
          %4275 = vmatpush1.msra.mxu0 %v3646
          %4276 = vmatprep.subr.mxu0 %v3655
          %4277 = vmatpush1.msra.mxu0 %v3654
          %4278 = vmatprep.subr.mxu0 %v3663
          %4279 = vmatpush1.msra.mxu0 %v3662
          %4280 = vmatprep.subr.mxu0 %v3671
          %4281 = vmatpush1.msra.mxu0 %v3670
          %4282 = vmatprep.subr.mxu0 %v3679
          %4283 = vmatpush1.msra.mxu0 %v3678
          %4284 = vmatprep.subr.mxu0 %v3687
          %4285 = vmatpush1.msra.mxu0 %v3686
          %4286 = vmatprep.subr.mxu0 %v3695
          %4287 = vmatpush1.msra.mxu0 %v3694
          %4288 = vmatprep.mubr.f32.mxu0 %v4079
          %4289 = vmatmul.mubr.f32.gmra.mrb[0].mxu0 %v4078
          %v4290 = vpop.f32.mrb[0].mxu0
          %v4291 = vadd.f32 0.0, %v4290
          %v4292 = vpop.f32.mrb[0].mxu0
          %v4293 = vadd.f32 0.0, %v4292
          %4294 = vdwg.mxu0
          %4295 = vmatprep.subr.mxu0 %v3449
          %4296 = vmatpush1.msra.mxu0 %v3448
          %4297 = vmatprep.subr.mxu0 %v3457
          %4298 = vmatpush1.msra.mxu0 %v3456
          %4299 = vmatprep.subr.mxu0 %v3465
          %4300 = vmatpush1.msra.mxu0 %v3464
          %4301 = vmatprep.subr.mxu0 %v3473
          %4302 = vmatpush1.msra.mxu0 %v3472
          %4303 = vmatprep.subr.mxu0 %v3481
          %4304 = vmatpush1.msra.mxu0 %v3480
          %4305 = vmatprep.subr.mxu0 %v3489
          %4306 = vmatpush1.msra.mxu0 %v3488
          %4307 = vmatprep.subr.mxu0 %v3497
          %4308 = vmatpush1.msra.mxu0 %v3496
          %4309 = vmatprep.subr.mxu0 %v3505
          %4310 = vmatpush1.msra.mxu0 %v3504
          %4311 = vmatprep.subr.mxu0 %v3513
          %4312 = vmatpush1.msra.mxu0 %v3512
          %4313 = vmatprep.subr.mxu0 %v3521
          %4314 = vmatpush1.msra.mxu0 %v3520
          %4315 = vmatprep.subr.mxu0 %v3529
          %4316 = vmatpush1.msra.mxu0 %v3528
          %4317 = vmatprep.subr.mxu0 %v3537
          %4318 = vmatpush1.msra.mxu0 %v3536
          %4319 = vmatprep.subr.mxu0 %v3545
          %4320 = vmatpush1.msra.mxu0 %v3544
          %4321 = vmatprep.subr.mxu0 %v3553
          %4322 = vmatpush1.msra.mxu0 %v3552
          %4323 = vmatprep.subr.mxu0 %v3561
          %4324 = vmatpush1.msra.mxu0 %v3560
          %4325 = vmatprep.subr.mxu0 %v3569
          %4326 = vmatpush1.msra.mxu0 %v3568
          %4327 = vmatprep.subr.mxu0 %v3577
          %4328 = vmatpush1.msra.mxu0 %v3576
          %4329 = vmatprep.subr.mxu0 %v3585
          %4330 = vmatpush1.msra.mxu0 %v3584
          %4331 = vmatprep.subr.mxu0 %v3593
          %4332 = vmatpush1.msra.mxu0 %v3592
          %4333 = vmatprep.subr.mxu0 %v3601
          %4334 = vmatpush1.msra.mxu0 %v3600
          %4335 = vmatprep.subr.mxu0 %v3609
          %4336 = vmatpush1.msra.mxu0 %v3608
          %4337 = vmatprep.subr.mxu0 %v3617
          %4338 = vmatpush1.msra.mxu0 %v3616
          %4339 = vmatprep.subr.mxu0 %v3625
          %4340 = vmatpush1.msra.mxu0 %v3624
          %4341 = vmatprep.subr.mxu0 %v3633
          %4342 = vmatpush1.msra.mxu0 %v3632
          %4343 = vmatprep.subr.mxu0 %v3641
          %4344 = vmatpush1.msra.mxu0 %v3640
          %4345 = vmatprep.subr.mxu0 %v3649
          %4346 = vmatpush1.msra.mxu0 %v3648
          %4347 = vmatprep.subr.mxu0 %v3657
          %4348 = vmatpush1.msra.mxu0 %v3656
          %4349 = vmatprep.subr.mxu0 %v3665
          %4350 = vmatpush1.msra.mxu0 %v3664
          %4351 = vmatprep.subr.mxu0 %v3673
          %4352 = vmatpush1.msra.mxu0 %v3672
          %4353 = vmatprep.subr.mxu0 %v3681
          %4354 = vmatpush1.msra.mxu0 %v3680
          %4355 = vmatprep.subr.mxu0 %v3689
          %4356 = vmatpush1.msra.mxu0 %v3688
          %4357 = vmatprep.subr.mxu0 %v3697
          %4358 = vmatpush1.msra.mxu0 %v3696
          %4359 = vmatprep.mubr.f32.mxu0 %v4079
          %4360 = vmatmul.mubr.f32.gmra.mrb[0].mxu0 %v4078
          %v4361 = vpop.f32.mrb[0].mxu0
          %v4362 = vadd.f32 0.0, %v4361
          %v4363 = vpop.f32.mrb[0].mxu0
          %v4364 = vadd.f32 0.0, %v4363
          %4365 = vdwg.mxu0
          %v4366 = vadd.f32 %v3434, %v4149
          %v4367 = vadd.f32 %v3435, %v4151
          %v4368 = vadd.f32 %v3436, %v4220
          %v4369 = vadd.f32 %v3437, %v4222
          %v4370 = vadd.f32 %v3438, %v4291
          %v4371 = vadd.f32 %v3439, %v4293
          %v4372 = vadd.f32 %v3440, %v4362
          %v4373 = vadd.f32 %v3441, %v4364
          %v4374 = vld [vmem:[#allocation2 + $0xc00] sm:$0xff]
          %v4375 = vld [vmem:[#allocation2 + $0xc08] sm:$0xff]
          %v4376 = vld [vmem:[#allocation2 + $0xc10] sm:$0xff]
          %v4377 = vld [vmem:[#allocation2 + $0xc18] sm:$0xff]
          %v4378 = vld [vmem:[#allocation2 + $0xc20] sm:$0xff]
          %v4379 = vld [vmem:[#allocation2 + $0xc28] sm:$0xff]
          %v4380 = vld [vmem:[#allocation2 + $0xc30] sm:$0xff]
          %v4381 = vld [vmem:[#allocation2 + $0xc38] sm:$0xff]
          %v4382 = vld [vmem:[#allocation2 + $0xc40] sm:$0xff]
          %v4383 = vld [vmem:[#allocation2 + $0xc48] sm:$0xff]
          %v4384 = vld [vmem:[#allocation2 + $0xc50] sm:$0xff]
          %v4385 = vld [vmem:[#allocation2 + $0xc58] sm:$0xff]
          %v4386 = vld [vmem:[#allocation2 + $0xc60] sm:$0xff]
          %v4387 = vld [vmem:[#allocation2 + $0xc68] sm:$0xff]
          %v4388 = vld [vmem:[#allocation2 + $0xc70] sm:$0xff]
          %v4389 = vld [vmem:[#allocation2 + $0xc78] sm:$0xff]
          %v4390 = vld [vmem:[#allocation2 + $0xc80] sm:$0xff]
          %v4391 = vld [vmem:[#allocation2 + $0xc88] sm:$0xff]
          %v4392 = vld [vmem:[#allocation2 + $0xc90] sm:$0xff]
          %v4393 = vld [vmem:[#allocation2 + $0xc98] sm:$0xff]
          %v4394 = vld [vmem:[#allocation2 + $0xca0] sm:$0xff]
          %v4395 = vld [vmem:[#allocation2 + $0xca8] sm:$0xff]
          %v4396 = vld [vmem:[#allocation2 + $0xcb0] sm:$0xff]
          %v4397 = vld [vmem:[#allocation2 + $0xcb8] sm:$0xff]
          %v4398 = vld [vmem:[#allocation2 + $0xcc0] sm:$0xff]
          %v4399 = vld [vmem:[#allocation2 + $0xcc8] sm:$0xff]
          %v4400 = vld [vmem:[#allocation2 + $0xcd0] sm:$0xff]
          %v4401 = vld [vmem:[#allocation2 + $0xcd8] sm:$0xff]
          %v4402 = vld [vmem:[#allocation2 + $0xce0] sm:$0xff]
          %v4403 = vld [vmem:[#allocation2 + $0xce8] sm:$0xff]
          %v4404 = vld [vmem:[#allocation2 + $0xcf0] sm:$0xff]
          %v4405 = vld [vmem:[#allocation2 + $0xcf8] sm:$0xff]
          %v4406 = vld [vmem:[#allocation2 + $0xd00] sm:$0xff]
          %v4407 = vld [vmem:[#allocation2 + $0xd08] sm:$0xff]
          %v4408 = vld [vmem:[#allocation2 + $0xd10] sm:$0xff]
          %v4409 = vld [vmem:[#allocation2 + $0xd18] sm:$0xff]
          %v4410 = vld [vmem:[#allocation2 + $0xd20] sm:$0xff]
          %v4411 = vld [vmem:[#allocation2 + $0xd28] sm:$0xff]
          %v4412 = vld [vmem:[#allocation2 + $0xd30] sm:$0xff]
          %v4413 = vld [vmem:[#allocation2 + $0xd38] sm:$0xff]
          %v4414 = vld [vmem:[#allocation2 + $0xd40] sm:$0xff]
          %v4415 = vld [vmem:[#allocation2 + $0xd48] sm:$0xff]
          %v4416 = vld [vmem:[#allocation2 + $0xd50] sm:$0xff]
          %v4417 = vld [vmem:[#allocation2 + $0xd58] sm:$0xff]
          %v4418 = vld [vmem:[#allocation2 + $0xd60] sm:$0xff]
          %v4419 = vld [vmem:[#allocation2 + $0xd68] sm:$0xff]
          %v4420 = vld [vmem:[#allocation2 + $0xd70] sm:$0xff]
          %v4421 = vld [vmem:[#allocation2 + $0xd78] sm:$0xff]
          %v4422 = vld [vmem:[#allocation2 + $0xd80] sm:$0xff]
          %v4423 = vld [vmem:[#allocation2 + $0xd88] sm:$0xff]
          %v4424 = vld [vmem:[#allocation2 + $0xd90] sm:$0xff]
          %v4425 = vld [vmem:[#allocation2 + $0xd98] sm:$0xff]
          %v4426 = vld [vmem:[#allocation2 + $0xda0] sm:$0xff]
          %v4427 = vld [vmem:[#allocation2 + $0xda8] sm:$0xff]
          %v4428 = vld [vmem:[#allocation2 + $0xdb0] sm:$0xff]
          %v4429 = vld [vmem:[#allocation2 + $0xdb8] sm:$0xff]
          %v4430 = vld [vmem:[#allocation2 + $0xdc0] sm:$0xff]
          %v4431 = vld [vmem:[#allocation2 + $0xdc8] sm:$0xff]
          %v4432 = vld [vmem:[#allocation2 + $0xdd0] sm:$0xff]
          %v4433 = vld [vmem:[#allocation2 + $0xdd8] sm:$0xff]
          %v4434 = vld [vmem:[#allocation2 + $0xde0] sm:$0xff]
          %v4435 = vld [vmem:[#allocation2 + $0xde8] sm:$0xff]
          %v4436 = vld [vmem:[#allocation2 + $0xdf0] sm:$0xff]
          %v4437 = vld [vmem:[#allocation2 + $0xdf8] sm:$0xff]
          %v4438 = vld [vmem:[#allocation2 + $0xe00] sm:$0xff]
          %v4439 = vld [vmem:[#allocation2 + $0xe08] sm:$0xff]
          %v4440 = vld [vmem:[#allocation2 + $0xe10] sm:$0xff]
          %v4441 = vld [vmem:[#allocation2 + $0xe18] sm:$0xff]
          %v4442 = vld [vmem:[#allocation2 + $0xe20] sm:$0xff]
          %v4443 = vld [vmem:[#allocation2 + $0xe28] sm:$0xff]
          %v4444 = vld [vmem:[#allocation2 + $0xe30] sm:$0xff]
          %v4445 = vld [vmem:[#allocation2 + $0xe38] sm:$0xff]
          %v4446 = vld [vmem:[#allocation2 + $0xe40] sm:$0xff]
          %v4447 = vld [vmem:[#allocation2 + $0xe48] sm:$0xff]
          %v4448 = vld [vmem:[#allocation2 + $0xe50] sm:$0xff]
          %v4449 = vld [vmem:[#allocation2 + $0xe58] sm:$0xff]
          %v4450 = vld [vmem:[#allocation2 + $0xe60] sm:$0xff]
          %v4451 = vld [vmem:[#allocation2 + $0xe68] sm:$0xff]
          %v4452 = vld [vmem:[#allocation2 + $0xe70] sm:$0xff]
          %v4453 = vld [vmem:[#allocation2 + $0xe78] sm:$0xff]
          %v4454 = vld [vmem:[#allocation2 + $0xe80] sm:$0xff]
          %v4455 = vld [vmem:[#allocation2 + $0xe88] sm:$0xff]
          %v4456 = vld [vmem:[#allocation2 + $0xe90] sm:$0xff]
          %v4457 = vld [vmem:[#allocation2 + $0xe98] sm:$0xff]
          %v4458 = vld [vmem:[#allocation2 + $0xea0] sm:$0xff]
          %v4459 = vld [vmem:[#allocation2 + $0xea8] sm:$0xff]
          %v4460 = vld [vmem:[#allocation2 + $0xeb0] sm:$0xff]
          %v4461 = vld [vmem:[#allocation2 + $0xeb8] sm:$0xff]
          %v4462 = vld [vmem:[#allocation2 + $0xec0] sm:$0xff]
          %v4463 = vld [vmem:[#allocation2 + $0xec8] sm:$0xff]
          %v4464 = vld [vmem:[#allocation2 + $0xed0] sm:$0xff]
          %v4465 = vld [vmem:[#allocation2 + $0xed8] sm:$0xff]
          %v4466 = vld [vmem:[#allocation2 + $0xee0] sm:$0xff]
          %v4467 = vld [vmem:[#allocation2 + $0xee8] sm:$0xff]
          %v4468 = vld [vmem:[#allocation2 + $0xef0] sm:$0xff]
          %v4469 = vld [vmem:[#allocation2 + $0xef8] sm:$0xff]
          %v4470 = vld [vmem:[#allocation2 + $0xf00] sm:$0xff]
          %v4471 = vld [vmem:[#allocation2 + $0xf08] sm:$0xff]
          %v4472 = vld [vmem:[#allocation2 + $0xf10] sm:$0xff]
          %v4473 = vld [vmem:[#allocation2 + $0xf18] sm:$0xff]
          %v4474 = vld [vmem:[#allocation2 + $0xf20] sm:$0xff]
          %v4475 = vld [vmem:[#allocation2 + $0xf28] sm:$0xff]
          %v4476 = vld [vmem:[#allocation2 + $0xf30] sm:$0xff]
          %v4477 = vld [vmem:[#allocation2 + $0xf38] sm:$0xff]
          %v4478 = vld [vmem:[#allocation2 + $0xf40] sm:$0xff]
          %v4479 = vld [vmem:[#allocation2 + $0xf48] sm:$0xff]
          %v4480 = vld [vmem:[#allocation2 + $0xf50] sm:$0xff]
          %v4481 = vld [vmem:[#allocation2 + $0xf58] sm:$0xff]
          %v4482 = vld [vmem:[#allocation2 + $0xf60] sm:$0xff]
          %v4483 = vld [vmem:[#allocation2 + $0xf68] sm:$0xff]
          %v4484 = vld [vmem:[#allocation2 + $0xf70] sm:$0xff]
          %v4485 = vld [vmem:[#allocation2 + $0xf78] sm:$0xff]
          %v4486 = vld [vmem:[#allocation2 + $0xf80] sm:$0xff]
          %v4487 = vld [vmem:[#allocation2 + $0xf88] sm:$0xff]
          %v4488 = vld [vmem:[#allocation2 + $0xf90] sm:$0xff]
          %v4489 = vld [vmem:[#allocation2 + $0xf98] sm:$0xff]
          %v4490 = vld [vmem:[#allocation2 + $0xfa0] sm:$0xff]
          %v4491 = vld [vmem:[#allocation2 + $0xfa8] sm:$0xff]
          %v4492 = vld [vmem:[#allocation2 + $0xfb0] sm:$0xff]
          %v4493 = vld [vmem:[#allocation2 + $0xfb8] sm:$0xff]
          %v4494 = vld [vmem:[#allocation2 + $0xfc0] sm:$0xff]
          %v4495 = vld [vmem:[#allocation2 + $0xfc8] sm:$0xff]
          %v4496 = vld [vmem:[#allocation2 + $0xfd0] sm:$0xff]
          %v4497 = vld [vmem:[#allocation2 + $0xfd8] sm:$0xff]
          %v4498 = vld [vmem:[#allocation2 + $0xfe0] sm:$0xff]
          %v4499 = vld [vmem:[#allocation2 + $0xfe8] sm:$0xff]
          %v4500 = vld [vmem:[#allocation2 + $0xff0] sm:$0xff]
          %v4501 = vld [vmem:[#allocation2 + $0xff8] sm:$0xff]
          %v4534 = vlaneseq
          %v4535 = vshrl.u32 %v4534, 7
          %v4536 = vsub.s32 %v1597, %v4535
          %v4537 = vrot.slane %v2725, %v4536
          %v4538 = vlaneseq
          %v4539 = vshrl.u32 %v4538, 7
          %v4540 = vsub.s32 %v2922, %v4539
          %v4541 = vrot.slane %v2726, %v4540
          %v4542 = vsel %vm2927, %v4541, %v4537
          %v4543 = vlaneseq
          %v4544 = vshrl.u32 %v4543, 7
          %v4545 = vsub.s32 %v2929, %v4544
          %v4546 = vrot.slane %v2727, %v4545
          %v4547 = vsel %vm2934, %v4546, %v4542
          %v4548 = vlaneseq
          %v4549 = vshrl.u32 %v4548, 7
          %v4550 = vsub.s32 %v2936, %v4549
          %v4551 = vrot.slane %v2728, %v4550
          %v4552 = vsel %vm2941, %v4551, %v4547
          %v4553 = vlaneseq
          %v4554 = vshrl.u32 %v4553, 7
          %v4555 = vsub.s32 %v2943, %v4554
          %v4556 = vrot.slane %v2729, %v4555
          %v4557 = vsel %vm2948, %v4556, %v4552
          %v4558 = vlaneseq
          %v4559 = vshrl.u32 %v4558, 7
          %v4560 = vsub.s32 %v2950, %v4559
          %v4561 = vrot.slane %v2730, %v4560
          %v4562 = vsel %vm2955, %v4561, %v4557
          %v4563 = vlaneseq
          %v4564 = vshrl.u32 %v4563, 7
          %v4565 = vsub.s32 %v2957, %v4564
          %v4566 = vrot.slane %v2731, %v4565
          %v4567 = vsel %vm2962, %v4566, %v4562
          %v4568 = vlaneseq
          %v4569 = vshrl.u32 %v4568, 7
          %v4570 = vsub.s32 %v2964, %v4569
          %v4571 = vrot.slane %v2732, %v4570
          %v4572 = vsel %vm2969, %v4571, %v4567
          %v4573 = vlaneseq
          %v4574 = vshrl.u32 %v4573, 7
          %v4575 = vsub.s32 %v2971, %v4574
          %v4576 = vrot.slane %v2733, %v4575
          %v4577 = vsel %vm2976, %v4576, %v4572
          %v4578 = vlaneseq
          %v4579 = vshrl.u32 %v4578, 7
          %v4580 = vsub.s32 %v2978, %v4579
          %v4581 = vrot.slane %v2734, %v4580
          %v4582 = vsel %vm2983, %v4581, %v4577
          %v4583 = vlaneseq
          %v4584 = vshrl.u32 %v4583, 7
          %v4585 = vsub.s32 %v2985, %v4584
          %v4586 = vrot.slane %v2735, %v4585
          %v4587 = vsel %vm2990, %v4586, %v4582
          %v4588 = vlaneseq
          %v4589 = vshrl.u32 %v4588, 7
          %v4590 = vsub.s32 %v2992, %v4589
          %v4591 = vrot.slane %v2736, %v4590
          %v4592 = vsel %vm2997, %v4591, %v4587
          %v4593 = vlaneseq
          %v4594 = vshrl.u32 %v4593, 7
          %v4595 = vsub.s32 %v2999, %v4594
          %v4596 = vrot.slane %v2737, %v4595
          %v4597 = vsel %vm3004, %v4596, %v4592
          %v4598 = vlaneseq
          %v4599 = vshrl.u32 %v4598, 7
          %v4600 = vsub.s32 %v3006, %v4599
          %v4601 = vrot.slane %v2738, %v4600
          %v4602 = vsel %vm3011, %v4601, %v4597
          %v4603 = vlaneseq
          %v4604 = vshrl.u32 %v4603, 7
          %v4605 = vsub.s32 %v3013, %v4604
          %v4606 = vrot.slane %v2739, %v4605
          %v4607 = vsel %vm3018, %v4606, %v4602
          %v4608 = vlaneseq
          %v4609 = vshrl.u32 %v4608, 7
          %v4610 = vsub.s32 %v3020, %v4609
          %v4611 = vrot.slane %v2740, %v4610
          %v4612 = vsel %vm3025, %v4611, %v4607
          %v4613 = vlaneseq
          %v4614 = vshrl.u32 %v4613, 7
          %v4615 = vsub.s32 %v1597, %v4614
          %v4616 = vrot.slane %v2741, %v4615
          %v4617 = vlaneseq
          %v4618 = vshrl.u32 %v4617, 7
          %v4619 = vsub.s32 %v2922, %v4618
          %v4620 = vrot.slane %v2742, %v4619
          %v4621 = vsel %vm2927, %v4620, %v4616
          %v4622 = vlaneseq
          %v4623 = vshrl.u32 %v4622, 7
          %v4624 = vsub.s32 %v2929, %v4623
          %v4625 = vrot.slane %v2743, %v4624
          %v4626 = vsel %vm2934, %v4625, %v4621
          %v4627 = vlaneseq
          %v4628 = vshrl.u32 %v4627, 7
          %v4629 = vsub.s32 %v2936, %v4628
          %v4630 = vrot.slane %v2744, %v4629
          %v4631 = vsel %vm2941, %v4630, %v4626
          %v4632 = vlaneseq
          %v4633 = vshrl.u32 %v4632, 7
          %v4634 = vsub.s32 %v2943, %v4633
          %v4635 = vrot.slane %v2745, %v4634
          %v4636 = vsel %vm2948, %v4635, %v4631
          %v4637 = vlaneseq
          %v4638 = vshrl.u32 %v4637, 7
          %v4639 = vsub.s32 %v2950, %v4638
          %v4640 = vrot.slane %v2746, %v4639
          %v4641 = vsel %vm2955, %v4640, %v4636
          %v4642 = vlaneseq
          %v4643 = vshrl.u32 %v4642, 7
          %v4644 = vsub.s32 %v2957, %v4643
          %v4645 = vrot.slane %v2747, %v4644
          %v4646 = vsel %vm2962, %v4645, %v4641
          %v4647 = vlaneseq
          %v4648 = vshrl.u32 %v4647, 7
          %v4649 = vsub.s32 %v2964, %v4648
          %v4650 = vrot.slane %v2748, %v4649
          %v4651 = vsel %vm2969, %v4650, %v4646
          %v4652 = vlaneseq
          %v4653 = vshrl.u32 %v4652, 7
          %v4654 = vsub.s32 %v2971, %v4653
          %v4655 = vrot.slane %v2749, %v4654
          %v4656 = vsel %vm2976, %v4655, %v4651
          %v4657 = vlaneseq
          %v4658 = vshrl.u32 %v4657, 7
          %v4659 = vsub.s32 %v2978, %v4658
          %v4660 = vrot.slane %v2750, %v4659
          %v4661 = vsel %vm2983, %v4660, %v4656
          %v4662 = vlaneseq
          %v4663 = vshrl.u32 %v4662, 7
          %v4664 = vsub.s32 %v2985, %v4663
          %v4665 = vrot.slane %v2751, %v4664
          %v4666 = vsel %vm2990, %v4665, %v4661
          %v4667 = vlaneseq
          %v4668 = vshrl.u32 %v4667, 7
          %v4669 = vsub.s32 %v2992, %v4668
          %v4670 = vrot.slane %v2752, %v4669
          %v4671 = vsel %vm2997, %v4670, %v4666
          %v4672 = vlaneseq
          %v4673 = vshrl.u32 %v4672, 7
          %v4674 = vsub.s32 %v2999, %v4673
          %v4675 = vrot.slane %v2753, %v4674
          %v4676 = vsel %vm3004, %v4675, %v4671
          %v4677 = vlaneseq
          %v4678 = vshrl.u32 %v4677, 7
          %v4679 = vsub.s32 %v3006, %v4678
          %v4680 = vrot.slane %v2754, %v4679
          %v4681 = vsel %vm3011, %v4680, %v4676
          %v4682 = vlaneseq
          %v4683 = vshrl.u32 %v4682, 7
          %v4684 = vsub.s32 %v3013, %v4683
          %v4685 = vrot.slane %v2755, %v4684
          %v4686 = vsel %vm3018, %v4685, %v4681
          %v4687 = vlaneseq
          %v4688 = vshrl.u32 %v4687, 7
          %v4689 = vsub.s32 %v3020, %v4688
          %v4690 = vrot.slane %v2756, %v4689
          %v4691 = vsel %vm3025, %v4690, %v4686
          %v4692 = vsel %vm3106, %v4691, %v4612
          %4694 = vmatprep.subr.mxu0 %v4375
          %4695 = vmatpush1.msra.mxu0 %v4374
          %4696 = vmatprep.subr.mxu0 %v4383
          %4697 = vmatpush1.msra.mxu0 %v4382
          %4698 = vmatprep.subr.mxu0 %v4391
          %4699 = vmatpush1.msra.mxu0 %v4390
          %4700 = vmatprep.subr.mxu0 %v4399
          %4701 = vmatpush1.msra.mxu0 %v4398
          %4702 = vmatprep.subr.mxu0 %v4407
          %4703 = vmatpush1.msra.mxu0 %v4406
          %4704 = vmatprep.subr.mxu0 %v4415
          %4705 = vmatpush1.msra.mxu0 %v4414
          %4706 = vmatprep.subr.mxu0 %v4423
          %4707 = vmatpush1.msra.mxu0 %v4422
          %4708 = vmatprep.subr.mxu0 %v4431
          %4709 = vmatpush1.msra.mxu0 %v4430
          %4710 = vmatprep.subr.mxu0 %v4439
          %4711 = vmatpush1.msra.mxu0 %v4438
          %4712 = vmatprep.subr.mxu0 %v4447
          %4713 = vmatpush1.msra.mxu0 %v4446
          %4714 = vmatprep.subr.mxu0 %v4455
          %4715 = vmatpush1.msra.mxu0 %v4454
          %4716 = vmatprep.subr.mxu0 %v4463
          %4717 = vmatpush1.msra.mxu0 %v4462
          %4718 = vmatprep.subr.mxu0 %v4471
          %4719 = vmatpush1.msra.mxu0 %v4470
          %4720 = vmatprep.subr.mxu0 %v4479
          %4721 = vmatpush1.msra.mxu0 %v4478
          %4722 = vmatprep.subr.mxu0 %v4487
          %4723 = vmatpush1.msra.mxu0 %v4486
          %4724 = vmatprep.subr.mxu0 %v4495
          %4725 = vmatpush1.msra.mxu0 %v4494
          %4726 = vmatprep.subr.mxu0 0.0
          %4727 = vmatpush1.msra.mxu0 0.0
          %4728 = vmatprep.subr.mxu0 0.0
          %4729 = vmatpush1.msra.mxu0 0.0
          %4730 = vmatprep.subr.mxu0 0.0
          %4731 = vmatpush1.msra.mxu0 0.0
          %4732 = vmatprep.subr.mxu0 0.0
          %4733 = vmatpush1.msra.mxu0 0.0
          %4734 = vmatprep.subr.mxu0 0.0
          %4735 = vmatpush1.msra.mxu0 0.0
          %4736 = vmatprep.subr.mxu0 0.0
          %4737 = vmatpush1.msra.mxu0 0.0
          %4738 = vmatprep.subr.mxu0 0.0
          %4739 = vmatpush1.msra.mxu0 0.0
          %4740 = vmatprep.subr.mxu0 0.0
          %4741 = vmatpush1.msra.mxu0 0.0
          %4742 = vmatprep.subr.mxu0 0.0
          %4743 = vmatpush1.msra.mxu0 0.0
          %4744 = vmatprep.subr.mxu0 0.0
          %4745 = vmatpush1.msra.mxu0 0.0
          %4746 = vmatprep.subr.mxu0 0.0
          %4747 = vmatpush1.msra.mxu0 0.0
          %4748 = vmatprep.subr.mxu0 0.0
          %4749 = vmatpush1.msra.mxu0 0.0
          %4750 = vmatprep.subr.mxu0 0.0
          %4751 = vmatpush1.msra.mxu0 0.0
          %4752 = vmatprep.subr.mxu0 0.0
          %4753 = vmatpush1.msra.mxu0 0.0
          %4754 = vmatprep.subr.mxu0 0.0
          %4755 = vmatpush1.msra.mxu0 0.0
          %4756 = vmatprep.subr.mxu0 0.0
          %4757 = vmatpush1.msra.mxu0 0.0
          %4758 = vmatprep.mubr.f32.mxu0 0.0
          %4759 = vmatmul.mubr.f32.gmra.mrb[0].mxu0 %v4692
          %v4760 = vpop.f32.mrb[0].mxu0
          %v4761 = vadd.f32 0.0, %v4760
          %v4762 = vpop.f32.mrb[0].mxu0
          %v4763 = vadd.f32 0.0, %v4762
          %4764 = vdwg.mxu0
          %4765 = vmatprep.subr.mxu0 %v4377
          %4766 = vmatpush1.msra.mxu0 %v4376
          %4767 = vmatprep.subr.mxu0 %v4385
          %4768 = vmatpush1.msra.mxu0 %v4384
          %4769 = vmatprep.subr.mxu0 %v4393
          %4770 = vmatpush1.msra.mxu0 %v4392
          %4771 = vmatprep.subr.mxu0 %v4401
          %4772 = vmatpush1.msra.mxu0 %v4400
          %4773 = vmatprep.subr.mxu0 %v4409
          %4774 = vmatpush1.msra.mxu0 %v4408
          %4775 = vmatprep.subr.mxu0 %v4417
          %4776 = vmatpush1.msra.mxu0 %v4416
          %4777 = vmatprep.subr.mxu0 %v4425
          %4778 = vmatpush1.msra.mxu0 %v4424
          %4779 = vmatprep.subr.mxu0 %v4433
          %4780 = vmatpush1.msra.mxu0 %v4432
          %4781 = vmatprep.subr.mxu0 %v4441
          %4782 = vmatpush1.msra.mxu0 %v4440
          %4783 = vmatprep.subr.mxu0 %v4449
          %4784 = vmatpush1.msra.mxu0 %v4448
          %4785 = vmatprep.subr.mxu0 %v4457
          %4786 = vmatpush1.msra.mxu0 %v4456
          %4787 = vmatprep.subr.mxu0 %v4465
          %4788 = vmatpush1.msra.mxu0 %v4464
          %4789 = vmatprep.subr.mxu0 %v4473
          %4790 = vmatpush1.msra.mxu0 %v4472
          %4791 = vmatprep.subr.mxu0 %v4481
          %4792 = vmatpush1.msra.mxu0 %v4480
          %4793 = vmatprep.subr.mxu0 %v4489
          %4794 = vmatpush1.msra.mxu0 %v4488
          %4795 = vmatprep.subr.mxu0 %v4497
          %4796 = vmatpush1.msra.mxu0 %v4496
          %4797 = vmatprep.subr.mxu0 0.0
          %4798 = vmatpush1.msra.mxu0 0.0
          %4799 = vmatprep.subr.mxu0 0.0
          %4800 = vmatpush1.msra.mxu0 0.0
          %4801 = vmatprep.subr.mxu0 0.0
          %4802 = vmatpush1.msra.mxu0 0.0
          %4803 = vmatprep.subr.mxu0 0.0
          %4804 = vmatpush1.msra.mxu0 0.0
          %4805 = vmatprep.subr.mxu0 0.0
          %4806 = vmatpush1.msra.mxu0 0.0
          %4807 = vmatprep.subr.mxu0 0.0
          %4808 = vmatpush1.msra.mxu0 0.0
          %4809 = vmatprep.subr.mxu0 0.0
          %4810 = vmatpush1.msra.mxu0 0.0
          %4811 = vmatprep.subr.mxu0 0.0
          %4812 = vmatpush1.msra.mxu0 0.0
          %4813 = vmatprep.subr.mxu0 0.0
          %4814 = vmatpush1.msra.mxu0 0.0
          %4815 = vmatprep.subr.mxu0 0.0
          %4816 = vmatpush1.msra.mxu0 0.0
          %4817 = vmatprep.subr.mxu0 0.0
          %4818 = vmatpush1.msra.mxu0 0.0
          %4819 = vmatprep.subr.mxu0 0.0
          %4820 = vmatpush1.msra.mxu0 0.0
          %4821 = vmatprep.subr.mxu0 0.0
          %4822 = vmatpush1.msra.mxu0 0.0
          %4823 = vmatprep.subr.mxu0 0.0
          %4824 = vmatpush1.msra.mxu0 0.0
          %4825 = vmatprep.subr.mxu0 0.0
          %4826 = vmatpush1.msra.mxu0 0.0
          %4827 = vmatprep.subr.mxu0 0.0
          %4828 = vmatpush1.msra.mxu0 0.0
          %4829 = vmatprep.mubr.f32.mxu0 0.0
          %4830 = vmatmul.mubr.f32.gmra.mrb[0].mxu0 %v4692
          %v4831 = vpop.f32.mrb[0].mxu0
          %v4832 = vadd.f32 0.0, %v4831
          %v4833 = vpop.f32.mrb[0].mxu0
          %v4834 = vadd.f32 0.0, %v4833
          %4835 = vdwg.mxu0
          %4836 = vmatprep.subr.mxu0 %v4379
          %4837 = vmatpush1.msra.mxu0 %v4378
          %4838 = vmatprep.subr.mxu0 %v4387
          %4839 = vmatpush1.msra.mxu0 %v4386
          %4840 = vmatprep.subr.mxu0 %v4395
          %4841 = vmatpush1.msra.mxu0 %v4394
          %4842 = vmatprep.subr.mxu0 %v4403
          %4843 = vmatpush1.msra.mxu0 %v4402
          %4844 = vmatprep.subr.mxu0 %v4411
          %4845 = vmatpush1.msra.mxu0 %v4410
          %4846 = vmatprep.subr.mxu0 %v4419
          %4847 = vmatpush1.msra.mxu0 %v4418
          %4848 = vmatprep.subr.mxu0 %v4427
          %4849 = vmatpush1.msra.mxu0 %v4426
          %4850 = vmatprep.subr.mxu0 %v4435
          %4851 = vmatpush1.msra.mxu0 %v4434
          %4852 = vmatprep.subr.mxu0 %v4443
          %4853 = vmatpush1.msra.mxu0 %v4442
          %4854 = vmatprep.subr.mxu0 %v4451
          %4855 = vmatpush1.msra.mxu0 %v4450
          %4856 = vmatprep.subr.mxu0 %v4459
          %4857 = vmatpush1.msra.mxu0 %v4458
          %4858 = vmatprep.subr.mxu0 %v4467
          %4859 = vmatpush1.msra.mxu0 %v4466
          %4860 = vmatprep.subr.mxu0 %v4475
          %4861 = vmatpush1.msra.mxu0 %v4474
          %4862 = vmatprep.subr.mxu0 %v4483
          %4863 = vmatpush1.msra.mxu0 %v4482
          %4864 = vmatprep.subr.mxu0 %v4491
          %4865 = vmatpush1.msra.mxu0 %v4490
          %4866 = vmatprep.subr.mxu0 %v4499
          %4867 = vmatpush1.msra.mxu0 %v4498
          %4868 = vmatprep.subr.mxu0 0.0
          %4869 = vmatpush1.msra.mxu0 0.0
          %4870 = vmatprep.subr.mxu0 0.0
          %4871 = vmatpush1.msra.mxu0 0.0
          %4872 = vmatprep.subr.mxu0 0.0
          %4873 = vmatpush1.msra.mxu0 0.0
          %4874 = vmatprep.subr.mxu0 0.0
          %4875 = vmatpush1.msra.mxu0 0.0
          %4876 = vmatprep.subr.mxu0 0.0
          %4877 = vmatpush1.msra.mxu0 0.0
          %4878 = vmatprep.subr.mxu0 0.0
          %4879 = vmatpush1.msra.mxu0 0.0
          %4880 = vmatprep.subr.mxu0 0.0
          %4881 = vmatpush1.msra.mxu0 0.0
          %4882 = vmatprep.subr.mxu0 0.0
          %4883 = vmatpush1.msra.mxu0 0.0
          %4884 = vmatprep.subr.mxu0 0.0
          %4885 = vmatpush1.msra.mxu0 0.0
          %4886 = vmatprep.subr.mxu0 0.0
          %4887 = vmatpush1.msra.mxu0 0.0
          %4888 = vmatprep.subr.mxu0 0.0
          %4889 = vmatpush1.msra.mxu0 0.0
          %4890 = vmatprep.subr.mxu0 0.0
          %4891 = vmatpush1.msra.mxu0 0.0
          %4892 = vmatprep.subr.mxu0 0.0
          %4893 = vmatpush1.msra.mxu0 0.0
          %4894 = vmatprep.subr.mxu0 0.0
          %4895 = vmatpush1.msra.mxu0 0.0
          %4896 = vmatprep.subr.mxu0 0.0
          %4897 = vmatpush1.msra.mxu0 0.0
          %4898 = vmatprep.subr.mxu0 0.0
          %4899 = vmatpush1.msra.mxu0 0.0
          %4900 = vmatprep.mubr.f32.mxu0 0.0
          %4901 = vmatmul.mubr.f32.gmra.mrb[0].mxu0 %v4692
          %v4902 = vpop.f32.mrb[0].mxu0
          %v4903 = vadd.f32 0.0, %v4902
          %v4904 = vpop.f32.mrb[0].mxu0
          %v4905 = vadd.f32 0.0, %v4904
          %4906 = vdwg.mxu0
          %4907 = vmatprep.subr.mxu0 %v4381
          %4908 = vmatpush1.msra.mxu0 %v4380
          %4909 = vmatprep.subr.mxu0 %v4389
          %4910 = vmatpush1.msra.mxu0 %v4388
          %4911 = vmatprep.subr.mxu0 %v4397
          %4912 = vmatpush1.msra.mxu0 %v4396
          %4913 = vmatprep.subr.mxu0 %v4405
          %4914 = vmatpush1.msra.mxu0 %v4404
          %4915 = vmatprep.subr.mxu0 %v4413
          %4916 = vmatpush1.msra.mxu0 %v4412
          %4917 = vmatprep.subr.mxu0 %v4421
          %4918 = vmatpush1.msra.mxu0 %v4420
          %4919 = vmatprep.subr.mxu0 %v4429
          %4920 = vmatpush1.msra.mxu0 %v4428
          %4921 = vmatprep.subr.mxu0 %v4437
          %4922 = vmatpush1.msra.mxu0 %v4436
          %4923 = vmatprep.subr.mxu0 %v4445
          %4924 = vmatpush1.msra.mxu0 %v4444
          %4925 = vmatprep.subr.mxu0 %v4453
          %4926 = vmatpush1.msra.mxu0 %v4452
          %4927 = vmatprep.subr.mxu0 %v4461
          %4928 = vmatpush1.msra.mxu0 %v4460
          %4929 = vmatprep.subr.mxu0 %v4469
          %4930 = vmatpush1.msra.mxu0 %v4468
          %4931 = vmatprep.subr.mxu0 %v4477
          %4932 = vmatpush1.msra.mxu0 %v4476
          %4933 = vmatprep.subr.mxu0 %v4485
          %4934 = vmatpush1.msra.mxu0 %v4484
          %4935 = vmatprep.subr.mxu0 %v4493
          %4936 = vmatpush1.msra.mxu0 %v4492
          %4937 = vmatprep.subr.mxu0 %v4501
          %4938 = vmatpush1.msra.mxu0 %v4500
          %4939 = vmatprep.subr.mxu0 0.0
          %4940 = vmatpush1.msra.mxu0 0.0
          %4941 = vmatprep.subr.mxu0 0.0
          %4942 = vmatpush1.msra.mxu0 0.0
          %4943 = vmatprep.subr.mxu0 0.0
          %4944 = vmatpush1.msra.mxu0 0.0
          %4945 = vmatprep.subr.mxu0 0.0
          %4946 = vmatpush1.msra.mxu0 0.0
          %4947 = vmatprep.subr.mxu0 0.0
          %4948 = vmatpush1.msra.mxu0 0.0
          %4949 = vmatprep.subr.mxu0 0.0
          %4950 = vmatpush1.msra.mxu0 0.0
          %4951 = vmatprep.subr.mxu0 0.0
          %4952 = vmatpush1.msra.mxu0 0.0
          %4953 = vmatprep.subr.mxu0 0.0
          %4954 = vmatpush1.msra.mxu0 0.0
          %4955 = vmatprep.subr.mxu0 0.0
          %4956 = vmatpush1.msra.mxu0 0.0
          %4957 = vmatprep.subr.mxu0 0.0
          %4958 = vmatpush1.msra.mxu0 0.0
          %4959 = vmatprep.subr.mxu0 0.0
          %4960 = vmatpush1.msra.mxu0 0.0
          %4961 = vmatprep.subr.mxu0 0.0
          %4962 = vmatpush1.msra.mxu0 0.0
          %4963 = vmatprep.subr.mxu0 0.0
          %4964 = vmatpush1.msra.mxu0 0.0
          %4965 = vmatprep.subr.mxu0 0.0
          %4966 = vmatpush1.msra.mxu0 0.0
          %4967 = vmatprep.subr.mxu0 0.0
          %4968 = vmatpush1.msra.mxu0 0.0
          %4969 = vmatprep.subr.mxu0 0.0
          %4970 = vmatpush1.msra.mxu0 0.0
          %4971 = vmatprep.mubr.f32.mxu0 0.0
          %4972 = vmatmul.mubr.f32.gmra.mrb[0].mxu0 %v4692
          %v4973 = vpop.f32.mrb[0].mxu0
          %v4974 = vadd.f32 0.0, %v4973
          %v4975 = vpop.f32.mrb[0].mxu0
          %v4976 = vadd.f32 0.0, %v4975
          %4977 = vdwg.mxu0
          %v4978 = vadd.f32 %v4366, %v4761
          %v4979 = vadd.f32 %v4367, %v4763
          %v4980 = vadd.f32 %v4368, %v4832
          %v4981 = vadd.f32 %v4369, %v4834
          %v4982 = vadd.f32 %v4370, %v4903
          %v4983 = vadd.f32 %v4371, %v4905
          %v4984 = vadd.f32 %v4372, %v4974
          %v4985 = vadd.f32 %v4373, %v4976
          %v4986 = vmax.f32 %v4978, 0.0
          %v4987 = vmax.f32 %v4979, 0.0
          %v4988 = vmax.f32 %v4980, 0.0
          %v4989 = vmax.f32 %v4981, 0.0
          %v4990 = vmax.f32 %v4982, 0.0
          %v4991 = vmax.f32 %v4983, 0.0
          %v4992 = vmax.f32 %v4984, 0.0
          %v4993 = vmax.f32 %v4985, 0.0
          %v4994 = vld [vmem:[#allocation13] sm:$0xff]
          %v4996 = vlaneseq
          %v4997 = vshrl.u32 %v4996, 7
          %v4998 = vsub.s32 0, %v4997
          %v4999 = vrot.slane %v4994, %v4998
          %v5000 = vlaneseq
          %v5001 = vshrl.u32 %v5000, 7
          %v5002 = vsub.s32 1, %v5001
          %v5003 = vrot.slane %v4994, %v5002
          %v5004 = vlaneseq
          %v5005 = vshrl.u32 %v5004, 7
          %v5006 = vsub.s32 2, %v5005
          %v5007 = vrot.slane %v4994, %v5006
          %v5008 = vlaneseq
          %v5009 = vshrl.u32 %v5008, 7
          %v5010 = vsub.s32 3, %v5009
          %v5011 = vrot.slane %v4994, %v5010
          %v5012 = vlaneseq
          %v5013 = vshrl.u32 %v5012, 7
          %v5014 = vsub.s32 4, %v5013
          %v5015 = vrot.slane %v4994, %v5014
          %v5016 = vlaneseq
          %v5017 = vshrl.u32 %v5016, 7
          %v5018 = vsub.s32 5, %v5017
          %v5019 = vrot.slane %v4994, %v5018
          %v5020 = vlaneseq
          %v5021 = vshrl.u32 %v5020, 7
          %v5022 = vsub.s32 6, %v5021
          %v5023 = vrot.slane %v4994, %v5022
          %v5024 = vlaneseq
          %v5025 = vshrl.u32 %v5024, 7
          %v5026 = vsub.s32 7, %v5025
          %v5027 = vrot.slane %v4994, %v5026
          %v5036 = vmul.f32 %v4986, %v4999
          %v5037 = vmul.f32 %v4987, %v5003
          %v5038 = vmul.f32 %v4988, %v5007
          %v5039 = vmul.f32 %v4989, %v5011
          %v5040 = vmul.f32 %v4990, %v5015
          %v5041 = vmul.f32 %v4991, %v5019
          %v5042 = vmul.f32 %v4992, %v5023
          %v5043 = vmul.f32 %v4993, %v5027
          %vm5044 = vcmask 1041408
          %v5045 = vsel %vm5044, %v5036, 0.0
          %v5046 = vsel %vm5044, %v5037, 0.0
          %v5047 = vadd.f32 %v5045, %v5046
          %v5048 = vsel %vm5044, %v5038, 0.0
          %v5049 = vadd.f32 %v5047, %v5048
          %v5050 = vsel %vm5044, %v5039, 0.0
          %v5051 = vadd.f32 %v5049, %v5050
          %v5052 = vsel %vm5044, %v5040, 0.0
          %v5053 = vadd.f32 %v5051, %v5052
          %v5054 = vsel %vm5044, %v5041, 0.0
          %v5055 = vadd.f32 %v5053, %v5054
          %v5056 = vsel %vm5044, %v5042, 0.0
          %v5057 = vadd.f32 %v5055, %v5056
          %v5058 = vsel %vm5044, %v5043, 0.0
          %v5059 = vadd.f32 %v5057, %v5058
          %5060 = vadd.xlane.f32.xlu0 %v5059
          %v5061 = vpop.xlane.xlu0 %5060
          %v5062 = vld [vmem:[#allocation7] sm:$0x1]
          %v5064 = vlaneseq
          %v5065 = vshrl.u32 %v5064, 7
          %v5066 = vsub.s32 0, %v5065
          %v5067 = vrot.slane %v5062, %v5066
          %v5069 = vadd.f32 %v5061, %v5067
          %v5070 = vsub.f32 %v5069, %v5069
          %v5071 = vmul.f32 %v5070, 1.442695
          %v5072 = vpow.pop %v5071
          %v5073 = vadd.f32 %v5072, 0.0
          %v5074 = vrcp.pop %v5073
          %v5075 = vmul.f32 %v5072, %v5074
          %vm5076 = vcmask 1024
          %5077 = vst.msk [vmem:[%s7] sm:$0x3] %vm5076, %v5075
          %5078 = vst.msk [vmem:[%s8] sm:$0x3] %vm5076, %v5069
        $region182: #{tpu_custom_call.1} parent=145 // pred_fallthru
          _
        // Predicated region
        $region183: #{tpu_custom_call.1} parent=145 // pred_check
          %p5079 = pneg %p178
        $region184: #{tpu_custom_call.1} parent=145 // pred_check_branch
          %5081 = sbr.rel (%p5079) target = $region186
        $region185: #{tpu_custom_call.1} parent=145 // pred_region
          _
        $region186: #{tpu_custom_call.1} parent=145 // pred_fallthru
          _
        // Predicated region
        $region187: #{tpu_custom_call.1} parent=145 // pred_check
          %p5082 = pneg %p199
        $region188: #{tpu_custom_call.1} parent=145 // pred_check_branch
          %5084 = sbr.rel (%p5082) target = $region190
        $region189: #{tpu_custom_call.1} parent=145 // pred_region
          _
        $region190: #{tpu_custom_call.1} parent=145 // pred_fallthru
          _
        // Predicated region
        $region191: #{tpu_custom_call.1} parent=145 // pred_check
          %p5085 = pneg %p178
        $region192: #{tpu_custom_call.1} parent=145 // pred_check_branch
          %5087 = sbr.rel (%p5085) target = $region194
        $region193: #{tpu_custom_call.1} parent=145 // pred_region
          _
        $region194: #{tpu_custom_call.1} parent=145 // pred_fallthru
          _
        // Predicated region
        $region195: #{tpu_custom_call.1} parent=145 // pred_check
          %p5088 = pneg %p199
        $region196: #{tpu_custom_call.1} parent=145 // pred_check_branch
          %5090 = sbr.rel (%p5088) target = $region198
        $region197: #{tpu_custom_call.1} parent=145 // pred_region
          _
        $region198: #{tpu_custom_call.1} parent=145 // pred_fallthru
          _
      $region146: #{tpu_custom_call.1} parent=5 // pred_fallthru
        _
      %p5091 = scmp.le.s32.totalorder 2, %s19
      // Predicated region
      $region199: #{tpu_custom_call.1} parent=5 // pred_check
        %p5092 = pneg %p5091
      $region200: #{tpu_custom_call.1} parent=5 // pred_check_branch
        %5094 = sbr.rel (%p5092) target = $region202
      $region201: #{tpu_custom_call.1} parent=5 // pred_region
        %s5095 = ssub.s32 %s19, 2
      $region202: #{tpu_custom_call.1} parent=5 // pred_fallthru
        _
    $region6: #{tpu_custom_call.1} parent=1 // loop_footer
      %s23 = sadd.s32 1, %s19
    $region7: #{tpu_custom_call.1} parent=1 // loop_footer_branch
      %18 = sbr.rel target = $region3
    $region8: #{tpu_custom_call.1} parent=1 // loop_exit
      _
    %5096 = vsyncpa [#allocation12], 1
    %s5097 = scalar_lea.sflag [#allocation12], 1
    %5098 = vsyncpa %s5097, 1
    %5099 = vsyncpa [#allocation14], 1
  %5100 = vsyncmov [#allocation3]
  %s5101 = vpop.sfrf %5100
  %p5102 = scmp.eq.s32.totalorder %s5101, 0
  %p5103 = pneg %p5102
  %5105 = shalt.err (%p5103)

</llo_original>
